<compile_context>
chip_gen: v7x
topology: tpu7x:2x2x1
jax: 0.10.0
libtpu: 0.0.40
codegen_flags: <defaults>
</compile_context>

<pallas_src>
import jax
import jax.numpy as jnp
from jax.experimental import pallas as pl
from jax.experimental.pallas import tpu as pltpu


# ----------------------------------------------------------------------------
# helpers
# ----------------------------------------------------------------------------
def _vmem_capacity():
    try:
        return int(pltpu.get_tpu_info().vmem_capacity_bytes)
    except Exception:
        return 64 * 1024 * 1024  # conservative fallback (v7x per-TC)


def _pick_batch_block(B):
    """Split the batch only on 2-TensorCore chips (v7x); on v5e/v6e a split
    just serializes the grid and halves the recurrent matmul M-dim."""
    try:
        two_tc = "v7" in jax.devices()[0].device_kind.lower()
    except Exception:
        two_tc = False
    if two_tc and B % 16 == 0:
        return B // 2
    return B


def _pick_time_block(T, bytes_per_step, fixed_bytes, vmem_cap, cap=64):
    """Largest divisor of T (<= cap) whose per-block footprint fits ~60% of
    VMEM, preferring sublane-aligned (multiple of 8) blocks."""
    budget = max(int(0.6 * vmem_cap) - fixed_bytes, bytes_per_step)
    divisors = [d for d in range(1, min(T, cap) + 1) if T % d == 0]
    fits = [d for d in divisors if d * bytes_per_step <= budget] or [1]
    aligned = [d for d in fits if d % 8 == 0 or d == T]
    return max(aligned) if aligned else max(fits)


def _full_spec(a):
    """Whole-array block at a constant index; single-buffered when supported
    (constant index never re-DMAs, so double-buffering only wastes VMEM)."""
    idx = lambda bb, tb: (0,) * a.ndim
    try:
        return pl.BlockSpec(a.shape, idx, pipeline_mode=pl.Buffered(1))
    except Exception:
        return pl.BlockSpec(a.shape, idx)


def _gru_cell(gi, gh, h, H):
    """PyTorch GRU cell, gate order (r, z, n); gh already includes b_hh."""
    r = jax.nn.sigmoid(gi[:, 0 * H:1 * H] + gh[:, 0 * H:1 * H])
    z = jax.nn.sigmoid(gi[:, 1 * H:2 * H] + gh[:, 1 * H:2 * H])
    n = jnp.tanh(gi[:, 2 * H:3 * H] + r * gh[:, 2 * H:3 * H])
    return (1.0 - z) * n + z * h


# ----------------------------------------------------------------------------
# Kernel 1: encoder = 2-layer GRU over time + fused head
#           (relu(h_n[-1]) -> Linear(H->NL) -> L2 normalize)
#           + decoder mask computed from the already-resident x block.
#   grid = (batch_blocks, time_blocks); hidden state persists in VMEM scratch.
# ----------------------------------------------------------------------------
def _encoder_kernel(x_ref, wih0, whh0, bih0, bhh0, wih1, whh1, bih1, bhh1,
                    lin_w, lin_b, ht1_ref, mask_ref, h_ref, gi0_ref):
    tb = pl.program_id(1)
    BB, TS, D = x_ref.shape
    H = whh0.shape[0]
    G = 3 * H

    @pl.when(tb == 0)
    def _():
        h_ref[...] = jnp.zeros_like(h_ref)

    xb = x_ref[...]                                         # (BB, TS, D) f32

    # --- decoder mask for this block (PyTorch-literal semantics), batch-major
    m = jnp.sum(jnp.where(xb > 0, 1.0, xb), axis=-1, keepdims=True)  # (BB,TS,1)
    mask_ref[...] = jnp.where(m >= 1.0, 1.0, m)

    # --- layer-0 input projection for the whole time block: ONE MXU matmul
    #     (bf16 operands, f32 accumulation), bias folded in; off the serial
    #     chain, staged into VMEM scratch.
    x2 = xb.reshape(BB * TS, D).astype(jnp.bfloat16)
    gi0 = jnp.dot(x2, wih0[...], preferred_element_type=jnp.float32) + bih0[...]
    gi0_ref[...] = gi0.reshape(BB, TS, G)

    # --- hoist loop-invariant bias broadcasts off the serial chain
    bhh0_b = jnp.broadcast_to(bhh0[...], (BB, G))
    bih1_b = jnp.broadcast_to(bih1[...], (BB, G))
    bhh1_b = jnp.broadcast_to(bhh1[...], (BB, G))

    # --- serial recurrence, statically unrolled (all time indices static)
    h0 = h_ref[0]
    h1 = h_ref[1]
    for s in range(TS):
        gh0 = jnp.dot(h0.astype(jnp.bfloat16), whh0[...],
                      preferred_element_type=jnp.float32) + bhh0_b
        h0 = _gru_cell(gi0_ref[:, s], gh0, h0, H)
        gi1 = jnp.dot(h0.astype(jnp.bfloat16), wih1[...],
                      preferred_element_type=jnp.float32) + bih1_b
        gh1 = jnp.dot(h1.astype(jnp.bfloat16), whh1[...],
                      preferred_element_type=jnp.float32) + bhh1_b
        h1 = _gru_cell(gi1, gh1, h1, H)
    h_ref[0] = h0
    h_ref[1] = h1

    # --- fused encoder head on the final hidden state only (no (T,B,H) out)
    @pl.when(tb == pl.num_programs(1) - 1)
    def _():
        hl = jnp.maximum(h1, 0.0)
        y = jnp.dot(hl.astype(jnp.bfloat16), lin_w[...],
                    preferred_element_type=jnp.float32) + lin_b[...]
        norm = jnp.sqrt(jnp.sum(y * y, axis=1, keepdims=True))
        ht1_ref[...] = y / jnp.maximum(norm, 1e-12)   # matches F.normalize eps


def gru_encoder(x_btd, p):
    B, T, D = x_btd.shape
    H = p["enc_whh0"].shape[0]
    NL = p["enc_lin_w"].shape[1]
    BB = _pick_batch_block(B)
    cap = _vmem_capacity()

    weights = [p[k] for k in ("enc_wih0", "enc_whh0", "enc_bih0", "enc_bhh0",
                              "enc_wih1", "enc_whh1", "enc_bih1", "enc_bhh1",
                              "enc_lin_w", "enc_lin_b")]
    fixed = (sum(int(w.size) * w.dtype.itemsize for w in weights)  # single-buffered
             + 2 * BB * H * 4                 # h0/h1 state scratch
             + 2 * BB * NL * 4)               # ht1 output block
    per_step = (2 * BB * D * 4                # x block (double-buffered)
                + BB * 3 * H * 4              # gi0 staging scratch
                + 2 * BB * 1 * 4)             # mask output block
    TS = _pick_time_block(T, per_step, fixed, cap)
    n_bb, n_tb = B // BB, T // TS

    return pl.pallas_call(
        _encoder_kernel,
        out_shape=(jax.ShapeDtypeStruct((B, NL), jnp.float32),
                   jax.ShapeDtypeStruct((B, T, 1), jnp.float32)),
        grid=(n_bb, n_tb),
        in_specs=[pl.BlockSpec((BB, TS, D), lambda bb, tb: (bb, tb, 0))]
                 + [_full_spec(w) for w in weights],
        out_specs=(pl.BlockSpec((BB, NL), lambda bb, tb: (bb, 0)),
                   pl.BlockSpec((BB, TS, 1), lambda bb, tb: (bb, tb, 0))),
        scratch_shapes=[
            pltpu.VMEM((2, BB, H), jnp.float32),        # h0 / h1 state
            pltpu.VMEM((BB, TS, 3 * H), jnp.float32),   # hoisted layer-0 gates
        ],
        compiler_params=pltpu.CompilerParams(
            dimension_semantics=("parallel", "arbitrary"),
            vmem_limit_bytes=int(0.75 * cap)),
    )(x_btd, *weights)


# ----------------------------------------------------------------------------
# Kernel 2: decoder = 2-layer GRU over time on
#             dec_in_t = mask_rev_t * relu(Linear(NL->D)(ht1)).
#   The layer-0 input projection is time-invariant up to the per-row scalar
#   mask, so g_base = relu(Linear(ht1)) @ W_ih0 is computed ONCE at tb==0 and
#   kept in VMEM; layer-0 gates are mask_t * g_base + b_ih0.  The mask time
#   reversal is done by the BlockSpec index_map + a static within-block flip.
# ----------------------------------------------------------------------------
def _decoder_kernel(mask_ref, ht1_ref, dlin_w, dlin_b,
                    wih0, whh0, bih0, bhh0, wih1, whh1, bih1, bhh1,
                    y_ref, h_ref, gbase_ref):
    tb = pl.program_id(1)
    BB, TS, H = y_ref.shape
    G = 3 * H

    @pl.when(tb == 0)
    def _():
        h_ref[...] = jnp.zeros_like(h_ref)
        lh = jnp.maximum(
            jnp.dot(ht1_ref[...].astype(jnp.bfloat16), dlin_w[...],
                    preferred_element_type=jnp.float32) + dlin_b[...], 0.0)
        gbase_ref[...] = jnp.dot(lh.astype(jnp.bfloat16), wih0[...],
                                 preferred_element_type=jnp.float32)  # (BB,3H)

    # --- hoisted loop invariants (g_base load + bias broadcasts)
    gbase = gbase_ref[...]
    bih0_b = jnp.broadcast_to(bih0[...], (BB, G))
    bhh0_b = jnp.broadcast_to(bhh0[...], (BB, G))
    bih1_b = jnp.broadcast_to(bih1[...], (BB, G))
    bhh1_b = jnp.broadcast_to(bhh1[...], (BB, G))

    h0 = h_ref[0]
    h1 = h_ref[1]
    for s in range(TS):
        # dec_in_t @ W_ih0 + b_ih0 == mask_rev_t * g_base + b_ih0;
        # mask arrives in forward time order, the flipped block index in the
        # BlockSpec plus the static (TS-1-s) index implement the reversal.
        gi0 = mask_ref[:, TS - 1 - s] * gbase + bih0_b
        gh0 = jnp.dot(h0.astype(jnp.bfloat16), whh0[...],
                      preferred_element_type=jnp.float32) + bhh0_b
        h0 = _gru_cell(gi0, gh0, h0, H)
        gi1 = jnp.dot(h0.astype(jnp.bfloat16), wih1[...],
                      preferred_element_type=jnp.float32) + bih1_b
        gh1 = jnp.dot(h1.astype(jnp.bfloat16), whh1[...],
                      preferred_element_type=jnp.float32) + bhh1_b
        h1 = _gru_cell(gi1, gh1, h1, H)
        y_ref[:, s] = h1.astype(y_ref.dtype)
    h_ref[0] = h0
    h_ref[1] = h1


def gru_decoder(mask, ht1, p):
    B, T, _ = mask.shape
    NL = ht1.shape[1]
    H = p["dec_whh0"].shape[0]
    BB = _pick_batch_block(B)
    cap = _vmem_capacity()

    weights = [p[k] for k in ("dec_lin_w", "dec_lin_b",
                              "dec_wih0", "dec_whh0", "dec_bih0", "dec_bhh0",
                              "dec_wih1", "dec_whh1", "dec_bih1", "dec_bhh1")]
    fixed = (sum(int(w.size) * w.dtype.itemsize for w in weights)
             + 2 * BB * H * 4                 # h0/h1 state
             + BB * 3 * H * 4                 # g_base scratch
             + 2 * BB * NL * 4)               # ht1 input block
    per_step = (2 * BB * 1 * 4                # mask block (double-buffered)
                + 2 * BB * H * 4)             # y output block (double-buffered)
    TS = _pick_time_block(T, per_step, fixed, cap)
    n_bb, n_tb = B // BB, T // TS

    return pl.pallas_call(
        _decoder_kernel,
        out_shape=jax.ShapeDtypeStruct((B, T, H), jnp.float32),
        grid=(n_bb, n_tb),
        in_specs=[
            # reversed time: decoder block tb reads mask block n_tb-1-tb
            pl.BlockSpec((BB, TS, 1), lambda bb, tb: (bb, n_tb - 1 - tb, 0)),
            pl.BlockSpec((BB, NL), lambda bb, tb: (bb, 0)),
        ] + [_full_spec(w) for w in weights],
        out_specs=pl.BlockSpec((BB, TS, H), lambda bb, tb: (bb, tb, 0)),
        scratch_shapes=[
            pltpu.VMEM((2, BB, H), jnp.float32),    # h0 / h1 state
            pltpu.VMEM((BB, 3 * H), jnp.float32),   # g_base = lh @ W_ih0
        ],
        compiler_params=pltpu.CompilerParams(
            dimension_semantics=("parallel", "arbitrary"),
            vmem_limit_bytes=int(0.75 * cap)),
    )(mask, ht1, *weights)


# ----------------------------------------------------------------------------
# Parameters (deterministic synthetic init; shapes follow the PyTorch module).
#   GRUAE(input_size=D, hidden_size=H, num_layers=NL):
#     encoder GRU: D -> H (2 layers);  encoder Linear: H -> NL
#     decoder Linear: NL -> D;         decoder GRU: D -> H (2 layers)
#   GRU/linear weight matrices stored in bf16 (MXU-native), biases in f32,
#   weights pre-transposed to (in_dim, 3H) with PyTorch gate order (r, z, n).
# ----------------------------------------------------------------------------
def init_params(key, D, H, NL):
    ks = jax.random.split(key, 20)

    def w(k, shape, dtype=jnp.bfloat16, scale=0.1):
        return (scale * jax.random.normal(k, shape)).astype(dtype)

    f32 = jnp.float32
    p = {}
    # encoder GRU
    p["enc_wih0"] = w(ks[0], (D, 3 * H));       p["enc_whh0"] = w(ks[1], (H, 3 * H))
    p["enc_bih0"] = w(ks[2], (1, 3 * H), f32);  p["enc_bhh0"] = w(ks[3], (1, 3 * H), f32)
    p["enc_wih1"] = w(ks[4], (H, 3 * H));       p["enc_whh1"] = w(ks[5], (H, 3 * H))
    p["enc_bih1"] = w(ks[6], (1, 3 * H), f32);  p["enc_bhh1"] = w(ks[7], (1, 3 * H), f32)
    # encoder linear H -> NL
    p["enc_lin_w"] = w(ks[8], (H, NL));         p["enc_lin_b"] = w(ks[9], (1, NL), f32)
    # decoder linear NL -> D
    p["dec_lin_w"] = w(ks[10], (NL, D));        p["dec_lin_b"] = w(ks[11], (1, D), f32)
    # decoder GRU (input D -> hidden H, 2 layers)
    p["dec_wih0"] = w(ks[12], (D, 3 * H));      p["dec_whh0"] = w(ks[13], (H, 3 * H))
    p["dec_bih0"] = w(ks[14], (1, 3 * H), f32); p["dec_bhh0"] = w(ks[15], (1, 3 * H), f32)
    p["dec_wih1"] = w(ks[16], (H, 3 * H));      p["dec_whh1"] = w(ks[17], (H, 3 * H))
    p["dec_bih1"] = w(ks[18], (1, 3 * H), f32); p["dec_bhh1"] = w(ks[19], (1, 3 * H), f32)
    return p


def gru_ae_forward(x_btd, p):
    """x_btd: (B, T, D) float32 -> (B, T, H) float32 (decoded_output, eval mode)."""
    # Encoder: 2-layer GRU + fused relu/Linear/L2-normalize head; also emits
    # the decoder mask computed from the x block already resident in VMEM
    # (x is read from HBM exactly once, no wrapper transposes or mask ops).
    ht1, mask = gru_encoder(x_btd, p)          # (B, NL), (B, T, 1)
    # Decoder: Linear(NL->D)+relu and the per-(b,t) mask multiply are folded
    # into the decoder kernel; the time reversal lives in its BlockSpec.
    return gru_decoder(mask, ht1, p)           # (B, T, H), batch-major


if __name__ == "__main__":
    # GRUAE(input_size=4, hidden_size=32, num_layers=2)
    B, T, D, H, NL = 2, 8, 4, 32, 2
    key = jax.random.PRNGKey(0)
    kx, kp = jax.random.split(key)
    x = jax.random.normal(kx, (B, T, D), dtype=jnp.float32)
    params = init_params(kp, D, H, NL)

    out = jax.jit(gru_ae_forward)(x, params)
    jax.block_until_ready(out)
    assert out.shape == (B, T, H), out.shape
    assert bool(jnp.all(jnp.isfinite(out)))
    print("KERNEL_OK")
</pallas_src>

<mosaic_0001>
module attributes {stable_mosaic.version = 11 : i64} {
  func.func @_encoder_kernel(%arg0: i32, %arg1: i32, %arg2: memref<2x8x4xf32, #tpu.memory_space<vmem>>, %arg3: memref<4x96xbf16, #tpu.memory_space<vmem>>, %arg4: memref<32x96xbf16, #tpu.memory_space<vmem>>, %arg5: memref<1x96xf32, #tpu.memory_space<vmem>>, %arg6: memref<1x96xf32, #tpu.memory_space<vmem>>, %arg7: memref<32x96xbf16, #tpu.memory_space<vmem>>, %arg8: memref<32x96xbf16, #tpu.memory_space<vmem>>, %arg9: memref<1x96xf32, #tpu.memory_space<vmem>>, %arg10: memref<1x96xf32, #tpu.memory_space<vmem>>, %arg11: memref<32x2xbf16, #tpu.memory_space<vmem>>, %arg12: memref<1x2xf32, #tpu.memory_space<vmem>>, %arg13: memref<2x2xf32, #tpu.memory_space<vmem>>, %arg14: memref<2x8x1xf32, #tpu.memory_space<vmem>>, %arg15: memref<2x2x32xf32, #tpu.memory_space<vmem>>, %arg16: memref<2x8x96xf32, #tpu.memory_space<vmem>>) attributes {dimension_semantics = [#tpu.dimension_semantics<parallel>, #tpu.dimension_semantics<arbitrary>], iteration_bounds = array<i64: 1, 1>, scalar_prefetch = 0 : i64, scratch_operands = 2 : i64, tpu.core_type = #tpu.core_type<tc>, window_params = [{transform_indices = @transform_0, window_bounds = array<i64: 2, 8, 4>}, {pipeline_mode = #tpu.pipeline_mode<synchronous>, transform_indices = @transform_1, window_bounds = array<i64: 4, 96>}, {pipeline_mode = #tpu.pipeline_mode<synchronous>, transform_indices = @transform_2, window_bounds = array<i64: 32, 96>}, {pipeline_mode = #tpu.pipeline_mode<synchronous>, transform_indices = @transform_3, window_bounds = array<i64: 1, 96>}, {pipeline_mode = #tpu.pipeline_mode<synchronous>, transform_indices = @transform_4, window_bounds = array<i64: 1, 96>}, {pipeline_mode = #tpu.pipeline_mode<synchronous>, transform_indices = @transform_5, window_bounds = array<i64: 32, 96>}, {pipeline_mode = #tpu.pipeline_mode<synchronous>, transform_indices = @transform_6, window_bounds = array<i64: 32, 96>}, {pipeline_mode = #tpu.pipeline_mode<synchronous>, transform_indices = @transform_7, window_bounds = array<i64: 1, 96>}, {pipeline_mode = #tpu.pipeline_mode<synchronous>, transform_indices = @transform_8, window_bounds = array<i64: 1, 96>}, {pipeline_mode = #tpu.pipeline_mode<synchronous>, transform_indices = @transform_9, window_bounds = array<i64: 32, 2>}, {pipeline_mode = #tpu.pipeline_mode<synchronous>, transform_indices = @transform_10, window_bounds = array<i64: 1, 2>}, {transform_indices = @transform_11, window_bounds = array<i64: 2, 2>}, {transform_indices = @transform_12, window_bounds = array<i64: 2, 8, 1>}]} {
    %c0_i32 = arith.constant 0 : i32
    %0 = arith.cmpi eq, %arg1, %c0_i32 : i32
    %1 = arith.extui %0 : i1 to i32
    %c0_i32_0 = arith.constant 0 : i32
    %2 = arith.cmpi ne, %1, %c0_i32_0 : i32
    scf.if %2 {
      %cst_175 = arith.constant 0.000000e+00 : f32
      %574 = vector.broadcast %cst_175 : f32 to vector<2x2x32xf32>
      %c0_176 = arith.constant 0 : index
      %c0_177 = arith.constant 0 : index
      %c0_178 = arith.constant 0 : index
      %575 = vector.load %arg15[%c0_176, %c0_177, %c0_178] : memref<2x2x32xf32, #tpu.memory_space<vmem>>, vector<2x2x32xf32>
      tpu.vector_store %arg15[%c0_176, %c0_177, %c0_178], %574 {strides = array<i32>} : memref<2x2x32xf32, #tpu.memory_space<vmem>>, vector<2x2x32xf32>,
    } else {
    }
    %c0 = arith.constant 0 : index
    %c0_1 = arith.constant 0 : index
    %c0_2 = arith.constant 0 : index
    %3 = vector.load %arg2[%c0, %c0_1, %c0_2] : memref<2x8x4xf32, #tpu.memory_space<vmem>>, vector<2x8x4xf32>
    %cst = arith.constant 0.000000e+00 : f32
    %4 = vector.broadcast %cst : f32 to vector<2x8x4xf32>
    %5 = arith.cmpf ogt, %3, %4 : vector<2x8x4xf32>
    %cst_3 = arith.constant 1.000000e+00 : f32
    %6 = vector.broadcast %cst_3 : f32 to vector<2x8x4xf32>
    %7 = arith.select %5, %6, %3 : vector<2x8x4xi1>, vector<2x8x4xf32>
    %cst_4 = arith.constant dense<0.000000e+00> : vector<2x8xf32>
    %8 = vector.multi_reduction <add>, %7, %cst_4 [2] : vector<2x8x4xf32> to vector<2x8xf32>
    %9 = vector.shape_cast %8 : vector<2x8xf32> to vector<2x8x1xf32>
    %cst_5 = arith.constant 1.000000e+00 : f32
    %10 = vector.broadcast %cst_5 : f32 to vector<2x8x1xf32>
    %11 = arith.cmpf oge, %9, %10 : vector<2x8x1xf32>
    %cst_6 = arith.constant 1.000000e+00 : f32
    %12 = vector.broadcast %cst_6 : f32 to vector<2x8x1xf32>
    %13 = arith.select %11, %12, %9 : vector<2x8x1xi1>, vector<2x8x1xf32>
    %c0_7 = arith.constant 0 : index
    %c0_8 = arith.constant 0 : index
    %c0_9 = arith.constant 0 : index
    %14 = vector.load %arg14[%c0_7, %c0_8, %c0_9] : memref<2x8x1xf32, #tpu.memory_space<vmem>>, vector<2x8x1xf32>
    tpu.vector_store %arg14[%c0_7, %c0_8, %c0_9], %13 {strides = array<i32>} : memref<2x8x1xf32, #tpu.memory_space<vmem>>, vector<2x8x1xf32>,
    %15 = vector.shape_cast %3 : vector<2x8x4xf32> to vector<16x4xf32>
    %16 = arith.truncf %15 : vector<16x4xf32> to vector<16x4xbf16>
    %c0_10 = arith.constant 0 : index
    %c0_11 = arith.constant 0 : index
    %17 = vector.load %arg3[%c0_10, %c0_11] : memref<4x96xbf16, #tpu.memory_space<vmem>>, vector<4x96xbf16>
    %cst_12 = arith.constant dense<0.000000e+00> : vector<16x96xf32>
    %18 = tpu.matmul %16, %17, %cst_12 {dimension_numbers = #tpu.dot_dimension_numbers<[1], [0], [0], [1], [0, 0, 1, 1], [], []>} : vector<16x4xbf16>, vector<4x96xbf16>, vector<16x96xf32> -> vector<16x96xf32>
    %c0_13 = arith.constant 0 : index
    %c0_14 = arith.constant 0 : index
    %19 = vector.load %arg5[%c0_13, %c0_14] : memref<1x96xf32, #tpu.memory_space<vmem>>, vector<1x96xf32>
    %20 = vector.broadcast %19 : vector<1x96xf32> to vector<16x96xf32>
    %21 = arith.addf %18, %20 : vector<16x96xf32>
    %22 = vector.shape_cast %21 : vector<16x96xf32> to vector<2x8x96xf32>
    %c0_15 = arith.constant 0 : index
    %c0_16 = arith.constant 0 : index
    %c0_17 = arith.constant 0 : index
    %23 = vector.load %arg16[%c0_15, %c0_16, %c0_17] : memref<2x8x96xf32, #tpu.memory_space<vmem>>, vector<2x8x96xf32>
    tpu.vector_store %arg16[%c0_15, %c0_16, %c0_17], %22 {strides = array<i32>} : memref<2x8x96xf32, #tpu.memory_space<vmem>>, vector<2x8x96xf32>,
    %c0_18 = arith.constant 0 : index
    %c0_19 = arith.constant 0 : index
    %24 = vector.load %arg6[%c0_18, %c0_19] : memref<1x96xf32, #tpu.memory_space<vmem>>, vector<1x96xf32>
    %25 = vector.shape_cast %24 : vector<1x96xf32> to vector<1x96xf32>
    %26 = vector.broadcast %25 : vector<1x96xf32> to vector<2x96xf32>
    %c0_20 = arith.constant 0 : index
    %c0_21 = arith.constant 0 : index
    %27 = vector.load %arg9[%c0_20, %c0_21] : memref<1x96xf32, #tpu.memory_space<vmem>>, vector<1x96xf32>
    %28 = vector.shape_cast %27 : vector<1x96xf32> to vector<1x96xf32>
    %29 = vector.broadcast %28 : vector<1x96xf32> to vector<2x96xf32>
    %c0_22 = arith.constant 0 : index
    %c0_23 = arith.constant 0 : index
    %30 = vector.load %arg10[%c0_22, %c0_23] : memref<1x96xf32, #tpu.memory_space<vmem>>, vector<1x96xf32>
    %31 = vector.shape_cast %30 : vector<1x96xf32> to vector<1x96xf32>
    %32 = vector.broadcast %31 : vector<1x96xf32> to vector<2x96xf32>
    %c0_24 = arith.constant 0 : index
    %c0_25 = arith.constant 0 : index
    %c0_26 = arith.constant 0 : index
    %33 = vector.load %arg15[%c0_24, %c0_25, %c0_26] : memref<2x2x32xf32, #tpu.memory_space<vmem>>, vector<1x2x32xf32>
    %34 = vector.shape_cast %33 : vector<1x2x32xf32> to vector<2x32xf32>
    %c1 = arith.constant 1 : index
    %c0_27 = arith.constant 0 : index
    %c0_28 = arith.constant 0 : index
    %35 = vector.load %arg15[%c1, %c0_27, %c0_28] : memref<2x2x32xf32, #tpu.memory_space<vmem>>, vector<1x2x32xf32>
    %36 = vector.shape_cast %35 : vector<1x2x32xf32> to vector<2x32xf32>
    %37 = arith.truncf %34 : vector<2x32xf32> to vector<2x32xbf16>
    %c0_29 = arith.constant 0 : index
    %c0_30 = arith.constant 0 : index
    %38 = vector.load %arg4[%c0_29, %c0_30] : memref<32x96xbf16, #tpu.memory_space<vmem>>, vector<32x96xbf16>
    %cst_31 = arith.constant dense<0.000000e+00> : vector<2x96xf32>
    %39 = tpu.matmul %37, %38, %cst_31 {dimension_numbers = #tpu.dot_dimension_numbers<[1], [0], [0], [1], [0, 0, 1, 1], [], []>} : vector<2x32xbf16>, vector<32x96xbf16>, vector<2x96xf32> -> vector<2x96xf32>
    %40 = arith.addf %39, %26 : vector<2x96xf32>
    %c0_32 = arith.constant 0 : index
    %c0_33 = arith.constant 0 : index
    %c0_34 = arith.constant 0 : index
    %41 = vector.load %arg16[%c0_32, %c0_33, %c0_34] : memref<2x8x96xf32, #tpu.memory_space<vmem>>, vector<2x1x96xf32>
    %42 = vector.shape_cast %41 : vector<2x1x96xf32> to vector<2x96xf32>
    %43 = vector.extract_strided_slice %42 {offsets = [0, 0], sizes = [2, 32], strides = [1, 1]} : vector<2x96xf32> to vector<2x32xf32>
    %44 = vector.extract_strided_slice %40 {offsets = [0, 0], sizes = [2, 32], strides = [1, 1]} : vector<2x96xf32> to vector<2x32xf32>
    %45 = arith.addf %43, %44 : vector<2x32xf32>
    %46 = arith.negf %45 : vector<2x32xf32>
    %47 = math.exp %46 : vector<2x32xf32>
    %cst_35 = arith.constant 1.000000e+00 : f32
    %48 = vector.broadcast %cst_35 : f32 to vector<2x32xf32>
    %49 = arith.addf %48, %47 : vector<2x32xf32>
    %50 = arith.divf %48, %49 : vector<2x32xf32>
    %51 = vector.extract_strided_slice %42 {offsets = [0, 32], sizes = [2, 32], strides = [1, 1]} : vector<2x96xf32> to vector<2x32xf32>
    %52 = vector.extract_strided_slice %40 {offsets = [0, 32], sizes = [2, 32], strides = [1, 1]} : vector<2x96xf32> to vector<2x32xf32>
    %53 = arith.addf %51, %52 : vector<2x32xf32>
    %54 = arith.negf %53 : vector<2x32xf32>
    %55 = math.exp %54 : vector<2x32xf32>
    %cst_36 = arith.constant 1.000000e+00 : f32
    %56 = vector.broadcast %cst_36 : f32 to vector<2x32xf32>
    %57 = arith.addf %56, %55 : vector<2x32xf32>
    %58 = arith.divf %56, %57 : vector<2x32xf32>
    %59 = vector.extract_strided_slice %42 {offsets = [0, 64], sizes = [2, 32], strides = [1, 1]} : vector<2x96xf32> to vector<2x32xf32>
    %60 = vector.extract_strided_slice %40 {offsets = [0, 64], sizes = [2, 32], strides = [1, 1]} : vector<2x96xf32> to vector<2x32xf32>
    %61 = arith.mulf %50, %60 : vector<2x32xf32>
    %62 = arith.addf %59, %61 : vector<2x32xf32>
    %63 = math.tanh %62 : vector<2x32xf32>
    %cst_37 = arith.constant 1.000000e+00 : f32
    %64 = vector.broadcast %cst_37 : f32 to vector<2x32xf32>
    %65 = arith.subf %64, %58 : vector<2x32xf32>
    %66 = arith.mulf %65, %63 : vector<2x32xf32>
    %67 = arith.mulf %58, %34 : vector<2x32xf32>
    %68 = arith.addf %66, %67 : vector<2x32xf32>
    %69 = arith.truncf %68 : vector<2x32xf32> to vector<2x32xbf16>
    %c0_38 = arith.constant 0 : index
    %c0_39 = arith.constant 0 : index
    %70 = vector.load %arg7[%c0_38, %c0_39] : memref<32x96xbf16, #tpu.memory_space<vmem>>, vector<32x96xbf16>
    %cst_40 = arith.constant dense<0.000000e+00> : vector<2x96xf32>
    %71 = tpu.matmul %69, %70, %cst_40 {dimension_numbers = #tpu.dot_dimension_numbers<[1], [0], [0], [1], [0, 0, 1, 1], [], []>} : vector<2x32xbf16>, vector<32x96xbf16>, vector<2x96xf32> -> vector<2x96xf32>
    %72 = arith.addf %71, %29 : vector<2x96xf32>
    %73 = arith.truncf %36 : vector<2x32xf32> to vector<2x32xbf16>
    %c0_41 = arith.constant 0 : index
    %c0_42 = arith.constant 0 : index
    %74 = vector.load %arg8[%c0_41, %c0_42] : memref<32x96xbf16, #tpu.memory_space<vmem>>, vector<32x96xbf16>
    %cst_43 = arith.constant dense<0.000000e+00> : vector<2x96xf32>
    %75 = tpu.matmul %73, %74, %cst_43 {dimension_numbers = #tpu.dot_dimension_numbers<[1], [0], [0], [1], [0, 0, 1, 1], [], []>} : vector<2x32xbf16>, vector<32x96xbf16>, vector<2x96xf32> -> vector<2x96xf32>
    %76 = arith.addf %75, %32 : vector<2x96xf32>
    %77 = vector.extract_strided_slice %72 {offsets = [0, 0], sizes = [2, 32], strides = [1, 1]} : vector<2x96xf32> to vector<2x32xf32>
    %78 = vector.extract_strided_slice %76 {offsets = [0, 0], sizes = [2, 32], strides = [1, 1]} : vector<2x96xf32> to vector<2x32xf32>
    %79 = arith.addf %77, %78 : vector<2x32xf32>
    %80 = arith.negf %79 : vector<2x32xf32>
    %81 = math.exp %80 : vector<2x32xf32>
    %cst_44 = arith.constant 1.000000e+00 : f32
    %82 = vector.broadcast %cst_44 : f32 to vector<2x32xf32>
    %83 = arith.addf %82, %81 : vector<2x32xf32>
    %84 = arith.divf %82, %83 : vector<2x32xf32>
    %85 = vector.extract_strided_slice %72 {offsets = [0, 32], sizes = [2, 32], strides = [1, 1]} : vector<2x96xf32> to vector<2x32xf32>
    %86 = vector.extract_strided_slice %76 {offsets = [0, 32], sizes = [2, 32], strides = [1, 1]} : vector<2x96xf32> to vector<2x32xf32>
    %87 = arith.addf %85, %86 : vector<2x32xf32>
    %88 = arith.negf %87 : vector<2x32xf32>
    %89 = math.exp %88 : vector<2x32xf32>
    %cst_45 = arith.constant 1.000000e+00 : f32
    %90 = vector.broadcast %cst_45 : f32 to vector<2x32xf32>
    %91 = arith.addf %90, %89 : vector<2x32xf32>
    %92 = arith.divf %90, %91 : vector<2x32xf32>
    %93 = vector.extract_strided_slice %72 {offsets = [0, 64], sizes = [2, 32], strides = [1, 1]} : vector<2x96xf32> to vector<2x32xf32>
    %94 = vector.extract_strided_slice %76 {offsets = [0, 64], sizes = [2, 32], strides = [1, 1]} : vector<2x96xf32> to vector<2x32xf32>
    %95 = arith.mulf %84, %94 : vector<2x32xf32>
    %96 = arith.addf %93, %95 : vector<2x32xf32>
    %97 = math.tanh %96 : vector<2x32xf32>
    %cst_46 = arith.constant 1.000000e+00 : f32
    %98 = vector.broadcast %cst_46 : f32 to vector<2x32xf32>
    %99 = arith.subf %98, %92 : vector<2x32xf32>
    %100 = arith.mulf %99, %97 : vector<2x32xf32>
    %101 = arith.mulf %92, %36 : vector<2x32xf32>
    %102 = arith.addf %100, %101 : vector<2x32xf32>
    %103 = arith.truncf %68 : vector<2x32xf32> to vector<2x32xbf16>
    %c0_47 = arith.constant 0 : index
    %c0_48 = arith.constant 0 : index
    %104 = vector.load %arg4[%c0_47, %c0_48] : memref<32x96xbf16, #tpu.memory_space<vmem>>, vector<32x96xbf16>
    %cst_49 = arith.constant dense<0.000000e+00> : vector<2x96xf32>
    %105 = tpu.matmul %103, %104, %cst_49 {dimension_numbers = #tpu.dot_dimension_numbers<[1], [0], [0], [1], [0, 0, 1, 1], [], []>} : vector<2x32xbf16>, vector<32x96xbf16>, vector<2x96xf32> -> vector<2x96xf32>
    %106 = arith.addf %105, %26 : vector<2x96xf32>
    %c0_50 = arith.constant 0 : index
    %c1_51 = arith.constant 1 : index
    %c0_52 = arith.constant 0 : index
    %107 = vector.load %arg16[%c0_50, %c1_51, %c0_52] : memref<2x8x96xf32, #tpu.memory_space<vmem>>, vector<2x1x96xf32>
    %108 = vector.shape_cast %107 : vector<2x1x96xf32> to vector<2x96xf32>
    %109 = vector.extract_strided_slice %108 {offsets = [0, 0], sizes = [2, 32], strides = [1, 1]} : vector<2x96xf32> to vector<2x32xf32>
    %110 = vector.extract_strided_slice %106 {offsets = [0, 0], sizes = [2, 32], strides = [1, 1]} : vector<2x96xf32> to vector<2x32xf32>
    %111 = arith.addf %109, %110 : vector<2x32xf32>
    %112 = arith.negf %111 : vector<2x32xf32>
    %113 = math.exp %112 : vector<2x32xf32>
    %cst_53 = arith.constant 1.000000e+00 : f32
    %114 = vector.broadcast %cst_53 : f32 to vector<2x32xf32>
    %115 = arith.addf %114, %113 : vector<2x32xf32>
    %116 = arith.divf %114, %115 : vector<2x32xf32>
    %117 = vector.extract_strided_slice %108 {offsets = [0, 32], sizes = [2, 32], strides = [1, 1]} : vector<2x96xf32> to vector<2x32xf32>
    %118 = vector.extract_strided_slice %106 {offsets = [0, 32], sizes = [2, 32], strides = [1, 1]} : vector<2x96xf32> to vector<2x32xf32>
    %119 = arith.addf %117, %118 : vector<2x32xf32>
    %120 = arith.negf %119 : vector<2x32xf32>
    %121 = math.exp %120 : vector<2x32xf32>
    %cst_54 = arith.constant 1.000000e+00 : f32
    %122 = vector.broadcast %cst_54 : f32 to vector<2x32xf32>
    %123 = arith.addf %122, %121 : vector<2x32xf32>
    %124 = arith.divf %122, %123 : vector<2x32xf32>
    %125 = vector.extract_strided_slice %108 {offsets = [0, 64], sizes = [2, 32], strides = [1, 1]} : vector<2x96xf32> to vector<2x32xf32>
    %126 = vector.extract_strided_slice %106 {offsets = [0, 64], sizes = [2, 32], strides = [1, 1]} : vector<2x96xf32> to vector<2x32xf32>
    %127 = arith.mulf %116, %126 : vector<2x32xf32>
    %128 = arith.addf %125, %127 : vector<2x32xf32>
    %129 = math.tanh %128 : vector<2x32xf32>
    %cst_55 = arith.constant 1.000000e+00 : f32
    %130 = vector.broadcast %cst_55 : f32 to vector<2x32xf32>
    %131 = arith.subf %130, %124 : vector<2x32xf32>
    %132 = arith.mulf %131, %129 : vector<2x32xf32>
    %133 = arith.mulf %124, %68 : vector<2x32xf32>
    %134 = arith.addf %132, %133 : vector<2x32xf32>
    %135 = arith.truncf %134 : vector<2x32xf32> to vector<2x32xbf16>
    %c0_56 = arith.constant 0 : index
    %c0_57 = arith.constant 0 : index
    %136 = vector.load %arg7[%c0_56, %c0_57] : memref<32x96xbf16, #tpu.memory_space<vmem>>, vector<32x96xbf16>
    %cst_58 = arith.constant dense<0.000000e+00> : vector<2x96xf32>
    %137 = tpu.matmul %135, %136, %cst_58 {dimension_numbers = #tpu.dot_dimension_numbers<[1], [0], [0], [1], [0, 0, 1, 1], [], []>} : vector<2x32xbf16>, vector<32x96xbf16>, vector<2x96xf32> -> vector<2x96xf32>
    %138 = arith.addf %137, %29 : vector<2x96xf32>
    %139 = arith.truncf %102 : vector<2x32xf32> to vector<2x32xbf16>
    %c0_59 = arith.constant 0 : index
    %c0_60 = arith.constant 0 : index
    %140 = vector.load %arg8[%c0_59, %c0_60] : memref<32x96xbf16, #tpu.memory_space<vmem>>, vector<32x96xbf16>
    %cst_61 = arith.constant dense<0.000000e+00> : vector<2x96xf32>
    %141 = tpu.matmul %139, %140, %cst_61 {dimension_numbers = #tpu.dot_dimension_numbers<[1], [0], [0], [1], [0, 0, 1, 1], [], []>} : vector<2x32xbf16>, vector<32x96xbf16>, vector<2x96xf32> -> vector<2x96xf32>
    %142 = arith.addf %141, %32 : vector<2x96xf32>
    %143 = vector.extract_strided_slice %138 {offsets = [0, 0], sizes = [2, 32], strides = [1, 1]} : vector<2x96xf32> to vector<2x32xf32>
    %144 = vector.extract_strided_slice %142 {offsets = [0, 0], sizes = [2, 32], strides = [1, 1]} : vector<2x96xf32> to vector<2x32xf32>
    %145 = arith.addf %143, %144 : vector<2x32xf32>
    %146 = arith.negf %145 : vector<2x32xf32>
    %147 = math.exp %146 : vector<2x32xf32>
    %cst_62 = arith.constant 1.000000e+00 : f32
    %148 = vector.broadcast %cst_62 : f32 to vector<2x32xf32>
    %149 = arith.addf %148, %147 : vector<2x32xf32>
    %150 = arith.divf %148, %149 : vector<2x32xf32>
    %151 = vector.extract_strided_slice %138 {offsets = [0, 32], sizes = [2, 32], strides = [1, 1]} : vector<2x96xf32> to vector<2x32xf32>
    %152 = vector.extract_strided_slice %142 {offsets = [0, 32], sizes = [2, 32], strides = [1, 1]} : vector<2x96xf32> to vector<2x32xf32>
    %153 = arith.addf %151, %152 : vector<2x32xf32>
    %154 = arith.negf %153 : vector<2x32xf32>
    %155 = math.exp %154 : vector<2x32xf32>
    %cst_63 = arith.constant 1.000000e+00 : f32
    %156 = vector.broadcast %cst_63 : f32 to vector<2x32xf32>
    %157 = arith.addf %156, %155 : vector<2x32xf32>
    %158 = arith.divf %156, %157 : vector<2x32xf32>
    %159 = vector.extract_strided_slice %138 {offsets = [0, 64], sizes = [2, 32], strides = [1, 1]} : vector<2x96xf32> to vector<2x32xf32>
    %160 = vector.extract_strided_slice %142 {offsets = [0, 64], sizes = [2, 32], strides = [1, 1]} : vector<2x96xf32> to vector<2x32xf32>
    %161 = arith.mulf %150, %160 : vector<2x32xf32>
    %162 = arith.addf %159, %161 : vector<2x32xf32>
    %163 = math.tanh %162 : vector<2x32xf32>
    %cst_64 = arith.constant 1.000000e+00 : f32
    %164 = vector.broadcast %cst_64 : f32 to vector<2x32xf32>
    %165 = arith.subf %164, %158 : vector<2x32xf32>
    %166 = arith.mulf %165, %163 : vector<2x32xf32>
    %167 = arith.mulf %158, %102 : vector<2x32xf32>
    %168 = arith.addf %166, %167 : vector<2x32xf32>
    %169 = arith.truncf %134 : vector<2x32xf32> to vector<2x32xbf16>
    %c0_65 = arith.constant 0 : index
    %c0_66 = arith.constant 0 : index
    %170 = vector.load %arg4[%c0_65, %c0_66] : memref<32x96xbf16, #tpu.memory_space<vmem>>, vector<32x96xbf16>
    %cst_67 = arith.constant dense<0.000000e+00> : vector<2x96xf32>
    %171 = tpu.matmul %169, %170, %cst_67 {dimension_numbers = #tpu.dot_dimension_numbers<[1], [0], [0], [1], [0, 0, 1, 1], [], []>} : vector<2x32xbf16>, vector<32x96xbf16>, vector<2x96xf32> -> vector<2x96xf32>
    %172 = arith.addf %171, %26 : vector<2x96xf32>
    %c0_68 = arith.constant 0 : index
    %c2 = arith.constant 2 : index
    %c0_69 = arith.constant 0 : index
    %173 = vector.load %arg16[%c0_68, %c2, %c0_69] : memref<2x8x96xf32, #tpu.memory_space<vmem>>, vector<2x1x96xf32>
    %174 = vector.shape_cast %173 : vector<2x1x96xf32> to vector<2x96xf32>
    %175 = vector.extract_strided_slice %174 {offsets = [0, 0], sizes = [2, 32], strides = [1, 1]} : vector<2x96xf32> to vector<2x32xf32>
    %176 = vector.extract_strided_slice %172 {offsets = [0, 0], sizes = [2, 32], strides = [1, 1]} : vector<2x96xf32> to vector<2x32xf32>
    %177 = arith.addf %175, %176 : vector<2x32xf32>
    %178 = arith.negf %177 : vector<2x32xf32>
    %179 = math.exp %178 : vector<2x32xf32>
    %cst_70 = arith.constant 1.000000e+00 : f32
    %180 = vector.broadcast %cst_70 : f32 to vector<2x32xf32>
    %181 = arith.addf %180, %179 : vector<2x32xf32>
    %182 = arith.divf %180, %181 : vector<2x32xf32>
    %183 = vector.extract_strided_slice %174 {offsets = [0, 32], sizes = [2, 32], strides = [1, 1]} : vector<2x96xf32> to vector<2x32xf32>
    %184 = vector.extract_strided_slice %172 {offsets = [0, 32], sizes = [2, 32], strides = [1, 1]} : vector<2x96xf32> to vector<2x32xf32>
    %185 = arith.addf %183, %184 : vector<2x32xf32>
    %186 = arith.negf %185 : vector<2x32xf32>
    %187 = math.exp %186 : vector<2x32xf32>
    %cst_71 = arith.constant 1.000000e+00 : f32
    %188 = vector.broadcast %cst_71 : f32 to vector<2x32xf32>
    %189 = arith.addf %188, %187 : vector<2x32xf32>
    %190 = arith.divf %188, %189 : vector<2x32xf32>
    %191 = vector.extract_strided_slice %174 {offsets = [0, 64], sizes = [2, 32], strides = [1, 1]} : vector<2x96xf32> to vector<2x32xf32>
    %192 = vector.extract_strided_slice %172 {offsets = [0, 64], sizes = [2, 32], strides = [1, 1]} : vector<2x96xf32> to vector<2x32xf32>
    %193 = arith.mulf %182, %192 : vector<2x32xf32>
    %194 = arith.addf %191, %193 : vector<2x32xf32>
    %195 = math.tanh %194 : vector<2x32xf32>
    %cst_72 = arith.constant 1.000000e+00 : f32
    %196 = vector.broadcast %cst_72 : f32 to vector<2x32xf32>
    %197 = arith.subf %196, %190 : vector<2x32xf32>
    %198 = arith.mulf %197, %195 : vector<2x32xf32>
    %199 = arith.mulf %190, %134 : vector<2x32xf32>
    %200 = arith.addf %198, %199 : vector<2x32xf32>
    %201 = arith.truncf %200 : vector<2x32xf32> to vector<2x32xbf16>
    %c0_73 = arith.constant 0 : index
    %c0_74 = arith.constant 0 : index
    %202 = vector.load %arg7[%c0_73, %c0_74] : memref<32x96xbf16, #tpu.memory_space<vmem>>, vector<32x96xbf16>
    %cst_75 = arith.constant dense<0.000000e+00> : vector<2x96xf32>
    %203 = tpu.matmul %201, %202, %cst_75 {dimension_numbers = #tpu.dot_dimension_numbers<[1], [0], [0], [1], [0, 0, 1, 1], [], []>} : vector<2x32xbf16>, vector<32x96xbf16>, vector<2x96xf32> -> vector<2x96xf32>
    %204 = arith.addf %203, %29 : vector<2x96xf32>
    %205 = arith.truncf %168 : vector<2x32xf32> to vector<2x32xbf16>
    %c0_76 = arith.constant 0 : index
    %c0_77 = arith.constant 0 : index
    %206 = vector.load %arg8[%c0_76, %c0_77] : memref<32x96xbf16, #tpu.memory_space<vmem>>, vector<32x96xbf16>
    %cst_78 = arith.constant dense<0.000000e+00> : vector<2x96xf32>
    %207 = tpu.matmul %205, %206, %cst_78 {dimension_numbers = #tpu.dot_dimension_numbers<[1], [0], [0], [1], [0, 0, 1, 1], [], []>} : vector<2x32xbf16>, vector<32x96xbf16>, vector<2x96xf32> -> vector<2x96xf32>
    %208 = arith.addf %207, %32 : vector<2x96xf32>
    %209 = vector.extract_strided_slice %204 {offsets = [0, 0], sizes = [2, 32], strides = [1, 1]} : vector<2x96xf32> to vector<2x32xf32>
    %210 = vector.extract_strided_slice %208 {offsets = [0, 0], sizes = [2, 32], strides = [1, 1]} : vector<2x96xf32> to vector<2x32xf32>
    %211 = arith.addf %209, %210 : vector<2x32xf32>
    %212 = arith.negf %211 : vector<2x32xf32>
    %213 = math.exp %212 : vector<2x32xf32>
    %cst_79 = arith.constant 1.000000e+00 : f32
    %214 = vector.broadcast %cst_79 : f32 to vector<2x32xf32>
    %215 = arith.addf %214, %213 : vector<2x32xf32>
    %216 = arith.divf %214, %215 : vector<2x32xf32>
    %217 = vector.extract_strided_slice %204 {offsets = [0, 32], sizes = [2, 32], strides = [1, 1]} : vector<2x96xf32> to vector<2x32xf32>
    %218 = vector.extract_strided_slice %208 {offsets = [0, 32], sizes = [2, 32], strides = [1, 1]} : vector<2x96xf32> to vector<2x32xf32>
    %219 = arith.addf %217, %218 : vector<2x32xf32>
    %220 = arith.negf %219 : vector<2x32xf32>
    %221 = math.exp %220 : vector<2x32xf32>
    %cst_80 = arith.constant 1.000000e+00 : f32
    %222 = vector.broadcast %cst_80 : f32 to vector<2x32xf32>
    %223 = arith.addf %222, %221 : vector<2x32xf32>
    %224 = arith.divf %222, %223 : vector<2x32xf32>
    %225 = vector.extract_strided_slice %204 {offsets = [0, 64], sizes = [2, 32], strides = [1, 1]} : vector<2x96xf32> to vector<2x32xf32>
    %226 = vector.extract_strided_slice %208 {offsets = [0, 64], sizes = [2, 32], strides = [1, 1]} : vector<2x96xf32> to vector<2x32xf32>
    %227 = arith.mulf %216, %226 : vector<2x32xf32>
    %228 = arith.addf %225, %227 : vector<2x32xf32>
    %229 = math.tanh %228 : vector<2x32xf32>
    %cst_81 = arith.constant 1.000000e+00 : f32
    %230 = vector.broadcast %cst_81 : f32 to vector<2x32xf32>
    %231 = arith.subf %230, %224 : vector<2x32xf32>
    %232 = arith.mulf %231, %229 : vector<2x32xf32>
    %233 = arith.mulf %224, %168 : vector<2x32xf32>
    %234 = arith.addf %232, %233 : vector<2x32xf32>
    %235 = arith.truncf %200 : vector<2x32xf32> to vector<2x32xbf16>
    %c0_82 = arith.constant 0 : index
    %c0_83 = arith.constant 0 : index
    %236 = vector.load %arg4[%c0_82, %c0_83] : memref<32x96xbf16, #tpu.memory_space<vmem>>, vector<32x96xbf16>
    %cst_84 = arith.constant dense<0.000000e+00> : vector<2x96xf32>
    %237 = tpu.matmul %235, %236, %cst_84 {dimension_numbers = #tpu.dot_dimension_numbers<[1], [0], [0], [1], [0, 0, 1, 1], [], []>} : vector<2x32xbf16>, vector<32x96xbf16>, vector<2x96xf32> -> vector<2x96xf32>
    %238 = arith.addf %237, %26 : vector<2x96xf32>
    %c0_85 = arith.constant 0 : index
    %c3 = arith.constant 3 : index
    %c0_86 = arith.constant 0 : index
    %239 = vector.load %arg16[%c0_85, %c3, %c0_86] : memref<2x8x96xf32, #tpu.memory_space<vmem>>, vector<2x1x96xf32>
    %240 = vector.shape_cast %239 : vector<2x1x96xf32> to vector<2x96xf32>
    %241 = vector.extract_strided_slice %240 {offsets = [0, 0], sizes = [2, 32], strides = [1, 1]} : vector<2x96xf32> to vector<2x32xf32>
    %242 = vector.extract_strided_slice %238 {offsets = [0, 0], sizes = [2, 32], strides = [1, 1]} : vector<2x96xf32> to vector<2x32xf32>
    %243 = arith.addf %241, %242 : vector<2x32xf32>
    %244 = arith.negf %243 : vector<2x32xf32>
    %245 = math.exp %244 : vector<2x32xf32>
    %cst_87 = arith.constant 1.000000e+00 : f32
    %246 = vector.broadcast %cst_87 : f32 to vector<2x32xf32>
    %247 = arith.addf %246, %245 : vector<2x32xf32>
    %248 = arith.divf %246, %247 : vector<2x32xf32>
    %249 = vector.extract_strided_slice %240 {offsets = [0, 32], sizes = [2, 32], strides = [1, 1]} : vector<2x96xf32> to vector<2x32xf32>
    %250 = vector.extract_strided_slice %238 {offsets = [0, 32], sizes = [2, 32], strides = [1, 1]} : vector<2x96xf32> to vector<2x32xf32>
    %251 = arith.addf %249, %250 : vector<2x32xf32>
    %252 = arith.negf %251 : vector<2x32xf32>
    %253 = math.exp %252 : vector<2x32xf32>
    %cst_88 = arith.constant 1.000000e+00 : f32
    %254 = vector.broadcast %cst_88 : f32 to vector<2x32xf32>
    %255 = arith.addf %254, %253 : vector<2x32xf32>
    %256 = arith.divf %254, %255 : vector<2x32xf32>
    %257 = vector.extract_strided_slice %240 {offsets = [0, 64], sizes = [2, 32], strides = [1, 1]} : vector<2x96xf32> to vector<2x32xf32>
    %258 = vector.extract_strided_slice %238 {offsets = [0, 64], sizes = [2, 32], strides = [1, 1]} : vector<2x96xf32> to vector<2x32xf32>
    %259 = arith.mulf %248, %258 : vector<2x32xf32>
    %260 = arith.addf %257, %259 : vector<2x32xf32>
    %261 = math.tanh %260 : vector<2x32xf32>
    %cst_89 = arith.constant 1.000000e+00 : f32
    %262 = vector.broadcast %cst_89 : f32 to vector<2x32xf32>
    %263 = arith.subf %262, %256 : vector<2x32xf32>
    %264 = arith.mulf %263, %261 : vector<2x32xf32>
    %265 = arith.mulf %256, %200 : vector<2x32xf32>
    %266 = arith.addf %264, %265 : vector<2x32xf32>
    %267 = arith.truncf %266 : vector<2x32xf32> to vector<2x32xbf16>
    %c0_90 = arith.constant 0 : index
    %c0_91 = arith.constant 0 : index
    %268 = vector.load %arg7[%c0_90, %c0_91] : memref<32x96xbf16, #tpu.memory_space<vmem>>, vector<32x96xbf16>
    %cst_92 = arith.constant dense<0.000000e+00> : vector<2x96xf32>
    %269 = tpu.matmul %267, %268, %cst_92 {dimension_numbers = #tpu.dot_dimension_numbers<[1], [0], [0], [1], [0, 0, 1, 1], [], []>} : vector<2x32xbf16>, vector<32x96xbf16>, vector<2x96xf32> -> vector<2x96xf32>
    %270 = arith.addf %269, %29 : vector<2x96xf32>
    %271 = arith.truncf %234 : vector<2x32xf32> to vector<2x32xbf16>
    %c0_93 = arith.constant 0 : index
    %c0_94 = arith.constant 0 : index
    %272 = vector.load %arg8[%c0_93, %c0_94] : memref<32x96xbf16, #tpu.memory_space<vmem>>, vector<32x96xbf16>
    %cst_95 = arith.constant dense<0.000000e+00> : vector<2x96xf32>
    %273 = tpu.matmul %271, %272, %cst_95 {dimension_numbers = #tpu.dot_dimension_numbers<[1], [0], [0], [1], [0, 0, 1, 1], [], []>} : vector<2x32xbf16>, vector<32x96xbf16>, vector<2x96xf32> -> vector<2x96xf32>
    %274 = arith.addf %273, %32 : vector<2x96xf32>
    %275 = vector.extract_strided_slice %270 {offsets = [0, 0], sizes = [2, 32], strides = [1, 1]} : vector<2x96xf32> to vector<2x32xf32>
    %276 = vector.extract_strided_slice %274 {offsets = [0, 0], sizes = [2, 32], strides = [1, 1]} : vector<2x96xf32> to vector<2x32xf32>
    %277 = arith.addf %275, %276 : vector<2x32xf32>
    %278 = arith.negf %277 : vector<2x32xf32>
    %279 = math.exp %278 : vector<2x32xf32>
    %cst_96 = arith.constant 1.000000e+00 : f32
    %280 = vector.broadcast %cst_96 : f32 to vector<2x32xf32>
    %281 = arith.addf %280, %279 : vector<2x32xf32>
    %282 = arith.divf %280, %281 : vector<2x32xf32>
    %283 = vector.extract_strided_slice %270 {offsets = [0, 32], sizes = [2, 32], strides = [1, 1]} : vector<2x96xf32> to vector<2x32xf32>
    %284 = vector.extract_strided_slice %274 {offsets = [0, 32], sizes = [2, 32], strides = [1, 1]} : vector<2x96xf32> to vector<2x32xf32>
    %285 = arith.addf %283, %284 : vector<2x32xf32>
    %286 = arith.negf %285 : vector<2x32xf32>
    %287 = math.exp %286 : vector<2x32xf32>
    %cst_97 = arith.constant 1.000000e+00 : f32
    %288 = vector.broadcast %cst_97 : f32 to vector<2x32xf32>
    %289 = arith.addf %288, %287 : vector<2x32xf32>
    %290 = arith.divf %288, %289 : vector<2x32xf32>
    %291 = vector.extract_strided_slice %270 {offsets = [0, 64], sizes = [2, 32], strides = [1, 1]} : vector<2x96xf32> to vector<2x32xf32>
    %292 = vector.extract_strided_slice %274 {offsets = [0, 64], sizes = [2, 32], strides = [1, 1]} : vector<2x96xf32> to vector<2x32xf32>
    %293 = arith.mulf %282, %292 : vector<2x32xf32>
    %294 = arith.addf %291, %293 : vector<2x32xf32>
    %295 = math.tanh %294 : vector<2x32xf32>
    %cst_98 = arith.constant 1.000000e+00 : f32
    %296 = vector.broadcast %cst_98 : f32 to vector<2x32xf32>
    %297 = arith.subf %296, %290 : vector<2x32xf32>
    %298 = arith.mulf %297, %295 : vector<2x32xf32>
    %299 = arith.mulf %290, %234 : vector<2x32xf32>
    %300 = arith.addf %298, %299 : vector<2x32xf32>
    %301 = arith.truncf %266 : vector<2x32xf32> to vector<2x32xbf16>
    %c0_99 = arith.constant 0 : index
    %c0_100 = arith.constant 0 : index
    %302 = vector.load %arg4[%c0_99, %c0_100] : memref<32x96xbf16, #tpu.memory_space<vmem>>, vector<32x96xbf16>
    %cst_101 = arith.constant dense<0.000000e+00> : vector<2x96xf32>
    %303 = tpu.matmul %301, %302, %cst_101 {dimension_numbers = #tpu.dot_dimension_numbers<[1], [0], [0], [1], [0, 0, 1, 1], [], []>} : vector<2x32xbf16>, vector<32x96xbf16>, vector<2x96xf32> -> vector<2x96xf32>
    %304 = arith.addf %303, %26 : vector<2x96xf32>
    %c0_102 = arith.constant 0 : index
    %c4 = arith.constant 4 : index
    %c0_103 = arith.constant 0 : index
    %305 = vector.load %arg16[%c0_102, %c4, %c0_103] : memref<2x8x96xf32, #tpu.memory_space<vmem>>, vector<2x1x96xf32>
    %306 = vector.shape_cast %305 : vector<2x1x96xf32> to vector<2x96xf32>
    %307 = vector.extract_strided_slice %306 {offsets = [0, 0], sizes = [2, 32], strides = [1, 1]} : vector<2x96xf32> to vector<2x32xf32>
    %308 = vector.extract_strided_slice %304 {offsets = [0, 0], sizes = [2, 32], strides = [1, 1]} : vector<2x96xf32> to vector<2x32xf32>
    %309 = arith.addf %307, %308 : vector<2x32xf32>
    %310 = arith.negf %309 : vector<2x32xf32>
    %311 = math.exp %310 : vector<2x32xf32>
    %cst_104 = arith.constant 1.000000e+00 : f32
    %312 = vector.broadcast %cst_104 : f32 to vector<2x32xf32>
    %313 = arith.addf %312, %311 : vector<2x32xf32>
    %314 = arith.divf %312, %313 : vector<2x32xf32>
    %315 = vector.extract_strided_slice %306 {offsets = [0, 32], sizes = [2, 32], strides = [1, 1]} : vector<2x96xf32> to vector<2x32xf32>
    %316 = vector.extract_strided_slice %304 {offsets = [0, 32], sizes = [2, 32], strides = [1, 1]} : vector<2x96xf32> to vector<2x32xf32>
    %317 = arith.addf %315, %316 : vector<2x32xf32>
    %318 = arith.negf %317 : vector<2x32xf32>
    %319 = math.exp %318 : vector<2x32xf32>
    %cst_105 = arith.constant 1.000000e+00 : f32
    %320 = vector.broadcast %cst_105 : f32 to vector<2x32xf32>
    %321 = arith.addf %320, %319 : vector<2x32xf32>
    %322 = arith.divf %320, %321 : vector<2x32xf32>
    %323 = vector.extract_strided_slice %306 {offsets = [0, 64], sizes = [2, 32], strides = [1, 1]} : vector<2x96xf32> to vector<2x32xf32>
    %324 = vector.extract_strided_slice %304 {offsets = [0, 64], sizes = [2, 32], strides = [1, 1]} : vector<2x96xf32> to vector<2x32xf32>
    %325 = arith.mulf %314, %324 : vector<2x32xf32>
    %326 = arith.addf %323, %325 : vector<2x32xf32>
    %327 = math.tanh %326 : vector<2x32xf32>
    %cst_106 = arith.constant 1.000000e+00 : f32
    %328 = vector.broadcast %cst_106 : f32 to vector<2x32xf32>
    %329 = arith.subf %328, %322 : vector<2x32xf32>
    %330 = arith.mulf %329, %327 : vector<2x32xf32>
    %331 = arith.mulf %322, %266 : vector<2x32xf32>
    %332 = arith.addf %330, %331 : vector<2x32xf32>
    %333 = arith.truncf %332 : vector<2x32xf32> to vector<2x32xbf16>
    %c0_107 = arith.constant 0 : index
    %c0_108 = arith.constant 0 : index
    %334 = vector.load %arg7[%c0_107, %c0_108] : memref<32x96xbf16, #tpu.memory_space<vmem>>, vector<32x96xbf16>
    %cst_109 = arith.constant dense<0.000000e+00> : vector<2x96xf32>
    %335 = tpu.matmul %333, %334, %cst_109 {dimension_numbers = #tpu.dot_dimension_numbers<[1], [0], [0], [1], [0, 0, 1, 1], [], []>} : vector<2x32xbf16>, vector<32x96xbf16>, vector<2x96xf32> -> vector<2x96xf32>
    %336 = arith.addf %335, %29 : vector<2x96xf32>
    %337 = arith.truncf %300 : vector<2x32xf32> to vector<2x32xbf16>
    %c0_110 = arith.constant 0 : index
    %c0_111 = arith.constant 0 : index
    %338 = vector.load %arg8[%c0_110, %c0_111] : memref<32x96xbf16, #tpu.memory_space<vmem>>, vector<32x96xbf16>
    %cst_112 = arith.constant dense<0.000000e+00> : vector<2x96xf32>
    %339 = tpu.matmul %337, %338, %cst_112 {dimension_numbers = #tpu.dot_dimension_numbers<[1], [0], [0], [1], [0, 0, 1, 1], [], []>} : vector<2x32xbf16>, vector<32x96xbf16>, vector<2x96xf32> -> vector<2x96xf32>
    %340 = arith.addf %339, %32 : vector<2x96xf32>
    %341 = vector.extract_strided_slice %336 {offsets = [0, 0], sizes = [2, 32], strides = [1, 1]} : vector<2x96xf32> to vector<2x32xf32>
    %342 = vector.extract_strided_slice %340 {offsets = [0, 0], sizes = [2, 32], strides = [1, 1]} : vector<2x96xf32> to vector<2x32xf32>
    %343 = arith.addf %341, %342 : vector<2x32xf32>
    %344 = arith.negf %343 : vector<2x32xf32>
    %345 = math.exp %344 : vector<2x32xf32>
    %cst_113 = arith.constant 1.000000e+00 : f32
    %346 = vector.broadcast %cst_113 : f32 to vector<2x32xf32>
    %347 = arith.addf %346, %345 : vector<2x32xf32>
    %348 = arith.divf %346, %347 : vector<2x32xf32>
    %349 = vector.extract_strided_slice %336 {offsets = [0, 32], sizes = [2, 32], strides = [1, 1]} : vector<2x96xf32> to vector<2x32xf32>
    %350 = vector.extract_strided_slice %340 {offsets = [0, 32], sizes = [2, 32], strides = [1, 1]} : vector<2x96xf32> to vector<2x32xf32>
    %351 = arith.addf %349, %350 : vector<2x32xf32>
    %352 = arith.negf %351 : vector<2x32xf32>
    %353 = math.exp %352 : vector<2x32xf32>
    %cst_114 = arith.constant 1.000000e+00 : f32
    %354 = vector.broadcast %cst_114 : f32 to vector<2x32xf32>
    %355 = arith.addf %354, %353 : vector<2x32xf32>
    %356 = arith.divf %354, %355 : vector<2x32xf32>
    %357 = vector.extract_strided_slice %336 {offsets = [0, 64], sizes = [2, 32], strides = [1, 1]} : vector<2x96xf32> to vector<2x32xf32>
    %358 = vector.extract_strided_slice %340 {offsets = [0, 64], sizes = [2, 32], strides = [1, 1]} : vector<2x96xf32> to vector<2x32xf32>
    %359 = arith.mulf %348, %358 : vector<2x32xf32>
    %360 = arith.addf %357, %359 : vector<2x32xf32>
    %361 = math.tanh %360 : vector<2x32xf32>
    %cst_115 = arith.constant 1.000000e+00 : f32
    %362 = vector.broadcast %cst_115 : f32 to vector<2x32xf32>
    %363 = arith.subf %362, %356 : vector<2x32xf32>
    %364 = arith.mulf %363, %361 : vector<2x32xf32>
    %365 = arith.mulf %356, %300 : vector<2x32xf32>
    %366 = arith.addf %364, %365 : vector<2x32xf32>
    %367 = arith.truncf %332 : vector<2x32xf32> to vector<2x32xbf16>
    %c0_116 = arith.constant 0 : index
    %c0_117 = arith.constant 0 : index
    %368 = vector.load %arg4[%c0_116, %c0_117] : memref<32x96xbf16, #tpu.memory_space<vmem>>, vector<32x96xbf16>
    %cst_118 = arith.constant dense<0.000000e+00> : vector<2x96xf32>
    %369 = tpu.matmul %367, %368, %cst_118 {dimension_numbers = #tpu.dot_dimension_numbers<[1], [0], [0], [1], [0, 0, 1, 1], [], []>} : vector<2x32xbf16>, vector<32x96xbf16>, vector<2x96xf32> -> vector<2x96xf32>
    %370 = arith.addf %369, %26 : vector<2x96xf32>
    %c0_119 = arith.constant 0 : index
    %c5 = arith.constant 5 : index
    %c0_120 = arith.constant 0 : index
    %371 = vector.load %arg16[%c0_119, %c5, %c0_120] : memref<2x8x96xf32, #tpu.memory_space<vmem>>, vector<2x1x96xf32>
    %372 = vector.shape_cast %371 : vector<2x1x96xf32> to vector<2x96xf32>
    %373 = vector.extract_strided_slice %372 {offsets = [0, 0], sizes = [2, 32], strides = [1, 1]} : vector<2x96xf32> to vector<2x32xf32>
    %374 = vector.extract_strided_slice %370 {offsets = [0, 0], sizes = [2, 32], strides = [1, 1]} : vector<2x96xf32> to vector<2x32xf32>
    %375 = arith.addf %373, %374 : vector<2x32xf32>
    %376 = arith.negf %375 : vector<2x32xf32>
    %377 = math.exp %376 : vector<2x32xf32>
    %cst_121 = arith.constant 1.000000e+00 : f32
    %378 = vector.broadcast %cst_121 : f32 to vector<2x32xf32>
    %379 = arith.addf %378, %377 : vector<2x32xf32>
    %380 = arith.divf %378, %379 : vector<2x32xf32>
    %381 = vector.extract_strided_slice %372 {offsets = [0, 32], sizes = [2, 32], strides = [1, 1]} : vector<2x96xf32> to vector<2x32xf32>
    %382 = vector.extract_strided_slice %370 {offsets = [0, 32], sizes = [2, 32], strides = [1, 1]} : vector<2x96xf32> to vector<2x32xf32>
    %383 = arith.addf %381, %382 : vector<2x32xf32>
    %384 = arith.negf %383 : vector<2x32xf32>
    %385 = math.exp %384 : vector<2x32xf32>
    %cst_122 = arith.constant 1.000000e+00 : f32
    %386 = vector.broadcast %cst_122 : f32 to vector<2x32xf32>
    %387 = arith.addf %386, %385 : vector<2x32xf32>
    %388 = arith.divf %386, %387 : vector<2x32xf32>
    %389 = vector.extract_strided_slice %372 {offsets = [0, 64], sizes = [2, 32], strides = [1, 1]} : vector<2x96xf32> to vector<2x32xf32>
    %390 = vector.extract_strided_slice %370 {offsets = [0, 64], sizes = [2, 32], strides = [1, 1]} : vector<2x96xf32> to vector<2x32xf32>
    %391 = arith.mulf %380, %390 : vector<2x32xf32>
    %392 = arith.addf %389, %391 : vector<2x32xf32>
    %393 = math.tanh %392 : vector<2x32xf32>
    %cst_123 = arith.constant 1.000000e+00 : f32
    %394 = vector.broadcast %cst_123 : f32 to vector<2x32xf32>
    %395 = arith.subf %394, %388 : vector<2x32xf32>
    %396 = arith.mulf %395, %393 : vector<2x32xf32>
    %397 = arith.mulf %388, %332 : vector<2x32xf32>
    %398 = arith.addf %396, %397 : vector<2x32xf32>
    %399 = arith.truncf %398 : vector<2x32xf32> to vector<2x32xbf16>
    %c0_124 = arith.constant 0 : index
    %c0_125 = arith.constant 0 : index
    %400 = vector.load %arg7[%c0_124, %c0_125] : memref<32x96xbf16, #tpu.memory_space<vmem>>, vector<32x96xbf16>
    %cst_126 = arith.constant dense<0.000000e+00> : vector<2x96xf32>
    %401 = tpu.matmul %399, %400, %cst_126 {dimension_numbers = #tpu.dot_dimension_numbers<[1], [0], [0], [1], [0, 0, 1, 1], [], []>} : vector<2x32xbf16>, vector<32x96xbf16>, vector<2x96xf32> -> vector<2x96xf32>
    %402 = arith.addf %401, %29 : vector<2x96xf32>
    %403 = arith.truncf %366 : vector<2x32xf32> to vector<2x32xbf16>
    %c0_127 = arith.constant 0 : index
    %c0_128 = arith.constant 0 : index
    %404 = vector.load %arg8[%c0_127, %c0_128] : memref<32x96xbf16, #tpu.memory_space<vmem>>, vector<32x96xbf16>
    %cst_129 = arith.constant dense<0.000000e+00> : vector<2x96xf32>
    %405 = tpu.matmul %403, %404, %cst_129 {dimension_numbers = #tpu.dot_dimension_numbers<[1], [0], [0], [1], [0, 0, 1, 1], [], []>} : vector<2x32xbf16>, vector<32x96xbf16>, vector<2x96xf32> -> vector<2x96xf32>
    %406 = arith.addf %405, %32 : vector<2x96xf32>
    %407 = vector.extract_strided_slice %402 {offsets = [0, 0], sizes = [2, 32], strides = [1, 1]} : vector<2x96xf32> to vector<2x32xf32>
    %408 = vector.extract_strided_slice %406 {offsets = [0, 0], sizes = [2, 32], strides = [1, 1]} : vector<2x96xf32> to vector<2x32xf32>
    %409 = arith.addf %407, %408 : vector<2x32xf32>
    %410 = arith.negf %409 : vector<2x32xf32>
    %411 = math.exp %410 : vector<2x32xf32>
    %cst_130 = arith.constant 1.000000e+00 : f32
    %412 = vector.broadcast %cst_130 : f32 to vector<2x32xf32>
    %413 = arith.addf %412, %411 : vector<2x32xf32>
    %414 = arith.divf %412, %413 : vector<2x32xf32>
    %415 = vector.extract_strided_slice %402 {offsets = [0, 32], sizes = [2, 32], strides = [1, 1]} : vector<2x96xf32> to vector<2x32xf32>
    %416 = vector.extract_strided_slice %406 {offsets = [0, 32], sizes = [2, 32], strides = [1, 1]} : vector<2x96xf32> to vector<2x32xf32>
    %417 = arith.addf %415, %416 : vector<2x32xf32>
    %418 = arith.negf %417 : vector<2x32xf32>
    %419 = math.exp %418 : vector<2x32xf32>
    %cst_131 = arith.constant 1.000000e+00 : f32
    %420 = vector.broadcast %cst_131 : f32 to vector<2x32xf32>
    %421 = arith.addf %420, %419 : vector<2x32xf32>
    %422 = arith.divf %420, %421 : vector<2x32xf32>
    %423 = vector.extract_strided_slice %402 {offsets = [0, 64], sizes = [2, 32], strides = [1, 1]} : vector<2x96xf32> to vector<2x32xf32>
    %424 = vector.extract_strided_slice %406 {offsets = [0, 64], sizes = [2, 32], strides = [1, 1]} : vector<2x96xf32> to vector<2x32xf32>
    %425 = arith.mulf %414, %424 : vector<2x32xf32>
    %426 = arith.addf %423, %425 : vector<2x32xf32>
    %427 = math.tanh %426 : vector<2x32xf32>
    %cst_132 = arith.constant 1.000000e+00 : f32
    %428 = vector.broadcast %cst_132 : f32 to vector<2x32xf32>
    %429 = arith.subf %428, %422 : vector<2x32xf32>
    %430 = arith.mulf %429, %427 : vector<2x32xf32>
    %431 = arith.mulf %422, %366 : vector<2x32xf32>
    %432 = arith.addf %430, %431 : vector<2x32xf32>
    %433 = arith.truncf %398 : vector<2x32xf32> to vector<2x32xbf16>
    %c0_133 = arith.constant 0 : index
    %c0_134 = arith.constant 0 : index
    %434 = vector.load %arg4[%c0_133, %c0_134] : memref<32x96xbf16, #tpu.memory_space<vmem>>, vector<32x96xbf16>
    %cst_135 = arith.constant dense<0.000000e+00> : vector<2x96xf32>
    %435 = tpu.matmul %433, %434, %cst_135 {dimension_numbers = #tpu.dot_dimension_numbers<[1], [0], [0], [1], [0, 0, 1, 1], [], []>} : vector<2x32xbf16>, vector<32x96xbf16>, vector<2x96xf32> -> vector<2x96xf32>
    %436 = arith.addf %435, %26 : vector<2x96xf32>
    %c0_136 = arith.constant 0 : index
    %c6 = arith.constant 6 : index
    %c0_137 = arith.constant 0 : index
    %437 = vector.load %arg16[%c0_136, %c6, %c0_137] : memref<2x8x96xf32, #tpu.memory_space<vmem>>, vector<2x1x96xf32>
    %438 = vector.shape_cast %437 : vector<2x1x96xf32> to vector<2x96xf32>
    %439 = vector.extract_strided_slice %438 {offsets = [0, 0], sizes = [2, 32], strides = [1, 1]} : vector<2x96xf32> to vector<2x32xf32>
    %440 = vector.extract_strided_slice %436 {offsets = [0, 0], sizes = [2, 32], strides = [1, 1]} : vector<2x96xf32> to vector<2x32xf32>
    %441 = arith.addf %439, %440 : vector<2x32xf32>
    %442 = arith.negf %441 : vector<2x32xf32>
    %443 = math.exp %442 : vector<2x32xf32>
    %cst_138 = arith.constant 1.000000e+00 : f32
    %444 = vector.broadcast %cst_138 : f32 to vector<2x32xf32>
    %445 = arith.addf %444, %443 : vector<2x32xf32>
    %446 = arith.divf %444, %445 : vector<2x32xf32>
    %447 = vector.extract_strided_slice %438 {offsets = [0, 32], sizes = [2, 32], strides = [1, 1]} : vector<2x96xf32> to vector<2x32xf32>
    %448 = vector.extract_strided_slice %436 {offsets = [0, 32], sizes = [2, 32], strides = [1, 1]} : vector<2x96xf32> to vector<2x32xf32>
    %449 = arith.addf %447, %448 : vector<2x32xf32>
    %450 = arith.negf %449 : vector<2x32xf32>
    %451 = math.exp %450 : vector<2x32xf32>
    %cst_139 = arith.constant 1.000000e+00 : f32
    %452 = vector.broadcast %cst_139 : f32 to vector<2x32xf32>
    %453 = arith.addf %452, %451 : vector<2x32xf32>
    %454 = arith.divf %452, %453 : vector<2x32xf32>
    %455 = vector.extract_strided_slice %438 {offsets = [0, 64], sizes = [2, 32], strides = [1, 1]} : vector<2x96xf32> to vector<2x32xf32>
    %456 = vector.extract_strided_slice %436 {offsets = [0, 64], sizes = [2, 32], strides = [1, 1]} : vector<2x96xf32> to vector<2x32xf32>
    %457 = arith.mulf %446, %456 : vector<2x32xf32>
    %458 = arith.addf %455, %457 : vector<2x32xf32>
    %459 = math.tanh %458 : vector<2x32xf32>
    %cst_140 = arith.constant 1.000000e+00 : f32
    %460 = vector.broadcast %cst_140 : f32 to vector<2x32xf32>
    %461 = arith.subf %460, %454 : vector<2x32xf32>
    %462 = arith.mulf %461, %459 : vector<2x32xf32>
    %463 = arith.mulf %454, %398 : vector<2x32xf32>
    %464 = arith.addf %462, %463 : vector<2x32xf32>
    %465 = arith.truncf %464 : vector<2x32xf32> to vector<2x32xbf16>
    %c0_141 = arith.constant 0 : index
    %c0_142 = arith.constant 0 : index
    %466 = vector.load %arg7[%c0_141, %c0_142] : memref<32x96xbf16, #tpu.memory_space<vmem>>, vector<32x96xbf16>
    %cst_143 = arith.constant dense<0.000000e+00> : vector<2x96xf32>
    %467 = tpu.matmul %465, %466, %cst_143 {dimension_numbers = #tpu.dot_dimension_numbers<[1], [0], [0], [1], [0, 0, 1, 1], [], []>} : vector<2x32xbf16>, vector<32x96xbf16>, vector<2x96xf32> -> vector<2x96xf32>
    %468 = arith.addf %467, %29 : vector<2x96xf32>
    %469 = arith.truncf %432 : vector<2x32xf32> to vector<2x32xbf16>
    %c0_144 = arith.constant 0 : index
    %c0_145 = arith.constant 0 : index
    %470 = vector.load %arg8[%c0_144, %c0_145] : memref<32x96xbf16, #tpu.memory_space<vmem>>, vector<32x96xbf16>
    %cst_146 = arith.constant dense<0.000000e+00> : vector<2x96xf32>
    %471 = tpu.matmul %469, %470, %cst_146 {dimension_numbers = #tpu.dot_dimension_numbers<[1], [0], [0], [1], [0, 0, 1, 1], [], []>} : vector<2x32xbf16>, vector<32x96xbf16>, vector<2x96xf32> -> vector<2x96xf32>
    %472 = arith.addf %471, %32 : vector<2x96xf32>
    %473 = vector.extract_strided_slice %468 {offsets = [0, 0], sizes = [2, 32], strides = [1, 1]} : vector<2x96xf32> to vector<2x32xf32>
    %474 = vector.extract_strided_slice %472 {offsets = [0, 0], sizes = [2, 32], strides = [1, 1]} : vector<2x96xf32> to vector<2x32xf32>
    %475 = arith.addf %473, %474 : vector<2x32xf32>
    %476 = arith.negf %475 : vector<2x32xf32>
    %477 = math.exp %476 : vector<2x32xf32>
    %cst_147 = arith.constant 1.000000e+00 : f32
    %478 = vector.broadcast %cst_147 : f32 to vector<2x32xf32>
    %479 = arith.addf %478, %477 : vector<2x32xf32>
    %480 = arith.divf %478, %479 : vector<2x32xf32>
    %481 = vector.extract_strided_slice %468 {offsets = [0, 32], sizes = [2, 32], strides = [1, 1]} : vector<2x96xf32> to vector<2x32xf32>
    %482 = vector.extract_strided_slice %472 {offsets = [0, 32], sizes = [2, 32], strides = [1, 1]} : vector<2x96xf32> to vector<2x32xf32>
    %483 = arith.addf %481, %482 : vector<2x32xf32>
    %484 = arith.negf %483 : vector<2x32xf32>
    %485 = math.exp %484 : vector<2x32xf32>
    %cst_148 = arith.constant 1.000000e+00 : f32
    %486 = vector.broadcast %cst_148 : f32 to vector<2x32xf32>
    %487 = arith.addf %486, %485 : vector<2x32xf32>
    %488 = arith.divf %486, %487 : vector<2x32xf32>
    %489 = vector.extract_strided_slice %468 {offsets = [0, 64], sizes = [2, 32], strides = [1, 1]} : vector<2x96xf32> to vector<2x32xf32>
    %490 = vector.extract_strided_slice %472 {offsets = [0, 64], sizes = [2, 32], strides = [1, 1]} : vector<2x96xf32> to vector<2x32xf32>
    %491 = arith.mulf %480, %490 : vector<2x32xf32>
    %492 = arith.addf %489, %491 : vector<2x32xf32>
    %493 = math.tanh %492 : vector<2x32xf32>
    %cst_149 = arith.constant 1.000000e+00 : f32
    %494 = vector.broadcast %cst_149 : f32 to vector<2x32xf32>
    %495 = arith.subf %494, %488 : vector<2x32xf32>
    %496 = arith.mulf %495, %493 : vector<2x32xf32>
    %497 = arith.mulf %488, %432 : vector<2x32xf32>
    %498 = arith.addf %496, %497 : vector<2x32xf32>
    %499 = arith.truncf %464 : vector<2x32xf32> to vector<2x32xbf16>
    %c0_150 = arith.constant 0 : index
    %c0_151 = arith.constant 0 : index
    %500 = vector.load %arg4[%c0_150, %c0_151] : memref<32x96xbf16, #tpu.memory_space<vmem>>, vector<32x96xbf16>
    %cst_152 = arith.constant dense<0.000000e+00> : vector<2x96xf32>
    %501 = tpu.matmul %499, %500, %cst_152 {dimension_numbers = #tpu.dot_dimension_numbers<[1], [0], [0], [1], [0, 0, 1, 1], [], []>} : vector<2x32xbf16>, vector<32x96xbf16>, vector<2x96xf32> -> vector<2x96xf32>
    %502 = arith.addf %501, %26 : vector<2x96xf32>
    %c0_153 = arith.constant 0 : index
    %c7 = arith.constant 7 : index
    %c0_154 = arith.constant 0 : index
    %503 = vector.load %arg16[%c0_153, %c7, %c0_154] : memref<2x8x96xf32, #tpu.memory_space<vmem>>, vector<2x1x96xf32>
    %504 = vector.shape_cast %503 : vector<2x1x96xf32> to vector<2x96xf32>
    %505 = vector.extract_strided_slice %504 {offsets = [0, 0], sizes = [2, 32], strides = [1, 1]} : vector<2x96xf32> to vector<2x32xf32>
    %506 = vector.extract_strided_slice %502 {offsets = [0, 0], sizes = [2, 32], strides = [1, 1]} : vector<2x96xf32> to vector<2x32xf32>
    %507 = arith.addf %505, %506 : vector<2x32xf32>
    %508 = arith.negf %507 : vector<2x32xf32>
    %509 = math.exp %508 : vector<2x32xf32>
    %cst_155 = arith.constant 1.000000e+00 : f32
    %510 = vector.broadcast %cst_155 : f32 to vector<2x32xf32>
    %511 = arith.addf %510, %509 : vector<2x32xf32>
    %512 = arith.divf %510, %511 : vector<2x32xf32>
    %513 = vector.extract_strided_slice %504 {offsets = [0, 32], sizes = [2, 32], strides = [1, 1]} : vector<2x96xf32> to vector<2x32xf32>
    %514 = vector.extract_strided_slice %502 {offsets = [0, 32], sizes = [2, 32], strides = [1, 1]} : vector<2x96xf32> to vector<2x32xf32>
    %515 = arith.addf %513, %514 : vector<2x32xf32>
    %516 = arith.negf %515 : vector<2x32xf32>
    %517 = math.exp %516 : vector<2x32xf32>
    %cst_156 = arith.constant 1.000000e+00 : f32
    %518 = vector.broadcast %cst_156 : f32 to vector<2x32xf32>
    %519 = arith.addf %518, %517 : vector<2x32xf32>
    %520 = arith.divf %518, %519 : vector<2x32xf32>
    %521 = vector.extract_strided_slice %504 {offsets = [0, 64], sizes = [2, 32], strides = [1, 1]} : vector<2x96xf32> to vector<2x32xf32>
    %522 = vector.extract_strided_slice %502 {offsets = [0, 64], sizes = [2, 32], strides = [1, 1]} : vector<2x96xf32> to vector<2x32xf32>
    %523 = arith.mulf %512, %522 : vector<2x32xf32>
    %524 = arith.addf %521, %523 : vector<2x32xf32>
    %525 = math.tanh %524 : vector<2x32xf32>
    %cst_157 = arith.constant 1.000000e+00 : f32
    %526 = vector.broadcast %cst_157 : f32 to vector<2x32xf32>
    %527 = arith.subf %526, %520 : vector<2x32xf32>
    %528 = arith.mulf %527, %525 : vector<2x32xf32>
    %529 = arith.mulf %520, %464 : vector<2x32xf32>
    %530 = arith.addf %528, %529 : vector<2x32xf32>
    %531 = arith.truncf %530 : vector<2x32xf32> to vector<2x32xbf16>
    %c0_158 = arith.constant 0 : index
    %c0_159 = arith.constant 0 : index
    %532 = vector.load %arg7[%c0_158, %c0_159] : memref<32x96xbf16, #tpu.memory_space<vmem>>, vector<32x96xbf16>
    %cst_160 = arith.constant dense<0.000000e+00> : vector<2x96xf32>
    %533 = tpu.matmul %531, %532, %cst_160 {dimension_numbers = #tpu.dot_dimension_numbers<[1], [0], [0], [1], [0, 0, 1, 1], [], []>} : vector<2x32xbf16>, vector<32x96xbf16>, vector<2x96xf32> -> vector<2x96xf32>
    %534 = arith.addf %533, %29 : vector<2x96xf32>
    %535 = arith.truncf %498 : vector<2x32xf32> to vector<2x32xbf16>
    %c0_161 = arith.constant 0 : index
    %c0_162 = arith.constant 0 : index
    %536 = vector.load %arg8[%c0_161, %c0_162] : memref<32x96xbf16, #tpu.memory_space<vmem>>, vector<32x96xbf16>
    %cst_163 = arith.constant dense<0.000000e+00> : vector<2x96xf32>
    %537 = tpu.matmul %535, %536, %cst_163 {dimension_numbers = #tpu.dot_dimension_numbers<[1], [0], [0], [1], [0, 0, 1, 1], [], []>} : vector<2x32xbf16>, vector<32x96xbf16>, vector<2x96xf32> -> vector<2x96xf32>
    %538 = arith.addf %537, %32 : vector<2x96xf32>
    %539 = vector.extract_strided_slice %534 {offsets = [0, 0], sizes = [2, 32], strides = [1, 1]} : vector<2x96xf32> to vector<2x32xf32>
    %540 = vector.extract_strided_slice %538 {offsets = [0, 0], sizes = [2, 32], strides = [1, 1]} : vector<2x96xf32> to vector<2x32xf32>
    %541 = arith.addf %539, %540 : vector<2x32xf32>
    %542 = arith.negf %541 : vector<2x32xf32>
    %543 = math.exp %542 : vector<2x32xf32>
    %cst_164 = arith.constant 1.000000e+00 : f32
    %544 = vector.broadcast %cst_164 : f32 to vector<2x32xf32>
    %545 = arith.addf %544, %543 : vector<2x32xf32>
    %546 = arith.divf %544, %545 : vector<2x32xf32>
    %547 = vector.extract_strided_slice %534 {offsets = [0, 32], sizes = [2, 32], strides = [1, 1]} : vector<2x96xf32> to vector<2x32xf32>
    %548 = vector.extract_strided_slice %538 {offsets = [0, 32], sizes = [2, 32], strides = [1, 1]} : vector<2x96xf32> to vector<2x32xf32>
    %549 = arith.addf %547, %548 : vector<2x32xf32>
    %550 = arith.negf %549 : vector<2x32xf32>
    %551 = math.exp %550 : vector<2x32xf32>
    %cst_165 = arith.constant 1.000000e+00 : f32
    %552 = vector.broadcast %cst_165 : f32 to vector<2x32xf32>
    %553 = arith.addf %552, %551 : vector<2x32xf32>
    %554 = arith.divf %552, %553 : vector<2x32xf32>
    %555 = vector.extract_strided_slice %534 {offsets = [0, 64], sizes = [2, 32], strides = [1, 1]} : vector<2x96xf32> to vector<2x32xf32>
    %556 = vector.extract_strided_slice %538 {offsets = [0, 64], sizes = [2, 32], strides = [1, 1]} : vector<2x96xf32> to vector<2x32xf32>
    %557 = arith.mulf %546, %556 : vector<2x32xf32>
    %558 = arith.addf %555, %557 : vector<2x32xf32>
    %559 = math.tanh %558 : vector<2x32xf32>
    %cst_166 = arith.constant 1.000000e+00 : f32
    %560 = vector.broadcast %cst_166 : f32 to vector<2x32xf32>
    %561 = arith.subf %560, %554 : vector<2x32xf32>
    %562 = arith.mulf %561, %559 : vector<2x32xf32>
    %563 = arith.mulf %554, %498 : vector<2x32xf32>
    %564 = arith.addf %562, %563 : vector<2x32xf32>
    %c0_167 = arith.constant 0 : index
    %c0_168 = arith.constant 0 : index
    %c0_169 = arith.constant 0 : index
    %565 = vector.load %arg15[%c0_167, %c0_168, %c0_169] : memref<2x2x32xf32, #tpu.memory_space<vmem>>, vector<1x2x32xf32>
    %566 = vector.shape_cast %565 : vector<1x2x32xf32> to vector<2x32xf32>
    %567 = vector.shape_cast %530 : vector<2x32xf32> to vector<1x2x32xf32>
    tpu.vector_store %arg15[%c0_167, %c0_168, %c0_169], %567 {strides = array<i32>} : memref<2x2x32xf32, #tpu.memory_space<vmem>>, vector<1x2x32xf32>,
    %c1_170 = arith.constant 1 : index
    %c0_171 = arith.constant 0 : index
    %c0_172 = arith.constant 0 : index
    %568 = vector.load %arg15[%c1_170, %c0_171, %c0_172] : memref<2x2x32xf32, #tpu.memory_space<vmem>>, vector<1x2x32xf32>
    %569 = vector.shape_cast %568 : vector<1x2x32xf32> to vector<2x32xf32>
    %570 = vector.shape_cast %564 : vector<2x32xf32> to vector<1x2x32xf32>
    tpu.vector_store %arg15[%c1_170, %c0_171, %c0_172], %570 {strides = array<i32>} : memref<2x2x32xf32, #tpu.memory_space<vmem>>, vector<1x2x32xf32>,
    %c0_i32_173 = arith.constant 0 : i32
    %571 = arith.cmpi eq, %arg1, %c0_i32_173 : i32
    %572 = arith.extui %571 : i1 to i32
    %c0_i32_174 = arith.constant 0 : i32
    %573 = arith.cmpi ne, %572, %c0_i32_174 : i32
    scf.if %573 {
      %cst_175 = arith.constant 0.000000e+00 : f32
      %574 = vector.broadcast %cst_175 : f32 to vector<2x32xf32>
      %575 = arith.maximumf %564, %574 : vector<2x32xf32>
      %576 = arith.truncf %575 : vector<2x32xf32> to vector<2x32xbf16>
      %c0_176 = arith.constant 0 : index
      %c0_177 = arith.constant 0 : index
      %577 = vector.load %arg11[%c0_176, %c0_177] : memref<32x2xbf16, #tpu.memory_space<vmem>>, vector<32x2xbf16>
      %cst_178 = arith.constant dense<0.000000e+00> : vector<2x2xf32>
      %578 = tpu.matmul %576, %577, %cst_178 {dimension_numbers = #tpu.dot_dimension_numbers<[1], [0], [0], [1], [0, 0, 1, 1], [], []>} : vector<2x32xbf16>, vector<32x2xbf16>, vector<2x2xf32> -> vector<2x2xf32>
      %c0_179 = arith.constant 0 : index
      %c0_180 = arith.constant 0 : index
      %579 = vector.load %arg12[%c0_179, %c0_180] : memref<1x2xf32, #tpu.memory_space<vmem>>, vector<1x2xf32>
      %580 = vector.broadcast %579 : vector<1x2xf32> to vector<2x2xf32>
      %581 = arith.addf %578, %580 : vector<2x2xf32>
      %582 = arith.mulf %581, %581 : vector<2x2xf32>
      %cst_181 = arith.constant dense<0.000000e+00> : vector<2xf32>
      %583 = vector.multi_reduction <add>, %582, %cst_181 [1] : vector<2x2xf32> to vector<2xf32>
      %584 = vector.shape_cast %583 : vector<2xf32> to vector<2x1xf32>
      %585 = math.sqrt %584 : vector<2x1xf32>
      %cst_182 = arith.constant 9.99999996E-13 : f32
      %586 = vector.broadcast %cst_182 : f32 to vector<2x1xf32>
      %587 = arith.maximumf %585, %586 : vector<2x1xf32>
      %588 = vector.broadcast %587 : vector<2x1xf32> to vector<2x2xf32>
      %589 = arith.divf %581, %588 : vector<2x2xf32>
      %c0_183 = arith.constant 0 : index
      %c0_184 = arith.constant 0 : index
      %590 = vector.load %arg13[%c0_183, %c0_184] : memref<2x2xf32, #tpu.memory_space<vmem>>, vector<2x2xf32>
      tpu.vector_store %arg13[%c0_183, %c0_184], %589 {strides = array<i32>} : memref<2x2xf32, #tpu.memory_space<vmem>>, vector<2x2xf32>,
    } else {
    }
    return
  }
  func.func @transform_0(%arg0: i32, %arg1: i32) -> (i32, i32, i32) {
    %c0_i32 = arith.constant 0 : i32
    %c0_i32_0 = arith.constant 0 : i32
    return %arg0, %arg1, %c0_i32 : i32, i32, i32
  }
  func.func @transform_1(%arg0: i32, %arg1: i32) -> (i32, i32) {
    %c0_i32 = arith.constant 0 : i32
    %c0_i32_0 = arith.constant 0 : i32
    %c0_i32_1 = arith.constant 0 : i32
    return %c0_i32, %c0_i32_0 : i32, i32
  }
  func.func @transform_2(%arg0: i32, %arg1: i32) -> (i32, i32) {
    %c0_i32 = arith.constant 0 : i32
    %c0_i32_0 = arith.constant 0 : i32
    %c0_i32_1 = arith.constant 0 : i32
    return %c0_i32, %c0_i32_0 : i32, i32
  }
  func.func @transform_3(%arg0: i32, %arg1: i32) -> (i32, i32) {
    %c0_i32 = arith.constant 0 : i32
    %c0_i32_0 = arith.constant 0 : i32
    %c0_i32_1 = arith.constant 0 : i32
    return %c0_i32, %c0_i32_0 : i32, i32
  }
  func.func @transform_4(%arg0: i32, %arg1: i32) -> (i32, i32) {
    %c0_i32 = arith.constant 0 : i32
    %c0_i32_0 = arith.constant 0 : i32
    %c0_i32_1 = arith.constant 0 : i32
    return %c0_i32, %c0_i32_0 : i32, i32
  }
  func.func @transform_5(%arg0: i32, %arg1: i32) -> (i32, i32) {
    %c0_i32 = arith.constant 0 : i32
    %c0_i32_0 = arith.constant 0 : i32
    %c0_i32_1 = arith.constant 0 : i32
    return %c0_i32, %c0_i32_0 : i32, i32
  }
  func.func @transform_6(%arg0: i32, %arg1: i32) -> (i32, i32) {
    %c0_i32 = arith.constant 0 : i32
    %c0_i32_0 = arith.constant 0 : i32
    %c0_i32_1 = arith.constant 0 : i32
    return %c0_i32, %c0_i32_0 : i32, i32
  }
  func.func @transform_7(%arg0: i32, %arg1: i32) -> (i32, i32) {
    %c0_i32 = arith.constant 0 : i32
    %c0_i32_0 = arith.constant 0 : i32
    %c0_i32_1 = arith.constant 0 : i32
    return %c0_i32, %c0_i32_0 : i32, i32
  }
  func.func @transform_8(%arg0: i32, %arg1: i32) -> (i32, i32) {
    %c0_i32 = arith.constant 0 : i32
    %c0_i32_0 = arith.constant 0 : i32
    %c0_i32_1 = arith.constant 0 : i32
    return %c0_i32, %c0_i32_0 : i32, i32
  }
  func.func @transform_9(%arg0: i32, %arg1: i32) -> (i32, i32) {
    %c0_i32 = arith.constant 0 : i32
    %c0_i32_0 = arith.constant 0 : i32
    %c0_i32_1 = arith.constant 0 : i32
    return %c0_i32, %c0_i32_0 : i32, i32
  }
  func.func @transform_10(%arg0: i32, %arg1: i32) -> (i32, i32) {
    %c0_i32 = arith.constant 0 : i32
    %c0_i32_0 = arith.constant 0 : i32
    %c0_i32_1 = arith.constant 0 : i32
    return %c0_i32, %c0_i32_0 : i32, i32
  }
  func.func @transform_11(%arg0: i32, %arg1: i32) -> (i32, i32) {
    %c0_i32 = arith.constant 0 : i32
    %c0_i32_0 = arith.constant 0 : i32
    return %arg0, %c0_i32 : i32, i32
  }
  func.func @transform_12(%arg0: i32, %arg1: i32) -> (i32, i32, i32) {
    %c0_i32 = arith.constant 0 : i32
    %c0_i32_0 = arith.constant 0 : i32
    return %arg0, %arg1, %c0_i32 : i32, i32, i32
  }
}

module attributes {stable_mosaic.version = 11 : i64} {
  func.func @_decoder_kernel(%arg0: i32, %arg1: i32, %arg2: memref<2x8x1xf32, #tpu.memory_space<vmem>>, %arg3: memref<2x2xf32, #tpu.memory_space<vmem>>, %arg4: memref<2x4xbf16, #tpu.memory_space<vmem>>, %arg5: memref<1x4xf32, #tpu.memory_space<vmem>>, %arg6: memref<4x96xbf16, #tpu.memory_space<vmem>>, %arg7: memref<32x96xbf16, #tpu.memory_space<vmem>>, %arg8: memref<1x96xf32, #tpu.memory_space<vmem>>, %arg9: memref<1x96xf32, #tpu.memory_space<vmem>>, %arg10: memref<32x96xbf16, #tpu.memory_space<vmem>>, %arg11: memref<32x96xbf16, #tpu.memory_space<vmem>>, %arg12: memref<1x96xf32, #tpu.memory_space<vmem>>, %arg13: memref<1x96xf32, #tpu.memory_space<vmem>>, %arg14: memref<2x8x32xf32, #tpu.memory_space<vmem>>, %arg15: memref<2x2x32xf32, #tpu.memory_space<vmem>>, %arg16: memref<2x96xf32, #tpu.memory_space<vmem>>) attributes {dimension_semantics = [#tpu.dimension_semantics<parallel>, #tpu.dimension_semantics<arbitrary>], iteration_bounds = array<i64: 1, 1>, scalar_prefetch = 0 : i64, scratch_operands = 2 : i64, tpu.core_type = #tpu.core_type<tc>, window_params = [{transform_indices = @transform_0, window_bounds = array<i64: 2, 8, 1>}, {transform_indices = @transform_1, window_bounds = array<i64: 2, 2>}, {pipeline_mode = #tpu.pipeline_mode<synchronous>, transform_indices = @transform_2, window_bounds = array<i64: 2, 4>}, {pipeline_mode = #tpu.pipeline_mode<synchronous>, transform_indices = @transform_3, window_bounds = array<i64: 1, 4>}, {pipeline_mode = #tpu.pipeline_mode<synchronous>, transform_indices = @transform_4, window_bounds = array<i64: 4, 96>}, {pipeline_mode = #tpu.pipeline_mode<synchronous>, transform_indices = @transform_5, window_bounds = array<i64: 32, 96>}, {pipeline_mode = #tpu.pipeline_mode<synchronous>, transform_indices = @transform_6, window_bounds = array<i64: 1, 96>}, {pipeline_mode = #tpu.pipeline_mode<synchronous>, transform_indices = @transform_7, window_bounds = array<i64: 1, 96>}, {pipeline_mode = #tpu.pipeline_mode<synchronous>, transform_indices = @transform_8, window_bounds = array<i64: 32, 96>}, {pipeline_mode = #tpu.pipeline_mode<synchronous>, transform_indices = @transform_9, window_bounds = array<i64: 32, 96>}, {pipeline_mode = #tpu.pipeline_mode<synchronous>, transform_indices = @transform_10, window_bounds = array<i64: 1, 96>}, {pipeline_mode = #tpu.pipeline_mode<synchronous>, transform_indices = @transform_11, window_bounds = array<i64: 1, 96>}, {transform_indices = @transform_12, window_bounds = array<i64: 2, 8, 32>}]} {
    %c0_i32 = arith.constant 0 : i32
    %0 = arith.cmpi eq, %arg1, %c0_i32 : i32
    %1 = arith.extui %0 : i1 to i32
    %c0_i32_0 = arith.constant 0 : i32
    %2 = arith.cmpi ne, %1, %c0_i32_0 : i32
    scf.if %2 {
      %cst_182 = arith.constant 0.000000e+00 : f32
      %602 = vector.broadcast %cst_182 : f32 to vector<2x2x32xf32>
      %c0_183 = arith.constant 0 : index
      %c0_184 = arith.constant 0 : index
      %c0_185 = arith.constant 0 : index
      %603 = vector.load %arg15[%c0_183, %c0_184, %c0_185] : memref<2x2x32xf32, #tpu.memory_space<vmem>>, vector<2x2x32xf32>
      tpu.vector_store %arg15[%c0_183, %c0_184, %c0_185], %602 {strides = array<i32>} : memref<2x2x32xf32, #tpu.memory_space<vmem>>, vector<2x2x32xf32>,
      %c0_186 = arith.constant 0 : index
      %c0_187 = arith.constant 0 : index
      %604 = vector.load %arg3[%c0_186, %c0_187] : memref<2x2xf32, #tpu.memory_space<vmem>>, vector<2x2xf32>
      %605 = arith.truncf %604 : vector<2x2xf32> to vector<2x2xbf16>
      %c0_188 = arith.constant 0 : index
      %c0_189 = arith.constant 0 : index
      %606 = vector.load %arg4[%c0_188, %c0_189] : memref<2x4xbf16, #tpu.memory_space<vmem>>, vector<2x4xbf16>
      %cst_190 = arith.constant dense<0.000000e+00> : vector<2x4xf32>
      %607 = tpu.matmul %605, %606, %cst_190 {dimension_numbers = #tpu.dot_dimension_numbers<[1], [0], [0], [1], [0, 0, 1, 1], [], []>} : vector<2x2xbf16>, vector<2x4xbf16>, vector<2x4xf32> -> vector<2x4xf32>
      %c0_191 = arith.constant 0 : index
      %c0_192 = arith.constant 0 : index
      %608 = vector.load %arg5[%c0_191, %c0_192] : memref<1x4xf32, #tpu.memory_space<vmem>>, vector<1x4xf32>
      %609 = vector.broadcast %608 : vector<1x4xf32> to vector<2x4xf32>
      %610 = arith.addf %607, %609 : vector<2x4xf32>
      %cst_193 = arith.constant 0.000000e+00 : f32
      %611 = vector.broadcast %cst_193 : f32 to vector<2x4xf32>
      %612 = arith.maximumf %610, %611 : vector<2x4xf32>
      %613 = arith.truncf %612 : vector<2x4xf32> to vector<2x4xbf16>
      %c0_194 = arith.constant 0 : index
      %c0_195 = arith.constant 0 : index
      %614 = vector.load %arg6[%c0_194, %c0_195] : memref<4x96xbf16, #tpu.memory_space<vmem>>, vector<4x96xbf16>
      %cst_196 = arith.constant dense<0.000000e+00> : vector<2x96xf32>
      %615 = tpu.matmul %613, %614, %cst_196 {dimension_numbers = #tpu.dot_dimension_numbers<[1], [0], [0], [1], [0, 0, 1, 1], [], []>} : vector<2x4xbf16>, vector<4x96xbf16>, vector<2x96xf32> -> vector<2x96xf32>
      %c0_197 = arith.constant 0 : index
      %c0_198 = arith.constant 0 : index
      %616 = vector.load %arg16[%c0_197, %c0_198] : memref<2x96xf32, #tpu.memory_space<vmem>>, vector<2x96xf32>
      tpu.vector_store %arg16[%c0_197, %c0_198], %615 {strides = array<i32>} : memref<2x96xf32, #tpu.memory_space<vmem>>, vector<2x96xf32>,
    } else {
    }
    %c0 = arith.constant 0 : index
    %c0_1 = arith.constant 0 : index
    %3 = vector.load %arg16[%c0, %c0_1] : memref<2x96xf32, #tpu.memory_space<vmem>>, vector<2x96xf32>
    %c0_2 = arith.constant 0 : index
    %c0_3 = arith.constant 0 : index
    %4 = vector.load %arg8[%c0_2, %c0_3] : memref<1x96xf32, #tpu.memory_space<vmem>>, vector<1x96xf32>
    %5 = vector.shape_cast %4 : vector<1x96xf32> to vector<1x96xf32>
    %6 = vector.broadcast %5 : vector<1x96xf32> to vector<2x96xf32>
    %c0_4 = arith.constant 0 : index
    %c0_5 = arith.constant 0 : index
    %7 = vector.load %arg9[%c0_4, %c0_5] : memref<1x96xf32, #tpu.memory_space<vmem>>, vector<1x96xf32>
    %8 = vector.shape_cast %7 : vector<1x96xf32> to vector<1x96xf32>
    %9 = vector.broadcast %8 : vector<1x96xf32> to vector<2x96xf32>
    %c0_6 = arith.constant 0 : index
    %c0_7 = arith.constant 0 : index
    %10 = vector.load %arg12[%c0_6, %c0_7] : memref<1x96xf32, #tpu.memory_space<vmem>>, vector<1x96xf32>
    %11 = vector.shape_cast %10 : vector<1x96xf32> to vector<1x96xf32>
    %12 = vector.broadcast %11 : vector<1x96xf32> to vector<2x96xf32>
    %c0_8 = arith.constant 0 : index
    %c0_9 = arith.constant 0 : index
    %13 = vector.load %arg13[%c0_8, %c0_9] : memref<1x96xf32, #tpu.memory_space<vmem>>, vector<1x96xf32>
    %14 = vector.shape_cast %13 : vector<1x96xf32> to vector<1x96xf32>
    %15 = vector.broadcast %14 : vector<1x96xf32> to vector<2x96xf32>
    %c0_10 = arith.constant 0 : index
    %c0_11 = arith.constant 0 : index
    %c0_12 = arith.constant 0 : index
    %16 = vector.load %arg15[%c0_10, %c0_11, %c0_12] : memref<2x2x32xf32, #tpu.memory_space<vmem>>, vector<1x2x32xf32>
    %17 = vector.shape_cast %16 : vector<1x2x32xf32> to vector<2x32xf32>
    %c1 = arith.constant 1 : index
    %c0_13 = arith.constant 0 : index
    %c0_14 = arith.constant 0 : index
    %18 = vector.load %arg15[%c1, %c0_13, %c0_14] : memref<2x2x32xf32, #tpu.memory_space<vmem>>, vector<1x2x32xf32>
    %19 = vector.shape_cast %18 : vector<1x2x32xf32> to vector<2x32xf32>
    %c0_15 = arith.constant 0 : index
    %c7 = arith.constant 7 : index
    %c0_16 = arith.constant 0 : index
    %20 = vector.load %arg2[%c0_15, %c7, %c0_16] : memref<2x8x1xf32, #tpu.memory_space<vmem>>, vector<2x1x1xf32>
    %21 = vector.shape_cast %20 : vector<2x1x1xf32> to vector<2x1xf32>
    %22 = vector.broadcast %21 : vector<2x1xf32> to vector<2x96xf32>
    %23 = arith.mulf %22, %3 : vector<2x96xf32>
    %24 = arith.addf %23, %6 : vector<2x96xf32>
    %25 = arith.truncf %17 : vector<2x32xf32> to vector<2x32xbf16>
    %c0_17 = arith.constant 0 : index
    %c0_18 = arith.constant 0 : index
    %26 = vector.load %arg7[%c0_17, %c0_18] : memref<32x96xbf16, #tpu.memory_space<vmem>>, vector<32x96xbf16>
    %cst = arith.constant dense<0.000000e+00> : vector<2x96xf32>
    %27 = tpu.matmul %25, %26, %cst {dimension_numbers = #tpu.dot_dimension_numbers<[1], [0], [0], [1], [0, 0, 1, 1], [], []>} : vector<2x32xbf16>, vector<32x96xbf16>, vector<2x96xf32> -> vector<2x96xf32>
    %28 = arith.addf %27, %9 : vector<2x96xf32>
    %29 = vector.extract_strided_slice %24 {offsets = [0, 0], sizes = [2, 32], strides = [1, 1]} : vector<2x96xf32> to vector<2x32xf32>
    %30 = vector.extract_strided_slice %28 {offsets = [0, 0], sizes = [2, 32], strides = [1, 1]} : vector<2x96xf32> to vector<2x32xf32>
    %31 = arith.addf %29, %30 : vector<2x32xf32>
    %32 = arith.negf %31 : vector<2x32xf32>
    %33 = math.exp %32 : vector<2x32xf32>
    %cst_19 = arith.constant 1.000000e+00 : f32
    %34 = vector.broadcast %cst_19 : f32 to vector<2x32xf32>
    %35 = arith.addf %34, %33 : vector<2x32xf32>
    %36 = arith.divf %34, %35 : vector<2x32xf32>
    %37 = vector.extract_strided_slice %24 {offsets = [0, 32], sizes = [2, 32], strides = [1, 1]} : vector<2x96xf32> to vector<2x32xf32>
    %38 = vector.extract_strided_slice %28 {offsets = [0, 32], sizes = [2, 32], strides = [1, 1]} : vector<2x96xf32> to vector<2x32xf32>
    %39 = arith.addf %37, %38 : vector<2x32xf32>
    %40 = arith.negf %39 : vector<2x32xf32>
    %41 = math.exp %40 : vector<2x32xf32>
    %cst_20 = arith.constant 1.000000e+00 : f32
    %42 = vector.broadcast %cst_20 : f32 to vector<2x32xf32>
    %43 = arith.addf %42, %41 : vector<2x32xf32>
    %44 = arith.divf %42, %43 : vector<2x32xf32>
    %45 = vector.extract_strided_slice %24 {offsets = [0, 64], sizes = [2, 32], strides = [1, 1]} : vector<2x96xf32> to vector<2x32xf32>
    %46 = vector.extract_strided_slice %28 {offsets = [0, 64], sizes = [2, 32], strides = [1, 1]} : vector<2x96xf32> to vector<2x32xf32>
    %47 = arith.mulf %36, %46 : vector<2x32xf32>
    %48 = arith.addf %45, %47 : vector<2x32xf32>
    %49 = math.tanh %48 : vector<2x32xf32>
    %cst_21 = arith.constant 1.000000e+00 : f32
    %50 = vector.broadcast %cst_21 : f32 to vector<2x32xf32>
    %51 = arith.subf %50, %44 : vector<2x32xf32>
    %52 = arith.mulf %51, %49 : vector<2x32xf32>
    %53 = arith.mulf %44, %17 : vector<2x32xf32>
    %54 = arith.addf %52, %53 : vector<2x32xf32>
    %55 = arith.truncf %54 : vector<2x32xf32> to vector<2x32xbf16>
    %c0_22 = arith.constant 0 : index
    %c0_23 = arith.constant 0 : index
    %56 = vector.load %arg10[%c0_22, %c0_23] : memref<32x96xbf16, #tpu.memory_space<vmem>>, vector<32x96xbf16>
    %cst_24 = arith.constant dense<0.000000e+00> : vector<2x96xf32>
    %57 = tpu.matmul %55, %56, %cst_24 {dimension_numbers = #tpu.dot_dimension_numbers<[1], [0], [0], [1], [0, 0, 1, 1], [], []>} : vector<2x32xbf16>, vector<32x96xbf16>, vector<2x96xf32> -> vector<2x96xf32>
    %58 = arith.addf %57, %12 : vector<2x96xf32>
    %59 = arith.truncf %19 : vector<2x32xf32> to vector<2x32xbf16>
    %c0_25 = arith.constant 0 : index
    %c0_26 = arith.constant 0 : index
    %60 = vector.load %arg11[%c0_25, %c0_26] : memref<32x96xbf16, #tpu.memory_space<vmem>>, vector<32x96xbf16>
    %cst_27 = arith.constant dense<0.000000e+00> : vector<2x96xf32>
    %61 = tpu.matmul %59, %60, %cst_27 {dimension_numbers = #tpu.dot_dimension_numbers<[1], [0], [0], [1], [0, 0, 1, 1], [], []>} : vector<2x32xbf16>, vector<32x96xbf16>, vector<2x96xf32> -> vector<2x96xf32>
    %62 = arith.addf %61, %15 : vector<2x96xf32>
    %63 = vector.extract_strided_slice %58 {offsets = [0, 0], sizes = [2, 32], strides = [1, 1]} : vector<2x96xf32> to vector<2x32xf32>
    %64 = vector.extract_strided_slice %62 {offsets = [0, 0], sizes = [2, 32], strides = [1, 1]} : vector<2x96xf32> to vector<2x32xf32>
    %65 = arith.addf %63, %64 : vector<2x32xf32>
    %66 = arith.negf %65 : vector<2x32xf32>
    %67 = math.exp %66 : vector<2x32xf32>
    %cst_28 = arith.constant 1.000000e+00 : f32
    %68 = vector.broadcast %cst_28 : f32 to vector<2x32xf32>
    %69 = arith.addf %68, %67 : vector<2x32xf32>
    %70 = arith.divf %68, %69 : vector<2x32xf32>
    %71 = vector.extract_strided_slice %58 {offsets = [0, 32], sizes = [2, 32], strides = [1, 1]} : vector<2x96xf32> to vector<2x32xf32>
    %72 = vector.extract_strided_slice %62 {offsets = [0, 32], sizes = [2, 32], strides = [1, 1]} : vector<2x96xf32> to vector<2x32xf32>
    %73 = arith.addf %71, %72 : vector<2x32xf32>
    %74 = arith.negf %73 : vector<2x32xf32>
    %75 = math.exp %74 : vector<2x32xf32>
    %cst_29 = arith.constant 1.000000e+00 : f32
    %76 = vector.broadcast %cst_29 : f32 to vector<2x32xf32>
    %77 = arith.addf %76, %75 : vector<2x32xf32>
    %78 = arith.divf %76, %77 : vector<2x32xf32>
    %79 = vector.extract_strided_slice %58 {offsets = [0, 64], sizes = [2, 32], strides = [1, 1]} : vector<2x96xf32> to vector<2x32xf32>
    %80 = vector.extract_strided_slice %62 {offsets = [0, 64], sizes = [2, 32], strides = [1, 1]} : vector<2x96xf32> to vector<2x32xf32>
    %81 = arith.mulf %70, %80 : vector<2x32xf32>
    %82 = arith.addf %79, %81 : vector<2x32xf32>
    %83 = math.tanh %82 : vector<2x32xf32>
    %cst_30 = arith.constant 1.000000e+00 : f32
    %84 = vector.broadcast %cst_30 : f32 to vector<2x32xf32>
    %85 = arith.subf %84, %78 : vector<2x32xf32>
    %86 = arith.mulf %85, %83 : vector<2x32xf32>
    %87 = arith.mulf %78, %19 : vector<2x32xf32>
    %88 = arith.addf %86, %87 : vector<2x32xf32>
    %c0_31 = arith.constant 0 : index
    %c0_32 = arith.constant 0 : index
    %c0_33 = arith.constant 0 : index
    %89 = vector.load %arg14[%c0_31, %c0_32, %c0_33] : memref<2x8x32xf32, #tpu.memory_space<vmem>>, vector<2x1x32xf32>
    %90 = vector.shape_cast %89 : vector<2x1x32xf32> to vector<2x32xf32>
    %91 = vector.shape_cast %88 : vector<2x32xf32> to vector<2x1x32xf32>
    tpu.vector_store %arg14[%c0_31, %c0_32, %c0_33], %91 {strides = array<i32>} : memref<2x8x32xf32, #tpu.memory_space<vmem>>, vector<2x1x32xf32>,
    %c0_34 = arith.constant 0 : index
    %c6 = arith.constant 6 : index
    %c0_35 = arith.constant 0 : index
    %92 = vector.load %arg2[%c0_34, %c6, %c0_35] : memref<2x8x1xf32, #tpu.memory_space<vmem>>, vector<2x1x1xf32>
    %93 = vector.shape_cast %92 : vector<2x1x1xf32> to vector<2x1xf32>
    %94 = vector.broadcast %93 : vector<2x1xf32> to vector<2x96xf32>
    %95 = arith.mulf %94, %3 : vector<2x96xf32>
    %96 = arith.addf %95, %6 : vector<2x96xf32>
    %97 = arith.truncf %54 : vector<2x32xf32> to vector<2x32xbf16>
    %c0_36 = arith.constant 0 : index
    %c0_37 = arith.constant 0 : index
    %98 = vector.load %arg7[%c0_36, %c0_37] : memref<32x96xbf16, #tpu.memory_space<vmem>>, vector<32x96xbf16>
    %cst_38 = arith.constant dense<0.000000e+00> : vector<2x96xf32>
    %99 = tpu.matmul %97, %98, %cst_38 {dimension_numbers = #tpu.dot_dimension_numbers<[1], [0], [0], [1], [0, 0, 1, 1], [], []>} : vector<2x32xbf16>, vector<32x96xbf16>, vector<2x96xf32> -> vector<2x96xf32>
    %100 = arith.addf %99, %9 : vector<2x96xf32>
    %101 = vector.extract_strided_slice %96 {offsets = [0, 0], sizes = [2, 32], strides = [1, 1]} : vector<2x96xf32> to vector<2x32xf32>
    %102 = vector.extract_strided_slice %100 {offsets = [0, 0], sizes = [2, 32], strides = [1, 1]} : vector<2x96xf32> to vector<2x32xf32>
    %103 = arith.addf %101, %102 : vector<2x32xf32>
    %104 = arith.negf %103 : vector<2x32xf32>
    %105 = math.exp %104 : vector<2x32xf32>
    %cst_39 = arith.constant 1.000000e+00 : f32
    %106 = vector.broadcast %cst_39 : f32 to vector<2x32xf32>
    %107 = arith.addf %106, %105 : vector<2x32xf32>
    %108 = arith.divf %106, %107 : vector<2x32xf32>
    %109 = vector.extract_strided_slice %96 {offsets = [0, 32], sizes = [2, 32], strides = [1, 1]} : vector<2x96xf32> to vector<2x32xf32>
    %110 = vector.extract_strided_slice %100 {offsets = [0, 32], sizes = [2, 32], strides = [1, 1]} : vector<2x96xf32> to vector<2x32xf32>
    %111 = arith.addf %109, %110 : vector<2x32xf32>
    %112 = arith.negf %111 : vector<2x32xf32>
    %113 = math.exp %112 : vector<2x32xf32>
    %cst_40 = arith.constant 1.000000e+00 : f32
    %114 = vector.broadcast %cst_40 : f32 to vector<2x32xf32>
    %115 = arith.addf %114, %113 : vector<2x32xf32>
    %116 = arith.divf %114, %115 : vector<2x32xf32>
    %117 = vector.extract_strided_slice %96 {offsets = [0, 64], sizes = [2, 32], strides = [1, 1]} : vector<2x96xf32> to vector<2x32xf32>
    %118 = vector.extract_strided_slice %100 {offsets = [0, 64], sizes = [2, 32], strides = [1, 1]} : vector<2x96xf32> to vector<2x32xf32>
    %119 = arith.mulf %108, %118 : vector<2x32xf32>
    %120 = arith.addf %117, %119 : vector<2x32xf32>
    %121 = math.tanh %120 : vector<2x32xf32>
    %cst_41 = arith.constant 1.000000e+00 : f32
    %122 = vector.broadcast %cst_41 : f32 to vector<2x32xf32>
    %123 = arith.subf %122, %116 : vector<2x32xf32>
    %124 = arith.mulf %123, %121 : vector<2x32xf32>
    %125 = arith.mulf %116, %54 : vector<2x32xf32>
    %126 = arith.addf %124, %125 : vector<2x32xf32>
    %127 = arith.truncf %126 : vector<2x32xf32> to vector<2x32xbf16>
    %c0_42 = arith.constant 0 : index
    %c0_43 = arith.constant 0 : index
    %128 = vector.load %arg10[%c0_42, %c0_43] : memref<32x96xbf16, #tpu.memory_space<vmem>>, vector<32x96xbf16>
    %cst_44 = arith.constant dense<0.000000e+00> : vector<2x96xf32>
    %129 = tpu.matmul %127, %128, %cst_44 {dimension_numbers = #tpu.dot_dimension_numbers<[1], [0], [0], [1], [0, 0, 1, 1], [], []>} : vector<2x32xbf16>, vector<32x96xbf16>, vector<2x96xf32> -> vector<2x96xf32>
    %130 = arith.addf %129, %12 : vector<2x96xf32>
    %131 = arith.truncf %88 : vector<2x32xf32> to vector<2x32xbf16>
    %c0_45 = arith.constant 0 : index
    %c0_46 = arith.constant 0 : index
    %132 = vector.load %arg11[%c0_45, %c0_46] : memref<32x96xbf16, #tpu.memory_space<vmem>>, vector<32x96xbf16>
    %cst_47 = arith.constant dense<0.000000e+00> : vector<2x96xf32>
    %133 = tpu.matmul %131, %132, %cst_47 {dimension_numbers = #tpu.dot_dimension_numbers<[1], [0], [0], [1], [0, 0, 1, 1], [], []>} : vector<2x32xbf16>, vector<32x96xbf16>, vector<2x96xf32> -> vector<2x96xf32>
    %134 = arith.addf %133, %15 : vector<2x96xf32>
    %135 = vector.extract_strided_slice %130 {offsets = [0, 0], sizes = [2, 32], strides = [1, 1]} : vector<2x96xf32> to vector<2x32xf32>
    %136 = vector.extract_strided_slice %134 {offsets = [0, 0], sizes = [2, 32], strides = [1, 1]} : vector<2x96xf32> to vector<2x32xf32>
    %137 = arith.addf %135, %136 : vector<2x32xf32>
    %138 = arith.negf %137 : vector<2x32xf32>
    %139 = math.exp %138 : vector<2x32xf32>
    %cst_48 = arith.constant 1.000000e+00 : f32
    %140 = vector.broadcast %cst_48 : f32 to vector<2x32xf32>
    %141 = arith.addf %140, %139 : vector<2x32xf32>
    %142 = arith.divf %140, %141 : vector<2x32xf32>
    %143 = vector.extract_strided_slice %130 {offsets = [0, 32], sizes = [2, 32], strides = [1, 1]} : vector<2x96xf32> to vector<2x32xf32>
    %144 = vector.extract_strided_slice %134 {offsets = [0, 32], sizes = [2, 32], strides = [1, 1]} : vector<2x96xf32> to vector<2x32xf32>
    %145 = arith.addf %143, %144 : vector<2x32xf32>
    %146 = arith.negf %145 : vector<2x32xf32>
    %147 = math.exp %146 : vector<2x32xf32>
    %cst_49 = arith.constant 1.000000e+00 : f32
    %148 = vector.broadcast %cst_49 : f32 to vector<2x32xf32>
    %149 = arith.addf %148, %147 : vector<2x32xf32>
    %150 = arith.divf %148, %149 : vector<2x32xf32>
    %151 = vector.extract_strided_slice %130 {offsets = [0, 64], sizes = [2, 32], strides = [1, 1]} : vector<2x96xf32> to vector<2x32xf32>
    %152 = vector.extract_strided_slice %134 {offsets = [0, 64], sizes = [2, 32], strides = [1, 1]} : vector<2x96xf32> to vector<2x32xf32>
    %153 = arith.mulf %142, %152 : vector<2x32xf32>
    %154 = arith.addf %151, %153 : vector<2x32xf32>
    %155 = math.tanh %154 : vector<2x32xf32>
    %cst_50 = arith.constant 1.000000e+00 : f32
    %156 = vector.broadcast %cst_50 : f32 to vector<2x32xf32>
    %157 = arith.subf %156, %150 : vector<2x32xf32>
    %158 = arith.mulf %157, %155 : vector<2x32xf32>
    %159 = arith.mulf %150, %88 : vector<2x32xf32>
    %160 = arith.addf %158, %159 : vector<2x32xf32>
    %c0_51 = arith.constant 0 : index
    %c1_52 = arith.constant 1 : index
    %c0_53 = arith.constant 0 : index
    %161 = vector.load %arg14[%c0_51, %c1_52, %c0_53] : memref<2x8x32xf32, #tpu.memory_space<vmem>>, vector<2x1x32xf32>
    %162 = vector.shape_cast %161 : vector<2x1x32xf32> to vector<2x32xf32>
    %163 = vector.shape_cast %160 : vector<2x32xf32> to vector<2x1x32xf32>
    tpu.vector_store %arg14[%c0_51, %c1_52, %c0_53], %163 {strides = array<i32>} : memref<2x8x32xf32, #tpu.memory_space<vmem>>, vector<2x1x32xf32>,
    %c0_54 = arith.constant 0 : index
    %c5 = arith.constant 5 : index
    %c0_55 = arith.constant 0 : index
    %164 = vector.load %arg2[%c0_54, %c5, %c0_55] : memref<2x8x1xf32, #tpu.memory_space<vmem>>, vector<2x1x1xf32>
    %165 = vector.shape_cast %164 : vector<2x1x1xf32> to vector<2x1xf32>
    %166 = vector.broadcast %165 : vector<2x1xf32> to vector<2x96xf32>
    %167 = arith.mulf %166, %3 : vector<2x96xf32>
    %168 = arith.addf %167, %6 : vector<2x96xf32>
    %169 = arith.truncf %126 : vector<2x32xf32> to vector<2x32xbf16>
    %c0_56 = arith.constant 0 : index
    %c0_57 = arith.constant 0 : index
    %170 = vector.load %arg7[%c0_56, %c0_57] : memref<32x96xbf16, #tpu.memory_space<vmem>>, vector<32x96xbf16>
    %cst_58 = arith.constant dense<0.000000e+00> : vector<2x96xf32>
    %171 = tpu.matmul %169, %170, %cst_58 {dimension_numbers = #tpu.dot_dimension_numbers<[1], [0], [0], [1], [0, 0, 1, 1], [], []>} : vector<2x32xbf16>, vector<32x96xbf16>, vector<2x96xf32> -> vector<2x96xf32>
    %172 = arith.addf %171, %9 : vector<2x96xf32>
    %173 = vector.extract_strided_slice %168 {offsets = [0, 0], sizes = [2, 32], strides = [1, 1]} : vector<2x96xf32> to vector<2x32xf32>
    %174 = vector.extract_strided_slice %172 {offsets = [0, 0], sizes = [2, 32], strides = [1, 1]} : vector<2x96xf32> to vector<2x32xf32>
    %175 = arith.addf %173, %174 : vector<2x32xf32>
    %176 = arith.negf %175 : vector<2x32xf32>
    %177 = math.exp %176 : vector<2x32xf32>
    %cst_59 = arith.constant 1.000000e+00 : f32
    %178 = vector.broadcast %cst_59 : f32 to vector<2x32xf32>
    %179 = arith.addf %178, %177 : vector<2x32xf32>
    %180 = arith.divf %178, %179 : vector<2x32xf32>
    %181 = vector.extract_strided_slice %168 {offsets = [0, 32], sizes = [2, 32], strides = [1, 1]} : vector<2x96xf32> to vector<2x32xf32>
    %182 = vector.extract_strided_slice %172 {offsets = [0, 32], sizes = [2, 32], strides = [1, 1]} : vector<2x96xf32> to vector<2x32xf32>
    %183 = arith.addf %181, %182 : vector<2x32xf32>
    %184 = arith.negf %183 : vector<2x32xf32>
    %185 = math.exp %184 : vector<2x32xf32>
    %cst_60 = arith.constant 1.000000e+00 : f32
    %186 = vector.broadcast %cst_60 : f32 to vector<2x32xf32>
    %187 = arith.addf %186, %185 : vector<2x32xf32>
    %188 = arith.divf %186, %187 : vector<2x32xf32>
    %189 = vector.extract_strided_slice %168 {offsets = [0, 64], sizes = [2, 32], strides = [1, 1]} : vector<2x96xf32> to vector<2x32xf32>
    %190 = vector.extract_strided_slice %172 {offsets = [0, 64], sizes = [2, 32], strides = [1, 1]} : vector<2x96xf32> to vector<2x32xf32>
    %191 = arith.mulf %180, %190 : vector<2x32xf32>
    %192 = arith.addf %189, %191 : vector<2x32xf32>
    %193 = math.tanh %192 : vector<2x32xf32>
    %cst_61 = arith.constant 1.000000e+00 : f32
    %194 = vector.broadcast %cst_61 : f32 to vector<2x32xf32>
    %195 = arith.subf %194, %188 : vector<2x32xf32>
    %196 = arith.mulf %195, %193 : vector<2x32xf32>
    %197 = arith.mulf %188, %126 : vector<2x32xf32>
    %198 = arith.addf %196, %197 : vector<2x32xf32>
    %199 = arith.truncf %198 : vector<2x32xf32> to vector<2x32xbf16>
    %c0_62 = arith.constant 0 : index
    %c0_63 = arith.constant 0 : index
    %200 = vector.load %arg10[%c0_62, %c0_63] : memref<32x96xbf16, #tpu.memory_space<vmem>>, vector<32x96xbf16>
    %cst_64 = arith.constant dense<0.000000e+00> : vector<2x96xf32>
    %201 = tpu.matmul %199, %200, %cst_64 {dimension_numbers = #tpu.dot_dimension_numbers<[1], [0], [0], [1], [0, 0, 1, 1], [], []>} : vector<2x32xbf16>, vector<32x96xbf16>, vector<2x96xf32> -> vector<2x96xf32>
    %202 = arith.addf %201, %12 : vector<2x96xf32>
    %203 = arith.truncf %160 : vector<2x32xf32> to vector<2x32xbf16>
    %c0_65 = arith.constant 0 : index
    %c0_66 = arith.constant 0 : index
    %204 = vector.load %arg11[%c0_65, %c0_66] : memref<32x96xbf16, #tpu.memory_space<vmem>>, vector<32x96xbf16>
    %cst_67 = arith.constant dense<0.000000e+00> : vector<2x96xf32>
    %205 = tpu.matmul %203, %204, %cst_67 {dimension_numbers = #tpu.dot_dimension_numbers<[1], [0], [0], [1], [0, 0, 1, 1], [], []>} : vector<2x32xbf16>, vector<32x96xbf16>, vector<2x96xf32> -> vector<2x96xf32>
    %206 = arith.addf %205, %15 : vector<2x96xf32>
    %207 = vector.extract_strided_slice %202 {offsets = [0, 0], sizes = [2, 32], strides = [1, 1]} : vector<2x96xf32> to vector<2x32xf32>
    %208 = vector.extract_strided_slice %206 {offsets = [0, 0], sizes = [2, 32], strides = [1, 1]} : vector<2x96xf32> to vector<2x32xf32>
    %209 = arith.addf %207, %208 : vector<2x32xf32>
    %210 = arith.negf %209 : vector<2x32xf32>
    %211 = math.exp %210 : vector<2x32xf32>
    %cst_68 = arith.constant 1.000000e+00 : f32
    %212 = vector.broadcast %cst_68 : f32 to vector<2x32xf32>
    %213 = arith.addf %212, %211 : vector<2x32xf32>
    %214 = arith.divf %212, %213 : vector<2x32xf32>
    %215 = vector.extract_strided_slice %202 {offsets = [0, 32], sizes = [2, 32], strides = [1, 1]} : vector<2x96xf32> to vector<2x32xf32>
    %216 = vector.extract_strided_slice %206 {offsets = [0, 32], sizes = [2, 32], strides = [1, 1]} : vector<2x96xf32> to vector<2x32xf32>
    %217 = arith.addf %215, %216 : vector<2x32xf32>
    %218 = arith.negf %217 : vector<2x32xf32>
    %219 = math.exp %218 : vector<2x32xf32>
    %cst_69 = arith.constant 1.000000e+00 : f32
    %220 = vector.broadcast %cst_69 : f32 to vector<2x32xf32>
    %221 = arith.addf %220, %219 : vector<2x32xf32>
    %222 = arith.divf %220, %221 : vector<2x32xf32>
    %223 = vector.extract_strided_slice %202 {offsets = [0, 64], sizes = [2, 32], strides = [1, 1]} : vector<2x96xf32> to vector<2x32xf32>
    %224 = vector.extract_strided_slice %206 {offsets = [0, 64], sizes = [2, 32], strides = [1, 1]} : vector<2x96xf32> to vector<2x32xf32>
    %225 = arith.mulf %214, %224 : vector<2x32xf32>
    %226 = arith.addf %223, %225 : vector<2x32xf32>
    %227 = math.tanh %226 : vector<2x32xf32>
    %cst_70 = arith.constant 1.000000e+00 : f32
    %228 = vector.broadcast %cst_70 : f32 to vector<2x32xf32>
    %229 = arith.subf %228, %222 : vector<2x32xf32>
    %230 = arith.mulf %229, %227 : vector<2x32xf32>
    %231 = arith.mulf %222, %160 : vector<2x32xf32>
    %232 = arith.addf %230, %231 : vector<2x32xf32>
    %c0_71 = arith.constant 0 : index
    %c2 = arith.constant 2 : index
    %c0_72 = arith.constant 0 : index
    %233 = vector.load %arg14[%c0_71, %c2, %c0_72] : memref<2x8x32xf32, #tpu.memory_space<vmem>>, vector<2x1x32xf32>
    %234 = vector.shape_cast %233 : vector<2x1x32xf32> to vector<2x32xf32>
    %235 = vector.shape_cast %232 : vector<2x32xf32> to vector<2x1x32xf32>
    tpu.vector_store %arg14[%c0_71, %c2, %c0_72], %235 {strides = array<i32>} : memref<2x8x32xf32, #tpu.memory_space<vmem>>, vector<2x1x32xf32>,
    %c0_73 = arith.constant 0 : index
    %c4 = arith.constant 4 : index
    %c0_74 = arith.constant 0 : index
    %236 = vector.load %arg2[%c0_73, %c4, %c0_74] : memref<2x8x1xf32, #tpu.memory_space<vmem>>, vector<2x1x1xf32>
    %237 = vector.shape_cast %236 : vector<2x1x1xf32> to vector<2x1xf32>
    %238 = vector.broadcast %237 : vector<2x1xf32> to vector<2x96xf32>
    %239 = arith.mulf %238, %3 : vector<2x96xf32>
    %240 = arith.addf %239, %6 : vector<2x96xf32>
    %241 = arith.truncf %198 : vector<2x32xf32> to vector<2x32xbf16>
    %c0_75 = arith.constant 0 : index
    %c0_76 = arith.constant 0 : index
    %242 = vector.load %arg7[%c0_75, %c0_76] : memref<32x96xbf16, #tpu.memory_space<vmem>>, vector<32x96xbf16>
    %cst_77 = arith.constant dense<0.000000e+00> : vector<2x96xf32>
    %243 = tpu.matmul %241, %242, %cst_77 {dimension_numbers = #tpu.dot_dimension_numbers<[1], [0], [0], [1], [0, 0, 1, 1], [], []>} : vector<2x32xbf16>, vector<32x96xbf16>, vector<2x96xf32> -> vector<2x96xf32>
    %244 = arith.addf %243, %9 : vector<2x96xf32>
    %245 = vector.extract_strided_slice %240 {offsets = [0, 0], sizes = [2, 32], strides = [1, 1]} : vector<2x96xf32> to vector<2x32xf32>
    %246 = vector.extract_strided_slice %244 {offsets = [0, 0], sizes = [2, 32], strides = [1, 1]} : vector<2x96xf32> to vector<2x32xf32>
    %247 = arith.addf %245, %246 : vector<2x32xf32>
    %248 = arith.negf %247 : vector<2x32xf32>
    %249 = math.exp %248 : vector<2x32xf32>
    %cst_78 = arith.constant 1.000000e+00 : f32
    %250 = vector.broadcast %cst_78 : f32 to vector<2x32xf32>
    %251 = arith.addf %250, %249 : vector<2x32xf32>
    %252 = arith.divf %250, %251 : vector<2x32xf32>
    %253 = vector.extract_strided_slice %240 {offsets = [0, 32], sizes = [2, 32], strides = [1, 1]} : vector<2x96xf32> to vector<2x32xf32>
    %254 = vector.extract_strided_slice %244 {offsets = [0, 32], sizes = [2, 32], strides = [1, 1]} : vector<2x96xf32> to vector<2x32xf32>
    %255 = arith.addf %253, %254 : vector<2x32xf32>
    %256 = arith.negf %255 : vector<2x32xf32>
    %257 = math.exp %256 : vector<2x32xf32>
    %cst_79 = arith.constant 1.000000e+00 : f32
    %258 = vector.broadcast %cst_79 : f32 to vector<2x32xf32>
    %259 = arith.addf %258, %257 : vector<2x32xf32>
    %260 = arith.divf %258, %259 : vector<2x32xf32>
    %261 = vector.extract_strided_slice %240 {offsets = [0, 64], sizes = [2, 32], strides = [1, 1]} : vector<2x96xf32> to vector<2x32xf32>
    %262 = vector.extract_strided_slice %244 {offsets = [0, 64], sizes = [2, 32], strides = [1, 1]} : vector<2x96xf32> to vector<2x32xf32>
    %263 = arith.mulf %252, %262 : vector<2x32xf32>
    %264 = arith.addf %261, %263 : vector<2x32xf32>
    %265 = math.tanh %264 : vector<2x32xf32>
    %cst_80 = arith.constant 1.000000e+00 : f32
    %266 = vector.broadcast %cst_80 : f32 to vector<2x32xf32>
    %267 = arith.subf %266, %260 : vector<2x32xf32>
    %268 = arith.mulf %267, %265 : vector<2x32xf32>
    %269 = arith.mulf %260, %198 : vector<2x32xf32>
    %270 = arith.addf %268, %269 : vector<2x32xf32>
    %271 = arith.truncf %270 : vector<2x32xf32> to vector<2x32xbf16>
    %c0_81 = arith.constant 0 : index
    %c0_82 = arith.constant 0 : index
    %272 = vector.load %arg10[%c0_81, %c0_82] : memref<32x96xbf16, #tpu.memory_space<vmem>>, vector<32x96xbf16>
    %cst_83 = arith.constant dense<0.000000e+00> : vector<2x96xf32>
    %273 = tpu.matmul %271, %272, %cst_83 {dimension_numbers = #tpu.dot_dimension_numbers<[1], [0], [0], [1], [0, 0, 1, 1], [], []>} : vector<2x32xbf16>, vector<32x96xbf16>, vector<2x96xf32> -> vector<2x96xf32>
    %274 = arith.addf %273, %12 : vector<2x96xf32>
    %275 = arith.truncf %232 : vector<2x32xf32> to vector<2x32xbf16>
    %c0_84 = arith.constant 0 : index
    %c0_85 = arith.constant 0 : index
    %276 = vector.load %arg11[%c0_84, %c0_85] : memref<32x96xbf16, #tpu.memory_space<vmem>>, vector<32x96xbf16>
    %cst_86 = arith.constant dense<0.000000e+00> : vector<2x96xf32>
    %277 = tpu.matmul %275, %276, %cst_86 {dimension_numbers = #tpu.dot_dimension_numbers<[1], [0], [0], [1], [0, 0, 1, 1], [], []>} : vector<2x32xbf16>, vector<32x96xbf16>, vector<2x96xf32> -> vector<2x96xf32>
    %278 = arith.addf %277, %15 : vector<2x96xf32>
    %279 = vector.extract_strided_slice %274 {offsets = [0, 0], sizes = [2, 32], strides = [1, 1]} : vector<2x96xf32> to vector<2x32xf32>
    %280 = vector.extract_strided_slice %278 {offsets = [0, 0], sizes = [2, 32], strides = [1, 1]} : vector<2x96xf32> to vector<2x32xf32>
    %281 = arith.addf %279, %280 : vector<2x32xf32>
    %282 = arith.negf %281 : vector<2x32xf32>
    %283 = math.exp %282 : vector<2x32xf32>
    %cst_87 = arith.constant 1.000000e+00 : f32
    %284 = vector.broadcast %cst_87 : f32 to vector<2x32xf32>
    %285 = arith.addf %284, %283 : vector<2x32xf32>
    %286 = arith.divf %284, %285 : vector<2x32xf32>
    %287 = vector.extract_strided_slice %274 {offsets = [0, 32], sizes = [2, 32], strides = [1, 1]} : vector<2x96xf32> to vector<2x32xf32>
    %288 = vector.extract_strided_slice %278 {offsets = [0, 32], sizes = [2, 32], strides = [1, 1]} : vector<2x96xf32> to vector<2x32xf32>
    %289 = arith.addf %287, %288 : vector<2x32xf32>
    %290 = arith.negf %289 : vector<2x32xf32>
    %291 = math.exp %290 : vector<2x32xf32>
    %cst_88 = arith.constant 1.000000e+00 : f32
    %292 = vector.broadcast %cst_88 : f32 to vector<2x32xf32>
    %293 = arith.addf %292, %291 : vector<2x32xf32>
    %294 = arith.divf %292, %293 : vector<2x32xf32>
    %295 = vector.extract_strided_slice %274 {offsets = [0, 64], sizes = [2, 32], strides = [1, 1]} : vector<2x96xf32> to vector<2x32xf32>
    %296 = vector.extract_strided_slice %278 {offsets = [0, 64], sizes = [2, 32], strides = [1, 1]} : vector<2x96xf32> to vector<2x32xf32>
    %297 = arith.mulf %286, %296 : vector<2x32xf32>
    %298 = arith.addf %295, %297 : vector<2x32xf32>
    %299 = math.tanh %298 : vector<2x32xf32>
    %cst_89 = arith.constant 1.000000e+00 : f32
    %300 = vector.broadcast %cst_89 : f32 to vector<2x32xf32>
    %301 = arith.subf %300, %294 : vector<2x32xf32>
    %302 = arith.mulf %301, %299 : vector<2x32xf32>
    %303 = arith.mulf %294, %232 : vector<2x32xf32>
    %304 = arith.addf %302, %303 : vector<2x32xf32>
    %c0_90 = arith.constant 0 : index
    %c3 = arith.constant 3 : index
    %c0_91 = arith.constant 0 : index
    %305 = vector.load %arg14[%c0_90, %c3, %c0_91] : memref<2x8x32xf32, #tpu.memory_space<vmem>>, vector<2x1x32xf32>
    %306 = vector.shape_cast %305 : vector<2x1x32xf32> to vector<2x32xf32>
    %307 = vector.shape_cast %304 : vector<2x32xf32> to vector<2x1x32xf32>
    tpu.vector_store %arg14[%c0_90, %c3, %c0_91], %307 {strides = array<i32>} : memref<2x8x32xf32, #tpu.memory_space<vmem>>, vector<2x1x32xf32>,
    %c0_92 = arith.constant 0 : index
    %c3_93 = arith.constant 3 : index
    %c0_94 = arith.constant 0 : index
    %308 = vector.load %arg2[%c0_92, %c3_93, %c0_94] : memref<2x8x1xf32, #tpu.memory_space<vmem>>, vector<2x1x1xf32>
    %309 = vector.shape_cast %308 : vector<2x1x1xf32> to vector<2x1xf32>
    %310 = vector.broadcast %309 : vector<2x1xf32> to vector<2x96xf32>
    %311 = arith.mulf %310, %3 : vector<2x96xf32>
    %312 = arith.addf %311, %6 : vector<2x96xf32>
    %313 = arith.truncf %270 : vector<2x32xf32> to vector<2x32xbf16>
    %c0_95 = arith.constant 0 : index
    %c0_96 = arith.constant 0 : index
    %314 = vector.load %arg7[%c0_95, %c0_96] : memref<32x96xbf16, #tpu.memory_space<vmem>>, vector<32x96xbf16>
    %cst_97 = arith.constant dense<0.000000e+00> : vector<2x96xf32>
    %315 = tpu.matmul %313, %314, %cst_97 {dimension_numbers = #tpu.dot_dimension_numbers<[1], [0], [0], [1], [0, 0, 1, 1], [], []>} : vector<2x32xbf16>, vector<32x96xbf16>, vector<2x96xf32> -> vector<2x96xf32>
    %316 = arith.addf %315, %9 : vector<2x96xf32>
    %317 = vector.extract_strided_slice %312 {offsets = [0, 0], sizes = [2, 32], strides = [1, 1]} : vector<2x96xf32> to vector<2x32xf32>
    %318 = vector.extract_strided_slice %316 {offsets = [0, 0], sizes = [2, 32], strides = [1, 1]} : vector<2x96xf32> to vector<2x32xf32>
    %319 = arith.addf %317, %318 : vector<2x32xf32>
    %320 = arith.negf %319 : vector<2x32xf32>
    %321 = math.exp %320 : vector<2x32xf32>
    %cst_98 = arith.constant 1.000000e+00 : f32
    %322 = vector.broadcast %cst_98 : f32 to vector<2x32xf32>
    %323 = arith.addf %322, %321 : vector<2x32xf32>
    %324 = arith.divf %322, %323 : vector<2x32xf32>
    %325 = vector.extract_strided_slice %312 {offsets = [0, 32], sizes = [2, 32], strides = [1, 1]} : vector<2x96xf32> to vector<2x32xf32>
    %326 = vector.extract_strided_slice %316 {offsets = [0, 32], sizes = [2, 32], strides = [1, 1]} : vector<2x96xf32> to vector<2x32xf32>
    %327 = arith.addf %325, %326 : vector<2x32xf32>
    %328 = arith.negf %327 : vector<2x32xf32>
    %329 = math.exp %328 : vector<2x32xf32>
    %cst_99 = arith.constant 1.000000e+00 : f32
    %330 = vector.broadcast %cst_99 : f32 to vector<2x32xf32>
    %331 = arith.addf %330, %329 : vector<2x32xf32>
    %332 = arith.divf %330, %331 : vector<2x32xf32>
    %333 = vector.extract_strided_slice %312 {offsets = [0, 64], sizes = [2, 32], strides = [1, 1]} : vector<2x96xf32> to vector<2x32xf32>
    %334 = vector.extract_strided_slice %316 {offsets = [0, 64], sizes = [2, 32], strides = [1, 1]} : vector<2x96xf32> to vector<2x32xf32>
    %335 = arith.mulf %324, %334 : vector<2x32xf32>
    %336 = arith.addf %333, %335 : vector<2x32xf32>
    %337 = math.tanh %336 : vector<2x32xf32>
    %cst_100 = arith.constant 1.000000e+00 : f32
    %338 = vector.broadcast %cst_100 : f32 to vector<2x32xf32>
    %339 = arith.subf %338, %332 : vector<2x32xf32>
    %340 = arith.mulf %339, %337 : vector<2x32xf32>
    %341 = arith.mulf %332, %270 : vector<2x32xf32>
    %342 = arith.addf %340, %341 : vector<2x32xf32>
    %343 = arith.truncf %342 : vector<2x32xf32> to vector<2x32xbf16>
    %c0_101 = arith.constant 0 : index
    %c0_102 = arith.constant 0 : index
    %344 = vector.load %arg10[%c0_101, %c0_102] : memref<32x96xbf16, #tpu.memory_space<vmem>>, vector<32x96xbf16>
    %cst_103 = arith.constant dense<0.000000e+00> : vector<2x96xf32>
    %345 = tpu.matmul %343, %344, %cst_103 {dimension_numbers = #tpu.dot_dimension_numbers<[1], [0], [0], [1], [0, 0, 1, 1], [], []>} : vector<2x32xbf16>, vector<32x96xbf16>, vector<2x96xf32> -> vector<2x96xf32>
    %346 = arith.addf %345, %12 : vector<2x96xf32>
    %347 = arith.truncf %304 : vector<2x32xf32> to vector<2x32xbf16>
    %c0_104 = arith.constant 0 : index
    %c0_105 = arith.constant 0 : index
    %348 = vector.load %arg11[%c0_104, %c0_105] : memref<32x96xbf16, #tpu.memory_space<vmem>>, vector<32x96xbf16>
    %cst_106 = arith.constant dense<0.000000e+00> : vector<2x96xf32>
    %349 = tpu.matmul %347, %348, %cst_106 {dimension_numbers = #tpu.dot_dimension_numbers<[1], [0], [0], [1], [0, 0, 1, 1], [], []>} : vector<2x32xbf16>, vector<32x96xbf16>, vector<2x96xf32> -> vector<2x96xf32>
    %350 = arith.addf %349, %15 : vector<2x96xf32>
    %351 = vector.extract_strided_slice %346 {offsets = [0, 0], sizes = [2, 32], strides = [1, 1]} : vector<2x96xf32> to vector<2x32xf32>
    %352 = vector.extract_strided_slice %350 {offsets = [0, 0], sizes = [2, 32], strides = [1, 1]} : vector<2x96xf32> to vector<2x32xf32>
    %353 = arith.addf %351, %352 : vector<2x32xf32>
    %354 = arith.negf %353 : vector<2x32xf32>
    %355 = math.exp %354 : vector<2x32xf32>
    %cst_107 = arith.constant 1.000000e+00 : f32
    %356 = vector.broadcast %cst_107 : f32 to vector<2x32xf32>
    %357 = arith.addf %356, %355 : vector<2x32xf32>
    %358 = arith.divf %356, %357 : vector<2x32xf32>
    %359 = vector.extract_strided_slice %346 {offsets = [0, 32], sizes = [2, 32], strides = [1, 1]} : vector<2x96xf32> to vector<2x32xf32>
    %360 = vector.extract_strided_slice %350 {offsets = [0, 32], sizes = [2, 32], strides = [1, 1]} : vector<2x96xf32> to vector<2x32xf32>
    %361 = arith.addf %359, %360 : vector<2x32xf32>
    %362 = arith.negf %361 : vector<2x32xf32>
    %363 = math.exp %362 : vector<2x32xf32>
    %cst_108 = arith.constant 1.000000e+00 : f32
    %364 = vector.broadcast %cst_108 : f32 to vector<2x32xf32>
    %365 = arith.addf %364, %363 : vector<2x32xf32>
    %366 = arith.divf %364, %365 : vector<2x32xf32>
    %367 = vector.extract_strided_slice %346 {offsets = [0, 64], sizes = [2, 32], strides = [1, 1]} : vector<2x96xf32> to vector<2x32xf32>
    %368 = vector.extract_strided_slice %350 {offsets = [0, 64], sizes = [2, 32], strides = [1, 1]} : vector<2x96xf32> to vector<2x32xf32>
    %369 = arith.mulf %358, %368 : vector<2x32xf32>
    %370 = arith.addf %367, %369 : vector<2x32xf32>
    %371 = math.tanh %370 : vector<2x32xf32>
    %cst_109 = arith.constant 1.000000e+00 : f32
    %372 = vector.broadcast %cst_109 : f32 to vector<2x32xf32>
    %373 = arith.subf %372, %366 : vector<2x32xf32>
    %374 = arith.mulf %373, %371 : vector<2x32xf32>
    %375 = arith.mulf %366, %304 : vector<2x32xf32>
    %376 = arith.addf %374, %375 : vector<2x32xf32>
    %c0_110 = arith.constant 0 : index
    %c4_111 = arith.constant 4 : index
    %c0_112 = arith.constant 0 : index
    %377 = vector.load %arg14[%c0_110, %c4_111, %c0_112] : memref<2x8x32xf32, #tpu.memory_space<vmem>>, vector<2x1x32xf32>
    %378 = vector.shape_cast %377 : vector<2x1x32xf32> to vector<2x32xf32>
    %379 = vector.shape_cast %376 : vector<2x32xf32> to vector<2x1x32xf32>
    tpu.vector_store %arg14[%c0_110, %c4_111, %c0_112], %379 {strides = array<i32>} : memref<2x8x32xf32, #tpu.memory_space<vmem>>, vector<2x1x32xf32>,
    %c0_113 = arith.constant 0 : index
    %c2_114 = arith.constant 2 : index
    %c0_115 = arith.constant 0 : index
    %380 = vector.load %arg2[%c0_113, %c2_114, %c0_115] : memref<2x8x1xf32, #tpu.memory_space<vmem>>, vector<2x1x1xf32>
    %381 = vector.shape_cast %380 : vector<2x1x1xf32> to vector<2x1xf32>
    %382 = vector.broadcast %381 : vector<2x1xf32> to vector<2x96xf32>
    %383 = arith.mulf %382, %3 : vector<2x96xf32>
    %384 = arith.addf %383, %6 : vector<2x96xf32>
    %385 = arith.truncf %342 : vector<2x32xf32> to vector<2x32xbf16>
    %c0_116 = arith.constant 0 : index
    %c0_117 = arith.constant 0 : index
    %386 = vector.load %arg7[%c0_116, %c0_117] : memref<32x96xbf16, #tpu.memory_space<vmem>>, vector<32x96xbf16>
    %cst_118 = arith.constant dense<0.000000e+00> : vector<2x96xf32>
    %387 = tpu.matmul %385, %386, %cst_118 {dimension_numbers = #tpu.dot_dimension_numbers<[1], [0], [0], [1], [0, 0, 1, 1], [], []>} : vector<2x32xbf16>, vector<32x96xbf16>, vector<2x96xf32> -> vector<2x96xf32>
    %388 = arith.addf %387, %9 : vector<2x96xf32>
    %389 = vector.extract_strided_slice %384 {offsets = [0, 0], sizes = [2, 32], strides = [1, 1]} : vector<2x96xf32> to vector<2x32xf32>
    %390 = vector.extract_strided_slice %388 {offsets = [0, 0], sizes = [2, 32], strides = [1, 1]} : vector<2x96xf32> to vector<2x32xf32>
    %391 = arith.addf %389, %390 : vector<2x32xf32>
    %392 = arith.negf %391 : vector<2x32xf32>
    %393 = math.exp %392 : vector<2x32xf32>
    %cst_119 = arith.constant 1.000000e+00 : f32
    %394 = vector.broadcast %cst_119 : f32 to vector<2x32xf32>
    %395 = arith.addf %394, %393 : vector<2x32xf32>
    %396 = arith.divf %394, %395 : vector<2x32xf32>
    %397 = vector.extract_strided_slice %384 {offsets = [0, 32], sizes = [2, 32], strides = [1, 1]} : vector<2x96xf32> to vector<2x32xf32>
    %398 = vector.extract_strided_slice %388 {offsets = [0, 32], sizes = [2, 32], strides = [1, 1]} : vector<2x96xf32> to vector<2x32xf32>
    %399 = arith.addf %397, %398 : vector<2x32xf32>
    %400 = arith.negf %399 : vector<2x32xf32>
    %401 = math.exp %400 : vector<2x32xf32>
    %cst_120 = arith.constant 1.000000e+00 : f32
    %402 = vector.broadcast %cst_120 : f32 to vector<2x32xf32>
    %403 = arith.addf %402, %401 : vector<2x32xf32>
    %404 = arith.divf %402, %403 : vector<2x32xf32>
    %405 = vector.extract_strided_slice %384 {offsets = [0, 64], sizes = [2, 32], strides = [1, 1]} : vector<2x96xf32> to vector<2x32xf32>
    %406 = vector.extract_strided_slice %388 {offsets = [0, 64], sizes = [2, 32], strides = [1, 1]} : vector<2x96xf32> to vector<2x32xf32>
    %407 = arith.mulf %396, %406 : vector<2x32xf32>
    %408 = arith.addf %405, %407 : vector<2x32xf32>
    %409 = math.tanh %408 : vector<2x32xf32>
    %cst_121 = arith.constant 1.000000e+00 : f32
    %410 = vector.broadcast %cst_121 : f32 to vector<2x32xf32>
    %411 = arith.subf %410, %404 : vector<2x32xf32>
    %412 = arith.mulf %411, %409 : vector<2x32xf32>
    %413 = arith.mulf %404, %342 : vector<2x32xf32>
    %414 = arith.addf %412, %413 : vector<2x32xf32>
    %415 = arith.truncf %414 : vector<2x32xf32> to vector<2x32xbf16>
    %c0_122 = arith.constant 0 : index
    %c0_123 = arith.constant 0 : index
    %416 = vector.load %arg10[%c0_122, %c0_123] : memref<32x96xbf16, #tpu.memory_space<vmem>>, vector<32x96xbf16>
    %cst_124 = arith.constant dense<0.000000e+00> : vector<2x96xf32>
    %417 = tpu.matmul %415, %416, %cst_124 {dimension_numbers = #tpu.dot_dimension_numbers<[1], [0], [0], [1], [0, 0, 1, 1], [], []>} : vector<2x32xbf16>, vector<32x96xbf16>, vector<2x96xf32> -> vector<2x96xf32>
    %418 = arith.addf %417, %12 : vector<2x96xf32>
    %419 = arith.truncf %376 : vector<2x32xf32> to vector<2x32xbf16>
    %c0_125 = arith.constant 0 : index
    %c0_126 = arith.constant 0 : index
    %420 = vector.load %arg11[%c0_125, %c0_126] : memref<32x96xbf16, #tpu.memory_space<vmem>>, vector<32x96xbf16>
    %cst_127 = arith.constant dense<0.000000e+00> : vector<2x96xf32>
    %421 = tpu.matmul %419, %420, %cst_127 {dimension_numbers = #tpu.dot_dimension_numbers<[1], [0], [0], [1], [0, 0, 1, 1], [], []>} : vector<2x32xbf16>, vector<32x96xbf16>, vector<2x96xf32> -> vector<2x96xf32>
    %422 = arith.addf %421, %15 : vector<2x96xf32>
    %423 = vector.extract_strided_slice %418 {offsets = [0, 0], sizes = [2, 32], strides = [1, 1]} : vector<2x96xf32> to vector<2x32xf32>
    %424 = vector.extract_strided_slice %422 {offsets = [0, 0], sizes = [2, 32], strides = [1, 1]} : vector<2x96xf32> to vector<2x32xf32>
    %425 = arith.addf %423, %424 : vector<2x32xf32>
    %426 = arith.negf %425 : vector<2x32xf32>
    %427 = math.exp %426 : vector<2x32xf32>
    %cst_128 = arith.constant 1.000000e+00 : f32
    %428 = vector.broadcast %cst_128 : f32 to vector<2x32xf32>
    %429 = arith.addf %428, %427 : vector<2x32xf32>
    %430 = arith.divf %428, %429 : vector<2x32xf32>
    %431 = vector.extract_strided_slice %418 {offsets = [0, 32], sizes = [2, 32], strides = [1, 1]} : vector<2x96xf32> to vector<2x32xf32>
    %432 = vector.extract_strided_slice %422 {offsets = [0, 32], sizes = [2, 32], strides = [1, 1]} : vector<2x96xf32> to vector<2x32xf32>
    %433 = arith.addf %431, %432 : vector<2x32xf32>
    %434 = arith.negf %433 : vector<2x32xf32>
    %435 = math.exp %434 : vector<2x32xf32>
    %cst_129 = arith.constant 1.000000e+00 : f32
    %436 = vector.broadcast %cst_129 : f32 to vector<2x32xf32>
    %437 = arith.addf %436, %435 : vector<2x32xf32>
    %438 = arith.divf %436, %437 : vector<2x32xf32>
    %439 = vector.extract_strided_slice %418 {offsets = [0, 64], sizes = [2, 32], strides = [1, 1]} : vector<2x96xf32> to vector<2x32xf32>
    %440 = vector.extract_strided_slice %422 {offsets = [0, 64], sizes = [2, 32], strides = [1, 1]} : vector<2x96xf32> to vector<2x32xf32>
    %441 = arith.mulf %430, %440 : vector<2x32xf32>
    %442 = arith.addf %439, %441 : vector<2x32xf32>
    %443 = math.tanh %442 : vector<2x32xf32>
    %cst_130 = arith.constant 1.000000e+00 : f32
    %444 = vector.broadcast %cst_130 : f32 to vector<2x32xf32>
    %445 = arith.subf %444, %438 : vector<2x32xf32>
    %446 = arith.mulf %445, %443 : vector<2x32xf32>
    %447 = arith.mulf %438, %376 : vector<2x32xf32>
    %448 = arith.addf %446, %447 : vector<2x32xf32>
    %c0_131 = arith.constant 0 : index
    %c5_132 = arith.constant 5 : index
    %c0_133 = arith.constant 0 : index
    %449 = vector.load %arg14[%c0_131, %c5_132, %c0_133] : memref<2x8x32xf32, #tpu.memory_space<vmem>>, vector<2x1x32xf32>
    %450 = vector.shape_cast %449 : vector<2x1x32xf32> to vector<2x32xf32>
    %451 = vector.shape_cast %448 : vector<2x32xf32> to vector<2x1x32xf32>
    tpu.vector_store %arg14[%c0_131, %c5_132, %c0_133], %451 {strides = array<i32>} : memref<2x8x32xf32, #tpu.memory_space<vmem>>, vector<2x1x32xf32>,
    %c0_134 = arith.constant 0 : index
    %c1_135 = arith.constant 1 : index
    %c0_136 = arith.constant 0 : index
    %452 = vector.load %arg2[%c0_134, %c1_135, %c0_136] : memref<2x8x1xf32, #tpu.memory_space<vmem>>, vector<2x1x1xf32>
    %453 = vector.shape_cast %452 : vector<2x1x1xf32> to vector<2x1xf32>
    %454 = vector.broadcast %453 : vector<2x1xf32> to vector<2x96xf32>
    %455 = arith.mulf %454, %3 : vector<2x96xf32>
    %456 = arith.addf %455, %6 : vector<2x96xf32>
    %457 = arith.truncf %414 : vector<2x32xf32> to vector<2x32xbf16>
    %c0_137 = arith.constant 0 : index
    %c0_138 = arith.constant 0 : index
    %458 = vector.load %arg7[%c0_137, %c0_138] : memref<32x96xbf16, #tpu.memory_space<vmem>>, vector<32x96xbf16>
    %cst_139 = arith.constant dense<0.000000e+00> : vector<2x96xf32>
    %459 = tpu.matmul %457, %458, %cst_139 {dimension_numbers = #tpu.dot_dimension_numbers<[1], [0], [0], [1], [0, 0, 1, 1], [], []>} : vector<2x32xbf16>, vector<32x96xbf16>, vector<2x96xf32> -> vector<2x96xf32>
    %460 = arith.addf %459, %9 : vector<2x96xf32>
    %461 = vector.extract_strided_slice %456 {offsets = [0, 0], sizes = [2, 32], strides = [1, 1]} : vector<2x96xf32> to vector<2x32xf32>
    %462 = vector.extract_strided_slice %460 {offsets = [0, 0], sizes = [2, 32], strides = [1, 1]} : vector<2x96xf32> to vector<2x32xf32>
    %463 = arith.addf %461, %462 : vector<2x32xf32>
    %464 = arith.negf %463 : vector<2x32xf32>
    %465 = math.exp %464 : vector<2x32xf32>
    %cst_140 = arith.constant 1.000000e+00 : f32
    %466 = vector.broadcast %cst_140 : f32 to vector<2x32xf32>
    %467 = arith.addf %466, %465 : vector<2x32xf32>
    %468 = arith.divf %466, %467 : vector<2x32xf32>
    %469 = vector.extract_strided_slice %456 {offsets = [0, 32], sizes = [2, 32], strides = [1, 1]} : vector<2x96xf32> to vector<2x32xf32>
    %470 = vector.extract_strided_slice %460 {offsets = [0, 32], sizes = [2, 32], strides = [1, 1]} : vector<2x96xf32> to vector<2x32xf32>
    %471 = arith.addf %469, %470 : vector<2x32xf32>
    %472 = arith.negf %471 : vector<2x32xf32>
    %473 = math.exp %472 : vector<2x32xf32>
    %cst_141 = arith.constant 1.000000e+00 : f32
    %474 = vector.broadcast %cst_141 : f32 to vector<2x32xf32>
    %475 = arith.addf %474, %473 : vector<2x32xf32>
    %476 = arith.divf %474, %475 : vector<2x32xf32>
    %477 = vector.extract_strided_slice %456 {offsets = [0, 64], sizes = [2, 32], strides = [1, 1]} : vector<2x96xf32> to vector<2x32xf32>
    %478 = vector.extract_strided_slice %460 {offsets = [0, 64], sizes = [2, 32], strides = [1, 1]} : vector<2x96xf32> to vector<2x32xf32>
    %479 = arith.mulf %468, %478 : vector<2x32xf32>
    %480 = arith.addf %477, %479 : vector<2x32xf32>
    %481 = math.tanh %480 : vector<2x32xf32>
    %cst_142 = arith.constant 1.000000e+00 : f32
    %482 = vector.broadcast %cst_142 : f32 to vector<2x32xf32>
    %483 = arith.subf %482, %476 : vector<2x32xf32>
    %484 = arith.mulf %483, %481 : vector<2x32xf32>
    %485 = arith.mulf %476, %414 : vector<2x32xf32>
    %486 = arith.addf %484, %485 : vector<2x32xf32>
    %487 = arith.truncf %486 : vector<2x32xf32> to vector<2x32xbf16>
    %c0_143 = arith.constant 0 : index
    %c0_144 = arith.constant 0 : index
    %488 = vector.load %arg10[%c0_143, %c0_144] : memref<32x96xbf16, #tpu.memory_space<vmem>>, vector<32x96xbf16>
    %cst_145 = arith.constant dense<0.000000e+00> : vector<2x96xf32>
    %489 = tpu.matmul %487, %488, %cst_145 {dimension_numbers = #tpu.dot_dimension_numbers<[1], [0], [0], [1], [0, 0, 1, 1], [], []>} : vector<2x32xbf16>, vector<32x96xbf16>, vector<2x96xf32> -> vector<2x96xf32>
    %490 = arith.addf %489, %12 : vector<2x96xf32>
    %491 = arith.truncf %448 : vector<2x32xf32> to vector<2x32xbf16>
    %c0_146 = arith.constant 0 : index
    %c0_147 = arith.constant 0 : index
    %492 = vector.load %arg11[%c0_146, %c0_147] : memref<32x96xbf16, #tpu.memory_space<vmem>>, vector<32x96xbf16>
    %cst_148 = arith.constant dense<0.000000e+00> : vector<2x96xf32>
    %493 = tpu.matmul %491, %492, %cst_148 {dimension_numbers = #tpu.dot_dimension_numbers<[1], [0], [0], [1], [0, 0, 1, 1], [], []>} : vector<2x32xbf16>, vector<32x96xbf16>, vector<2x96xf32> -> vector<2x96xf32>
    %494 = arith.addf %493, %15 : vector<2x96xf32>
    %495 = vector.extract_strided_slice %490 {offsets = [0, 0], sizes = [2, 32], strides = [1, 1]} : vector<2x96xf32> to vector<2x32xf32>
    %496 = vector.extract_strided_slice %494 {offsets = [0, 0], sizes = [2, 32], strides = [1, 1]} : vector<2x96xf32> to vector<2x32xf32>
    %497 = arith.addf %495, %496 : vector<2x32xf32>
    %498 = arith.negf %497 : vector<2x32xf32>
    %499 = math.exp %498 : vector<2x32xf32>
    %cst_149 = arith.constant 1.000000e+00 : f32
    %500 = vector.broadcast %cst_149 : f32 to vector<2x32xf32>
    %501 = arith.addf %500, %499 : vector<2x32xf32>
    %502 = arith.divf %500, %501 : vector<2x32xf32>
    %503 = vector.extract_strided_slice %490 {offsets = [0, 32], sizes = [2, 32], strides = [1, 1]} : vector<2x96xf32> to vector<2x32xf32>
    %504 = vector.extract_strided_slice %494 {offsets = [0, 32], sizes = [2, 32], strides = [1, 1]} : vector<2x96xf32> to vector<2x32xf32>
    %505 = arith.addf %503, %504 : vector<2x32xf32>
    %506 = arith.negf %505 : vector<2x32xf32>
    %507 = math.exp %506 : vector<2x32xf32>
    %cst_150 = arith.constant 1.000000e+00 : f32
    %508 = vector.broadcast %cst_150 : f32 to vector<2x32xf32>
    %509 = arith.addf %508, %507 : vector<2x32xf32>
    %510 = arith.divf %508, %509 : vector<2x32xf32>
    %511 = vector.extract_strided_slice %490 {offsets = [0, 64], sizes = [2, 32], strides = [1, 1]} : vector<2x96xf32> to vector<2x32xf32>
    %512 = vector.extract_strided_slice %494 {offsets = [0, 64], sizes = [2, 32], strides = [1, 1]} : vector<2x96xf32> to vector<2x32xf32>
    %513 = arith.mulf %502, %512 : vector<2x32xf32>
    %514 = arith.addf %511, %513 : vector<2x32xf32>
    %515 = math.tanh %514 : vector<2x32xf32>
    %cst_151 = arith.constant 1.000000e+00 : f32
    %516 = vector.broadcast %cst_151 : f32 to vector<2x32xf32>
    %517 = arith.subf %516, %510 : vector<2x32xf32>
    %518 = arith.mulf %517, %515 : vector<2x32xf32>
    %519 = arith.mulf %510, %448 : vector<2x32xf32>
    %520 = arith.addf %518, %519 : vector<2x32xf32>
    %c0_152 = arith.constant 0 : index
    %c6_153 = arith.constant 6 : index
    %c0_154 = arith.constant 0 : index
    %521 = vector.load %arg14[%c0_152, %c6_153, %c0_154] : memref<2x8x32xf32, #tpu.memory_space<vmem>>, vector<2x1x32xf32>
    %522 = vector.shape_cast %521 : vector<2x1x32xf32> to vector<2x32xf32>
    %523 = vector.shape_cast %520 : vector<2x32xf32> to vector<2x1x32xf32>
    tpu.vector_store %arg14[%c0_152, %c6_153, %c0_154], %523 {strides = array<i32>} : memref<2x8x32xf32, #tpu.memory_space<vmem>>, vector<2x1x32xf32>,
    %c0_155 = arith.constant 0 : index
    %c0_156 = arith.constant 0 : index
    %c0_157 = arith.constant 0 : index
    %524 = vector.load %arg2[%c0_155, %c0_156, %c0_157] : memref<2x8x1xf32, #tpu.memory_space<vmem>>, vector<2x1x1xf32>
    %525 = vector.shape_cast %524 : vector<2x1x1xf32> to vector<2x1xf32>
    %526 = vector.broadcast %525 : vector<2x1xf32> to vector<2x96xf32>
    %527 = arith.mulf %526, %3 : vector<2x96xf32>
    %528 = arith.addf %527, %6 : vector<2x96xf32>
    %529 = arith.truncf %486 : vector<2x32xf32> to vector<2x32xbf16>
    %c0_158 = arith.constant 0 : index
    %c0_159 = arith.constant 0 : index
    %530 = vector.load %arg7[%c0_158, %c0_159] : memref<32x96xbf16, #tpu.memory_space<vmem>>, vector<32x96xbf16>
    %cst_160 = arith.constant dense<0.000000e+00> : vector<2x96xf32>
    %531 = tpu.matmul %529, %530, %cst_160 {dimension_numbers = #tpu.dot_dimension_numbers<[1], [0], [0], [1], [0, 0, 1, 1], [], []>} : vector<2x32xbf16>, vector<32x96xbf16>, vector<2x96xf32> -> vector<2x96xf32>
    %532 = arith.addf %531, %9 : vector<2x96xf32>
    %533 = vector.extract_strided_slice %528 {offsets = [0, 0], sizes = [2, 32], strides = [1, 1]} : vector<2x96xf32> to vector<2x32xf32>
    %534 = vector.extract_strided_slice %532 {offsets = [0, 0], sizes = [2, 32], strides = [1, 1]} : vector<2x96xf32> to vector<2x32xf32>
    %535 = arith.addf %533, %534 : vector<2x32xf32>
    %536 = arith.negf %535 : vector<2x32xf32>
    %537 = math.exp %536 : vector<2x32xf32>
    %cst_161 = arith.constant 1.000000e+00 : f32
    %538 = vector.broadcast %cst_161 : f32 to vector<2x32xf32>
    %539 = arith.addf %538, %537 : vector<2x32xf32>
    %540 = arith.divf %538, %539 : vector<2x32xf32>
    %541 = vector.extract_strided_slice %528 {offsets = [0, 32], sizes = [2, 32], strides = [1, 1]} : vector<2x96xf32> to vector<2x32xf32>
    %542 = vector.extract_strided_slice %532 {offsets = [0, 32], sizes = [2, 32], strides = [1, 1]} : vector<2x96xf32> to vector<2x32xf32>
    %543 = arith.addf %541, %542 : vector<2x32xf32>
    %544 = arith.negf %543 : vector<2x32xf32>
    %545 = math.exp %544 : vector<2x32xf32>
    %cst_162 = arith.constant 1.000000e+00 : f32
    %546 = vector.broadcast %cst_162 : f32 to vector<2x32xf32>
    %547 = arith.addf %546, %545 : vector<2x32xf32>
    %548 = arith.divf %546, %547 : vector<2x32xf32>
    %549 = vector.extract_strided_slice %528 {offsets = [0, 64], sizes = [2, 32], strides = [1, 1]} : vector<2x96xf32> to vector<2x32xf32>
    %550 = vector.extract_strided_slice %532 {offsets = [0, 64], sizes = [2, 32], strides = [1, 1]} : vector<2x96xf32> to vector<2x32xf32>
    %551 = arith.mulf %540, %550 : vector<2x32xf32>
    %552 = arith.addf %549, %551 : vector<2x32xf32>
    %553 = math.tanh %552 : vector<2x32xf32>
    %cst_163 = arith.constant 1.000000e+00 : f32
    %554 = vector.broadcast %cst_163 : f32 to vector<2x32xf32>
    %555 = arith.subf %554, %548 : vector<2x32xf32>
    %556 = arith.mulf %555, %553 : vector<2x32xf32>
    %557 = arith.mulf %548, %486 : vector<2x32xf32>
    %558 = arith.addf %556, %557 : vector<2x32xf32>
    %559 = arith.truncf %558 : vector<2x32xf32> to vector<2x32xbf16>
    %c0_164 = arith.constant 0 : index
    %c0_165 = arith.constant 0 : index
    %560 = vector.load %arg10[%c0_164, %c0_165] : memref<32x96xbf16, #tpu.memory_space<vmem>>, vector<32x96xbf16>
    %cst_166 = arith.constant dense<0.000000e+00> : vector<2x96xf32>
    %561 = tpu.matmul %559, %560, %cst_166 {dimension_numbers = #tpu.dot_dimension_numbers<[1], [0], [0], [1], [0, 0, 1, 1], [], []>} : vector<2x32xbf16>, vector<32x96xbf16>, vector<2x96xf32> -> vector<2x96xf32>
    %562 = arith.addf %561, %12 : vector<2x96xf32>
    %563 = arith.truncf %520 : vector<2x32xf32> to vector<2x32xbf16>
    %c0_167 = arith.constant 0 : index
    %c0_168 = arith.constant 0 : index
    %564 = vector.load %arg11[%c0_167, %c0_168] : memref<32x96xbf16, #tpu.memory_space<vmem>>, vector<32x96xbf16>
    %cst_169 = arith.constant dense<0.000000e+00> : vector<2x96xf32>
    %565 = tpu.matmul %563, %564, %cst_169 {dimension_numbers = #tpu.dot_dimension_numbers<[1], [0], [0], [1], [0, 0, 1, 1], [], []>} : vector<2x32xbf16>, vector<32x96xbf16>, vector<2x96xf32> -> vector<2x96xf32>
    %566 = arith.addf %565, %15 : vector<2x96xf32>
    %567 = vector.extract_strided_slice %562 {offsets = [0, 0], sizes = [2, 32], strides = [1, 1]} : vector<2x96xf32> to vector<2x32xf32>
    %568 = vector.extract_strided_slice %566 {offsets = [0, 0], sizes = [2, 32], strides = [1, 1]} : vector<2x96xf32> to vector<2x32xf32>
    %569 = arith.addf %567, %568 : vector<2x32xf32>
    %570 = arith.negf %569 : vector<2x32xf32>
    %571 = math.exp %570 : vector<2x32xf32>
    %cst_170 = arith.constant 1.000000e+00 : f32
    %572 = vector.broadcast %cst_170 : f32 to vector<2x32xf32>
    %573 = arith.addf %572, %571 : vector<2x32xf32>
    %574 = arith.divf %572, %573 : vector<2x32xf32>
    %575 = vector.extract_strided_slice %562 {offsets = [0, 32], sizes = [2, 32], strides = [1, 1]} : vector<2x96xf32> to vector<2x32xf32>
    %576 = vector.extract_strided_slice %566 {offsets = [0, 32], sizes = [2, 32], strides = [1, 1]} : vector<2x96xf32> to vector<2x32xf32>
    %577 = arith.addf %575, %576 : vector<2x32xf32>
    %578 = arith.negf %577 : vector<2x32xf32>
    %579 = math.exp %578 : vector<2x32xf32>
    %cst_171 = arith.constant 1.000000e+00 : f32
    %580 = vector.broadcast %cst_171 : f32 to vector<2x32xf32>
    %581 = arith.addf %580, %579 : vector<2x32xf32>
    %582 = arith.divf %580, %581 : vector<2x32xf32>
    %583 = vector.extract_strided_slice %562 {offsets = [0, 64], sizes = [2, 32], strides = [1, 1]} : vector<2x96xf32> to vector<2x32xf32>
    %584 = vector.extract_strided_slice %566 {offsets = [0, 64], sizes = [2, 32], strides = [1, 1]} : vector<2x96xf32> to vector<2x32xf32>
    %585 = arith.mulf %574, %584 : vector<2x32xf32>
    %586 = arith.addf %583, %585 : vector<2x32xf32>
    %587 = math.tanh %586 : vector<2x32xf32>
    %cst_172 = arith.constant 1.000000e+00 : f32
    %588 = vector.broadcast %cst_172 : f32 to vector<2x32xf32>
    %589 = arith.subf %588, %582 : vector<2x32xf32>
    %590 = arith.mulf %589, %587 : vector<2x32xf32>
    %591 = arith.mulf %582, %520 : vector<2x32xf32>
    %592 = arith.addf %590, %591 : vector<2x32xf32>
    %c0_173 = arith.constant 0 : index
    %c7_174 = arith.constant 7 : index
    %c0_175 = arith.constant 0 : index
    %593 = vector.load %arg14[%c0_173, %c7_174, %c0_175] : memref<2x8x32xf32, #tpu.memory_space<vmem>>, vector<2x1x32xf32>
    %594 = vector.shape_cast %593 : vector<2x1x32xf32> to vector<2x32xf32>
    %595 = vector.shape_cast %592 : vector<2x32xf32> to vector<2x1x32xf32>
    tpu.vector_store %arg14[%c0_173, %c7_174, %c0_175], %595 {strides = array<i32>} : memref<2x8x32xf32, #tpu.memory_space<vmem>>, vector<2x1x32xf32>,
    %c0_176 = arith.constant 0 : index
    %c0_177 = arith.constant 0 : index
    %c0_178 = arith.constant 0 : index
    %596 = vector.load %arg15[%c0_176, %c0_177, %c0_178] : memref<2x2x32xf32, #tpu.memory_space<vmem>>, vector<1x2x32xf32>
    %597 = vector.shape_cast %596 : vector<1x2x32xf32> to vector<2x32xf32>
    %598 = vector.shape_cast %558 : vector<2x32xf32> to vector<1x2x32xf32>
    tpu.vector_store %arg15[%c0_176, %c0_177, %c0_178], %598 {strides = array<i32>} : memref<2x2x32xf32, #tpu.memory_space<vmem>>, vector<1x2x32xf32>,
    %c1_179 = arith.constant 1 : index
    %c0_180 = arith.constant 0 : index
    %c0_181 = arith.constant 0 : index
    %599 = vector.load %arg15[%c1_179, %c0_180, %c0_181] : memref<2x2x32xf32, #tpu.memory_space<vmem>>, vector<1x2x32xf32>
    %600 = vector.shape_cast %599 : vector<1x2x32xf32> to vector<2x32xf32>
    %601 = vector.shape_cast %592 : vector<2x32xf32> to vector<1x2x32xf32>
    tpu.vector_store %arg15[%c1_179, %c0_180, %c0_181], %601 {strides = array<i32>} : memref<2x2x32xf32, #tpu.memory_space<vmem>>, vector<1x2x32xf32>,
    return
  }
  func.func @transform_0(%arg0: i32, %arg1: i32) -> (i32, i32, i32) {
    %c0_i32 = arith.constant 0 : i32
    %0 = arith.subi %c0_i32, %arg1 : i32
    %c0_i32_0 = arith.constant 0 : i32
    %c0_i32_1 = arith.constant 0 : i32
    return %arg0, %0, %c0_i32_0 : i32, i32, i32
  }
  func.func @transform_1(%arg0: i32, %arg1: i32) -> (i32, i32) {
    %c0_i32 = arith.constant 0 : i32
    %c0_i32_0 = arith.constant 0 : i32
    return %arg0, %c0_i32 : i32, i32
  }
  func.func @transform_2(%arg0: i32, %arg1: i32) -> (i32, i32) {
    %c0_i32 = arith.constant 0 : i32
    %c0_i32_0 = arith.constant 0 : i32
    %c0_i32_1 = arith.constant 0 : i32
    return %c0_i32, %c0_i32_0 : i32, i32
  }
  func.func @transform_3(%arg0: i32, %arg1: i32) -> (i32, i32) {
    %c0_i32 = arith.constant 0 : i32
    %c0_i32_0 = arith.constant 0 : i32
    %c0_i32_1 = arith.constant 0 : i32
    return %c0_i32, %c0_i32_0 : i32, i32
  }
  func.func @transform_4(%arg0: i32, %arg1: i32) -> (i32, i32) {
    %c0_i32 = arith.constant 0 : i32
    %c0_i32_0 = arith.constant 0 : i32
    %c0_i32_1 = arith.constant 0 : i32
    return %c0_i32, %c0_i32_0 : i32, i32
  }
  func.func @transform_5(%arg0: i32, %arg1: i32) -> (i32, i32) {
    %c0_i32 = arith.constant 0 : i32
    %c0_i32_0 = arith.constant 0 : i32
    %c0_i32_1 = arith.constant 0 : i32
    return %c0_i32, %c0_i32_0 : i32, i32
  }
  func.func @transform_6(%arg0: i32, %arg1: i32) -> (i32, i32) {
    %c0_i32 = arith.constant 0 : i32
    %c0_i32_0 = arith.constant 0 : i32
    %c0_i32_1 = arith.constant 0 : i32
    return %c0_i32, %c0_i32_0 : i32, i32
  }
  func.func @transform_7(%arg0: i32, %arg1: i32) -> (i32, i32) {
    %c0_i32 = arith.constant 0 : i32
    %c0_i32_0 = arith.constant 0 : i32
    %c0_i32_1 = arith.constant 0 : i32
    return %c0_i32, %c0_i32_0 : i32, i32
  }
  func.func @transform_8(%arg0: i32, %arg1: i32) -> (i32, i32) {
    %c0_i32 = arith.constant 0 : i32
    %c0_i32_0 = arith.constant 0 : i32
    %c0_i32_1 = arith.constant 0 : i32
    return %c0_i32, %c0_i32_0 : i32, i32
  }
  func.func @transform_9(%arg0: i32, %arg1: i32) -> (i32, i32) {
    %c0_i32 = arith.constant 0 : i32
    %c0_i32_0 = arith.constant 0 : i32
    %c0_i32_1 = arith.constant 0 : i32
    return %c0_i32, %c0_i32_0 : i32, i32
  }
  func.func @transform_10(%arg0: i32, %arg1: i32) -> (i32, i32) {
    %c0_i32 = arith.constant 0 : i32
    %c0_i32_0 = arith.constant 0 : i32
    %c0_i32_1 = arith.constant 0 : i32
    return %c0_i32, %c0_i32_0 : i32, i32
  }
  func.func @transform_11(%arg0: i32, %arg1: i32) -> (i32, i32) {
    %c0_i32 = arith.constant 0 : i32
    %c0_i32_0 = arith.constant 0 : i32
    %c0_i32_1 = arith.constant 0 : i32
    return %c0_i32, %c0_i32_0 : i32, i32
  }
  func.func @transform_12(%arg0: i32, %arg1: i32) -> (i32, i32, i32) {
    %c0_i32 = arith.constant 0 : i32
    %c0_i32_0 = arith.constant 0 : i32
    return %arg0, %arg1, %c0_i32 : i32, i32, i32
  }
}

</mosaic_0001>

<llo_original>
// kernel: gru_ae_forward.2
$region0: #{gru_ae_forward.2}
  #allocation0 [shape = 'u32[]', space=smem, size = 0x4, offset = 0x4, fixed_abs, tag = 'smem constant byte address 0x4 - core index']
  #allocation1 [shape = 'u32[144,128]{1,0:T(1,128)}', space=vmem, size = 0x12000, scoped, tag = 'internal scratch']
  #allocation2 [shape = 'f32[2,2,32]{2,1,0:T(2,128)}', space=vmem, size = 0x800, scoped, tag = 'scratch operand']
  #allocation3 [shape = 'f32[2,8,96]{2,1,0:T(8,128)}', space=vmem, size = 0x2000, scoped, tag = 'scratch operand']
  %s0 = inlined_call_operand.vmem [shape: f32[2,8,4], index: 0, kind: input, shape index: {}]
  %s1 = inlined_call_operand.vmem [shape: bf16[4,96], index: 1, kind: input, shape index: {}]
  %s2 = inlined_call_operand.vmem [shape: bf16[32,96], index: 2, kind: input, shape index: {}]
  %s3 = inlined_call_operand.vmem [shape: f32[1,96], index: 3, kind: input, shape index: {}]
  %s4 = inlined_call_operand.vmem [shape: f32[1,96], index: 4, kind: input, shape index: {}]
  %s5 = inlined_call_operand.vmem [shape: bf16[32,96], index: 5, kind: input, shape index: {}]
  %s6 = inlined_call_operand.vmem [shape: bf16[32,96], index: 6, kind: input, shape index: {}]
  %s7 = inlined_call_operand.vmem [shape: f32[1,96], index: 7, kind: input, shape index: {}]
  %s8 = inlined_call_operand.vmem [shape: f32[1,96], index: 8, kind: input, shape index: {}]
  %s9 = inlined_call_operand.vmem [shape: bf16[32,2], index: 9, kind: input, shape index: {}]
  %s10 = inlined_call_operand.vmem [shape: f32[1,2], index: 10, kind: input, shape index: {}]
  %s11 = inlined_call_operand.vmem [shape: f32[2,2], index: 11, kind: output, shape index: {0}]
  %s12 = inlined_call_operand.vmem [shape: f32[2,8,1], index: 12, kind: output, shape index: {1}]
  %13 = xla_tuple %s11, %s12
  %s14 = sld [smem:[#allocation0]]
  $region70: #{gru_ae_forward.2} parent=0
    _
  %s16 = ssub.s32 1, %s14
  %s17 = scalar_select 0, %s16, %s14
  // Predicated region
  $region2: #{gru_ae_forward.2} parent=0 // pred_check
    _
  $region3: #{gru_ae_forward.2} parent=0 // pred_check_branch
    %19 = sbr.rel (0) target = $region5
  $region4: #{gru_ae_forward.2} parent=0 // pred_region
    _
  $region5: #{gru_ae_forward.2} parent=0 // pred_fallthru
    _
  // Predicated region
  $region6: #{gru_ae_forward.2} parent=0 // pred_check
    _
  $region7: #{gru_ae_forward.2} parent=0 // pred_check_branch
    %21 = sbr.rel (0) target = $region9
  $region8: #{gru_ae_forward.2} parent=0 // pred_region
    _
  $region9: #{gru_ae_forward.2} parent=0 // pred_fallthru
    _
  // Predicated region
  $region10: #{gru_ae_forward.2} parent=0 // pred_check
    _
  $region11: #{gru_ae_forward.2} parent=0 // pred_check_branch
    %23 = sbr.rel (0) target = $region13
  $region12: #{gru_ae_forward.2} parent=0 // pred_region
    _
  $region13: #{gru_ae_forward.2} parent=0 // pred_fallthru
    _
  // Predicated region
  $region14: #{gru_ae_forward.2} parent=0 // pred_check
    _
  $region15: #{gru_ae_forward.2} parent=0 // pred_check_branch
    %25 = sbr.rel (0) target = $region17
  $region16: #{gru_ae_forward.2} parent=0 // pred_region
    _
  $region17: #{gru_ae_forward.2} parent=0 // pred_fallthru
    _
  // Predicated region
  $region18: #{gru_ae_forward.2} parent=0 // pred_check
    _
  $region19: #{gru_ae_forward.2} parent=0 // pred_check_branch
    %27 = sbr.rel (0) target = $region21
  $region20: #{gru_ae_forward.2} parent=0 // pred_region
    _
  $region21: #{gru_ae_forward.2} parent=0 // pred_fallthru
    _
  // Predicated region
  $region22: #{gru_ae_forward.2} parent=0 // pred_check
    _
  $region23: #{gru_ae_forward.2} parent=0 // pred_check_branch
    %29 = sbr.rel (0) target = $region25
  $region24: #{gru_ae_forward.2} parent=0 // pred_region
    _
  $region25: #{gru_ae_forward.2} parent=0 // pred_fallthru
    _
  // Predicated region
  $region26: #{gru_ae_forward.2} parent=0 // pred_check
    _
  $region27: #{gru_ae_forward.2} parent=0 // pred_check_branch
    %31 = sbr.rel (0) target = $region29
  $region28: #{gru_ae_forward.2} parent=0 // pred_region
    _
  $region29: #{gru_ae_forward.2} parent=0 // pred_fallthru
    _
  // Predicated region
  $region30: #{gru_ae_forward.2} parent=0 // pred_check
    _
  $region31: #{gru_ae_forward.2} parent=0 // pred_check_branch
    %33 = sbr.rel (0) target = $region33
  $region32: #{gru_ae_forward.2} parent=0 // pred_region
    _
  $region33: #{gru_ae_forward.2} parent=0 // pred_fallthru
    _
  // Predicated region
  $region34: #{gru_ae_forward.2} parent=0 // pred_check
    _
  $region35: #{gru_ae_forward.2} parent=0 // pred_check_branch
    %35 = sbr.rel (0) target = $region37
  $region36: #{gru_ae_forward.2} parent=0 // pred_region
    _
  $region37: #{gru_ae_forward.2} parent=0 // pred_fallthru
    _
  // Predicated region
  $region38: #{gru_ae_forward.2} parent=0 // pred_check
    _
  $region39: #{gru_ae_forward.2} parent=0 // pred_check_branch
    %37 = sbr.rel (0) target = $region41
  $region40: #{gru_ae_forward.2} parent=0 // pred_region
    _
  $region41: #{gru_ae_forward.2} parent=0 // pred_fallthru
    _
  // Predicated region
  $region42: #{gru_ae_forward.2} parent=0 // pred_check
    _
  $region43: #{gru_ae_forward.2} parent=0 // pred_check_branch
    %39 = sbr.rel (0) target = $region45
  $region44: #{gru_ae_forward.2} parent=0 // pred_region
    _
  $region45: #{gru_ae_forward.2} parent=0 // pred_fallthru
    _
  %p41 = scmp.eq.s32.totalorder 0, 0
  // Predicated region
  $region46: #{gru_ae_forward.2} parent=0 // pred_check
    %p42 = pneg %p41
  $region47: #{gru_ae_forward.2} parent=0 // pred_check_branch
    %44 = sbr.rel (%p42) target = $region49
  $region48: #{gru_ae_forward.2} parent=0 // pred_region
    %vm45 = vcmask 254976
    %46 = vst.msk [vmem:[#allocation2] sm:$0x3] %vm45, 0.0
    %47 = vst.msk [vmem:[#allocation2 + $0x2] sm:$0x3] %vm45, 0.0
  $region49: #{gru_ae_forward.2} parent=0 // pred_fallthru
    _
  %v48 = vld [vmem:[%s0] sm:$0xff]
  %v49 = vld [vmem:[%s0 + $0x8] sm:$0xff]
  %vm50 = vcmp.gt.f32.partialorder %v48, 0.0
  %vm51 = vcmp.gt.f32.partialorder %v49, 0.0
  %v52 = vsel %vm50, 1.0, %v48
  %v53 = vsel %vm51, 1.0, %v49
  %vm54 = vcmask 31744
  %v55 = vsel %vm54, %v52, 0.0
  %56 = vadd.xlane.f32.xlu0 %v55
  %v57 = vpop.xlane.xlu0 %56
  %v58 = vsel %vm54, %v53, 0.0
  %59 = vadd.xlane.f32.xlu0 %v58
  %v60 = vpop.xlane.xlu0 %59
  %vm61 = vcmp.ge.f32.partialorder %v57, 1.0
  %vm62 = vcmp.ge.f32.partialorder %v60, 1.0
  %v63 = vsel %vm61, 1.0, %v57
  %v64 = vsel %vm62, 1.0, %v60
  %vm65 = vcmask 7168
  %66 = vst.msk [vmem:[%s12] sm:$0xff] %vm65, %v63
  %67 = vst.msk [vmem:[%s12 + $0x8] sm:$0xff] %vm65, %v64
  %v68 = vpack.c.bf16 %v49, %v48
  %v69 = vld [vmem:[%s1] sm:$0x3]
  %v70 = vld [vmem:[%s3] sm:$0x1]
  %v72 = vlaneseq
  %v73 = vshrl.u32 %v72, 7
  %v74 = vsub.s32 0, %v73
  %v75 = vrot.slane %v70, %v74
  %v78 = vsel %vm54, %v68, 0
  %vm80 = vcmask 1041408
  %v82 = vsel %vm80, %v69, 0
  %84 = vmatprep.subr.bf16.mxu0 0
  %85 = vmatpush1.bf16.msra.mxu0 %v82
  %86 = vmatprep.subr.bf16.mxu0 0
  %87 = vmatpush1.bf16.msra.mxu0 0
  %88 = vmatprep.subr.bf16.mxu0 0
  %89 = vmatpush1.bf16.msra.mxu0 0
  %90 = vmatprep.subr.bf16.mxu0 0
  %91 = vmatpush1.bf16.msra.mxu0 0
  %92 = vmatprep.subr.bf16.mxu0 0
  %93 = vmatpush1.bf16.msra.mxu0 0
  %94 = vmatprep.subr.bf16.mxu0 0
  %95 = vmatpush1.bf16.msra.mxu0 0
  %96 = vmatprep.subr.bf16.mxu0 0
  %97 = vmatpush1.bf16.msra.mxu0 0
  %98 = vmatprep.subr.bf16.mxu0 0
  %99 = vmatpush1.bf16.msra.mxu0 0
  %100 = vmatprep.subr.bf16.mxu0 0
  %101 = vmatpush1.bf16.msra.mxu0 0
  %102 = vmatprep.subr.bf16.mxu0 0
  %103 = vmatpush1.bf16.msra.mxu0 0
  %104 = vmatprep.subr.bf16.mxu0 0
  %105 = vmatpush1.bf16.msra.mxu0 0
  %106 = vmatprep.subr.bf16.mxu0 0
  %107 = vmatpush1.bf16.msra.mxu0 0
  %108 = vmatprep.subr.bf16.mxu0 0
  %109 = vmatpush1.bf16.msra.mxu0 0
  %110 = vmatprep.subr.bf16.mxu0 0
  %111 = vmatpush1.bf16.msra.mxu0 0
  %112 = vmatprep.subr.bf16.mxu0 0
  %113 = vmatpush1.bf16.msra.mxu0 0
  %114 = vmatprep.subr.bf16.mxu0 0
  %115 = vmatpush1.bf16.msra.mxu0 0
  %116 = vmatprep.mubr.bf16.mxu0 0
  %117 = vmatmul.mubr.bf16.gmra.mrb[0].mxu0 %v78
  %v118 = vpop.f32.mrb[0].mxu0
  %v119 = vadd.f32 %v75, %v118
  %v120 = vpop.f32.mrb[0].mxu0
  %v121 = vpop.f32.mrb[0].mxu0
  %v122 = vadd.f32 %v75, %v121
  %v123 = vpop.f32.mrb[0].mxu0
  %124 = vdwg.mxu0
  %vm125 = vcmask 785408
  %126 = vst.msk [vmem:[#allocation3] sm:$0xff] %vm125, %v119
  %127 = vst.msk [vmem:[#allocation3 + $0x8] sm:$0xff] %vm125, %v122
  %v128 = vld [vmem:[%s4] sm:$0x1]
  %v130 = vlaneseq
  %v131 = vshrl.u32 %v130, 7
  %v132 = vsub.s32 0, %v131
  %v133 = vrot.slane %v128, %v132
  %v135 = vld [vmem:[%s7] sm:$0x1]
  %v137 = vlaneseq
  %v138 = vshrl.u32 %v137, 7
  %v139 = vsub.s32 0, %v138
  %v140 = vrot.slane %v135, %v139
  %v142 = vld [vmem:[%s8] sm:$0x1]
  %v144 = vlaneseq
  %v145 = vshrl.u32 %v144, 7
  %v146 = vsub.s32 0, %v145
  %v147 = vrot.slane %v142, %v146
  %v149 = vld [vmem:[#allocation2] sm:$0x3]
  %s150 = scalar_lea.vmem [#allocation2], 2
  %v151 = vld [vmem:[%s150] sm:$0x3]
  %v152 = vpack.c.bf16 %v149, %v149
  %v153 = vld [vmem:[%s2] sm:$0xf]
  %v154 = vld [vmem:[%s2 + $0x4] sm:$0xf]
  %v155 = vld [vmem:[%s2 + $0x8] sm:$0xf]
  %v156 = vld [vmem:[%s2 + $0xc] sm:$0xf]
  %v161 = vunpack.c.l.b16 %v153
  %v162 = vunpack.c.l.b16 %v154
  %v163 = vunpack.c.l.b16 %v155
  %v164 = vunpack.c.l.b16 %v156
  %v165 = vpack.c.b16 %v162, %v161
  %v166 = vpack.c.b16 %v164, %v163
  %vm169 = vcmask 261120
  %v171 = vsel %vm169, %v152, 0
  %173 = vmatprep.subr.bf16.mxu0 0
  %174 = vmatpush1.bf16.msra.mxu0 %v165
  %175 = vmatprep.subr.bf16.mxu0 0
  %176 = vmatpush1.bf16.msra.mxu0 %v166
  %177 = vmatprep.subr.bf16.mxu0 0
  %178 = vmatpush1.bf16.msra.mxu0 0
  %179 = vmatprep.subr.bf16.mxu0 0
  %180 = vmatpush1.bf16.msra.mxu0 0
  %181 = vmatprep.subr.bf16.mxu0 0
  %182 = vmatpush1.bf16.msra.mxu0 0
  %183 = vmatprep.subr.bf16.mxu0 0
  %184 = vmatpush1.bf16.msra.mxu0 0
  %185 = vmatprep.subr.bf16.mxu0 0
  %186 = vmatpush1.bf16.msra.mxu0 0
  %187 = vmatprep.subr.bf16.mxu0 0
  %188 = vmatpush1.bf16.msra.mxu0 0
  %189 = vmatprep.subr.bf16.mxu0 0
  %190 = vmatpush1.bf16.msra.mxu0 0
  %191 = vmatprep.subr.bf16.mxu0 0
  %192 = vmatpush1.bf16.msra.mxu0 0
  %193 = vmatprep.subr.bf16.mxu0 0
  %194 = vmatpush1.bf16.msra.mxu0 0
  %195 = vmatprep.subr.bf16.mxu0 0
  %196 = vmatpush1.bf16.msra.mxu0 0
  %197 = vmatprep.subr.bf16.mxu0 0
  %198 = vmatpush1.bf16.msra.mxu0 0
  %199 = vmatprep.subr.bf16.mxu0 0
  %200 = vmatpush1.bf16.msra.mxu0 0
  %201 = vmatprep.subr.bf16.mxu0 0
  %202 = vmatpush1.bf16.msra.mxu0 0
  %203 = vmatprep.subr.bf16.mxu0 0
  %204 = vmatpush1.bf16.msra.mxu0 0
  %205 = vmatprep.mubr.bf16.mxu0 0
  %206 = vmatmul.mubr.bf16.gmra.mrb[0].mxu0 %v171
  %v207 = vpop.f32.mrb[0].mxu0
  %v208 = vadd.f32 %v133, %v207
  %v209 = vpop.f32.mrb[0].mxu0
  %v210 = vpop.f32.mrb[0].mxu0
  %v211 = vpop.f32.mrb[0].mxu0
  %212 = vdwg.mxu0
  %v213 = vld [vmem:[#allocation3] sm:$0x1]
  %v214 = vld [vmem:[#allocation3 + $0x8] sm:$0x1]
  %v216 = vrot.slane %v208, 1
  %v219 = vadd.f32 %v213, %v208
  %v220 = vadd.f32 %v214, %v216
  %v221 = vxor.u32 %v219, 2147483648
  %v222 = vxor.u32 %v220, 2147483648
  %v223 = vmul.f32 %v221, 1.442695
  %v224 = vpow.pop %v223
  %v225 = vmul.f32 %v222, 1.442695
  %v226 = vpow.pop %v225
  %v227 = vadd.f32 %v224, 1.0
  %v228 = vadd.f32 %v226, 1.0
  %v229 = vrcp.pop %v227
  %v230 = vmul.f32 1.0, %v229
  %v231 = vrcp.pop %v228
  %v232 = vmul.f32 1.0, %v231
  %233 = vrot.lane.b32.xlu0 %v208, 64
  %v234 = vpop.permute.xlu0 %233
  %235 = vrot.lane.b32.xlu0 %v216, 64
  %v236 = vpop.permute.xlu0 %235
  %v239 = vmul.f32 %v230, %v234
  %v240 = vmul.f32 %v232, %v236
  %243 = vrot.lane.b32.xlu0 %v239, 64
  %v244 = vpop.permute.xlu0 %243
  %245 = vrot.lane.b32.xlu0 %v240, 64
  %v246 = vpop.permute.xlu0 %245
  %v249 = vadd.f32 %v213, %v244
  %v250 = vadd.f32 %v214, %v246
  %v251 = vtanh.pop %v249
  %v252 = vtanh.pop %v250
  %v253 = vsub.f32 1.0, %v230
  %v254 = vsub.f32 1.0, %v232
  %257 = vrot.lane.b32.xlu0 %v251, 96
  %v258 = vpop.permute.xlu0 %257
  %259 = vrot.lane.b32.xlu0 %v252, 96
  %v260 = vpop.permute.xlu0 %259
  %v263 = vmul.f32 %v253, %v258
  %v264 = vmul.f32 %v254, %v260
  %v266 = vrot.slane %v149, 1
  %267 = vrot.lane.b32.xlu0 %v149, 32
  %v268 = vpop.permute.xlu0 %267
  %269 = vrot.lane.b32.xlu0 %v266, 32
  %v270 = vpop.permute.xlu0 %269
  %v273 = vmul.f32 %v230, %v268
  %v274 = vmul.f32 %v232, %v270
  %v275 = vadd.f32 %v263, %v273
  %v276 = vadd.f32 %v264, %v274
  %v277 = vpack.c.bf16 %v275, %v275
  %v278 = vpack.c.bf16 %v276, %v276
  %v279 = vld [vmem:[%s5] sm:$0xf]
  %v280 = vld [vmem:[%s5 + $0x4] sm:$0xf]
  %v281 = vld [vmem:[%s5 + $0x8] sm:$0xf]
  %v282 = vld [vmem:[%s5 + $0xc] sm:$0xf]
  %v285 = vunpack.c.l.b16 %v277
  %v286 = vunpack.c.l.b16 %v278
  %v287 = vrot.slane %v286, 7
  %vm288 = vcmask 1041409
  %v289 = vsel %vm288, %v287, %v285
  %v290 = vpack.c.b16 %v289, %v289
  %291 = vrot.lane.b32.xlu0 %v290, 96
  %v292 = vpop.permute.xlu0 %291
  %v297 = vunpack.c.l.b16 %v279
  %v298 = vunpack.c.l.b16 %v280
  %v299 = vunpack.c.l.b16 %v281
  %v300 = vunpack.c.l.b16 %v282
  %v301 = vpack.c.b16 %v298, %v297
  %v302 = vpack.c.b16 %v300, %v299
  %v306 = vsel %vm169, %v292, 0
  %308 = vmatprep.subr.bf16.mxu0 0
  %309 = vmatpush1.bf16.msra.mxu0 %v301
  %310 = vmatprep.subr.bf16.mxu0 0
  %311 = vmatpush1.bf16.msra.mxu0 %v302
  %312 = vmatprep.subr.bf16.mxu0 0
  %313 = vmatpush1.bf16.msra.mxu0 0
  %314 = vmatprep.subr.bf16.mxu0 0
  %315 = vmatpush1.bf16.msra.mxu0 0
  %316 = vmatprep.subr.bf16.mxu0 0
  %317 = vmatpush1.bf16.msra.mxu0 0
  %318 = vmatprep.subr.bf16.mxu0 0
  %319 = vmatpush1.bf16.msra.mxu0 0
  %320 = vmatprep.subr.bf16.mxu0 0
  %321 = vmatpush1.bf16.msra.mxu0 0
  %322 = vmatprep.subr.bf16.mxu0 0
  %323 = vmatpush1.bf16.msra.mxu0 0
  %324 = vmatprep.subr.bf16.mxu0 0
  %325 = vmatpush1.bf16.msra.mxu0 0
  %326 = vmatprep.subr.bf16.mxu0 0
  %327 = vmatpush1.bf16.msra.mxu0 0
  %328 = vmatprep.subr.bf16.mxu0 0
  %329 = vmatpush1.bf16.msra.mxu0 0
  %330 = vmatprep.subr.bf16.mxu0 0
  %331 = vmatpush1.bf16.msra.mxu0 0
  %332 = vmatprep.subr.bf16.mxu0 0
  %333 = vmatpush1.bf16.msra.mxu0 0
  %334 = vmatprep.subr.bf16.mxu0 0
  %335 = vmatpush1.bf16.msra.mxu0 0
  %336 = vmatprep.subr.bf16.mxu0 0
  %337 = vmatpush1.bf16.msra.mxu0 0
  %338 = vmatprep.subr.bf16.mxu0 0
  %339 = vmatpush1.bf16.msra.mxu0 0
  %340 = vmatprep.mubr.bf16.mxu0 0
  %341 = vmatmul.mubr.bf16.gmra.mrb[0].mxu0 %v306
  %v342 = vpop.f32.mrb[0].mxu0
  %v343 = vadd.f32 %v140, %v342
  %v344 = vpop.f32.mrb[0].mxu0
  %v345 = vpop.f32.mrb[0].mxu0
  %v346 = vpop.f32.mrb[0].mxu0
  %347 = vdwg.mxu0
  %v348 = vpack.c.bf16 %v151, %v151
  %v349 = vld [vmem:[%s6] sm:$0xf]
  %v350 = vld [vmem:[%s6 + $0x4] sm:$0xf]
  %v351 = vld [vmem:[%s6 + $0x8] sm:$0xf]
  %v352 = vld [vmem:[%s6 + $0xc] sm:$0xf]
  %v357 = vunpack.c.l.b16 %v349
  %v358 = vunpack.c.l.b16 %v350
  %v359 = vunpack.c.l.b16 %v351
  %v360 = vunpack.c.l.b16 %v352
  %v361 = vpack.c.b16 %v358, %v357
  %v362 = vpack.c.b16 %v360, %v359
  %v366 = vsel %vm169, %v348, 0
  %368 = vmatprep.subr.bf16.mxu0 0
  %369 = vmatpush1.bf16.msra.mxu0 %v361
  %370 = vmatprep.subr.bf16.mxu0 0
  %371 = vmatpush1.bf16.msra.mxu0 %v362
  %372 = vmatprep.subr.bf16.mxu0 0
  %373 = vmatpush1.bf16.msra.mxu0 0
  %374 = vmatprep.subr.bf16.mxu0 0
  %375 = vmatpush1.bf16.msra.mxu0 0
  %376 = vmatprep.subr.bf16.mxu0 0
  %377 = vmatpush1.bf16.msra.mxu0 0
  %378 = vmatprep.subr.bf16.mxu0 0
  %379 = vmatpush1.bf16.msra.mxu0 0
  %380 = vmatprep.subr.bf16.mxu0 0
  %381 = vmatpush1.bf16.msra.mxu0 0
  %382 = vmatprep.subr.bf16.mxu0 0
  %383 = vmatpush1.bf16.msra.mxu0 0
  %384 = vmatprep.subr.bf16.mxu0 0
  %385 = vmatpush1.bf16.msra.mxu0 0
  %386 = vmatprep.subr.bf16.mxu0 0
  %387 = vmatpush1.bf16.msra.mxu0 0
  %388 = vmatprep.subr.bf16.mxu0 0
  %389 = vmatpush1.bf16.msra.mxu0 0
  %390 = vmatprep.subr.bf16.mxu0 0
  %391 = vmatpush1.bf16.msra.mxu0 0
  %392 = vmatprep.subr.bf16.mxu0 0
  %393 = vmatpush1.bf16.msra.mxu0 0
  %394 = vmatprep.subr.bf16.mxu0 0
  %395 = vmatpush1.bf16.msra.mxu0 0
  %396 = vmatprep.subr.bf16.mxu0 0
  %397 = vmatpush1.bf16.msra.mxu0 0
  %398 = vmatprep.subr.bf16.mxu0 0
  %399 = vmatpush1.bf16.msra.mxu0 0
  %400 = vmatprep.mubr.bf16.mxu0 0
  %401 = vmatmul.mubr.bf16.gmra.mrb[0].mxu0 %v366
  %v402 = vpop.f32.mrb[0].mxu0
  %v403 = vadd.f32 %v147, %v402
  %v404 = vpop.f32.mrb[0].mxu0
  %v405 = vpop.f32.mrb[0].mxu0
  %v406 = vpop.f32.mrb[0].mxu0
  %407 = vdwg.mxu0
  %v408 = vadd.f32 %v343, %v403
  %v409 = vxor.u32 %v408, 2147483648
  %v410 = vmul.f32 %v409, 1.442695
  %v411 = vpow.pop %v410
  %v412 = vadd.f32 %v411, 1.0
  %v413 = vrcp.pop %v412
  %v414 = vmul.f32 1.0, %v413
  %416 = vrot.lane.b32.xlu0 %v403, 64
  %v417 = vpop.permute.xlu0 %416
  %v419 = vmul.f32 %v414, %v417
  %421 = vrot.lane.b32.xlu0 %v419, 64
  %v422 = vpop.permute.xlu0 %421
  %v424 = vadd.f32 %v343, %v422
  %v425 = vtanh.pop %v424
  %v426 = vsub.f32 1.0, %v414
  %428 = vrot.lane.b32.xlu0 %v425, 96
  %v429 = vpop.permute.xlu0 %428
  %v431 = vmul.f32 %v426, %v429
  %433 = vrot.lane.b32.xlu0 %v151, 32
  %v434 = vpop.permute.xlu0 %433
  %v436 = vmul.f32 %v414, %v434
  %v437 = vadd.f32 %v431, %v436
  %438 = vmatprep.subr.bf16.mxu0 0
  %439 = vmatpush1.bf16.msra.mxu0 %v165
  %440 = vmatprep.subr.bf16.mxu0 0
  %441 = vmatpush1.bf16.msra.mxu0 %v166
  %442 = vmatprep.subr.bf16.mxu0 0
  %443 = vmatpush1.bf16.msra.mxu0 0
  %444 = vmatprep.subr.bf16.mxu0 0
  %445 = vmatpush1.bf16.msra.mxu0 0
  %446 = vmatprep.subr.bf16.mxu0 0
  %447 = vmatpush1.bf16.msra.mxu0 0
  %448 = vmatprep.subr.bf16.mxu0 0
  %449 = vmatpush1.bf16.msra.mxu0 0
  %450 = vmatprep.subr.bf16.mxu0 0
  %451 = vmatpush1.bf16.msra.mxu0 0
  %452 = vmatprep.subr.bf16.mxu0 0
  %453 = vmatpush1.bf16.msra.mxu0 0
  %454 = vmatprep.subr.bf16.mxu0 0
  %455 = vmatpush1.bf16.msra.mxu0 0
  %456 = vmatprep.subr.bf16.mxu0 0
  %457 = vmatpush1.bf16.msra.mxu0 0
  %458 = vmatprep.subr.bf16.mxu0 0
  %459 = vmatpush1.bf16.msra.mxu0 0
  %460 = vmatprep.subr.bf16.mxu0 0
  %461 = vmatpush1.bf16.msra.mxu0 0
  %462 = vmatprep.subr.bf16.mxu0 0
  %463 = vmatpush1.bf16.msra.mxu0 0
  %464 = vmatprep.subr.bf16.mxu0 0
  %465 = vmatpush1.bf16.msra.mxu0 0
  %466 = vmatprep.subr.bf16.mxu0 0
  %467 = vmatpush1.bf16.msra.mxu0 0
  %468 = vmatprep.subr.bf16.mxu0 0
  %469 = vmatpush1.bf16.msra.mxu0 0
  %470 = vmatprep.mubr.bf16.mxu0 0
  %471 = vmatmul.mubr.bf16.gmra.mrb[0].mxu0 %v306
  %v472 = vpop.f32.mrb[0].mxu0
  %v473 = vadd.f32 %v133, %v472
  %v474 = vpop.f32.mrb[0].mxu0
  %v475 = vpop.f32.mrb[0].mxu0
  %v476 = vpop.f32.mrb[0].mxu0
  %477 = vdwg.mxu0
  %v478 = vld [vmem:[#allocation3 + $0x1] sm:$0x1]
  %v479 = vld [vmem:[#allocation3 + $0x9] sm:$0x1]
  %v481 = vrot.slane %v473, 1
  %v484 = vadd.f32 %v478, %v473
  %v485 = vadd.f32 %v479, %v481
  %v486 = vxor.u32 %v484, 2147483648
  %v487 = vxor.u32 %v485, 2147483648
  %v488 = vmul.f32 %v486, 1.442695
  %v489 = vpow.pop %v488
  %v490 = vmul.f32 %v487, 1.442695
  %v491 = vpow.pop %v490
  %v492 = vadd.f32 %v489, 1.0
  %v493 = vadd.f32 %v491, 1.0
  %v494 = vrcp.pop %v492
  %v495 = vmul.f32 1.0, %v494
  %v496 = vrcp.pop %v493
  %v497 = vmul.f32 1.0, %v496
  %498 = vrot.lane.b32.xlu0 %v473, 64
  %v499 = vpop.permute.xlu0 %498
  %500 = vrot.lane.b32.xlu0 %v481, 64
  %v501 = vpop.permute.xlu0 %500
  %v504 = vmul.f32 %v495, %v499
  %v505 = vmul.f32 %v497, %v501
  %508 = vrot.lane.b32.xlu0 %v504, 64
  %v509 = vpop.permute.xlu0 %508
  %510 = vrot.lane.b32.xlu0 %v505, 64
  %v511 = vpop.permute.xlu0 %510
  %v514 = vadd.f32 %v478, %v509
  %v515 = vadd.f32 %v479, %v511
  %v516 = vtanh.pop %v514
  %v517 = vtanh.pop %v515
  %v518 = vsub.f32 1.0, %v495
  %v519 = vsub.f32 1.0, %v497
  %522 = vrot.lane.b32.xlu0 %v516, 96
  %v523 = vpop.permute.xlu0 %522
  %524 = vrot.lane.b32.xlu0 %v517, 96
  %v525 = vpop.permute.xlu0 %524
  %v528 = vmul.f32 %v518, %v523
  %v529 = vmul.f32 %v519, %v525
  %v530 = vmul.f32 %v495, %v275
  %v531 = vmul.f32 %v497, %v276
  %v532 = vadd.f32 %v528, %v530
  %v533 = vadd.f32 %v529, %v531
  %v534 = vpack.c.bf16 %v532, %v532
  %v535 = vpack.c.bf16 %v533, %v533
  %v538 = vunpack.c.l.b16 %v534
  %v539 = vunpack.c.l.b16 %v535
  %v540 = vrot.slane %v539, 7
  %v541 = vsel %vm288, %v540, %v538
  %v542 = vpack.c.b16 %v541, %v541
  %543 = vrot.lane.b32.xlu0 %v542, 96
  %v544 = vpop.permute.xlu0 %543
  %v546 = vsel %vm169, %v544, 0
  %548 = vmatprep.subr.bf16.mxu0 0
  %549 = vmatpush1.bf16.msra.mxu0 %v301
  %550 = vmatprep.subr.bf16.mxu0 0
  %551 = vmatpush1.bf16.msra.mxu0 %v302
  %552 = vmatprep.subr.bf16.mxu0 0
  %553 = vmatpush1.bf16.msra.mxu0 0
  %554 = vmatprep.subr.bf16.mxu0 0
  %555 = vmatpush1.bf16.msra.mxu0 0
  %556 = vmatprep.subr.bf16.mxu0 0
  %557 = vmatpush1.bf16.msra.mxu0 0
  %558 = vmatprep.subr.bf16.mxu0 0
  %559 = vmatpush1.bf16.msra.mxu0 0
  %560 = vmatprep.subr.bf16.mxu0 0
  %561 = vmatpush1.bf16.msra.mxu0 0
  %562 = vmatprep.subr.bf16.mxu0 0
  %563 = vmatpush1.bf16.msra.mxu0 0
  %564 = vmatprep.subr.bf16.mxu0 0
  %565 = vmatpush1.bf16.msra.mxu0 0
  %566 = vmatprep.subr.bf16.mxu0 0
  %567 = vmatpush1.bf16.msra.mxu0 0
  %568 = vmatprep.subr.bf16.mxu0 0
  %569 = vmatpush1.bf16.msra.mxu0 0
  %570 = vmatprep.subr.bf16.mxu0 0
  %571 = vmatpush1.bf16.msra.mxu0 0
  %572 = vmatprep.subr.bf16.mxu0 0
  %573 = vmatpush1.bf16.msra.mxu0 0
  %574 = vmatprep.subr.bf16.mxu0 0
  %575 = vmatpush1.bf16.msra.mxu0 0
  %576 = vmatprep.subr.bf16.mxu0 0
  %577 = vmatpush1.bf16.msra.mxu0 0
  %578 = vmatprep.subr.bf16.mxu0 0
  %579 = vmatpush1.bf16.msra.mxu0 0
  %580 = vmatprep.mubr.bf16.mxu0 0
  %581 = vmatmul.mubr.bf16.gmra.mrb[0].mxu0 %v546
  %v582 = vpop.f32.mrb[0].mxu0
  %v583 = vadd.f32 %v140, %v582
  %v584 = vpop.f32.mrb[0].mxu0
  %v585 = vpop.f32.mrb[0].mxu0
  %v586 = vpop.f32.mrb[0].mxu0
  %587 = vdwg.mxu0
  %v588 = vpack.c.bf16 %v437, %v437
  %590 = vrot.lane.b32.xlu0 %v588, 96
  %v591 = vpop.permute.xlu0 %590
  %v593 = vsel %vm169, %v591, 0
  %595 = vmatprep.subr.bf16.mxu0 0
  %596 = vmatpush1.bf16.msra.mxu0 %v361
  %597 = vmatprep.subr.bf16.mxu0 0
  %598 = vmatpush1.bf16.msra.mxu0 %v362
  %599 = vmatprep.subr.bf16.mxu0 0
  %600 = vmatpush1.bf16.msra.mxu0 0
  %601 = vmatprep.subr.bf16.mxu0 0
  %602 = vmatpush1.bf16.msra.mxu0 0
  %603 = vmatprep.subr.bf16.mxu0 0
  %604 = vmatpush1.bf16.msra.mxu0 0
  %605 = vmatprep.subr.bf16.mxu0 0
  %606 = vmatpush1.bf16.msra.mxu0 0
  %607 = vmatprep.subr.bf16.mxu0 0
  %608 = vmatpush1.bf16.msra.mxu0 0
  %609 = vmatprep.subr.bf16.mxu0 0
  %610 = vmatpush1.bf16.msra.mxu0 0
  %611 = vmatprep.subr.bf16.mxu0 0
  %612 = vmatpush1.bf16.msra.mxu0 0
  %613 = vmatprep.subr.bf16.mxu0 0
  %614 = vmatpush1.bf16.msra.mxu0 0
  %615 = vmatprep.subr.bf16.mxu0 0
  %616 = vmatpush1.bf16.msra.mxu0 0
  %617 = vmatprep.subr.bf16.mxu0 0
  %618 = vmatpush1.bf16.msra.mxu0 0
  %619 = vmatprep.subr.bf16.mxu0 0
  %620 = vmatpush1.bf16.msra.mxu0 0
  %621 = vmatprep.subr.bf16.mxu0 0
  %622 = vmatpush1.bf16.msra.mxu0 0
  %623 = vmatprep.subr.bf16.mxu0 0
  %624 = vmatpush1.bf16.msra.mxu0 0
  %625 = vmatprep.subr.bf16.mxu0 0
  %626 = vmatpush1.bf16.msra.mxu0 0
  %627 = vmatprep.mubr.bf16.mxu0 0
  %628 = vmatmul.mubr.bf16.gmra.mrb[0].mxu0 %v593
  %v629 = vpop.f32.mrb[0].mxu0
  %v630 = vadd.f32 %v147, %v629
  %v631 = vpop.f32.mrb[0].mxu0
  %v632 = vpop.f32.mrb[0].mxu0
  %v633 = vpop.f32.mrb[0].mxu0
  %634 = vdwg.mxu0
  %v635 = vadd.f32 %v583, %v630
  %v636 = vxor.u32 %v635, 2147483648
  %v637 = vmul.f32 %v636, 1.442695
  %v638 = vpow.pop %v637
  %v639 = vadd.f32 %v638, 1.0
  %v640 = vrcp.pop %v639
  %v641 = vmul.f32 1.0, %v640
  %643 = vrot.lane.b32.xlu0 %v630, 64
  %v644 = vpop.permute.xlu0 %643
  %v646 = vmul.f32 %v641, %v644
  %648 = vrot.lane.b32.xlu0 %v646, 64
  %v649 = vpop.permute.xlu0 %648
  %v651 = vadd.f32 %v583, %v649
  %v652 = vtanh.pop %v651
  %v653 = vsub.f32 1.0, %v641
  %655 = vrot.lane.b32.xlu0 %v652, 96
  %v656 = vpop.permute.xlu0 %655
  %v658 = vmul.f32 %v653, %v656
  %v659 = vmul.f32 %v641, %v437
  %v660 = vadd.f32 %v658, %v659
  %661 = vmatprep.subr.bf16.mxu0 0
  %662 = vmatpush1.bf16.msra.mxu0 %v165
  %663 = vmatprep.subr.bf16.mxu0 0
  %664 = vmatpush1.bf16.msra.mxu0 %v166
  %665 = vmatprep.subr.bf16.mxu0 0
  %666 = vmatpush1.bf16.msra.mxu0 0
  %667 = vmatprep.subr.bf16.mxu0 0
  %668 = vmatpush1.bf16.msra.mxu0 0
  %669 = vmatprep.subr.bf16.mxu0 0
  %670 = vmatpush1.bf16.msra.mxu0 0
  %671 = vmatprep.subr.bf16.mxu0 0
  %672 = vmatpush1.bf16.msra.mxu0 0
  %673 = vmatprep.subr.bf16.mxu0 0
  %674 = vmatpush1.bf16.msra.mxu0 0
  %675 = vmatprep.subr.bf16.mxu0 0
  %676 = vmatpush1.bf16.msra.mxu0 0
  %677 = vmatprep.subr.bf16.mxu0 0
  %678 = vmatpush1.bf16.msra.mxu0 0
  %679 = vmatprep.subr.bf16.mxu0 0
  %680 = vmatpush1.bf16.msra.mxu0 0
  %681 = vmatprep.subr.bf16.mxu0 0
  %682 = vmatpush1.bf16.msra.mxu0 0
  %683 = vmatprep.subr.bf16.mxu0 0
  %684 = vmatpush1.bf16.msra.mxu0 0
  %685 = vmatprep.subr.bf16.mxu0 0
  %686 = vmatpush1.bf16.msra.mxu0 0
  %687 = vmatprep.subr.bf16.mxu0 0
  %688 = vmatpush1.bf16.msra.mxu0 0
  %689 = vmatprep.subr.bf16.mxu0 0
  %690 = vmatpush1.bf16.msra.mxu0 0
  %691 = vmatprep.subr.bf16.mxu0 0
  %692 = vmatpush1.bf16.msra.mxu0 0
  %693 = vmatprep.mubr.bf16.mxu0 0
  %694 = vmatmul.mubr.bf16.gmra.mrb[0].mxu0 %v546
  %v695 = vpop.f32.mrb[0].mxu0
  %v696 = vadd.f32 %v133, %v695
  %v697 = vpop.f32.mrb[0].mxu0
  %v698 = vpop.f32.mrb[0].mxu0
  %v699 = vpop.f32.mrb[0].mxu0
  %700 = vdwg.mxu0
  %v701 = vld [vmem:[#allocation3 + $0x2] sm:$0x1]
  %v702 = vld [vmem:[#allocation3 + $0xa] sm:$0x1]
  %v704 = vrot.slane %v696, 1
  %v707 = vadd.f32 %v701, %v696
  %v708 = vadd.f32 %v702, %v704
  %v709 = vxor.u32 %v707, 2147483648
  %v710 = vxor.u32 %v708, 2147483648
  %v711 = vmul.f32 %v709, 1.442695
  %v712 = vpow.pop %v711
  %v713 = vmul.f32 %v710, 1.442695
  %v714 = vpow.pop %v713
  %v715 = vadd.f32 %v712, 1.0
  %v716 = vadd.f32 %v714, 1.0
  %v717 = vrcp.pop %v715
  %v718 = vmul.f32 1.0, %v717
  %v719 = vrcp.pop %v716
  %v720 = vmul.f32 1.0, %v719
  %721 = vrot.lane.b32.xlu0 %v696, 64
  %v722 = vpop.permute.xlu0 %721
  %723 = vrot.lane.b32.xlu0 %v704, 64
  %v724 = vpop.permute.xlu0 %723
  %v727 = vmul.f32 %v718, %v722
  %v728 = vmul.f32 %v720, %v724
  %731 = vrot.lane.b32.xlu0 %v727, 64
  %v732 = vpop.permute.xlu0 %731
  %733 = vrot.lane.b32.xlu0 %v728, 64
  %v734 = vpop.permute.xlu0 %733
  %v737 = vadd.f32 %v701, %v732
  %v738 = vadd.f32 %v702, %v734
  %v739 = vtanh.pop %v737
  %v740 = vtanh.pop %v738
  %v741 = vsub.f32 1.0, %v718
  %v742 = vsub.f32 1.0, %v720
  %745 = vrot.lane.b32.xlu0 %v739, 96
  %v746 = vpop.permute.xlu0 %745
  %747 = vrot.lane.b32.xlu0 %v740, 96
  %v748 = vpop.permute.xlu0 %747
  %v751 = vmul.f32 %v741, %v746
  %v752 = vmul.f32 %v742, %v748
  %v753 = vmul.f32 %v718, %v532
  %v754 = vmul.f32 %v720, %v533
  %v755 = vadd.f32 %v751, %v753
  %v756 = vadd.f32 %v752, %v754
  %v757 = vpack.c.bf16 %v755, %v755
  %v758 = vpack.c.bf16 %v756, %v756
  %v761 = vunpack.c.l.b16 %v757
  %v762 = vunpack.c.l.b16 %v758
  %v763 = vrot.slane %v762, 7
  %v764 = vsel %vm288, %v763, %v761
  %v765 = vpack.c.b16 %v764, %v764
  %766 = vrot.lane.b32.xlu0 %v765, 96
  %v767 = vpop.permute.xlu0 %766
  %v769 = vsel %vm169, %v767, 0
  %771 = vmatprep.subr.bf16.mxu0 0
  %772 = vmatpush1.bf16.msra.mxu0 %v301
  %773 = vmatprep.subr.bf16.mxu0 0
  %774 = vmatpush1.bf16.msra.mxu0 %v302
  %775 = vmatprep.subr.bf16.mxu0 0
  %776 = vmatpush1.bf16.msra.mxu0 0
  %777 = vmatprep.subr.bf16.mxu0 0
  %778 = vmatpush1.bf16.msra.mxu0 0
  %779 = vmatprep.subr.bf16.mxu0 0
  %780 = vmatpush1.bf16.msra.mxu0 0
  %781 = vmatprep.subr.bf16.mxu0 0
  %782 = vmatpush1.bf16.msra.mxu0 0
  %783 = vmatprep.subr.bf16.mxu0 0
  %784 = vmatpush1.bf16.msra.mxu0 0
  %785 = vmatprep.subr.bf16.mxu0 0
  %786 = vmatpush1.bf16.msra.mxu0 0
  %787 = vmatprep.subr.bf16.mxu0 0
  %788 = vmatpush1.bf16.msra.mxu0 0
  %789 = vmatprep.subr.bf16.mxu0 0
  %790 = vmatpush1.bf16.msra.mxu0 0
  %791 = vmatprep.subr.bf16.mxu0 0
  %792 = vmatpush1.bf16.msra.mxu0 0
  %793 = vmatprep.subr.bf16.mxu0 0
  %794 = vmatpush1.bf16.msra.mxu0 0
  %795 = vmatprep.subr.bf16.mxu0 0
  %796 = vmatpush1.bf16.msra.mxu0 0
  %797 = vmatprep.subr.bf16.mxu0 0
  %798 = vmatpush1.bf16.msra.mxu0 0
  %799 = vmatprep.subr.bf16.mxu0 0
  %800 = vmatpush1.bf16.msra.mxu0 0
  %801 = vmatprep.subr.bf16.mxu0 0
  %802 = vmatpush1.bf16.msra.mxu0 0
  %803 = vmatprep.mubr.bf16.mxu0 0
  %804 = vmatmul.mubr.bf16.gmra.mrb[0].mxu0 %v769
  %v805 = vpop.f32.mrb[0].mxu0
  %v806 = vadd.f32 %v140, %v805
  %v807 = vpop.f32.mrb[0].mxu0
  %v808 = vpop.f32.mrb[0].mxu0
  %v809 = vpop.f32.mrb[0].mxu0
  %810 = vdwg.mxu0
  %v811 = vpack.c.bf16 %v660, %v660
  %813 = vrot.lane.b32.xlu0 %v811, 96
  %v814 = vpop.permute.xlu0 %813
  %v816 = vsel %vm169, %v814, 0
  %818 = vmatprep.subr.bf16.mxu0 0
  %819 = vmatpush1.bf16.msra.mxu0 %v361
  %820 = vmatprep.subr.bf16.mxu0 0
  %821 = vmatpush1.bf16.msra.mxu0 %v362
  %822 = vmatprep.subr.bf16.mxu0 0
  %823 = vmatpush1.bf16.msra.mxu0 0
  %824 = vmatprep.subr.bf16.mxu0 0
  %825 = vmatpush1.bf16.msra.mxu0 0
  %826 = vmatprep.subr.bf16.mxu0 0
  %827 = vmatpush1.bf16.msra.mxu0 0
  %828 = vmatprep.subr.bf16.mxu0 0
  %829 = vmatpush1.bf16.msra.mxu0 0
  %830 = vmatprep.subr.bf16.mxu0 0
  %831 = vmatpush1.bf16.msra.mxu0 0
  %832 = vmatprep.subr.bf16.mxu0 0
  %833 = vmatpush1.bf16.msra.mxu0 0
  %834 = vmatprep.subr.bf16.mxu0 0
  %835 = vmatpush1.bf16.msra.mxu0 0
  %836 = vmatprep.subr.bf16.mxu0 0
  %837 = vmatpush1.bf16.msra.mxu0 0
  %838 = vmatprep.subr.bf16.mxu0 0
  %839 = vmatpush1.bf16.msra.mxu0 0
  %840 = vmatprep.subr.bf16.mxu0 0
  %841 = vmatpush1.bf16.msra.mxu0 0
  %842 = vmatprep.subr.bf16.mxu0 0
  %843 = vmatpush1.bf16.msra.mxu0 0
  %844 = vmatprep.subr.bf16.mxu0 0
  %845 = vmatpush1.bf16.msra.mxu0 0
  %846 = vmatprep.subr.bf16.mxu0 0
  %847 = vmatpush1.bf16.msra.mxu0 0
  %848 = vmatprep.subr.bf16.mxu0 0
  %849 = vmatpush1.bf16.msra.mxu0 0
  %850 = vmatprep.mubr.bf16.mxu0 0
  %851 = vmatmul.mubr.bf16.gmra.mrb[0].mxu0 %v816
  %v852 = vpop.f32.mrb[0].mxu0
  %v853 = vadd.f32 %v147, %v852
  %v854 = vpop.f32.mrb[0].mxu0
  %v855 = vpop.f32.mrb[0].mxu0
  %v856 = vpop.f32.mrb[0].mxu0
  %857 = vdwg.mxu0
  %v858 = vadd.f32 %v806, %v853
  %v859 = vxor.u32 %v858, 2147483648
  %v860 = vmul.f32 %v859, 1.442695
  %v861 = vpow.pop %v860
  %v862 = vadd.f32 %v861, 1.0
  %v863 = vrcp.pop %v862
  %v864 = vmul.f32 1.0, %v863
  %866 = vrot.lane.b32.xlu0 %v853, 64
  %v867 = vpop.permute.xlu0 %866
  %v869 = vmul.f32 %v864, %v867
  %871 = vrot.lane.b32.xlu0 %v869, 64
  %v872 = vpop.permute.xlu0 %871
  %v874 = vadd.f32 %v806, %v872
  %v875 = vtanh.pop %v874
  %v876 = vsub.f32 1.0, %v864
  %878 = vrot.lane.b32.xlu0 %v875, 96
  %v879 = vpop.permute.xlu0 %878
  %v881 = vmul.f32 %v876, %v879
  %v882 = vmul.f32 %v864, %v660
  %v883 = vadd.f32 %v881, %v882
  %884 = vmatprep.subr.bf16.mxu0 0
  %885 = vmatpush1.bf16.msra.mxu0 %v165
  %886 = vmatprep.subr.bf16.mxu0 0
  %887 = vmatpush1.bf16.msra.mxu0 %v166
  %888 = vmatprep.subr.bf16.mxu0 0
  %889 = vmatpush1.bf16.msra.mxu0 0
  %890 = vmatprep.subr.bf16.mxu0 0
  %891 = vmatpush1.bf16.msra.mxu0 0
  %892 = vmatprep.subr.bf16.mxu0 0
  %893 = vmatpush1.bf16.msra.mxu0 0
  %894 = vmatprep.subr.bf16.mxu0 0
  %895 = vmatpush1.bf16.msra.mxu0 0
  %896 = vmatprep.subr.bf16.mxu0 0
  %897 = vmatpush1.bf16.msra.mxu0 0
  %898 = vmatprep.subr.bf16.mxu0 0
  %899 = vmatpush1.bf16.msra.mxu0 0
  %900 = vmatprep.subr.bf16.mxu0 0
  %901 = vmatpush1.bf16.msra.mxu0 0
  %902 = vmatprep.subr.bf16.mxu0 0
  %903 = vmatpush1.bf16.msra.mxu0 0
  %904 = vmatprep.subr.bf16.mxu0 0
  %905 = vmatpush1.bf16.msra.mxu0 0
  %906 = vmatprep.subr.bf16.mxu0 0
  %907 = vmatpush1.bf16.msra.mxu0 0
  %908 = vmatprep.subr.bf16.mxu0 0
  %909 = vmatpush1.bf16.msra.mxu0 0
  %910 = vmatprep.subr.bf16.mxu0 0
  %911 = vmatpush1.bf16.msra.mxu0 0
  %912 = vmatprep.subr.bf16.mxu0 0
  %913 = vmatpush1.bf16.msra.mxu0 0
  %914 = vmatprep.subr.bf16.mxu0 0
  %915 = vmatpush1.bf16.msra.mxu0 0
  %916 = vmatprep.mubr.bf16.mxu0 0
  %917 = vmatmul.mubr.bf16.gmra.mrb[0].mxu0 %v769
  %v918 = vpop.f32.mrb[0].mxu0
  %v919 = vadd.f32 %v133, %v918
  %v920 = vpop.f32.mrb[0].mxu0
  %v921 = vpop.f32.mrb[0].mxu0
  %v922 = vpop.f32.mrb[0].mxu0
  %923 = vdwg.mxu0
  %v924 = vld [vmem:[#allocation3 + $0x3] sm:$0x1]
  %v925 = vld [vmem:[#allocation3 + $0xb] sm:$0x1]
  %v927 = vrot.slane %v919, 1
  %v930 = vadd.f32 %v924, %v919
  %v931 = vadd.f32 %v925, %v927
  %v932 = vxor.u32 %v930, 2147483648
  %v933 = vxor.u32 %v931, 2147483648
  %v934 = vmul.f32 %v932, 1.442695
  %v935 = vpow.pop %v934
  %v936 = vmul.f32 %v933, 1.442695
  %v937 = vpow.pop %v936
  %v938 = vadd.f32 %v935, 1.0
  %v939 = vadd.f32 %v937, 1.0
  %v940 = vrcp.pop %v938
  %v941 = vmul.f32 1.0, %v940
  %v942 = vrcp.pop %v939
  %v943 = vmul.f32 1.0, %v942
  %944 = vrot.lane.b32.xlu0 %v919, 64
  %v945 = vpop.permute.xlu0 %944
  %946 = vrot.lane.b32.xlu0 %v927, 64
  %v947 = vpop.permute.xlu0 %946
  %v950 = vmul.f32 %v941, %v945
  %v951 = vmul.f32 %v943, %v947
  %954 = vrot.lane.b32.xlu0 %v950, 64
  %v955 = vpop.permute.xlu0 %954
  %956 = vrot.lane.b32.xlu0 %v951, 64
  %v957 = vpop.permute.xlu0 %956
  %v960 = vadd.f32 %v924, %v955
  %v961 = vadd.f32 %v925, %v957
  %v962 = vtanh.pop %v960
  %v963 = vtanh.pop %v961
  %v964 = vsub.f32 1.0, %v941
  %v965 = vsub.f32 1.0, %v943
  %968 = vrot.lane.b32.xlu0 %v962, 96
  %v969 = vpop.permute.xlu0 %968
  %970 = vrot.lane.b32.xlu0 %v963, 96
  %v971 = vpop.permute.xlu0 %970
  %v974 = vmul.f32 %v964, %v969
  %v975 = vmul.f32 %v965, %v971
  %v976 = vmul.f32 %v941, %v755
  %v977 = vmul.f32 %v943, %v756
  %v978 = vadd.f32 %v974, %v976
  %v979 = vadd.f32 %v975, %v977
  %v980 = vpack.c.bf16 %v978, %v978
  %v981 = vpack.c.bf16 %v979, %v979
  %v984 = vunpack.c.l.b16 %v980
  %v985 = vunpack.c.l.b16 %v981
  %v986 = vrot.slane %v985, 7
  %v987 = vsel %vm288, %v986, %v984
  %v988 = vpack.c.b16 %v987, %v987
  %989 = vrot.lane.b32.xlu0 %v988, 96
  %v990 = vpop.permute.xlu0 %989
  %v992 = vsel %vm169, %v990, 0
  %994 = vmatprep.subr.bf16.mxu0 0
  %995 = vmatpush1.bf16.msra.mxu0 %v301
  %996 = vmatprep.subr.bf16.mxu0 0
  %997 = vmatpush1.bf16.msra.mxu0 %v302
  %998 = vmatprep.subr.bf16.mxu0 0
  %999 = vmatpush1.bf16.msra.mxu0 0
  %1000 = vmatprep.subr.bf16.mxu0 0
  %1001 = vmatpush1.bf16.msra.mxu0 0
  %1002 = vmatprep.subr.bf16.mxu0 0
  %1003 = vmatpush1.bf16.msra.mxu0 0
  %1004 = vmatprep.subr.bf16.mxu0 0
  %1005 = vmatpush1.bf16.msra.mxu0 0
  %1006 = vmatprep.subr.bf16.mxu0 0
  %1007 = vmatpush1.bf16.msra.mxu0 0
  %1008 = vmatprep.subr.bf16.mxu0 0
  %1009 = vmatpush1.bf16.msra.mxu0 0
  %1010 = vmatprep.subr.bf16.mxu0 0
  %1011 = vmatpush1.bf16.msra.mxu0 0
  %1012 = vmatprep.subr.bf16.mxu0 0
  %1013 = vmatpush1.bf16.msra.mxu0 0
  %1014 = vmatprep.subr.bf16.mxu0 0
  %1015 = vmatpush1.bf16.msra.mxu0 0
  %1016 = vmatprep.subr.bf16.mxu0 0
  %1017 = vmatpush1.bf16.msra.mxu0 0
  %1018 = vmatprep.subr.bf16.mxu0 0
  %1019 = vmatpush1.bf16.msra.mxu0 0
  %1020 = vmatprep.subr.bf16.mxu0 0
  %1021 = vmatpush1.bf16.msra.mxu0 0
  %1022 = vmatprep.subr.bf16.mxu0 0
  %1023 = vmatpush1.bf16.msra.mxu0 0
  %1024 = vmatprep.subr.bf16.mxu0 0
  %1025 = vmatpush1.bf16.msra.mxu0 0
  %1026 = vmatprep.mubr.bf16.mxu0 0
  %1027 = vmatmul.mubr.bf16.gmra.mrb[0].mxu0 %v992
  %v1028 = vpop.f32.mrb[0].mxu0
  %v1029 = vadd.f32 %v140, %v1028
  %v1030 = vpop.f32.mrb[0].mxu0
  %v1031 = vpop.f32.mrb[0].mxu0
  %v1032 = vpop.f32.mrb[0].mxu0
  %1033 = vdwg.mxu0
  %v1034 = vpack.c.bf16 %v883, %v883
  %1036 = vrot.lane.b32.xlu0 %v1034, 96
  %v1037 = vpop.permute.xlu0 %1036
  %v1039 = vsel %vm169, %v1037, 0
  %1041 = vmatprep.subr.bf16.mxu0 0
  %1042 = vmatpush1.bf16.msra.mxu0 %v361
  %1043 = vmatprep.subr.bf16.mxu0 0
  %1044 = vmatpush1.bf16.msra.mxu0 %v362
  %1045 = vmatprep.subr.bf16.mxu0 0
  %1046 = vmatpush1.bf16.msra.mxu0 0
  %1047 = vmatprep.subr.bf16.mxu0 0
  %1048 = vmatpush1.bf16.msra.mxu0 0
  %1049 = vmatprep.subr.bf16.mxu0 0
  %1050 = vmatpush1.bf16.msra.mxu0 0
  %1051 = vmatprep.subr.bf16.mxu0 0
  %1052 = vmatpush1.bf16.msra.mxu0 0
  %1053 = vmatprep.subr.bf16.mxu0 0
  %1054 = vmatpush1.bf16.msra.mxu0 0
  %1055 = vmatprep.subr.bf16.mxu0 0
  %1056 = vmatpush1.bf16.msra.mxu0 0
  %1057 = vmatprep.subr.bf16.mxu0 0
  %1058 = vmatpush1.bf16.msra.mxu0 0
  %1059 = vmatprep.subr.bf16.mxu0 0
  %1060 = vmatpush1.bf16.msra.mxu0 0
  %1061 = vmatprep.subr.bf16.mxu0 0
  %1062 = vmatpush1.bf16.msra.mxu0 0
  %1063 = vmatprep.subr.bf16.mxu0 0
  %1064 = vmatpush1.bf16.msra.mxu0 0
  %1065 = vmatprep.subr.bf16.mxu0 0
  %1066 = vmatpush1.bf16.msra.mxu0 0
  %1067 = vmatprep.subr.bf16.mxu0 0
  %1068 = vmatpush1.bf16.msra.mxu0 0
  %1069 = vmatprep.subr.bf16.mxu0 0
  %1070 = vmatpush1.bf16.msra.mxu0 0
  %1071 = vmatprep.subr.bf16.mxu0 0
  %1072 = vmatpush1.bf16.msra.mxu0 0
  %1073 = vmatprep.mubr.bf16.mxu0 0
  %1074 = vmatmul.mubr.bf16.gmra.mrb[0].mxu0 %v1039
  %v1075 = vpop.f32.mrb[0].mxu0
  %v1076 = vadd.f32 %v147, %v1075
  %v1077 = vpop.f32.mrb[0].mxu0
  %v1078 = vpop.f32.mrb[0].mxu0
  %v1079 = vpop.f32.mrb[0].mxu0
  %1080 = vdwg.mxu0
  %v1081 = vadd.f32 %v1029, %v1076
  %v1082 = vxor.u32 %v1081, 2147483648
  %v1083 = vmul.f32 %v1082, 1.442695
  %v1084 = vpow.pop %v1083
  %v1085 = vadd.f32 %v1084, 1.0
  %v1086 = vrcp.pop %v1085
  %v1087 = vmul.f32 1.0, %v1086
  %1089 = vrot.lane.b32.xlu0 %v1076, 64
  %v1090 = vpop.permute.xlu0 %1089
  %v1092 = vmul.f32 %v1087, %v1090
  %1094 = vrot.lane.b32.xlu0 %v1092, 64
  %v1095 = vpop.permute.xlu0 %1094
  %v1097 = vadd.f32 %v1029, %v1095
  %v1098 = vtanh.pop %v1097
  %v1099 = vsub.f32 1.0, %v1087
  %1101 = vrot.lane.b32.xlu0 %v1098, 96
  %v1102 = vpop.permute.xlu0 %1101
  %v1104 = vmul.f32 %v1099, %v1102
  %v1105 = vmul.f32 %v1087, %v883
  %v1106 = vadd.f32 %v1104, %v1105
  %1107 = vmatprep.subr.bf16.mxu0 0
  %1108 = vmatpush1.bf16.msra.mxu0 %v165
  %1109 = vmatprep.subr.bf16.mxu0 0
  %1110 = vmatpush1.bf16.msra.mxu0 %v166
  %1111 = vmatprep.subr.bf16.mxu0 0
  %1112 = vmatpush1.bf16.msra.mxu0 0
  %1113 = vmatprep.subr.bf16.mxu0 0
  %1114 = vmatpush1.bf16.msra.mxu0 0
  %1115 = vmatprep.subr.bf16.mxu0 0
  %1116 = vmatpush1.bf16.msra.mxu0 0
  %1117 = vmatprep.subr.bf16.mxu0 0
  %1118 = vmatpush1.bf16.msra.mxu0 0
  %1119 = vmatprep.subr.bf16.mxu0 0
  %1120 = vmatpush1.bf16.msra.mxu0 0
  %1121 = vmatprep.subr.bf16.mxu0 0
  %1122 = vmatpush1.bf16.msra.mxu0 0
  %1123 = vmatprep.subr.bf16.mxu0 0
  %1124 = vmatpush1.bf16.msra.mxu0 0
  %1125 = vmatprep.subr.bf16.mxu0 0
  %1126 = vmatpush1.bf16.msra.mxu0 0
  %1127 = vmatprep.subr.bf16.mxu0 0
  %1128 = vmatpush1.bf16.msra.mxu0 0
  %1129 = vmatprep.subr.bf16.mxu0 0
  %1130 = vmatpush1.bf16.msra.mxu0 0
  %1131 = vmatprep.subr.bf16.mxu0 0
  %1132 = vmatpush1.bf16.msra.mxu0 0
  %1133 = vmatprep.subr.bf16.mxu0 0
  %1134 = vmatpush1.bf16.msra.mxu0 0
  %1135 = vmatprep.subr.bf16.mxu0 0
  %1136 = vmatpush1.bf16.msra.mxu0 0
  %1137 = vmatprep.subr.bf16.mxu0 0
  %1138 = vmatpush1.bf16.msra.mxu0 0
  %1139 = vmatprep.mubr.bf16.mxu0 0
  %1140 = vmatmul.mubr.bf16.gmra.mrb[0].mxu0 %v992
  %v1141 = vpop.f32.mrb[0].mxu0
  %v1142 = vadd.f32 %v133, %v1141
  %v1143 = vpop.f32.mrb[0].mxu0
  %v1144 = vpop.f32.mrb[0].mxu0
  %v1145 = vpop.f32.mrb[0].mxu0
  %1146 = vdwg.mxu0
  %v1147 = vld [vmem:[#allocation3 + $0x4] sm:$0x1]
  %v1148 = vld [vmem:[#allocation3 + $0xc] sm:$0x1]
  %v1150 = vrot.slane %v1142, 1
  %v1153 = vadd.f32 %v1147, %v1142
  %v1154 = vadd.f32 %v1148, %v1150
  %v1155 = vxor.u32 %v1153, 2147483648
  %v1156 = vxor.u32 %v1154, 2147483648
  %v1157 = vmul.f32 %v1155, 1.442695
  %v1158 = vpow.pop %v1157
  %v1159 = vmul.f32 %v1156, 1.442695
  %v1160 = vpow.pop %v1159
  %v1161 = vadd.f32 %v1158, 1.0
  %v1162 = vadd.f32 %v1160, 1.0
  %v1163 = vrcp.pop %v1161
  %v1164 = vmul.f32 1.0, %v1163
  %v1165 = vrcp.pop %v1162
  %v1166 = vmul.f32 1.0, %v1165
  %1167 = vrot.lane.b32.xlu0 %v1142, 64
  %v1168 = vpop.permute.xlu0 %1167
  %1169 = vrot.lane.b32.xlu0 %v1150, 64
  %v1170 = vpop.permute.xlu0 %1169
  %v1173 = vmul.f32 %v1164, %v1168
  %v1174 = vmul.f32 %v1166, %v1170
  %1177 = vrot.lane.b32.xlu0 %v1173, 64
  %v1178 = vpop.permute.xlu0 %1177
  %1179 = vrot.lane.b32.xlu0 %v1174, 64
  %v1180 = vpop.permute.xlu0 %1179
  %v1183 = vadd.f32 %v1147, %v1178
  %v1184 = vadd.f32 %v1148, %v1180
  %v1185 = vtanh.pop %v1183
  %v1186 = vtanh.pop %v1184
  %v1187 = vsub.f32 1.0, %v1164
  %v1188 = vsub.f32 1.0, %v1166
  %1191 = vrot.lane.b32.xlu0 %v1185, 96
  %v1192 = vpop.permute.xlu0 %1191
  %1193 = vrot.lane.b32.xlu0 %v1186, 96
  %v1194 = vpop.permute.xlu0 %1193
  %v1197 = vmul.f32 %v1187, %v1192
  %v1198 = vmul.f32 %v1188, %v1194
  %v1199 = vmul.f32 %v1164, %v978
  %v1200 = vmul.f32 %v1166, %v979
  %v1201 = vadd.f32 %v1197, %v1199
  %v1202 = vadd.f32 %v1198, %v1200
  %v1203 = vpack.c.bf16 %v1201, %v1201
  %v1204 = vpack.c.bf16 %v1202, %v1202
  %v1207 = vunpack.c.l.b16 %v1203
  %v1208 = vunpack.c.l.b16 %v1204
  %v1209 = vrot.slane %v1208, 7
  %v1210 = vsel %vm288, %v1209, %v1207
  %v1211 = vpack.c.b16 %v1210, %v1210
  %1212 = vrot.lane.b32.xlu0 %v1211, 96
  %v1213 = vpop.permute.xlu0 %1212
  %v1215 = vsel %vm169, %v1213, 0
  %1217 = vmatprep.subr.bf16.mxu0 0
  %1218 = vmatpush1.bf16.msra.mxu0 %v301
  %1219 = vmatprep.subr.bf16.mxu0 0
  %1220 = vmatpush1.bf16.msra.mxu0 %v302
  %1221 = vmatprep.subr.bf16.mxu0 0
  %1222 = vmatpush1.bf16.msra.mxu0 0
  %1223 = vmatprep.subr.bf16.mxu0 0
  %1224 = vmatpush1.bf16.msra.mxu0 0
  %1225 = vmatprep.subr.bf16.mxu0 0
  %1226 = vmatpush1.bf16.msra.mxu0 0
  %1227 = vmatprep.subr.bf16.mxu0 0
  %1228 = vmatpush1.bf16.msra.mxu0 0
  %1229 = vmatprep.subr.bf16.mxu0 0
  %1230 = vmatpush1.bf16.msra.mxu0 0
  %1231 = vmatprep.subr.bf16.mxu0 0
  %1232 = vmatpush1.bf16.msra.mxu0 0
  %1233 = vmatprep.subr.bf16.mxu0 0
  %1234 = vmatpush1.bf16.msra.mxu0 0
  %1235 = vmatprep.subr.bf16.mxu0 0
  %1236 = vmatpush1.bf16.msra.mxu0 0
  %1237 = vmatprep.subr.bf16.mxu0 0
  %1238 = vmatpush1.bf16.msra.mxu0 0
  %1239 = vmatprep.subr.bf16.mxu0 0
  %1240 = vmatpush1.bf16.msra.mxu0 0
  %1241 = vmatprep.subr.bf16.mxu0 0
  %1242 = vmatpush1.bf16.msra.mxu0 0
  %1243 = vmatprep.subr.bf16.mxu0 0
  %1244 = vmatpush1.bf16.msra.mxu0 0
  %1245 = vmatprep.subr.bf16.mxu0 0
  %1246 = vmatpush1.bf16.msra.mxu0 0
  %1247 = vmatprep.subr.bf16.mxu0 0
  %1248 = vmatpush1.bf16.msra.mxu0 0
  %1249 = vmatprep.mubr.bf16.mxu0 0
  %1250 = vmatmul.mubr.bf16.gmra.mrb[0].mxu0 %v1215
  %v1251 = vpop.f32.mrb[0].mxu0
  %v1252 = vadd.f32 %v140, %v1251
  %v1253 = vpop.f32.mrb[0].mxu0
  %v1254 = vpop.f32.mrb[0].mxu0
  %v1255 = vpop.f32.mrb[0].mxu0
  %1256 = vdwg.mxu0
  %v1257 = vpack.c.bf16 %v1106, %v1106
  %1259 = vrot.lane.b32.xlu0 %v1257, 96
  %v1260 = vpop.permute.xlu0 %1259
  %v1262 = vsel %vm169, %v1260, 0
  %1264 = vmatprep.subr.bf16.mxu0 0
  %1265 = vmatpush1.bf16.msra.mxu0 %v361
  %1266 = vmatprep.subr.bf16.mxu0 0
  %1267 = vmatpush1.bf16.msra.mxu0 %v362
  %1268 = vmatprep.subr.bf16.mxu0 0
  %1269 = vmatpush1.bf16.msra.mxu0 0
  %1270 = vmatprep.subr.bf16.mxu0 0
  %1271 = vmatpush1.bf16.msra.mxu0 0
  %1272 = vmatprep.subr.bf16.mxu0 0
  %1273 = vmatpush1.bf16.msra.mxu0 0
  %1274 = vmatprep.subr.bf16.mxu0 0
  %1275 = vmatpush1.bf16.msra.mxu0 0
  %1276 = vmatprep.subr.bf16.mxu0 0
  %1277 = vmatpush1.bf16.msra.mxu0 0
  %1278 = vmatprep.subr.bf16.mxu0 0
  %1279 = vmatpush1.bf16.msra.mxu0 0
  %1280 = vmatprep.subr.bf16.mxu0 0
  %1281 = vmatpush1.bf16.msra.mxu0 0
  %1282 = vmatprep.subr.bf16.mxu0 0
  %1283 = vmatpush1.bf16.msra.mxu0 0
  %1284 = vmatprep.subr.bf16.mxu0 0
  %1285 = vmatpush1.bf16.msra.mxu0 0
  %1286 = vmatprep.subr.bf16.mxu0 0
  %1287 = vmatpush1.bf16.msra.mxu0 0
  %1288 = vmatprep.subr.bf16.mxu0 0
  %1289 = vmatpush1.bf16.msra.mxu0 0
  %1290 = vmatprep.subr.bf16.mxu0 0
  %1291 = vmatpush1.bf16.msra.mxu0 0
  %1292 = vmatprep.subr.bf16.mxu0 0
  %1293 = vmatpush1.bf16.msra.mxu0 0
  %1294 = vmatprep.subr.bf16.mxu0 0
  %1295 = vmatpush1.bf16.msra.mxu0 0
  %1296 = vmatprep.mubr.bf16.mxu0 0
  %1297 = vmatmul.mubr.bf16.gmra.mrb[0].mxu0 %v1262
  %v1298 = vpop.f32.mrb[0].mxu0
  %v1299 = vadd.f32 %v147, %v1298
  %v1300 = vpop.f32.mrb[0].mxu0
  %v1301 = vpop.f32.mrb[0].mxu0
  %v1302 = vpop.f32.mrb[0].mxu0
  %1303 = vdwg.mxu0
  %v1304 = vadd.f32 %v1252, %v1299
  %v1305 = vxor.u32 %v1304, 2147483648
  %v1306 = vmul.f32 %v1305, 1.442695
  %v1307 = vpow.pop %v1306
  %v1308 = vadd.f32 %v1307, 1.0
  %v1309 = vrcp.pop %v1308
  %v1310 = vmul.f32 1.0, %v1309
  %1312 = vrot.lane.b32.xlu0 %v1299, 64
  %v1313 = vpop.permute.xlu0 %1312
  %v1315 = vmul.f32 %v1310, %v1313
  %1317 = vrot.lane.b32.xlu0 %v1315, 64
  %v1318 = vpop.permute.xlu0 %1317
  %v1320 = vadd.f32 %v1252, %v1318
  %v1321 = vtanh.pop %v1320
  %v1322 = vsub.f32 1.0, %v1310
  %1324 = vrot.lane.b32.xlu0 %v1321, 96
  %v1325 = vpop.permute.xlu0 %1324
  %v1327 = vmul.f32 %v1322, %v1325
  %v1328 = vmul.f32 %v1310, %v1106
  %v1329 = vadd.f32 %v1327, %v1328
  %1330 = vmatprep.subr.bf16.mxu0 0
  %1331 = vmatpush1.bf16.msra.mxu0 %v165
  %1332 = vmatprep.subr.bf16.mxu0 0
  %1333 = vmatpush1.bf16.msra.mxu0 %v166
  %1334 = vmatprep.subr.bf16.mxu0 0
  %1335 = vmatpush1.bf16.msra.mxu0 0
  %1336 = vmatprep.subr.bf16.mxu0 0
  %1337 = vmatpush1.bf16.msra.mxu0 0
  %1338 = vmatprep.subr.bf16.mxu0 0
  %1339 = vmatpush1.bf16.msra.mxu0 0
  %1340 = vmatprep.subr.bf16.mxu0 0
  %1341 = vmatpush1.bf16.msra.mxu0 0
  %1342 = vmatprep.subr.bf16.mxu0 0
  %1343 = vmatpush1.bf16.msra.mxu0 0
  %1344 = vmatprep.subr.bf16.mxu0 0
  %1345 = vmatpush1.bf16.msra.mxu0 0
  %1346 = vmatprep.subr.bf16.mxu0 0
  %1347 = vmatpush1.bf16.msra.mxu0 0
  %1348 = vmatprep.subr.bf16.mxu0 0
  %1349 = vmatpush1.bf16.msra.mxu0 0
  %1350 = vmatprep.subr.bf16.mxu0 0
  %1351 = vmatpush1.bf16.msra.mxu0 0
  %1352 = vmatprep.subr.bf16.mxu0 0
  %1353 = vmatpush1.bf16.msra.mxu0 0
  %1354 = vmatprep.subr.bf16.mxu0 0
  %1355 = vmatpush1.bf16.msra.mxu0 0
  %1356 = vmatprep.subr.bf16.mxu0 0
  %1357 = vmatpush1.bf16.msra.mxu0 0
  %1358 = vmatprep.subr.bf16.mxu0 0
  %1359 = vmatpush1.bf16.msra.mxu0 0
  %1360 = vmatprep.subr.bf16.mxu0 0
  %1361 = vmatpush1.bf16.msra.mxu0 0
  %1362 = vmatprep.mubr.bf16.mxu0 0
  %1363 = vmatmul.mubr.bf16.gmra.mrb[0].mxu0 %v1215
  %v1364 = vpop.f32.mrb[0].mxu0
  %v1365 = vadd.f32 %v133, %v1364
  %v1366 = vpop.f32.mrb[0].mxu0
  %v1367 = vpop.f32.mrb[0].mxu0
  %v1368 = vpop.f32.mrb[0].mxu0
  %1369 = vdwg.mxu0
  %v1370 = vld [vmem:[#allocation3 + $0x5] sm:$0x1]
  %v1371 = vld [vmem:[#allocation3 + $0xd] sm:$0x1]
  %v1373 = vrot.slane %v1365, 1
  %v1376 = vadd.f32 %v1370, %v1365
  %v1377 = vadd.f32 %v1371, %v1373
  %v1378 = vxor.u32 %v1376, 2147483648
  %v1379 = vxor.u32 %v1377, 2147483648
  %v1380 = vmul.f32 %v1378, 1.442695
  %v1381 = vpow.pop %v1380
  %v1382 = vmul.f32 %v1379, 1.442695
  %v1383 = vpow.pop %v1382
  %v1384 = vadd.f32 %v1381, 1.0
  %v1385 = vadd.f32 %v1383, 1.0
  %v1386 = vrcp.pop %v1384
  %v1387 = vmul.f32 1.0, %v1386
  %v1388 = vrcp.pop %v1385
  %v1389 = vmul.f32 1.0, %v1388
  %1390 = vrot.lane.b32.xlu0 %v1365, 64
  %v1391 = vpop.permute.xlu0 %1390
  %1392 = vrot.lane.b32.xlu0 %v1373, 64
  %v1393 = vpop.permute.xlu0 %1392
  %v1396 = vmul.f32 %v1387, %v1391
  %v1397 = vmul.f32 %v1389, %v1393
  %1400 = vrot.lane.b32.xlu0 %v1396, 64
  %v1401 = vpop.permute.xlu0 %1400
  %1402 = vrot.lane.b32.xlu0 %v1397, 64
  %v1403 = vpop.permute.xlu0 %1402
  %v1406 = vadd.f32 %v1370, %v1401
  %v1407 = vadd.f32 %v1371, %v1403
  %v1408 = vtanh.pop %v1406
  %v1409 = vtanh.pop %v1407
  %v1410 = vsub.f32 1.0, %v1387
  %v1411 = vsub.f32 1.0, %v1389
  %1414 = vrot.lane.b32.xlu0 %v1408, 96
  %v1415 = vpop.permute.xlu0 %1414
  %1416 = vrot.lane.b32.xlu0 %v1409, 96
  %v1417 = vpop.permute.xlu0 %1416
  %v1420 = vmul.f32 %v1410, %v1415
  %v1421 = vmul.f32 %v1411, %v1417
  %v1422 = vmul.f32 %v1387, %v1201
  %v1423 = vmul.f32 %v1389, %v1202
  %v1424 = vadd.f32 %v1420, %v1422
  %v1425 = vadd.f32 %v1421, %v1423
  %v1426 = vpack.c.bf16 %v1424, %v1424
  %v1427 = vpack.c.bf16 %v1425, %v1425
  %v1430 = vunpack.c.l.b16 %v1426
  %v1431 = vunpack.c.l.b16 %v1427
  %v1432 = vrot.slane %v1431, 7
  %v1433 = vsel %vm288, %v1432, %v1430
  %v1434 = vpack.c.b16 %v1433, %v1433
  %1435 = vrot.lane.b32.xlu0 %v1434, 96
  %v1436 = vpop.permute.xlu0 %1435
  %v1438 = vsel %vm169, %v1436, 0
  %1440 = vmatprep.subr.bf16.mxu0 0
  %1441 = vmatpush1.bf16.msra.mxu0 %v301
  %1442 = vmatprep.subr.bf16.mxu0 0
  %1443 = vmatpush1.bf16.msra.mxu0 %v302
  %1444 = vmatprep.subr.bf16.mxu0 0
  %1445 = vmatpush1.bf16.msra.mxu0 0
  %1446 = vmatprep.subr.bf16.mxu0 0
  %1447 = vmatpush1.bf16.msra.mxu0 0
  %1448 = vmatprep.subr.bf16.mxu0 0
  %1449 = vmatpush1.bf16.msra.mxu0 0
  %1450 = vmatprep.subr.bf16.mxu0 0
  %1451 = vmatpush1.bf16.msra.mxu0 0
  %1452 = vmatprep.subr.bf16.mxu0 0
  %1453 = vmatpush1.bf16.msra.mxu0 0
  %1454 = vmatprep.subr.bf16.mxu0 0
  %1455 = vmatpush1.bf16.msra.mxu0 0
  %1456 = vmatprep.subr.bf16.mxu0 0
  %1457 = vmatpush1.bf16.msra.mxu0 0
  %1458 = vmatprep.subr.bf16.mxu0 0
  %1459 = vmatpush1.bf16.msra.mxu0 0
  %1460 = vmatprep.subr.bf16.mxu0 0
  %1461 = vmatpush1.bf16.msra.mxu0 0
  %1462 = vmatprep.subr.bf16.mxu0 0
  %1463 = vmatpush1.bf16.msra.mxu0 0
  %1464 = vmatprep.subr.bf16.mxu0 0
  %1465 = vmatpush1.bf16.msra.mxu0 0
  %1466 = vmatprep.subr.bf16.mxu0 0
  %1467 = vmatpush1.bf16.msra.mxu0 0
  %1468 = vmatprep.subr.bf16.mxu0 0
  %1469 = vmatpush1.bf16.msra.mxu0 0
  %1470 = vmatprep.subr.bf16.mxu0 0
  %1471 = vmatpush1.bf16.msra.mxu0 0
  %1472 = vmatprep.mubr.bf16.mxu0 0
  %1473 = vmatmul.mubr.bf16.gmra.mrb[0].mxu0 %v1438
  %v1474 = vpop.f32.mrb[0].mxu0
  %v1475 = vadd.f32 %v140, %v1474
  %v1476 = vpop.f32.mrb[0].mxu0
  %v1477 = vpop.f32.mrb[0].mxu0
  %v1478 = vpop.f32.mrb[0].mxu0
  %1479 = vdwg.mxu0
  %v1480 = vpack.c.bf16 %v1329, %v1329
  %1482 = vrot.lane.b32.xlu0 %v1480, 96
  %v1483 = vpop.permute.xlu0 %1482
  %v1485 = vsel %vm169, %v1483, 0
  %1487 = vmatprep.subr.bf16.mxu0 0
  %1488 = vmatpush1.bf16.msra.mxu0 %v361
  %1489 = vmatprep.subr.bf16.mxu0 0
  %1490 = vmatpush1.bf16.msra.mxu0 %v362
  %1491 = vmatprep.subr.bf16.mxu0 0
  %1492 = vmatpush1.bf16.msra.mxu0 0
  %1493 = vmatprep.subr.bf16.mxu0 0
  %1494 = vmatpush1.bf16.msra.mxu0 0
  %1495 = vmatprep.subr.bf16.mxu0 0
  %1496 = vmatpush1.bf16.msra.mxu0 0
  %1497 = vmatprep.subr.bf16.mxu0 0
  %1498 = vmatpush1.bf16.msra.mxu0 0
  %1499 = vmatprep.subr.bf16.mxu0 0
  %1500 = vmatpush1.bf16.msra.mxu0 0
  %1501 = vmatprep.subr.bf16.mxu0 0
  %1502 = vmatpush1.bf16.msra.mxu0 0
  %1503 = vmatprep.subr.bf16.mxu0 0
  %1504 = vmatpush1.bf16.msra.mxu0 0
  %1505 = vmatprep.subr.bf16.mxu0 0
  %1506 = vmatpush1.bf16.msra.mxu0 0
  %1507 = vmatprep.subr.bf16.mxu0 0
  %1508 = vmatpush1.bf16.msra.mxu0 0
  %1509 = vmatprep.subr.bf16.mxu0 0
  %1510 = vmatpush1.bf16.msra.mxu0 0
  %1511 = vmatprep.subr.bf16.mxu0 0
  %1512 = vmatpush1.bf16.msra.mxu0 0
  %1513 = vmatprep.subr.bf16.mxu0 0
  %1514 = vmatpush1.bf16.msra.mxu0 0
  %1515 = vmatprep.subr.bf16.mxu0 0
  %1516 = vmatpush1.bf16.msra.mxu0 0
  %1517 = vmatprep.subr.bf16.mxu0 0
  %1518 = vmatpush1.bf16.msra.mxu0 0
  %1519 = vmatprep.mubr.bf16.mxu0 0
  %1520 = vmatmul.mubr.bf16.gmra.mrb[0].mxu0 %v1485
  %v1521 = vpop.f32.mrb[0].mxu0
  %v1522 = vadd.f32 %v147, %v1521
  %v1523 = vpop.f32.mrb[0].mxu0
  %v1524 = vpop.f32.mrb[0].mxu0
  %v1525 = vpop.f32.mrb[0].mxu0
  %1526 = vdwg.mxu0
  %v1527 = vadd.f32 %v1475, %v1522
  %v1528 = vxor.u32 %v1527, 2147483648
  %v1529 = vmul.f32 %v1528, 1.442695
  %v1530 = vpow.pop %v1529
  %v1531 = vadd.f32 %v1530, 1.0
  %v1532 = vrcp.pop %v1531
  %v1533 = vmul.f32 1.0, %v1532
  %1535 = vrot.lane.b32.xlu0 %v1522, 64
  %v1536 = vpop.permute.xlu0 %1535
  %v1538 = vmul.f32 %v1533, %v1536
  %1540 = vrot.lane.b32.xlu0 %v1538, 64
  %v1541 = vpop.permute.xlu0 %1540
  %v1543 = vadd.f32 %v1475, %v1541
  %v1544 = vtanh.pop %v1543
  %v1545 = vsub.f32 1.0, %v1533
  %1547 = vrot.lane.b32.xlu0 %v1544, 96
  %v1548 = vpop.permute.xlu0 %1547
  %v1550 = vmul.f32 %v1545, %v1548
  %v1551 = vmul.f32 %v1533, %v1329
  %v1552 = vadd.f32 %v1550, %v1551
  %1553 = vmatprep.subr.bf16.mxu0 0
  %1554 = vmatpush1.bf16.msra.mxu0 %v165
  %1555 = vmatprep.subr.bf16.mxu0 0
  %1556 = vmatpush1.bf16.msra.mxu0 %v166
  %1557 = vmatprep.subr.bf16.mxu0 0
  %1558 = vmatpush1.bf16.msra.mxu0 0
  %1559 = vmatprep.subr.bf16.mxu0 0
  %1560 = vmatpush1.bf16.msra.mxu0 0
  %1561 = vmatprep.subr.bf16.mxu0 0
  %1562 = vmatpush1.bf16.msra.mxu0 0
  %1563 = vmatprep.subr.bf16.mxu0 0
  %1564 = vmatpush1.bf16.msra.mxu0 0
  %1565 = vmatprep.subr.bf16.mxu0 0
  %1566 = vmatpush1.bf16.msra.mxu0 0
  %1567 = vmatprep.subr.bf16.mxu0 0
  %1568 = vmatpush1.bf16.msra.mxu0 0
  %1569 = vmatprep.subr.bf16.mxu0 0
  %1570 = vmatpush1.bf16.msra.mxu0 0
  %1571 = vmatprep.subr.bf16.mxu0 0
  %1572 = vmatpush1.bf16.msra.mxu0 0
  %1573 = vmatprep.subr.bf16.mxu0 0
  %1574 = vmatpush1.bf16.msra.mxu0 0
  %1575 = vmatprep.subr.bf16.mxu0 0
  %1576 = vmatpush1.bf16.msra.mxu0 0
  %1577 = vmatprep.subr.bf16.mxu0 0
  %1578 = vmatpush1.bf16.msra.mxu0 0
  %1579 = vmatprep.subr.bf16.mxu0 0
  %1580 = vmatpush1.bf16.msra.mxu0 0
  %1581 = vmatprep.subr.bf16.mxu0 0
  %1582 = vmatpush1.bf16.msra.mxu0 0
  %1583 = vmatprep.subr.bf16.mxu0 0
  %1584 = vmatpush1.bf16.msra.mxu0 0
  %1585 = vmatprep.mubr.bf16.mxu0 0
  %1586 = vmatmul.mubr.bf16.gmra.mrb[0].mxu0 %v1438
  %v1587 = vpop.f32.mrb[0].mxu0
  %v1588 = vadd.f32 %v133, %v1587
  %v1589 = vpop.f32.mrb[0].mxu0
  %v1590 = vpop.f32.mrb[0].mxu0
  %v1591 = vpop.f32.mrb[0].mxu0
  %1592 = vdwg.mxu0
  %v1593 = vld [vmem:[#allocation3 + $0x6] sm:$0x1]
  %v1594 = vld [vmem:[#allocation3 + $0xe] sm:$0x1]
  %v1596 = vrot.slane %v1588, 1
  %v1599 = vadd.f32 %v1593, %v1588
  %v1600 = vadd.f32 %v1594, %v1596
  %v1601 = vxor.u32 %v1599, 2147483648
  %v1602 = vxor.u32 %v1600, 2147483648
  %v1603 = vmul.f32 %v1601, 1.442695
  %v1604 = vpow.pop %v1603
  %v1605 = vmul.f32 %v1602, 1.442695
  %v1606 = vpow.pop %v1605
  %v1607 = vadd.f32 %v1604, 1.0
  %v1608 = vadd.f32 %v1606, 1.0
  %v1609 = vrcp.pop %v1607
  %v1610 = vmul.f32 1.0, %v1609
  %v1611 = vrcp.pop %v1608
  %v1612 = vmul.f32 1.0, %v1611
  %1613 = vrot.lane.b32.xlu0 %v1588, 64
  %v1614 = vpop.permute.xlu0 %1613
  %1615 = vrot.lane.b32.xlu0 %v1596, 64
  %v1616 = vpop.permute.xlu0 %1615
  %v1619 = vmul.f32 %v1610, %v1614
  %v1620 = vmul.f32 %v1612, %v1616
  %1623 = vrot.lane.b32.xlu0 %v1619, 64
  %v1624 = vpop.permute.xlu0 %1623
  %1625 = vrot.lane.b32.xlu0 %v1620, 64
  %v1626 = vpop.permute.xlu0 %1625
  %v1629 = vadd.f32 %v1593, %v1624
  %v1630 = vadd.f32 %v1594, %v1626
  %v1631 = vtanh.pop %v1629
  %v1632 = vtanh.pop %v1630
  %v1633 = vsub.f32 1.0, %v1610
  %v1634 = vsub.f32 1.0, %v1612
  %1637 = vrot.lane.b32.xlu0 %v1631, 96
  %v1638 = vpop.permute.xlu0 %1637
  %1639 = vrot.lane.b32.xlu0 %v1632, 96
  %v1640 = vpop.permute.xlu0 %1639
  %v1643 = vmul.f32 %v1633, %v1638
  %v1644 = vmul.f32 %v1634, %v1640
  %v1645 = vmul.f32 %v1610, %v1424
  %v1646 = vmul.f32 %v1612, %v1425
  %v1647 = vadd.f32 %v1643, %v1645
  %v1648 = vadd.f32 %v1644, %v1646
  %v1649 = vpack.c.bf16 %v1647, %v1647
  %v1650 = vpack.c.bf16 %v1648, %v1648
  %v1653 = vunpack.c.l.b16 %v1649
  %v1654 = vunpack.c.l.b16 %v1650
  %v1655 = vrot.slane %v1654, 7
  %v1656 = vsel %vm288, %v1655, %v1653
  %v1657 = vpack.c.b16 %v1656, %v1656
  %1658 = vrot.lane.b32.xlu0 %v1657, 96
  %v1659 = vpop.permute.xlu0 %1658
  %v1661 = vsel %vm169, %v1659, 0
  %1663 = vmatprep.subr.bf16.mxu0 0
  %1664 = vmatpush1.bf16.msra.mxu0 %v301
  %1665 = vmatprep.subr.bf16.mxu0 0
  %1666 = vmatpush1.bf16.msra.mxu0 %v302
  %1667 = vmatprep.subr.bf16.mxu0 0
  %1668 = vmatpush1.bf16.msra.mxu0 0
  %1669 = vmatprep.subr.bf16.mxu0 0
  %1670 = vmatpush1.bf16.msra.mxu0 0
  %1671 = vmatprep.subr.bf16.mxu0 0
  %1672 = vmatpush1.bf16.msra.mxu0 0
  %1673 = vmatprep.subr.bf16.mxu0 0
  %1674 = vmatpush1.bf16.msra.mxu0 0
  %1675 = vmatprep.subr.bf16.mxu0 0
  %1676 = vmatpush1.bf16.msra.mxu0 0
  %1677 = vmatprep.subr.bf16.mxu0 0
  %1678 = vmatpush1.bf16.msra.mxu0 0
  %1679 = vmatprep.subr.bf16.mxu0 0
  %1680 = vmatpush1.bf16.msra.mxu0 0
  %1681 = vmatprep.subr.bf16.mxu0 0
  %1682 = vmatpush1.bf16.msra.mxu0 0
  %1683 = vmatprep.subr.bf16.mxu0 0
  %1684 = vmatpush1.bf16.msra.mxu0 0
  %1685 = vmatprep.subr.bf16.mxu0 0
  %1686 = vmatpush1.bf16.msra.mxu0 0
  %1687 = vmatprep.subr.bf16.mxu0 0
  %1688 = vmatpush1.bf16.msra.mxu0 0
  %1689 = vmatprep.subr.bf16.mxu0 0
  %1690 = vmatpush1.bf16.msra.mxu0 0
  %1691 = vmatprep.subr.bf16.mxu0 0
  %1692 = vmatpush1.bf16.msra.mxu0 0
  %1693 = vmatprep.subr.bf16.mxu0 0
  %1694 = vmatpush1.bf16.msra.mxu0 0
  %1695 = vmatprep.mubr.bf16.mxu0 0
  %1696 = vmatmul.mubr.bf16.gmra.mrb[0].mxu0 %v1661
  %v1697 = vpop.f32.mrb[0].mxu0
  %v1698 = vadd.f32 %v140, %v1697
  %v1699 = vpop.f32.mrb[0].mxu0
  %v1700 = vpop.f32.mrb[0].mxu0
  %v1701 = vpop.f32.mrb[0].mxu0
  %1702 = vdwg.mxu0
  %v1703 = vpack.c.bf16 %v1552, %v1552
  %1705 = vrot.lane.b32.xlu0 %v1703, 96
  %v1706 = vpop.permute.xlu0 %1705
  %v1708 = vsel %vm169, %v1706, 0
  %1710 = vmatprep.subr.bf16.mxu0 0
  %1711 = vmatpush1.bf16.msra.mxu0 %v361
  %1712 = vmatprep.subr.bf16.mxu0 0
  %1713 = vmatpush1.bf16.msra.mxu0 %v362
  %1714 = vmatprep.subr.bf16.mxu0 0
  %1715 = vmatpush1.bf16.msra.mxu0 0
  %1716 = vmatprep.subr.bf16.mxu0 0
  %1717 = vmatpush1.bf16.msra.mxu0 0
  %1718 = vmatprep.subr.bf16.mxu0 0
  %1719 = vmatpush1.bf16.msra.mxu0 0
  %1720 = vmatprep.subr.bf16.mxu0 0
  %1721 = vmatpush1.bf16.msra.mxu0 0
  %1722 = vmatprep.subr.bf16.mxu0 0
  %1723 = vmatpush1.bf16.msra.mxu0 0
  %1724 = vmatprep.subr.bf16.mxu0 0
  %1725 = vmatpush1.bf16.msra.mxu0 0
  %1726 = vmatprep.subr.bf16.mxu0 0
  %1727 = vmatpush1.bf16.msra.mxu0 0
  %1728 = vmatprep.subr.bf16.mxu0 0
  %1729 = vmatpush1.bf16.msra.mxu0 0
  %1730 = vmatprep.subr.bf16.mxu0 0
  %1731 = vmatpush1.bf16.msra.mxu0 0
  %1732 = vmatprep.subr.bf16.mxu0 0
  %1733 = vmatpush1.bf16.msra.mxu0 0
  %1734 = vmatprep.subr.bf16.mxu0 0
  %1735 = vmatpush1.bf16.msra.mxu0 0
  %1736 = vmatprep.subr.bf16.mxu0 0
  %1737 = vmatpush1.bf16.msra.mxu0 0
  %1738 = vmatprep.subr.bf16.mxu0 0
  %1739 = vmatpush1.bf16.msra.mxu0 0
  %1740 = vmatprep.subr.bf16.mxu0 0
  %1741 = vmatpush1.bf16.msra.mxu0 0
  %1742 = vmatprep.mubr.bf16.mxu0 0
  %1743 = vmatmul.mubr.bf16.gmra.mrb[0].mxu0 %v1708
  %v1744 = vpop.f32.mrb[0].mxu0
  %v1745 = vadd.f32 %v147, %v1744
  %v1746 = vpop.f32.mrb[0].mxu0
  %v1747 = vpop.f32.mrb[0].mxu0
  %v1748 = vpop.f32.mrb[0].mxu0
  %1749 = vdwg.mxu0
  %v1750 = vadd.f32 %v1698, %v1745
  %v1751 = vxor.u32 %v1750, 2147483648
  %v1752 = vmul.f32 %v1751, 1.442695
  %v1753 = vpow.pop %v1752
  %v1754 = vadd.f32 %v1753, 1.0
  %v1755 = vrcp.pop %v1754
  %v1756 = vmul.f32 1.0, %v1755
  %1758 = vrot.lane.b32.xlu0 %v1745, 64
  %v1759 = vpop.permute.xlu0 %1758
  %v1761 = vmul.f32 %v1756, %v1759
  %1763 = vrot.lane.b32.xlu0 %v1761, 64
  %v1764 = vpop.permute.xlu0 %1763
  %v1766 = vadd.f32 %v1698, %v1764
  %v1767 = vtanh.pop %v1766
  %v1768 = vsub.f32 1.0, %v1756
  %1770 = vrot.lane.b32.xlu0 %v1767, 96
  %v1771 = vpop.permute.xlu0 %1770
  %v1773 = vmul.f32 %v1768, %v1771
  %v1774 = vmul.f32 %v1756, %v1552
  %v1775 = vadd.f32 %v1773, %v1774
  %1776 = vmatprep.subr.bf16.mxu0 0
  %1777 = vmatpush1.bf16.msra.mxu0 %v165
  %1778 = vmatprep.subr.bf16.mxu0 0
  %1779 = vmatpush1.bf16.msra.mxu0 %v166
  %1780 = vmatprep.subr.bf16.mxu0 0
  %1781 = vmatpush1.bf16.msra.mxu0 0
  %1782 = vmatprep.subr.bf16.mxu0 0
  %1783 = vmatpush1.bf16.msra.mxu0 0
  %1784 = vmatprep.subr.bf16.mxu0 0
  %1785 = vmatpush1.bf16.msra.mxu0 0
  %1786 = vmatprep.subr.bf16.mxu0 0
  %1787 = vmatpush1.bf16.msra.mxu0 0
  %1788 = vmatprep.subr.bf16.mxu0 0
  %1789 = vmatpush1.bf16.msra.mxu0 0
  %1790 = vmatprep.subr.bf16.mxu0 0
  %1791 = vmatpush1.bf16.msra.mxu0 0
  %1792 = vmatprep.subr.bf16.mxu0 0
  %1793 = vmatpush1.bf16.msra.mxu0 0
  %1794 = vmatprep.subr.bf16.mxu0 0
  %1795 = vmatpush1.bf16.msra.mxu0 0
  %1796 = vmatprep.subr.bf16.mxu0 0
  %1797 = vmatpush1.bf16.msra.mxu0 0
  %1798 = vmatprep.subr.bf16.mxu0 0
  %1799 = vmatpush1.bf16.msra.mxu0 0
  %1800 = vmatprep.subr.bf16.mxu0 0
  %1801 = vmatpush1.bf16.msra.mxu0 0
  %1802 = vmatprep.subr.bf16.mxu0 0
  %1803 = vmatpush1.bf16.msra.mxu0 0
  %1804 = vmatprep.subr.bf16.mxu0 0
  %1805 = vmatpush1.bf16.msra.mxu0 0
  %1806 = vmatprep.subr.bf16.mxu0 0
  %1807 = vmatpush1.bf16.msra.mxu0 0
  %1808 = vmatprep.mubr.bf16.mxu0 0
  %1809 = vmatmul.mubr.bf16.gmra.mrb[0].mxu0 %v1661
  %v1810 = vpop.f32.mrb[0].mxu0
  %v1811 = vadd.f32 %v133, %v1810
  %v1812 = vpop.f32.mrb[0].mxu0
  %v1813 = vpop.f32.mrb[0].mxu0
  %v1814 = vpop.f32.mrb[0].mxu0
  %1815 = vdwg.mxu0
  %v1816 = vld [vmem:[#allocation3 + $0x7] sm:$0x1]
  %v1817 = vld [vmem:[#allocation3 + $0xf] sm:$0x1]
  %v1819 = vrot.slane %v1811, 1
  %v1822 = vadd.f32 %v1816, %v1811
  %v1823 = vadd.f32 %v1817, %v1819
  %v1824 = vxor.u32 %v1822, 2147483648
  %v1825 = vxor.u32 %v1823, 2147483648
  %v1826 = vmul.f32 %v1824, 1.442695
  %v1827 = vpow.pop %v1826
  %v1828 = vmul.f32 %v1825, 1.442695
  %v1829 = vpow.pop %v1828
  %v1830 = vadd.f32 %v1827, 1.0
  %v1831 = vadd.f32 %v1829, 1.0
  %v1832 = vrcp.pop %v1830
  %v1833 = vmul.f32 1.0, %v1832
  %v1834 = vrcp.pop %v1831
  %v1835 = vmul.f32 1.0, %v1834
  %1836 = vrot.lane.b32.xlu0 %v1811, 64
  %v1837 = vpop.permute.xlu0 %1836
  %1838 = vrot.lane.b32.xlu0 %v1819, 64
  %v1839 = vpop.permute.xlu0 %1838
  %v1842 = vmul.f32 %v1833, %v1837
  %v1843 = vmul.f32 %v1835, %v1839
  %1846 = vrot.lane.b32.xlu0 %v1842, 64
  %v1847 = vpop.permute.xlu0 %1846
  %1848 = vrot.lane.b32.xlu0 %v1843, 64
  %v1849 = vpop.permute.xlu0 %1848
  %v1852 = vadd.f32 %v1816, %v1847
  %v1853 = vadd.f32 %v1817, %v1849
  %v1854 = vtanh.pop %v1852
  %v1855 = vtanh.pop %v1853
  %v1856 = vsub.f32 1.0, %v1833
  %v1857 = vsub.f32 1.0, %v1835
  %1860 = vrot.lane.b32.xlu0 %v1854, 96
  %v1861 = vpop.permute.xlu0 %1860
  %1862 = vrot.lane.b32.xlu0 %v1855, 96
  %v1863 = vpop.permute.xlu0 %1862
  %v1866 = vmul.f32 %v1856, %v1861
  %v1867 = vmul.f32 %v1857, %v1863
  %v1868 = vmul.f32 %v1833, %v1647
  %v1869 = vmul.f32 %v1835, %v1648
  %v1870 = vadd.f32 %v1866, %v1868
  %v1871 = vadd.f32 %v1867, %v1869
  %v1872 = vpack.c.bf16 %v1870, %v1870
  %v1873 = vpack.c.bf16 %v1871, %v1871
  %v1876 = vunpack.c.l.b16 %v1872
  %v1877 = vunpack.c.l.b16 %v1873
  %v1878 = vrot.slane %v1877, 7
  %v1879 = vsel %vm288, %v1878, %v1876
  %v1880 = vpack.c.b16 %v1879, %v1879
  %1881 = vrot.lane.b32.xlu0 %v1880, 96
  %v1882 = vpop.permute.xlu0 %1881
  %v1884 = vsel %vm169, %v1882, 0
  %1886 = vmatprep.subr.bf16.mxu0 0
  %1887 = vmatpush1.bf16.msra.mxu0 %v301
  %1888 = vmatprep.subr.bf16.mxu0 0
  %1889 = vmatpush1.bf16.msra.mxu0 %v302
  %1890 = vmatprep.subr.bf16.mxu0 0
  %1891 = vmatpush1.bf16.msra.mxu0 0
  %1892 = vmatprep.subr.bf16.mxu0 0
  %1893 = vmatpush1.bf16.msra.mxu0 0
  %1894 = vmatprep.subr.bf16.mxu0 0
  %1895 = vmatpush1.bf16.msra.mxu0 0
  %1896 = vmatprep.subr.bf16.mxu0 0
  %1897 = vmatpush1.bf16.msra.mxu0 0
  %1898 = vmatprep.subr.bf16.mxu0 0
  %1899 = vmatpush1.bf16.msra.mxu0 0
  %1900 = vmatprep.subr.bf16.mxu0 0
  %1901 = vmatpush1.bf16.msra.mxu0 0
  %1902 = vmatprep.subr.bf16.mxu0 0
  %1903 = vmatpush1.bf16.msra.mxu0 0
  %1904 = vmatprep.subr.bf16.mxu0 0
  %1905 = vmatpush1.bf16.msra.mxu0 0
  %1906 = vmatprep.subr.bf16.mxu0 0
  %1907 = vmatpush1.bf16.msra.mxu0 0
  %1908 = vmatprep.subr.bf16.mxu0 0
  %1909 = vmatpush1.bf16.msra.mxu0 0
  %1910 = vmatprep.subr.bf16.mxu0 0
  %1911 = vmatpush1.bf16.msra.mxu0 0
  %1912 = vmatprep.subr.bf16.mxu0 0
  %1913 = vmatpush1.bf16.msra.mxu0 0
  %1914 = vmatprep.subr.bf16.mxu0 0
  %1915 = vmatpush1.bf16.msra.mxu0 0
  %1916 = vmatprep.subr.bf16.mxu0 0
  %1917 = vmatpush1.bf16.msra.mxu0 0
  %1918 = vmatprep.mubr.bf16.mxu0 0
  %1919 = vmatmul.mubr.bf16.gmra.mrb[0].mxu0 %v1884
  %v1920 = vpop.f32.mrb[0].mxu0
  %v1921 = vadd.f32 %v140, %v1920
  %v1922 = vpop.f32.mrb[0].mxu0
  %v1923 = vpop.f32.mrb[0].mxu0
  %v1924 = vpop.f32.mrb[0].mxu0
  %1925 = vdwg.mxu0
  %v1926 = vpack.c.bf16 %v1775, %v1775
  %1928 = vrot.lane.b32.xlu0 %v1926, 96
  %v1929 = vpop.permute.xlu0 %1928
  %v1931 = vsel %vm169, %v1929, 0
  %1933 = vmatprep.subr.bf16.mxu0 0
  %1934 = vmatpush1.bf16.msra.mxu0 %v361
  %1935 = vmatprep.subr.bf16.mxu0 0
  %1936 = vmatpush1.bf16.msra.mxu0 %v362
  %1937 = vmatprep.subr.bf16.mxu0 0
  %1938 = vmatpush1.bf16.msra.mxu0 0
  %1939 = vmatprep.subr.bf16.mxu0 0
  %1940 = vmatpush1.bf16.msra.mxu0 0
  %1941 = vmatprep.subr.bf16.mxu0 0
  %1942 = vmatpush1.bf16.msra.mxu0 0
  %1943 = vmatprep.subr.bf16.mxu0 0
  %1944 = vmatpush1.bf16.msra.mxu0 0
  %1945 = vmatprep.subr.bf16.mxu0 0
  %1946 = vmatpush1.bf16.msra.mxu0 0
  %1947 = vmatprep.subr.bf16.mxu0 0
  %1948 = vmatpush1.bf16.msra.mxu0 0
  %1949 = vmatprep.subr.bf16.mxu0 0
  %1950 = vmatpush1.bf16.msra.mxu0 0
  %1951 = vmatprep.subr.bf16.mxu0 0
  %1952 = vmatpush1.bf16.msra.mxu0 0
  %1953 = vmatprep.subr.bf16.mxu0 0
  %1954 = vmatpush1.bf16.msra.mxu0 0
  %1955 = vmatprep.subr.bf16.mxu0 0
  %1956 = vmatpush1.bf16.msra.mxu0 0
  %1957 = vmatprep.subr.bf16.mxu0 0
  %1958 = vmatpush1.bf16.msra.mxu0 0
  %1959 = vmatprep.subr.bf16.mxu0 0
  %1960 = vmatpush1.bf16.msra.mxu0 0
  %1961 = vmatprep.subr.bf16.mxu0 0
  %1962 = vmatpush1.bf16.msra.mxu0 0
  %1963 = vmatprep.subr.bf16.mxu0 0
  %1964 = vmatpush1.bf16.msra.mxu0 0
  %1965 = vmatprep.mubr.bf16.mxu0 0
  %1966 = vmatmul.mubr.bf16.gmra.mrb[0].mxu0 %v1931
  %v1967 = vpop.f32.mrb[0].mxu0
  %v1968 = vadd.f32 %v147, %v1967
  %v1969 = vpop.f32.mrb[0].mxu0
  %v1970 = vpop.f32.mrb[0].mxu0
  %v1971 = vpop.f32.mrb[0].mxu0
  %1972 = vdwg.mxu0
  %v1973 = vadd.f32 %v1921, %v1968
  %v1974 = vxor.u32 %v1973, 2147483648
  %v1975 = vmul.f32 %v1974, 1.442695
  %v1976 = vpow.pop %v1975
  %v1977 = vadd.f32 %v1976, 1.0
  %v1978 = vrcp.pop %v1977
  %v1979 = vmul.f32 1.0, %v1978
  %1981 = vrot.lane.b32.xlu0 %v1968, 64
  %v1982 = vpop.permute.xlu0 %1981
  %v1984 = vmul.f32 %v1979, %v1982
  %1986 = vrot.lane.b32.xlu0 %v1984, 64
  %v1987 = vpop.permute.xlu0 %1986
  %v1989 = vadd.f32 %v1921, %v1987
  %v1990 = vtanh.pop %v1989
  %v1991 = vsub.f32 1.0, %v1979
  %1993 = vrot.lane.b32.xlu0 %v1990, 96
  %v1994 = vpop.permute.xlu0 %1993
  %v1996 = vmul.f32 %v1991, %v1994
  %v1997 = vmul.f32 %v1979, %v1775
  %v1998 = vadd.f32 %v1996, %v1997
  %v2001 = vrot.slane %v1871, 7
  %v2002 = vsel %vm288, %v2001, %v1870
  %2003 = vrot.lane.b32.xlu0 %v2002, 96
  %v2004 = vpop.permute.xlu0 %2003
  %vm2006 = vcmask 254976
  %2007 = vst.msk [vmem:[#allocation2] sm:$0x3] %vm2006, %v2004
  %2009 = vrot.lane.b32.xlu0 %v1998, 96
  %v2010 = vpop.permute.xlu0 %2009
  %2012 = vst.msk [vmem:[%s150] sm:$0x3] %vm2006, %v2010
  // Predicated region
  $region50: #{gru_ae_forward.2} parent=0 // pred_check
    %p2013 = pneg %p41
  $region51: #{gru_ae_forward.2} parent=0 // pred_check_branch
    %2015 = sbr.rel (%p2013) target = $region53
  $region52: #{gru_ae_forward.2} parent=0 // pred_region
    %v2016 = vmax.f32 %v1998, 0.0
    %v2017 = vpack.c.bf16 %v2016, %v2016
    %v2018 = vld [vmem:[%s9] sm:$0xf]
    %v2019 = vld [vmem:[%s9 + $0x4] sm:$0xf]
    %v2020 = vld [vmem:[%s9 + $0x8] sm:$0xf]
    %v2021 = vld [vmem:[%s9 + $0xc] sm:$0xf]
    %v2022 = vld [vmem:[%s10] sm:$0x1]
    %v2024 = vlaneseq
    %v2025 = vshrl.u32 %v2024, 7
    %v2026 = vsub.s32 0, %v2025
    %v2027 = vrot.slane %v2022, %v2026
    %2030 = vrot.lane.b32.xlu0 %v2017, 96
    %v2031 = vpop.permute.xlu0 %2030
    %v2036 = vunpack.c.l.b16 %v2018
    %v2037 = vunpack.c.l.b16 %v2019
    %v2038 = vunpack.c.l.b16 %v2020
    %v2039 = vunpack.c.l.b16 %v2021
    %v2040 = vpack.c.b16 %v2037, %v2036
    %v2041 = vpack.c.b16 %v2039, %v2038
    %v2045 = vsel %vm169, %v2031, 0
    %2047 = vmatprep.subr.bf16.mxu0 0
    %2048 = vmatpush1.bf16.msra.mxu0 %v2040
    %2049 = vmatprep.subr.bf16.mxu0 0
    %2050 = vmatpush1.bf16.msra.mxu0 %v2041
    %2051 = vmatprep.subr.bf16.mxu0 0
    %2052 = vmatpush1.bf16.msra.mxu0 0
    %2053 = vmatprep.subr.bf16.mxu0 0
    %2054 = vmatpush1.bf16.msra.mxu0 0
    %2055 = vmatprep.subr.bf16.mxu0 0
    %2056 = vmatpush1.bf16.msra.mxu0 0
    %2057 = vmatprep.subr.bf16.mxu0 0
    %2058 = vmatpush1.bf16.msra.mxu0 0
    %2059 = vmatprep.subr.bf16.mxu0 0
    %2060 = vmatpush1.bf16.msra.mxu0 0
    %2061 = vmatprep.subr.bf16.mxu0 0
    %2062 = vmatpush1.bf16.msra.mxu0 0
    %2063 = vmatprep.subr.bf16.mxu0 0
    %2064 = vmatpush1.bf16.msra.mxu0 0
    %2065 = vmatprep.subr.bf16.mxu0 0
    %2066 = vmatpush1.bf16.msra.mxu0 0
    %2067 = vmatprep.subr.bf16.mxu0 0
    %2068 = vmatpush1.bf16.msra.mxu0 0
    %2069 = vmatprep.subr.bf16.mxu0 0
    %2070 = vmatpush1.bf16.msra.mxu0 0
    %2071 = vmatprep.subr.bf16.mxu0 0
    %2072 = vmatpush1.bf16.msra.mxu0 0
    %2073 = vmatprep.subr.bf16.mxu0 0
    %2074 = vmatpush1.bf16.msra.mxu0 0
    %2075 = vmatprep.subr.bf16.mxu0 0
    %2076 = vmatpush1.bf16.msra.mxu0 0
    %2077 = vmatprep.subr.bf16.mxu0 0
    %2078 = vmatpush1.bf16.msra.mxu0 0
    %2079 = vmatprep.mubr.bf16.mxu0 0
    %2080 = vmatmul.mubr.bf16.gmra.mrb[0].mxu0 %v2045
    %v2081 = vpop.f32.mrb[0].mxu0
    %v2082 = vadd.f32 %v2027, %v2081
    %v2083 = vpop.f32.mrb[0].mxu0
    %v2084 = vpop.f32.mrb[0].mxu0
    %v2085 = vpop.f32.mrb[0].mxu0
    %2086 = vdwg.mxu0
    %v2087 = vmul.f32 %v2082, %v2082
    %vm2088 = vcmask 9216
    %v2089 = vsel %vm2088, %v2087, 0.0
    %2090 = vadd.xlane.f32.xlu0 %v2089
    %v2091 = vpop.xlane.xlu0 %2090
    %v2092 = vrsqrt.pop %v2091
    %v2093 = vmul.f32 %v2091, %v2092
    %vm2094 = vcmp.eq.f32.partialorder %v2091, inf
    %v2095 = vsel %vm2094, %v2091, %v2093
    %vm2096 = vcmp.eq.f32.partialorder %v2091, 0.0
    %v2097 = vand.u32 %v2091, 2147483648
    %v2098 = vsel %vm2096, %v2097, %v2095
    %v2099 = vmax.f32 %v2098, 1e-12
    %v2100 = vrcp.pop %v2099
    %v2101 = vmul.f32 %v2082, %v2100
    %2102 = vst.msk [vmem:[%s11] sm:$0x3] %vm2088, %v2101
  $region53: #{gru_ae_forward.2} parent=0 // pred_fallthru
    _
  // Predicated region
  $region54: #{gru_ae_forward.2} parent=0 // pred_check
    _
  $region55: #{gru_ae_forward.2} parent=0 // pred_check_branch
    %2104 = sbr.rel (0) target = $region57
  $region56: #{gru_ae_forward.2} parent=0 // pred_region
    _
  $region57: #{gru_ae_forward.2} parent=0 // pred_fallthru
    _
  // Predicated region
  $region58: #{gru_ae_forward.2} parent=0 // pred_check
    _
  $region59: #{gru_ae_forward.2} parent=0 // pred_check_branch
    %2106 = sbr.rel (0) target = $region61
  $region60: #{gru_ae_forward.2} parent=0 // pred_region
    _
  $region61: #{gru_ae_forward.2} parent=0 // pred_fallthru
    _
  // Predicated region
  $region62: #{gru_ae_forward.2} parent=0 // pred_check
    _
  $region63: #{gru_ae_forward.2} parent=0 // pred_check_branch
    %2108 = sbr.rel (0) target = $region65
  $region64: #{gru_ae_forward.2} parent=0 // pred_region
    _
  $region65: #{gru_ae_forward.2} parent=0 // pred_fallthru
    _
  // Predicated region
  $region66: #{gru_ae_forward.2} parent=0 // pred_check
    _
  $region67: #{gru_ae_forward.2} parent=0 // pred_check_branch
    %2110 = sbr.rel (0) target = $region69
  $region68: #{gru_ae_forward.2} parent=0 // pred_region
    _
  $region69: #{gru_ae_forward.2} parent=0 // pred_fallthru
    _

// kernel: gru_ae_forward.3
$region0: #{gru_ae_forward.3}
  #allocation0 [shape = 'u32[]', space=smem, size = 0x4, offset = 0x4, fixed_abs, tag = 'smem constant byte address 0x4 - core index']
  #allocation1 [shape = 'u32[144,128]{1,0:T(1,128)}', space=vmem, size = 0x12000, scoped, tag = 'internal scratch']
  #allocation2 [shape = 'f32[2,2,32]{2,1,0:T(2,128)}', space=vmem, size = 0x800, scoped, tag = 'scratch operand']
  #allocation3 [shape = 'f32[2,96]{1,0:T(2,128)}', space=vmem, size = 0x400, scoped, tag = 'scratch operand']
  %s0 = inlined_call_operand.vmem [shape: f32[2,8,1], index: 0, kind: input, shape index: {}]
  %s1 = inlined_call_operand.vmem [shape: f32[2,2], index: 1, kind: input, shape index: {}]
  %s2 = inlined_call_operand.vmem [shape: bf16[2,4], index: 2, kind: input, shape index: {}]
  %s3 = inlined_call_operand.vmem [shape: f32[1,4], index: 3, kind: input, shape index: {}]
  %s4 = inlined_call_operand.vmem [shape: bf16[4,96], index: 4, kind: input, shape index: {}]
  %s5 = inlined_call_operand.vmem [shape: bf16[32,96], index: 5, kind: input, shape index: {}]
  %s6 = inlined_call_operand.vmem [shape: f32[1,96], index: 6, kind: input, shape index: {}]
  %s7 = inlined_call_operand.vmem [shape: f32[1,96], index: 7, kind: input, shape index: {}]
  %s8 = inlined_call_operand.vmem [shape: bf16[32,96], index: 8, kind: input, shape index: {}]
  %s9 = inlined_call_operand.vmem [shape: bf16[32,96], index: 9, kind: input, shape index: {}]
  %s10 = inlined_call_operand.vmem [shape: f32[1,96], index: 10, kind: input, shape index: {}]
  %s11 = inlined_call_operand.vmem [shape: f32[1,96], index: 11, kind: input, shape index: {}]
  %s12 = inlined_call_operand.hbm [shape: f32[2,8,32], index: 12, kind: output, shape index: {}]
  %s13 = sld [smem:[#allocation0]]
  $region62: #{gru_ae_forward.3} parent=0
    _
  %s15 = ssub.s32 1, %s13
  %s16 = scalar_select 0, %s15, %s13
  $region1: #{gru_ae_forward.3} parent=0
    #allocation4 [shape = 'u8[8192]{0}', space=vmem, size = 0x2000, scoped, tag = 'output window, operand 0, single buffered']
    #allocation5 [shape = 's32[1]{0}', space=sflag, size = 0x4, scoped, tag = 'scoped memory for gru_ae_forward.3']
    %17 = vsyncpa [#allocation5], 0
    // Predicated region
    $region2: #{gru_ae_forward.3} parent=1 // pred_check
      _
    $region3: #{gru_ae_forward.3} parent=1 // pred_check_branch
      %19 = sbr.rel (0) target = $region5
    $region4: #{gru_ae_forward.3} parent=1 // pred_region
      %s20 = ssub.s32 0, 0
      %p21 = scmp.lt.s32.totalorder %s20, 0
      %s22 = scalar_select %p21, %s20, 0
      %s23 = smul.addr %s22, 8
      %s24 = scalar_lea.vmem %s0, %s23
      %s25 = ssub.s32 0, 0
    $region5: #{gru_ae_forward.3} parent=1 // pred_fallthru
      _
    // Predicated region
    $region6: #{gru_ae_forward.3} parent=1 // pred_check
      _
    $region7: #{gru_ae_forward.3} parent=1 // pred_check_branch
      %27 = sbr.rel (0) target = $region9
    $region8: #{gru_ae_forward.3} parent=1 // pred_region
      _
    $region9: #{gru_ae_forward.3} parent=1 // pred_fallthru
      _
    // Predicated region
    $region10: #{gru_ae_forward.3} parent=1 // pred_check
      _
    $region11: #{gru_ae_forward.3} parent=1 // pred_check_branch
      %29 = sbr.rel (0) target = $region13
    $region12: #{gru_ae_forward.3} parent=1 // pred_region
      _
    $region13: #{gru_ae_forward.3} parent=1 // pred_fallthru
      _
    // Predicated region
    $region14: #{gru_ae_forward.3} parent=1 // pred_check
      _
    $region15: #{gru_ae_forward.3} parent=1 // pred_check_branch
      %31 = sbr.rel (0) target = $region17
    $region16: #{gru_ae_forward.3} parent=1 // pred_region
      _
    $region17: #{gru_ae_forward.3} parent=1 // pred_fallthru
      _
    // Predicated region
    $region18: #{gru_ae_forward.3} parent=1 // pred_check
      _
    $region19: #{gru_ae_forward.3} parent=1 // pred_check_branch
      %33 = sbr.rel (0) target = $region21
    $region20: #{gru_ae_forward.3} parent=1 // pred_region
      _
    $region21: #{gru_ae_forward.3} parent=1 // pred_fallthru
      _
    // Predicated region
    $region22: #{gru_ae_forward.3} parent=1 // pred_check
      _
    $region23: #{gru_ae_forward.3} parent=1 // pred_check_branch
      %35 = sbr.rel (0) target = $region25
    $region24: #{gru_ae_forward.3} parent=1 // pred_region
      _
    $region25: #{gru_ae_forward.3} parent=1 // pred_fallthru
      _
    // Predicated region
    $region26: #{gru_ae_forward.3} parent=1 // pred_check
      _
    $region27: #{gru_ae_forward.3} parent=1 // pred_check_branch
      %37 = sbr.rel (0) target = $region29
    $region28: #{gru_ae_forward.3} parent=1 // pred_region
      _
    $region29: #{gru_ae_forward.3} parent=1 // pred_fallthru
      _
    // Predicated region
    $region30: #{gru_ae_forward.3} parent=1 // pred_check
      _
    $region31: #{gru_ae_forward.3} parent=1 // pred_check_branch
      %39 = sbr.rel (0) target = $region33
    $region32: #{gru_ae_forward.3} parent=1 // pred_region
      _
    $region33: #{gru_ae_forward.3} parent=1 // pred_fallthru
      _
    // Predicated region
    $region34: #{gru_ae_forward.3} parent=1 // pred_check
      _
    $region35: #{gru_ae_forward.3} parent=1 // pred_check_branch
      %41 = sbr.rel (0) target = $region37
    $region36: #{gru_ae_forward.3} parent=1 // pred_region
      _
    $region37: #{gru_ae_forward.3} parent=1 // pred_fallthru
      _
    // Predicated region
    $region38: #{gru_ae_forward.3} parent=1 // pred_check
      _
    $region39: #{gru_ae_forward.3} parent=1 // pred_check_branch
      %43 = sbr.rel (0) target = $region41
    $region40: #{gru_ae_forward.3} parent=1 // pred_region
      _
    $region41: #{gru_ae_forward.3} parent=1 // pred_fallthru
      _
    // Predicated region
    $region42: #{gru_ae_forward.3} parent=1 // pred_check
      _
    $region43: #{gru_ae_forward.3} parent=1 // pred_check_branch
      %45 = sbr.rel (0) target = $region45
    $region44: #{gru_ae_forward.3} parent=1 // pred_region
      _
    $region45: #{gru_ae_forward.3} parent=1 // pred_fallthru
      _
    // Predicated region
    $region46: #{gru_ae_forward.3} parent=1 // pred_check
      _
    $region47: #{gru_ae_forward.3} parent=1 // pred_check_branch
      %47 = sbr.rel (0) target = $region49
    $region48: #{gru_ae_forward.3} parent=1 // pred_region
      _
    $region49: #{gru_ae_forward.3} parent=1 // pred_fallthru
      _
    %s48 = ssub.s32 0, 0
    %p49 = scmp.lt.s32.totalorder %s48, 0
    %s50 = scalar_select %p49, %s48, 0
    %s51 = smul.addr %s50, 8
    %s52 = scalar_lea.vmem %s0, %s51
    %s53 = ssub.s32 0, 0
    %p54 = scmp.lt.s32.totalorder %s53, 0
    %s55 = scalar_select %p54, %s53, 0
    %s56 = smul.addr %s55, 8
    %s57 = scalar_lea.vmem %s0, %s56
    %s58 = ssub.s32 0, 0
    %p60 = scmp.eq.s32.totalorder 0, 0
    // Predicated region
    $region50: #{gru_ae_forward.3} parent=1 // pred_check
      %p61 = pneg %p60
    $region51: #{gru_ae_forward.3} parent=1 // pred_check_branch
      %63 = sbr.rel (%p61) target = $region53
    $region52: #{gru_ae_forward.3} parent=1 // pred_region
      %vm64 = vcmask 254976
      %65 = vst.msk [vmem:[#allocation2] sm:$0x3] %vm64, 0.0
      %66 = vst.msk [vmem:[#allocation2 + $0x2] sm:$0x3] %vm64, 0.0
      %v67 = vld [vmem:[%s1] sm:$0x3]
      %v68 = vpack.c.bf16 %v67, %v67
      %v69 = vld [vmem:[%s2] sm:$0x1]
      %v70 = vld [vmem:[%s3] sm:$0x1]
      %v72 = vlaneseq
      %v73 = vshrl.u32 %v72, 7
      %v74 = vsub.s32 0, %v73
      %v75 = vrot.slane %v70, %v74
      %vm77 = vcmask 15360
      %v79 = vsel %vm77, %v68, 0
      %vm81 = vcmask 1040384
      %v83 = vsel %vm81, %v69, 0
      %85 = vmatprep.subr.bf16.mxu0 0
      %86 = vmatpush1.bf16.msra.mxu0 %v83
      %87 = vmatprep.subr.bf16.mxu0 0
      %88 = vmatpush1.bf16.msra.mxu0 0
      %89 = vmatprep.subr.bf16.mxu0 0
      %90 = vmatpush1.bf16.msra.mxu0 0
      %91 = vmatprep.subr.bf16.mxu0 0
      %92 = vmatpush1.bf16.msra.mxu0 0
      %93 = vmatprep.subr.bf16.mxu0 0
      %94 = vmatpush1.bf16.msra.mxu0 0
      %95 = vmatprep.subr.bf16.mxu0 0
      %96 = vmatpush1.bf16.msra.mxu0 0
      %97 = vmatprep.subr.bf16.mxu0 0
      %98 = vmatpush1.bf16.msra.mxu0 0
      %99 = vmatprep.subr.bf16.mxu0 0
      %100 = vmatpush1.bf16.msra.mxu0 0
      %101 = vmatprep.subr.bf16.mxu0 0
      %102 = vmatpush1.bf16.msra.mxu0 0
      %103 = vmatprep.subr.bf16.mxu0 0
      %104 = vmatpush1.bf16.msra.mxu0 0
      %105 = vmatprep.subr.bf16.mxu0 0
      %106 = vmatpush1.bf16.msra.mxu0 0
      %107 = vmatprep.subr.bf16.mxu0 0
      %108 = vmatpush1.bf16.msra.mxu0 0
      %109 = vmatprep.subr.bf16.mxu0 0
      %110 = vmatpush1.bf16.msra.mxu0 0
      %111 = vmatprep.subr.bf16.mxu0 0
      %112 = vmatpush1.bf16.msra.mxu0 0
      %113 = vmatprep.subr.bf16.mxu0 0
      %114 = vmatpush1.bf16.msra.mxu0 0
      %115 = vmatprep.subr.bf16.mxu0 0
      %116 = vmatpush1.bf16.msra.mxu0 0
      %117 = vmatprep.mubr.bf16.mxu0 0
      %118 = vmatmul.mubr.bf16.gmra.mrb[0].mxu0 %v79
      %v119 = vpop.f32.mrb[0].mxu0
      %v120 = vadd.f32 %v75, %v119
      %v121 = vpop.f32.mrb[0].mxu0
      %v122 = vpop.f32.mrb[0].mxu0
      %v123 = vpop.f32.mrb[0].mxu0
      %124 = vdwg.mxu0
      %v125 = vmax.f32 %v120, 0.0
      %v126 = vpack.c.bf16 %v125, %v125
      %v127 = vld [vmem:[%s4] sm:$0x3]
      %vm128 = vcmask 31744
      %v130 = vsel %vm128, %v126, 0
      %vm132 = vcmask 1041408
      %v134 = vsel %vm132, %v127, 0
      %136 = vmatprep.subr.bf16.mxu0 0
      %137 = vmatpush1.bf16.msra.mxu0 %v134
      %138 = vmatprep.subr.bf16.mxu0 0
      %139 = vmatpush1.bf16.msra.mxu0 0
      %140 = vmatprep.subr.bf16.mxu0 0
      %141 = vmatpush1.bf16.msra.mxu0 0
      %142 = vmatprep.subr.bf16.mxu0 0
      %143 = vmatpush1.bf16.msra.mxu0 0
      %144 = vmatprep.subr.bf16.mxu0 0
      %145 = vmatpush1.bf16.msra.mxu0 0
      %146 = vmatprep.subr.bf16.mxu0 0
      %147 = vmatpush1.bf16.msra.mxu0 0
      %148 = vmatprep.subr.bf16.mxu0 0
      %149 = vmatpush1.bf16.msra.mxu0 0
      %150 = vmatprep.subr.bf16.mxu0 0
      %151 = vmatpush1.bf16.msra.mxu0 0
      %152 = vmatprep.subr.bf16.mxu0 0
      %153 = vmatpush1.bf16.msra.mxu0 0
      %154 = vmatprep.subr.bf16.mxu0 0
      %155 = vmatpush1.bf16.msra.mxu0 0
      %156 = vmatprep.subr.bf16.mxu0 0
      %157 = vmatpush1.bf16.msra.mxu0 0
      %158 = vmatprep.subr.bf16.mxu0 0
      %159 = vmatpush1.bf16.msra.mxu0 0
      %160 = vmatprep.subr.bf16.mxu0 0
      %161 = vmatpush1.bf16.msra.mxu0 0
      %162 = vmatprep.subr.bf16.mxu0 0
      %163 = vmatpush1.bf16.msra.mxu0 0
      %164 = vmatprep.subr.bf16.mxu0 0
      %165 = vmatpush1.bf16.msra.mxu0 0
      %166 = vmatprep.subr.bf16.mxu0 0
      %167 = vmatpush1.bf16.msra.mxu0 0
      %168 = vmatprep.mubr.bf16.mxu0 0
      %169 = vmatmul.mubr.bf16.gmra.mrb[0].mxu0 %v130
      %v170 = vpop.f32.mrb[0].mxu0
      %v171 = vadd.f32 0.0, %v170
      %v172 = vpop.f32.mrb[0].mxu0
      %v173 = vpop.f32.mrb[0].mxu0
      %v174 = vpop.f32.mrb[0].mxu0
      %175 = vdwg.mxu0
      %vm176 = vcmask 779264
      %177 = vst.msk [vmem:[#allocation3] sm:$0x3] %vm176, %v171
    $region53: #{gru_ae_forward.3} parent=1 // pred_fallthru
      _
    %v178 = vld [vmem:[#allocation3] sm:$0x3]
    %v179 = vld [vmem:[%s6] sm:$0x1]
    %v181 = vlaneseq
    %v182 = vshrl.u32 %v181, 7
    %v183 = vsub.s32 0, %v182
    %v184 = vrot.slane %v179, %v183
    %v186 = vld [vmem:[%s7] sm:$0x1]
    %v188 = vlaneseq
    %v189 = vshrl.u32 %v188, 7
    %v190 = vsub.s32 0, %v189
    %v191 = vrot.slane %v186, %v190
    %v193 = vld [vmem:[%s10] sm:$0x1]
    %v195 = vlaneseq
    %v196 = vshrl.u32 %v195, 7
    %v197 = vsub.s32 0, %v196
    %v198 = vrot.slane %v193, %v197
    %v200 = vld [vmem:[%s11] sm:$0x1]
    %v202 = vlaneseq
    %v203 = vshrl.u32 %v202, 7
    %v204 = vsub.s32 0, %v203
    %v205 = vrot.slane %v200, %v204
    %v207 = vld [vmem:[#allocation2] sm:$0x3]
    %s208 = scalar_lea.vmem [#allocation2], 2
    %v209 = vld [vmem:[%s208] sm:$0x3]
    %v210 = vld [vmem:[%s57 + $0x7] sm:$0x1]
    %v211 = vld [vmem:[%s57 + $0xf] sm:$0x1]
    %213 = vset.pattern.permute.xlu0 0
    %214 = vperm.xlu0 %213, %v210
    %v215 = vpop.permute.xlu0 %214
    %218 = vset.pattern.permute.xlu0 0
    %219 = vperm.xlu0 %218, %v211
    %v220 = vpop.permute.xlu0 %219
    %v223 = vrot.slane %v178, 1
    %v226 = vmul.f32 %v215, %v178
    %v227 = vmul.f32 %v220, %v223
    %v228 = vadd.f32 %v226, %v184
    %v229 = vadd.f32 %v227, %v184
    %v230 = vpack.c.bf16 %v207, %v207
    %v231 = vld [vmem:[%s5] sm:$0xf]
    %v232 = vld [vmem:[%s5 + $0x4] sm:$0xf]
    %v233 = vld [vmem:[%s5 + $0x8] sm:$0xf]
    %v234 = vld [vmem:[%s5 + $0xc] sm:$0xf]
    %v239 = vunpack.c.l.b16 %v231
    %v240 = vunpack.c.l.b16 %v232
    %v241 = vunpack.c.l.b16 %v233
    %v242 = vunpack.c.l.b16 %v234
    %v243 = vpack.c.b16 %v240, %v239
    %v244 = vpack.c.b16 %v242, %v241
    %vm247 = vcmask 261120
    %v249 = vsel %vm247, %v230, 0
    %251 = vmatprep.subr.bf16.mxu0 0
    %252 = vmatpush1.bf16.msra.mxu0 %v243
    %253 = vmatprep.subr.bf16.mxu0 0
    %254 = vmatpush1.bf16.msra.mxu0 %v244
    %255 = vmatprep.subr.bf16.mxu0 0
    %256 = vmatpush1.bf16.msra.mxu0 0
    %257 = vmatprep.subr.bf16.mxu0 0
    %258 = vmatpush1.bf16.msra.mxu0 0
    %259 = vmatprep.subr.bf16.mxu0 0
    %260 = vmatpush1.bf16.msra.mxu0 0
    %261 = vmatprep.subr.bf16.mxu0 0
    %262 = vmatpush1.bf16.msra.mxu0 0
    %263 = vmatprep.subr.bf16.mxu0 0
    %264 = vmatpush1.bf16.msra.mxu0 0
    %265 = vmatprep.subr.bf16.mxu0 0
    %266 = vmatpush1.bf16.msra.mxu0 0
    %267 = vmatprep.subr.bf16.mxu0 0
    %268 = vmatpush1.bf16.msra.mxu0 0
    %269 = vmatprep.subr.bf16.mxu0 0
    %270 = vmatpush1.bf16.msra.mxu0 0
    %271 = vmatprep.subr.bf16.mxu0 0
    %272 = vmatpush1.bf16.msra.mxu0 0
    %273 = vmatprep.subr.bf16.mxu0 0
    %274 = vmatpush1.bf16.msra.mxu0 0
    %275 = vmatprep.subr.bf16.mxu0 0
    %276 = vmatpush1.bf16.msra.mxu0 0
    %277 = vmatprep.subr.bf16.mxu0 0
    %278 = vmatpush1.bf16.msra.mxu0 0
    %279 = vmatprep.subr.bf16.mxu0 0
    %280 = vmatpush1.bf16.msra.mxu0 0
    %281 = vmatprep.subr.bf16.mxu0 0
    %282 = vmatpush1.bf16.msra.mxu0 0
    %283 = vmatprep.mubr.bf16.mxu0 0
    %284 = vmatmul.mubr.bf16.gmra.mrb[0].mxu0 %v249
    %v285 = vpop.f32.mrb[0].mxu0
    %v286 = vadd.f32 %v191, %v285
    %v287 = vpop.f32.mrb[0].mxu0
    %v288 = vpop.f32.mrb[0].mxu0
    %v289 = vpop.f32.mrb[0].mxu0
    %290 = vdwg.mxu0
    %v292 = vrot.slane %v286, 1
    %v295 = vadd.f32 %v228, %v286
    %v296 = vadd.f32 %v229, %v292
    %v297 = vxor.u32 %v295, 2147483648
    %v298 = vxor.u32 %v296, 2147483648
    %v299 = vmul.f32 %v297, 1.442695
    %v300 = vpow.pop %v299
    %v301 = vmul.f32 %v298, 1.442695
    %v302 = vpow.pop %v301
    %v303 = vadd.f32 %v300, 1.0
    %v304 = vadd.f32 %v302, 1.0
    %v305 = vrcp.pop %v303
    %v306 = vmul.f32 1.0, %v305
    %v307 = vrcp.pop %v304
    %v308 = vmul.f32 1.0, %v307
    %309 = vrot.lane.b32.xlu0 %v286, 64
    %v310 = vpop.permute.xlu0 %309
    %311 = vrot.lane.b32.xlu0 %v292, 64
    %v312 = vpop.permute.xlu0 %311
    %v315 = vmul.f32 %v306, %v310
    %v316 = vmul.f32 %v308, %v312
    %319 = vrot.lane.b32.xlu0 %v315, 64
    %v320 = vpop.permute.xlu0 %319
    %321 = vrot.lane.b32.xlu0 %v316, 64
    %v322 = vpop.permute.xlu0 %321
    %v325 = vadd.f32 %v228, %v320
    %v326 = vadd.f32 %v229, %v322
    %v327 = vtanh.pop %v325
    %v328 = vtanh.pop %v326
    %v329 = vsub.f32 1.0, %v306
    %v330 = vsub.f32 1.0, %v308
    %333 = vrot.lane.b32.xlu0 %v327, 96
    %v334 = vpop.permute.xlu0 %333
    %335 = vrot.lane.b32.xlu0 %v328, 96
    %v336 = vpop.permute.xlu0 %335
    %v339 = vmul.f32 %v329, %v334
    %v340 = vmul.f32 %v330, %v336
    %v342 = vrot.slane %v207, 1
    %343 = vrot.lane.b32.xlu0 %v207, 32
    %v344 = vpop.permute.xlu0 %343
    %345 = vrot.lane.b32.xlu0 %v342, 32
    %v346 = vpop.permute.xlu0 %345
    %v349 = vmul.f32 %v306, %v344
    %v350 = vmul.f32 %v308, %v346
    %v351 = vadd.f32 %v339, %v349
    %v352 = vadd.f32 %v340, %v350
    %v353 = vpack.c.bf16 %v351, %v351
    %v354 = vpack.c.bf16 %v352, %v352
    %v355 = vld [vmem:[%s8] sm:$0xf]
    %v356 = vld [vmem:[%s8 + $0x4] sm:$0xf]
    %v357 = vld [vmem:[%s8 + $0x8] sm:$0xf]
    %v358 = vld [vmem:[%s8 + $0xc] sm:$0xf]
    %v361 = vunpack.c.l.b16 %v353
    %v362 = vunpack.c.l.b16 %v354
    %v363 = vrot.slane %v362, 7
    %vm364 = vcmask 1041409
    %v365 = vsel %vm364, %v363, %v361
    %v366 = vpack.c.b16 %v365, %v365
    %367 = vrot.lane.b32.xlu0 %v366, 96
    %v368 = vpop.permute.xlu0 %367
    %v373 = vunpack.c.l.b16 %v355
    %v374 = vunpack.c.l.b16 %v356
    %v375 = vunpack.c.l.b16 %v357
    %v376 = vunpack.c.l.b16 %v358
    %v377 = vpack.c.b16 %v374, %v373
    %v378 = vpack.c.b16 %v376, %v375
    %v382 = vsel %vm247, %v368, 0
    %384 = vmatprep.subr.bf16.mxu0 0
    %385 = vmatpush1.bf16.msra.mxu0 %v377
    %386 = vmatprep.subr.bf16.mxu0 0
    %387 = vmatpush1.bf16.msra.mxu0 %v378
    %388 = vmatprep.subr.bf16.mxu0 0
    %389 = vmatpush1.bf16.msra.mxu0 0
    %390 = vmatprep.subr.bf16.mxu0 0
    %391 = vmatpush1.bf16.msra.mxu0 0
    %392 = vmatprep.subr.bf16.mxu0 0
    %393 = vmatpush1.bf16.msra.mxu0 0
    %394 = vmatprep.subr.bf16.mxu0 0
    %395 = vmatpush1.bf16.msra.mxu0 0
    %396 = vmatprep.subr.bf16.mxu0 0
    %397 = vmatpush1.bf16.msra.mxu0 0
    %398 = vmatprep.subr.bf16.mxu0 0
    %399 = vmatpush1.bf16.msra.mxu0 0
    %400 = vmatprep.subr.bf16.mxu0 0
    %401 = vmatpush1.bf16.msra.mxu0 0
    %402 = vmatprep.subr.bf16.mxu0 0
    %403 = vmatpush1.bf16.msra.mxu0 0
    %404 = vmatprep.subr.bf16.mxu0 0
    %405 = vmatpush1.bf16.msra.mxu0 0
    %406 = vmatprep.subr.bf16.mxu0 0
    %407 = vmatpush1.bf16.msra.mxu0 0
    %408 = vmatprep.subr.bf16.mxu0 0
    %409 = vmatpush1.bf16.msra.mxu0 0
    %410 = vmatprep.subr.bf16.mxu0 0
    %411 = vmatpush1.bf16.msra.mxu0 0
    %412 = vmatprep.subr.bf16.mxu0 0
    %413 = vmatpush1.bf16.msra.mxu0 0
    %414 = vmatprep.subr.bf16.mxu0 0
    %415 = vmatpush1.bf16.msra.mxu0 0
    %416 = vmatprep.mubr.bf16.mxu0 0
    %417 = vmatmul.mubr.bf16.gmra.mrb[0].mxu0 %v382
    %v418 = vpop.f32.mrb[0].mxu0
    %v419 = vadd.f32 %v198, %v418
    %v420 = vpop.f32.mrb[0].mxu0
    %v421 = vpop.f32.mrb[0].mxu0
    %v422 = vpop.f32.mrb[0].mxu0
    %423 = vdwg.mxu0
    %v424 = vpack.c.bf16 %v209, %v209
    %v425 = vld [vmem:[%s9] sm:$0xf]
    %v426 = vld [vmem:[%s9 + $0x4] sm:$0xf]
    %v427 = vld [vmem:[%s9 + $0x8] sm:$0xf]
    %v428 = vld [vmem:[%s9 + $0xc] sm:$0xf]
    %v433 = vunpack.c.l.b16 %v425
    %v434 = vunpack.c.l.b16 %v426
    %v435 = vunpack.c.l.b16 %v427
    %v436 = vunpack.c.l.b16 %v428
    %v437 = vpack.c.b16 %v434, %v433
    %v438 = vpack.c.b16 %v436, %v435
    %v442 = vsel %vm247, %v424, 0
    %444 = vmatprep.subr.bf16.mxu0 0
    %445 = vmatpush1.bf16.msra.mxu0 %v437
    %446 = vmatprep.subr.bf16.mxu0 0
    %447 = vmatpush1.bf16.msra.mxu0 %v438
    %448 = vmatprep.subr.bf16.mxu0 0
    %449 = vmatpush1.bf16.msra.mxu0 0
    %450 = vmatprep.subr.bf16.mxu0 0
    %451 = vmatpush1.bf16.msra.mxu0 0
    %452 = vmatprep.subr.bf16.mxu0 0
    %453 = vmatpush1.bf16.msra.mxu0 0
    %454 = vmatprep.subr.bf16.mxu0 0
    %455 = vmatpush1.bf16.msra.mxu0 0
    %456 = vmatprep.subr.bf16.mxu0 0
    %457 = vmatpush1.bf16.msra.mxu0 0
    %458 = vmatprep.subr.bf16.mxu0 0
    %459 = vmatpush1.bf16.msra.mxu0 0
    %460 = vmatprep.subr.bf16.mxu0 0
    %461 = vmatpush1.bf16.msra.mxu0 0
    %462 = vmatprep.subr.bf16.mxu0 0
    %463 = vmatpush1.bf16.msra.mxu0 0
    %464 = vmatprep.subr.bf16.mxu0 0
    %465 = vmatpush1.bf16.msra.mxu0 0
    %466 = vmatprep.subr.bf16.mxu0 0
    %467 = vmatpush1.bf16.msra.mxu0 0
    %468 = vmatprep.subr.bf16.mxu0 0
    %469 = vmatpush1.bf16.msra.mxu0 0
    %470 = vmatprep.subr.bf16.mxu0 0
    %471 = vmatpush1.bf16.msra.mxu0 0
    %472 = vmatprep.subr.bf16.mxu0 0
    %473 = vmatpush1.bf16.msra.mxu0 0
    %474 = vmatprep.subr.bf16.mxu0 0
    %475 = vmatpush1.bf16.msra.mxu0 0
    %476 = vmatprep.mubr.bf16.mxu0 0
    %477 = vmatmul.mubr.bf16.gmra.mrb[0].mxu0 %v442
    %v478 = vpop.f32.mrb[0].mxu0
    %v479 = vadd.f32 %v205, %v478
    %v480 = vpop.f32.mrb[0].mxu0
    %v481 = vpop.f32.mrb[0].mxu0
    %v482 = vpop.f32.mrb[0].mxu0
    %483 = vdwg.mxu0
    %v484 = vadd.f32 %v419, %v479
    %v485 = vxor.u32 %v484, 2147483648
    %v486 = vmul.f32 %v485, 1.442695
    %v487 = vpow.pop %v486
    %v488 = vadd.f32 %v487, 1.0
    %v489 = vrcp.pop %v488
    %v490 = vmul.f32 1.0, %v489
    %492 = vrot.lane.b32.xlu0 %v479, 64
    %v493 = vpop.permute.xlu0 %492
    %v495 = vmul.f32 %v490, %v493
    %497 = vrot.lane.b32.xlu0 %v495, 64
    %v498 = vpop.permute.xlu0 %497
    %v500 = vadd.f32 %v419, %v498
    %v501 = vtanh.pop %v500
    %v502 = vsub.f32 1.0, %v490
    %504 = vrot.lane.b32.xlu0 %v501, 96
    %v505 = vpop.permute.xlu0 %504
    %v507 = vmul.f32 %v502, %v505
    %509 = vrot.lane.b32.xlu0 %v209, 32
    %v510 = vpop.permute.xlu0 %509
    %v512 = vmul.f32 %v490, %v510
    %v513 = vadd.f32 %v507, %v512
    %v516 = vunpack.c.l.s4 1966171168
    %v517 = vunpack.c.0.s8 %v516
    %v518 = vlaneseq
    %v519 = vshrl.u32 %v518, 7
    %v520 = vsub.s32 %v517, %v519
    %v521 = vrot.slane %v513, %v520
    %v522 = vcombine.high %v521, %v521
    %v524 = vunpack.c.l.s4 1966171168
    %v525 = vunpack.c.0.s8 %v524
    %v526 = vlaneseq
    %v527 = vshrl.u32 %v526, 7
    %v528 = vsub.s32 %v525, %v527
    %v529 = vrot.slane %v521, %v528
    %v531 = vunpack.c.l.s4 1966171168
    %v532 = vunpack.c.0.s8 %v531
    %v533 = vlaneseq
    %v534 = vshrl.u32 %v533, 7
    %v535 = vsub.s32 %v532, %v534
    %v536 = vrot.slane %v522, %v535
    %v537 = vlaneseq
    %v538 = vshrl.u32 %v537, 7
    %v539 = vsub.s32 0, %v538
    %v540 = vrot.slane %v529, %v539
    %v541 = vlaneseq
    %v542 = vshrl.u32 %v541, 7
    %v543 = vsub.s32 0, %v542
    %v544 = vrot.slane %v536, %v543
    %545 = vrot.lane.b32.xlu0 %v540, 96
    %v546 = vpop.permute.xlu0 %545
    %547 = vrot.lane.b32.xlu0 %v544, 96
    %v548 = vpop.permute.xlu0 %547
    %vm551 = vcmask 253952
    %552 = vst.msk [vmem:[#allocation4] sm:$0x1] %vm551, %v546
    %553 = vst.msk [vmem:[#allocation4 + $0x8] sm:$0x1] %vm551, %v548
    %v554 = vld [vmem:[%s57 + $0x6] sm:$0x1]
    %v555 = vld [vmem:[%s57 + $0xe] sm:$0x1]
    %557 = vset.pattern.permute.xlu0 0
    %558 = vperm.xlu0 %557, %v554
    %v559 = vpop.permute.xlu0 %558
    %562 = vset.pattern.permute.xlu0 0
    %563 = vperm.xlu0 %562, %v555
    %v564 = vpop.permute.xlu0 %563
    %v566 = vmul.f32 %v559, %v178
    %v567 = vmul.f32 %v564, %v223
    %v568 = vadd.f32 %v566, %v184
    %v569 = vadd.f32 %v567, %v184
    %v570 = vld [vmem:[%s5] sm:$0xf]
    %v571 = vld [vmem:[%s5 + $0x4] sm:$0xf]
    %v572 = vld [vmem:[%s5 + $0x8] sm:$0xf]
    %v573 = vld [vmem:[%s5 + $0xc] sm:$0xf]
    %v578 = vunpack.c.l.b16 %v570
    %v579 = vunpack.c.l.b16 %v571
    %v580 = vunpack.c.l.b16 %v572
    %v581 = vunpack.c.l.b16 %v573
    %v582 = vpack.c.b16 %v579, %v578
    %v583 = vpack.c.b16 %v581, %v580
    %586 = vmatprep.subr.bf16.mxu0 0
    %587 = vmatpush1.bf16.msra.mxu0 %v582
    %588 = vmatprep.subr.bf16.mxu0 0
    %589 = vmatpush1.bf16.msra.mxu0 %v583
    %590 = vmatprep.subr.bf16.mxu0 0
    %591 = vmatpush1.bf16.msra.mxu0 0
    %592 = vmatprep.subr.bf16.mxu0 0
    %593 = vmatpush1.bf16.msra.mxu0 0
    %594 = vmatprep.subr.bf16.mxu0 0
    %595 = vmatpush1.bf16.msra.mxu0 0
    %596 = vmatprep.subr.bf16.mxu0 0
    %597 = vmatpush1.bf16.msra.mxu0 0
    %598 = vmatprep.subr.bf16.mxu0 0
    %599 = vmatpush1.bf16.msra.mxu0 0
    %600 = vmatprep.subr.bf16.mxu0 0
    %601 = vmatpush1.bf16.msra.mxu0 0
    %602 = vmatprep.subr.bf16.mxu0 0
    %603 = vmatpush1.bf16.msra.mxu0 0
    %604 = vmatprep.subr.bf16.mxu0 0
    %605 = vmatpush1.bf16.msra.mxu0 0
    %606 = vmatprep.subr.bf16.mxu0 0
    %607 = vmatpush1.bf16.msra.mxu0 0
    %608 = vmatprep.subr.bf16.mxu0 0
    %609 = vmatpush1.bf16.msra.mxu0 0
    %610 = vmatprep.subr.bf16.mxu0 0
    %611 = vmatpush1.bf16.msra.mxu0 0
    %612 = vmatprep.subr.bf16.mxu0 0
    %613 = vmatpush1.bf16.msra.mxu0 0
    %614 = vmatprep.subr.bf16.mxu0 0
    %615 = vmatpush1.bf16.msra.mxu0 0
    %616 = vmatprep.subr.bf16.mxu0 0
    %617 = vmatpush1.bf16.msra.mxu0 0
    %618 = vmatprep.mubr.bf16.mxu0 0
    %619 = vmatmul.mubr.bf16.gmra.mrb[0].mxu0 %v382
    %v620 = vpop.f32.mrb[0].mxu0
    %v621 = vadd.f32 %v191, %v620
    %v622 = vpop.f32.mrb[0].mxu0
    %v623 = vpop.f32.mrb[0].mxu0
    %v624 = vpop.f32.mrb[0].mxu0
    %625 = vdwg.mxu0
    %v627 = vrot.slane %v621, 1
    %v630 = vadd.f32 %v568, %v621
    %v631 = vadd.f32 %v569, %v627
    %v632 = vxor.u32 %v630, 2147483648
    %v633 = vxor.u32 %v631, 2147483648
    %v634 = vmul.f32 %v632, 1.442695
    %v635 = vpow.pop %v634
    %v636 = vmul.f32 %v633, 1.442695
    %v637 = vpow.pop %v636
    %v638 = vadd.f32 %v635, 1.0
    %v639 = vadd.f32 %v637, 1.0
    %v640 = vrcp.pop %v638
    %v641 = vmul.f32 1.0, %v640
    %v642 = vrcp.pop %v639
    %v643 = vmul.f32 1.0, %v642
    %644 = vrot.lane.b32.xlu0 %v621, 64
    %v645 = vpop.permute.xlu0 %644
    %646 = vrot.lane.b32.xlu0 %v627, 64
    %v647 = vpop.permute.xlu0 %646
    %v650 = vmul.f32 %v641, %v645
    %v651 = vmul.f32 %v643, %v647
    %654 = vrot.lane.b32.xlu0 %v650, 64
    %v655 = vpop.permute.xlu0 %654
    %656 = vrot.lane.b32.xlu0 %v651, 64
    %v657 = vpop.permute.xlu0 %656
    %v660 = vadd.f32 %v568, %v655
    %v661 = vadd.f32 %v569, %v657
    %v662 = vtanh.pop %v660
    %v663 = vtanh.pop %v661
    %v664 = vsub.f32 1.0, %v641
    %v665 = vsub.f32 1.0, %v643
    %668 = vrot.lane.b32.xlu0 %v662, 96
    %v669 = vpop.permute.xlu0 %668
    %670 = vrot.lane.b32.xlu0 %v663, 96
    %v671 = vpop.permute.xlu0 %670
    %v674 = vmul.f32 %v664, %v669
    %v675 = vmul.f32 %v665, %v671
    %v676 = vmul.f32 %v641, %v351
    %v677 = vmul.f32 %v643, %v352
    %v678 = vadd.f32 %v674, %v676
    %v679 = vadd.f32 %v675, %v677
    %v680 = vpack.c.bf16 %v678, %v678
    %v681 = vpack.c.bf16 %v679, %v679
    %v682 = vld [vmem:[%s8] sm:$0xf]
    %v683 = vld [vmem:[%s8 + $0x4] sm:$0xf]
    %v684 = vld [vmem:[%s8 + $0x8] sm:$0xf]
    %v685 = vld [vmem:[%s8 + $0xc] sm:$0xf]
    %v688 = vunpack.c.l.b16 %v680
    %v689 = vunpack.c.l.b16 %v681
    %v690 = vrot.slane %v689, 7
    %v691 = vsel %vm364, %v690, %v688
    %v692 = vpack.c.b16 %v691, %v691
    %693 = vrot.lane.b32.xlu0 %v692, 96
    %v694 = vpop.permute.xlu0 %693
    %v699 = vunpack.c.l.b16 %v682
    %v700 = vunpack.c.l.b16 %v683
    %v701 = vunpack.c.l.b16 %v684
    %v702 = vunpack.c.l.b16 %v685
    %v703 = vpack.c.b16 %v700, %v699
    %v704 = vpack.c.b16 %v702, %v701
    %v708 = vsel %vm247, %v694, 0
    %710 = vmatprep.subr.bf16.mxu0 0
    %711 = vmatpush1.bf16.msra.mxu0 %v703
    %712 = vmatprep.subr.bf16.mxu0 0
    %713 = vmatpush1.bf16.msra.mxu0 %v704
    %714 = vmatprep.subr.bf16.mxu0 0
    %715 = vmatpush1.bf16.msra.mxu0 0
    %716 = vmatprep.subr.bf16.mxu0 0
    %717 = vmatpush1.bf16.msra.mxu0 0
    %718 = vmatprep.subr.bf16.mxu0 0
    %719 = vmatpush1.bf16.msra.mxu0 0
    %720 = vmatprep.subr.bf16.mxu0 0
    %721 = vmatpush1.bf16.msra.mxu0 0
    %722 = vmatprep.subr.bf16.mxu0 0
    %723 = vmatpush1.bf16.msra.mxu0 0
    %724 = vmatprep.subr.bf16.mxu0 0
    %725 = vmatpush1.bf16.msra.mxu0 0
    %726 = vmatprep.subr.bf16.mxu0 0
    %727 = vmatpush1.bf16.msra.mxu0 0
    %728 = vmatprep.subr.bf16.mxu0 0
    %729 = vmatpush1.bf16.msra.mxu0 0
    %730 = vmatprep.subr.bf16.mxu0 0
    %731 = vmatpush1.bf16.msra.mxu0 0
    %732 = vmatprep.subr.bf16.mxu0 0
    %733 = vmatpush1.bf16.msra.mxu0 0
    %734 = vmatprep.subr.bf16.mxu0 0
    %735 = vmatpush1.bf16.msra.mxu0 0
    %736 = vmatprep.subr.bf16.mxu0 0
    %737 = vmatpush1.bf16.msra.mxu0 0
    %738 = vmatprep.subr.bf16.mxu0 0
    %739 = vmatpush1.bf16.msra.mxu0 0
    %740 = vmatprep.subr.bf16.mxu0 0
    %741 = vmatpush1.bf16.msra.mxu0 0
    %742 = vmatprep.mubr.bf16.mxu0 0
    %743 = vmatmul.mubr.bf16.gmra.mrb[0].mxu0 %v708
    %v744 = vpop.f32.mrb[0].mxu0
    %v745 = vadd.f32 %v198, %v744
    %v746 = vpop.f32.mrb[0].mxu0
    %v747 = vpop.f32.mrb[0].mxu0
    %v748 = vpop.f32.mrb[0].mxu0
    %749 = vdwg.mxu0
    %v750 = vpack.c.bf16 %v513, %v513
    %v751 = vld [vmem:[%s9] sm:$0xf]
    %v752 = vld [vmem:[%s9 + $0x4] sm:$0xf]
    %v753 = vld [vmem:[%s9 + $0x8] sm:$0xf]
    %v754 = vld [vmem:[%s9 + $0xc] sm:$0xf]
    %756 = vrot.lane.b32.xlu0 %v750, 96
    %v757 = vpop.permute.xlu0 %756
    %v762 = vunpack.c.l.b16 %v751
    %v763 = vunpack.c.l.b16 %v752
    %v764 = vunpack.c.l.b16 %v753
    %v765 = vunpack.c.l.b16 %v754
    %v766 = vpack.c.b16 %v763, %v762
    %v767 = vpack.c.b16 %v765, %v764
    %v771 = vsel %vm247, %v757, 0
    %773 = vmatprep.subr.bf16.mxu0 0
    %774 = vmatpush1.bf16.msra.mxu0 %v766
    %775 = vmatprep.subr.bf16.mxu0 0
    %776 = vmatpush1.bf16.msra.mxu0 %v767
    %777 = vmatprep.subr.bf16.mxu0 0
    %778 = vmatpush1.bf16.msra.mxu0 0
    %779 = vmatprep.subr.bf16.mxu0 0
    %780 = vmatpush1.bf16.msra.mxu0 0
    %781 = vmatprep.subr.bf16.mxu0 0
    %782 = vmatpush1.bf16.msra.mxu0 0
    %783 = vmatprep.subr.bf16.mxu0 0
    %784 = vmatpush1.bf16.msra.mxu0 0
    %785 = vmatprep.subr.bf16.mxu0 0
    %786 = vmatpush1.bf16.msra.mxu0 0
    %787 = vmatprep.subr.bf16.mxu0 0
    %788 = vmatpush1.bf16.msra.mxu0 0
    %789 = vmatprep.subr.bf16.mxu0 0
    %790 = vmatpush1.bf16.msra.mxu0 0
    %791 = vmatprep.subr.bf16.mxu0 0
    %792 = vmatpush1.bf16.msra.mxu0 0
    %793 = vmatprep.subr.bf16.mxu0 0
    %794 = vmatpush1.bf16.msra.mxu0 0
    %795 = vmatprep.subr.bf16.mxu0 0
    %796 = vmatpush1.bf16.msra.mxu0 0
    %797 = vmatprep.subr.bf16.mxu0 0
    %798 = vmatpush1.bf16.msra.mxu0 0
    %799 = vmatprep.subr.bf16.mxu0 0
    %800 = vmatpush1.bf16.msra.mxu0 0
    %801 = vmatprep.subr.bf16.mxu0 0
    %802 = vmatpush1.bf16.msra.mxu0 0
    %803 = vmatprep.subr.bf16.mxu0 0
    %804 = vmatpush1.bf16.msra.mxu0 0
    %805 = vmatprep.mubr.bf16.mxu0 0
    %806 = vmatmul.mubr.bf16.gmra.mrb[0].mxu0 %v771
    %v807 = vpop.f32.mrb[0].mxu0
    %v808 = vadd.f32 %v205, %v807
    %v809 = vpop.f32.mrb[0].mxu0
    %v810 = vpop.f32.mrb[0].mxu0
    %v811 = vpop.f32.mrb[0].mxu0
    %812 = vdwg.mxu0
    %v813 = vadd.f32 %v745, %v808
    %v814 = vxor.u32 %v813, 2147483648
    %v815 = vmul.f32 %v814, 1.442695
    %v816 = vpow.pop %v815
    %v817 = vadd.f32 %v816, 1.0
    %v818 = vrcp.pop %v817
    %v819 = vmul.f32 1.0, %v818
    %821 = vrot.lane.b32.xlu0 %v808, 64
    %v822 = vpop.permute.xlu0 %821
    %v824 = vmul.f32 %v819, %v822
    %826 = vrot.lane.b32.xlu0 %v824, 64
    %v827 = vpop.permute.xlu0 %826
    %v829 = vadd.f32 %v745, %v827
    %v830 = vtanh.pop %v829
    %v831 = vsub.f32 1.0, %v819
    %833 = vrot.lane.b32.xlu0 %v830, 96
    %v834 = vpop.permute.xlu0 %833
    %v836 = vmul.f32 %v831, %v834
    %v837 = vmul.f32 %v819, %v513
    %v838 = vadd.f32 %v836, %v837
    %v841 = vunpack.c.l.s4 1966171168
    %v842 = vunpack.c.0.s8 %v841
    %v843 = vlaneseq
    %v844 = vshrl.u32 %v843, 7
    %v845 = vsub.s32 %v842, %v844
    %v846 = vrot.slane %v838, %v845
    %v847 = vcombine.high %v846, %v846
    %v849 = vunpack.c.l.s4 1966171168
    %v850 = vunpack.c.0.s8 %v849
    %v851 = vlaneseq
    %v852 = vshrl.u32 %v851, 7
    %v853 = vsub.s32 %v850, %v852
    %v854 = vrot.slane %v846, %v853
    %v856 = vunpack.c.l.s4 1966171168
    %v857 = vunpack.c.0.s8 %v856
    %v858 = vlaneseq
    %v859 = vshrl.u32 %v858, 7
    %v860 = vsub.s32 %v857, %v859
    %v861 = vrot.slane %v847, %v860
    %v862 = vlaneseq
    %v863 = vshrl.u32 %v862, 7
    %v864 = vsub.s32 0, %v863
    %v865 = vrot.slane %v854, %v864
    %v866 = vlaneseq
    %v867 = vshrl.u32 %v866, 7
    %v868 = vsub.s32 0, %v867
    %v869 = vrot.slane %v861, %v868
    %870 = vrot.lane.b32.xlu0 %v865, 96
    %v871 = vpop.permute.xlu0 %870
    %872 = vrot.lane.b32.xlu0 %v869, 96
    %v873 = vpop.permute.xlu0 %872
    %876 = vst.msk [vmem:[#allocation4 + $0x1] sm:$0x1] %vm551, %v871
    %877 = vst.msk [vmem:[#allocation4 + $0x9] sm:$0x1] %vm551, %v873
    %v878 = vld [vmem:[%s57 + $0x5] sm:$0x1]
    %v879 = vld [vmem:[%s57 + $0xd] sm:$0x1]
    %881 = vset.pattern.permute.xlu0 0
    %882 = vperm.xlu0 %881, %v878
    %v883 = vpop.permute.xlu0 %882
    %886 = vset.pattern.permute.xlu0 0
    %887 = vperm.xlu0 %886, %v879
    %v888 = vpop.permute.xlu0 %887
    %v890 = vmul.f32 %v883, %v178
    %v891 = vmul.f32 %v888, %v223
    %v892 = vadd.f32 %v890, %v184
    %v893 = vadd.f32 %v891, %v184
    %v894 = vld [vmem:[%s5] sm:$0xf]
    %v895 = vld [vmem:[%s5 + $0x4] sm:$0xf]
    %v896 = vld [vmem:[%s5 + $0x8] sm:$0xf]
    %v897 = vld [vmem:[%s5 + $0xc] sm:$0xf]
    %v902 = vunpack.c.l.b16 %v894
    %v903 = vunpack.c.l.b16 %v895
    %v904 = vunpack.c.l.b16 %v896
    %v905 = vunpack.c.l.b16 %v897
    %v906 = vpack.c.b16 %v903, %v902
    %v907 = vpack.c.b16 %v905, %v904
    %910 = vmatprep.subr.bf16.mxu0 0
    %911 = vmatpush1.bf16.msra.mxu0 %v906
    %912 = vmatprep.subr.bf16.mxu0 0
    %913 = vmatpush1.bf16.msra.mxu0 %v907
    %914 = vmatprep.subr.bf16.mxu0 0
    %915 = vmatpush1.bf16.msra.mxu0 0
    %916 = vmatprep.subr.bf16.mxu0 0
    %917 = vmatpush1.bf16.msra.mxu0 0
    %918 = vmatprep.subr.bf16.mxu0 0
    %919 = vmatpush1.bf16.msra.mxu0 0
    %920 = vmatprep.subr.bf16.mxu0 0
    %921 = vmatpush1.bf16.msra.mxu0 0
    %922 = vmatprep.subr.bf16.mxu0 0
    %923 = vmatpush1.bf16.msra.mxu0 0
    %924 = vmatprep.subr.bf16.mxu0 0
    %925 = vmatpush1.bf16.msra.mxu0 0
    %926 = vmatprep.subr.bf16.mxu0 0
    %927 = vmatpush1.bf16.msra.mxu0 0
    %928 = vmatprep.subr.bf16.mxu0 0
    %929 = vmatpush1.bf16.msra.mxu0 0
    %930 = vmatprep.subr.bf16.mxu0 0
    %931 = vmatpush1.bf16.msra.mxu0 0
    %932 = vmatprep.subr.bf16.mxu0 0
    %933 = vmatpush1.bf16.msra.mxu0 0
    %934 = vmatprep.subr.bf16.mxu0 0
    %935 = vmatpush1.bf16.msra.mxu0 0
    %936 = vmatprep.subr.bf16.mxu0 0
    %937 = vmatpush1.bf16.msra.mxu0 0
    %938 = vmatprep.subr.bf16.mxu0 0
    %939 = vmatpush1.bf16.msra.mxu0 0
    %940 = vmatprep.subr.bf16.mxu0 0
    %941 = vmatpush1.bf16.msra.mxu0 0
    %942 = vmatprep.mubr.bf16.mxu0 0
    %943 = vmatmul.mubr.bf16.gmra.mrb[0].mxu0 %v708
    %v944 = vpop.f32.mrb[0].mxu0
    %v945 = vadd.f32 %v191, %v944
    %v946 = vpop.f32.mrb[0].mxu0
    %v947 = vpop.f32.mrb[0].mxu0
    %v948 = vpop.f32.mrb[0].mxu0
    %949 = vdwg.mxu0
    %v951 = vrot.slane %v945, 1
    %v954 = vadd.f32 %v892, %v945
    %v955 = vadd.f32 %v893, %v951
    %v956 = vxor.u32 %v954, 2147483648
    %v957 = vxor.u32 %v955, 2147483648
    %v958 = vmul.f32 %v956, 1.442695
    %v959 = vpow.pop %v958
    %v960 = vmul.f32 %v957, 1.442695
    %v961 = vpow.pop %v960
    %v962 = vadd.f32 %v959, 1.0
    %v963 = vadd.f32 %v961, 1.0
    %v964 = vrcp.pop %v962
    %v965 = vmul.f32 1.0, %v964
    %v966 = vrcp.pop %v963
    %v967 = vmul.f32 1.0, %v966
    %968 = vrot.lane.b32.xlu0 %v945, 64
    %v969 = vpop.permute.xlu0 %968
    %970 = vrot.lane.b32.xlu0 %v951, 64
    %v971 = vpop.permute.xlu0 %970
    %v974 = vmul.f32 %v965, %v969
    %v975 = vmul.f32 %v967, %v971
    %978 = vrot.lane.b32.xlu0 %v974, 64
    %v979 = vpop.permute.xlu0 %978
    %980 = vrot.lane.b32.xlu0 %v975, 64
    %v981 = vpop.permute.xlu0 %980
    %v984 = vadd.f32 %v892, %v979
    %v985 = vadd.f32 %v893, %v981
    %v986 = vtanh.pop %v984
    %v987 = vtanh.pop %v985
    %v988 = vsub.f32 1.0, %v965
    %v989 = vsub.f32 1.0, %v967
    %992 = vrot.lane.b32.xlu0 %v986, 96
    %v993 = vpop.permute.xlu0 %992
    %994 = vrot.lane.b32.xlu0 %v987, 96
    %v995 = vpop.permute.xlu0 %994
    %v998 = vmul.f32 %v988, %v993
    %v999 = vmul.f32 %v989, %v995
    %v1000 = vmul.f32 %v965, %v678
    %v1001 = vmul.f32 %v967, %v679
    %v1002 = vadd.f32 %v998, %v1000
    %v1003 = vadd.f32 %v999, %v1001
    %v1004 = vpack.c.bf16 %v1002, %v1002
    %v1005 = vpack.c.bf16 %v1003, %v1003
    %v1006 = vld [vmem:[%s8] sm:$0xf]
    %v1007 = vld [vmem:[%s8 + $0x4] sm:$0xf]
    %v1008 = vld [vmem:[%s8 + $0x8] sm:$0xf]
    %v1009 = vld [vmem:[%s8 + $0xc] sm:$0xf]
    %v1012 = vunpack.c.l.b16 %v1004
    %v1013 = vunpack.c.l.b16 %v1005
    %v1014 = vrot.slane %v1013, 7
    %v1015 = vsel %vm364, %v1014, %v1012
    %v1016 = vpack.c.b16 %v1015, %v1015
    %1017 = vrot.lane.b32.xlu0 %v1016, 96
    %v1018 = vpop.permute.xlu0 %1017
    %v1023 = vunpack.c.l.b16 %v1006
    %v1024 = vunpack.c.l.b16 %v1007
    %v1025 = vunpack.c.l.b16 %v1008
    %v1026 = vunpack.c.l.b16 %v1009
    %v1027 = vpack.c.b16 %v1024, %v1023
    %v1028 = vpack.c.b16 %v1026, %v1025
    %v1032 = vsel %vm247, %v1018, 0
    %1034 = vmatprep.subr.bf16.mxu0 0
    %1035 = vmatpush1.bf16.msra.mxu0 %v1027
    %1036 = vmatprep.subr.bf16.mxu0 0
    %1037 = vmatpush1.bf16.msra.mxu0 %v1028
    %1038 = vmatprep.subr.bf16.mxu0 0
    %1039 = vmatpush1.bf16.msra.mxu0 0
    %1040 = vmatprep.subr.bf16.mxu0 0
    %1041 = vmatpush1.bf16.msra.mxu0 0
    %1042 = vmatprep.subr.bf16.mxu0 0
    %1043 = vmatpush1.bf16.msra.mxu0 0
    %1044 = vmatprep.subr.bf16.mxu0 0
    %1045 = vmatpush1.bf16.msra.mxu0 0
    %1046 = vmatprep.subr.bf16.mxu0 0
    %1047 = vmatpush1.bf16.msra.mxu0 0
    %1048 = vmatprep.subr.bf16.mxu0 0
    %1049 = vmatpush1.bf16.msra.mxu0 0
    %1050 = vmatprep.subr.bf16.mxu0 0
    %1051 = vmatpush1.bf16.msra.mxu0 0
    %1052 = vmatprep.subr.bf16.mxu0 0
    %1053 = vmatpush1.bf16.msra.mxu0 0
    %1054 = vmatprep.subr.bf16.mxu0 0
    %1055 = vmatpush1.bf16.msra.mxu0 0
    %1056 = vmatprep.subr.bf16.mxu0 0
    %1057 = vmatpush1.bf16.msra.mxu0 0
    %1058 = vmatprep.subr.bf16.mxu0 0
    %1059 = vmatpush1.bf16.msra.mxu0 0
    %1060 = vmatprep.subr.bf16.mxu0 0
    %1061 = vmatpush1.bf16.msra.mxu0 0
    %1062 = vmatprep.subr.bf16.mxu0 0
    %1063 = vmatpush1.bf16.msra.mxu0 0
    %1064 = vmatprep.subr.bf16.mxu0 0
    %1065 = vmatpush1.bf16.msra.mxu0 0
    %1066 = vmatprep.mubr.bf16.mxu0 0
    %1067 = vmatmul.mubr.bf16.gmra.mrb[0].mxu0 %v1032
    %v1068 = vpop.f32.mrb[0].mxu0
    %v1069 = vadd.f32 %v198, %v1068
    %v1070 = vpop.f32.mrb[0].mxu0
    %v1071 = vpop.f32.mrb[0].mxu0
    %v1072 = vpop.f32.mrb[0].mxu0
    %1073 = vdwg.mxu0
    %v1074 = vpack.c.bf16 %v838, %v838
    %v1075 = vld [vmem:[%s9] sm:$0xf]
    %v1076 = vld [vmem:[%s9 + $0x4] sm:$0xf]
    %v1077 = vld [vmem:[%s9 + $0x8] sm:$0xf]
    %v1078 = vld [vmem:[%s9 + $0xc] sm:$0xf]
    %1080 = vrot.lane.b32.xlu0 %v1074, 96
    %v1081 = vpop.permute.xlu0 %1080
    %v1086 = vunpack.c.l.b16 %v1075
    %v1087 = vunpack.c.l.b16 %v1076
    %v1088 = vunpack.c.l.b16 %v1077
    %v1089 = vunpack.c.l.b16 %v1078
    %v1090 = vpack.c.b16 %v1087, %v1086
    %v1091 = vpack.c.b16 %v1089, %v1088
    %v1095 = vsel %vm247, %v1081, 0
    %1097 = vmatprep.subr.bf16.mxu0 0
    %1098 = vmatpush1.bf16.msra.mxu0 %v1090
    %1099 = vmatprep.subr.bf16.mxu0 0
    %1100 = vmatpush1.bf16.msra.mxu0 %v1091
    %1101 = vmatprep.subr.bf16.mxu0 0
    %1102 = vmatpush1.bf16.msra.mxu0 0
    %1103 = vmatprep.subr.bf16.mxu0 0
    %1104 = vmatpush1.bf16.msra.mxu0 0
    %1105 = vmatprep.subr.bf16.mxu0 0
    %1106 = vmatpush1.bf16.msra.mxu0 0
    %1107 = vmatprep.subr.bf16.mxu0 0
    %1108 = vmatpush1.bf16.msra.mxu0 0
    %1109 = vmatprep.subr.bf16.mxu0 0
    %1110 = vmatpush1.bf16.msra.mxu0 0
    %1111 = vmatprep.subr.bf16.mxu0 0
    %1112 = vmatpush1.bf16.msra.mxu0 0
    %1113 = vmatprep.subr.bf16.mxu0 0
    %1114 = vmatpush1.bf16.msra.mxu0 0
    %1115 = vmatprep.subr.bf16.mxu0 0
    %1116 = vmatpush1.bf16.msra.mxu0 0
    %1117 = vmatprep.subr.bf16.mxu0 0
    %1118 = vmatpush1.bf16.msra.mxu0 0
    %1119 = vmatprep.subr.bf16.mxu0 0
    %1120 = vmatpush1.bf16.msra.mxu0 0
    %1121 = vmatprep.subr.bf16.mxu0 0
    %1122 = vmatpush1.bf16.msra.mxu0 0
    %1123 = vmatprep.subr.bf16.mxu0 0
    %1124 = vmatpush1.bf16.msra.mxu0 0
    %1125 = vmatprep.subr.bf16.mxu0 0
    %1126 = vmatpush1.bf16.msra.mxu0 0
    %1127 = vmatprep.subr.bf16.mxu0 0
    %1128 = vmatpush1.bf16.msra.mxu0 0
    %1129 = vmatprep.mubr.bf16.mxu0 0
    %1130 = vmatmul.mubr.bf16.gmra.mrb[0].mxu0 %v1095
    %v1131 = vpop.f32.mrb[0].mxu0
    %v1132 = vadd.f32 %v205, %v1131
    %v1133 = vpop.f32.mrb[0].mxu0
    %v1134 = vpop.f32.mrb[0].mxu0
    %v1135 = vpop.f32.mrb[0].mxu0
    %1136 = vdwg.mxu0
    %v1137 = vadd.f32 %v1069, %v1132
    %v1138 = vxor.u32 %v1137, 2147483648
    %v1139 = vmul.f32 %v1138, 1.442695
    %v1140 = vpow.pop %v1139
    %v1141 = vadd.f32 %v1140, 1.0
    %v1142 = vrcp.pop %v1141
    %v1143 = vmul.f32 1.0, %v1142
    %1145 = vrot.lane.b32.xlu0 %v1132, 64
    %v1146 = vpop.permute.xlu0 %1145
    %v1148 = vmul.f32 %v1143, %v1146
    %1150 = vrot.lane.b32.xlu0 %v1148, 64
    %v1151 = vpop.permute.xlu0 %1150
    %v1153 = vadd.f32 %v1069, %v1151
    %v1154 = vtanh.pop %v1153
    %v1155 = vsub.f32 1.0, %v1143
    %1157 = vrot.lane.b32.xlu0 %v1154, 96
    %v1158 = vpop.permute.xlu0 %1157
    %v1160 = vmul.f32 %v1155, %v1158
    %v1161 = vmul.f32 %v1143, %v838
    %v1162 = vadd.f32 %v1160, %v1161
    %v1165 = vunpack.c.l.s4 1966171168
    %v1166 = vunpack.c.0.s8 %v1165
    %v1167 = vlaneseq
    %v1168 = vshrl.u32 %v1167, 7
    %v1169 = vsub.s32 %v1166, %v1168
    %v1170 = vrot.slane %v1162, %v1169
    %v1171 = vcombine.high %v1170, %v1170
    %v1173 = vunpack.c.l.s4 1966171168
    %v1174 = vunpack.c.0.s8 %v1173
    %v1175 = vlaneseq
    %v1176 = vshrl.u32 %v1175, 7
    %v1177 = vsub.s32 %v1174, %v1176
    %v1178 = vrot.slane %v1170, %v1177
    %v1180 = vunpack.c.l.s4 1966171168
    %v1181 = vunpack.c.0.s8 %v1180
    %v1182 = vlaneseq
    %v1183 = vshrl.u32 %v1182, 7
    %v1184 = vsub.s32 %v1181, %v1183
    %v1185 = vrot.slane %v1171, %v1184
    %v1186 = vlaneseq
    %v1187 = vshrl.u32 %v1186, 7
    %v1188 = vsub.s32 0, %v1187
    %v1189 = vrot.slane %v1178, %v1188
    %v1190 = vlaneseq
    %v1191 = vshrl.u32 %v1190, 7
    %v1192 = vsub.s32 0, %v1191
    %v1193 = vrot.slane %v1185, %v1192
    %1194 = vrot.lane.b32.xlu0 %v1189, 96
    %v1195 = vpop.permute.xlu0 %1194
    %1196 = vrot.lane.b32.xlu0 %v1193, 96
    %v1197 = vpop.permute.xlu0 %1196
    %1200 = vst.msk [vmem:[#allocation4 + $0x2] sm:$0x1] %vm551, %v1195
    %1201 = vst.msk [vmem:[#allocation4 + $0xa] sm:$0x1] %vm551, %v1197
    %v1202 = vld [vmem:[%s57 + $0x4] sm:$0x1]
    %v1203 = vld [vmem:[%s57 + $0xc] sm:$0x1]
    %1205 = vset.pattern.permute.xlu0 0
    %1206 = vperm.xlu0 %1205, %v1202
    %v1207 = vpop.permute.xlu0 %1206
    %1210 = vset.pattern.permute.xlu0 0
    %1211 = vperm.xlu0 %1210, %v1203
    %v1212 = vpop.permute.xlu0 %1211
    %v1214 = vmul.f32 %v1207, %v178
    %v1215 = vmul.f32 %v1212, %v223
    %v1216 = vadd.f32 %v1214, %v184
    %v1217 = vadd.f32 %v1215, %v184
    %v1218 = vld [vmem:[%s5] sm:$0xf]
    %v1219 = vld [vmem:[%s5 + $0x4] sm:$0xf]
    %v1220 = vld [vmem:[%s5 + $0x8] sm:$0xf]
    %v1221 = vld [vmem:[%s5 + $0xc] sm:$0xf]
    %v1226 = vunpack.c.l.b16 %v1218
    %v1227 = vunpack.c.l.b16 %v1219
    %v1228 = vunpack.c.l.b16 %v1220
    %v1229 = vunpack.c.l.b16 %v1221
    %v1230 = vpack.c.b16 %v1227, %v1226
    %v1231 = vpack.c.b16 %v1229, %v1228
    %1234 = vmatprep.subr.bf16.mxu0 0
    %1235 = vmatpush1.bf16.msra.mxu0 %v1230
    %1236 = vmatprep.subr.bf16.mxu0 0
    %1237 = vmatpush1.bf16.msra.mxu0 %v1231
    %1238 = vmatprep.subr.bf16.mxu0 0
    %1239 = vmatpush1.bf16.msra.mxu0 0
    %1240 = vmatprep.subr.bf16.mxu0 0
    %1241 = vmatpush1.bf16.msra.mxu0 0
    %1242 = vmatprep.subr.bf16.mxu0 0
    %1243 = vmatpush1.bf16.msra.mxu0 0
    %1244 = vmatprep.subr.bf16.mxu0 0
    %1245 = vmatpush1.bf16.msra.mxu0 0
    %1246 = vmatprep.subr.bf16.mxu0 0
    %1247 = vmatpush1.bf16.msra.mxu0 0
    %1248 = vmatprep.subr.bf16.mxu0 0
    %1249 = vmatpush1.bf16.msra.mxu0 0
    %1250 = vmatprep.subr.bf16.mxu0 0
    %1251 = vmatpush1.bf16.msra.mxu0 0
    %1252 = vmatprep.subr.bf16.mxu0 0
    %1253 = vmatpush1.bf16.msra.mxu0 0
    %1254 = vmatprep.subr.bf16.mxu0 0
    %1255 = vmatpush1.bf16.msra.mxu0 0
    %1256 = vmatprep.subr.bf16.mxu0 0
    %1257 = vmatpush1.bf16.msra.mxu0 0
    %1258 = vmatprep.subr.bf16.mxu0 0
    %1259 = vmatpush1.bf16.msra.mxu0 0
    %1260 = vmatprep.subr.bf16.mxu0 0
    %1261 = vmatpush1.bf16.msra.mxu0 0
    %1262 = vmatprep.subr.bf16.mxu0 0
    %1263 = vmatpush1.bf16.msra.mxu0 0
    %1264 = vmatprep.subr.bf16.mxu0 0
    %1265 = vmatpush1.bf16.msra.mxu0 0
    %1266 = vmatprep.mubr.bf16.mxu0 0
    %1267 = vmatmul.mubr.bf16.gmra.mrb[0].mxu0 %v1032
    %v1268 = vpop.f32.mrb[0].mxu0
    %v1269 = vadd.f32 %v191, %v1268
    %v1270 = vpop.f32.mrb[0].mxu0
    %v1271 = vpop.f32.mrb[0].mxu0
    %v1272 = vpop.f32.mrb[0].mxu0
    %1273 = vdwg.mxu0
    %v1275 = vrot.slane %v1269, 1
    %v1278 = vadd.f32 %v1216, %v1269
    %v1279 = vadd.f32 %v1217, %v1275
    %v1280 = vxor.u32 %v1278, 2147483648
    %v1281 = vxor.u32 %v1279, 2147483648
    %v1282 = vmul.f32 %v1280, 1.442695
    %v1283 = vpow.pop %v1282
    %v1284 = vmul.f32 %v1281, 1.442695
    %v1285 = vpow.pop %v1284
    %v1286 = vadd.f32 %v1283, 1.0
    %v1287 = vadd.f32 %v1285, 1.0
    %v1288 = vrcp.pop %v1286
    %v1289 = vmul.f32 1.0, %v1288
    %v1290 = vrcp.pop %v1287
    %v1291 = vmul.f32 1.0, %v1290
    %1292 = vrot.lane.b32.xlu0 %v1269, 64
    %v1293 = vpop.permute.xlu0 %1292
    %1294 = vrot.lane.b32.xlu0 %v1275, 64
    %v1295 = vpop.permute.xlu0 %1294
    %v1298 = vmul.f32 %v1289, %v1293
    %v1299 = vmul.f32 %v1291, %v1295
    %1302 = vrot.lane.b32.xlu0 %v1298, 64
    %v1303 = vpop.permute.xlu0 %1302
    %1304 = vrot.lane.b32.xlu0 %v1299, 64
    %v1305 = vpop.permute.xlu0 %1304
    %v1308 = vadd.f32 %v1216, %v1303
    %v1309 = vadd.f32 %v1217, %v1305
    %v1310 = vtanh.pop %v1308
    %v1311 = vtanh.pop %v1309
    %v1312 = vsub.f32 1.0, %v1289
    %v1313 = vsub.f32 1.0, %v1291
    %1316 = vrot.lane.b32.xlu0 %v1310, 96
    %v1317 = vpop.permute.xlu0 %1316
    %1318 = vrot.lane.b32.xlu0 %v1311, 96
    %v1319 = vpop.permute.xlu0 %1318
    %v1322 = vmul.f32 %v1312, %v1317
    %v1323 = vmul.f32 %v1313, %v1319
    %v1324 = vmul.f32 %v1289, %v1002
    %v1325 = vmul.f32 %v1291, %v1003
    %v1326 = vadd.f32 %v1322, %v1324
    %v1327 = vadd.f32 %v1323, %v1325
    %v1328 = vpack.c.bf16 %v1326, %v1326
    %v1329 = vpack.c.bf16 %v1327, %v1327
    %v1330 = vld [vmem:[%s8] sm:$0xf]
    %v1331 = vld [vmem:[%s8 + $0x4] sm:$0xf]
    %v1332 = vld [vmem:[%s8 + $0x8] sm:$0xf]
    %v1333 = vld [vmem:[%s8 + $0xc] sm:$0xf]
    %v1336 = vunpack.c.l.b16 %v1328
    %v1337 = vunpack.c.l.b16 %v1329
    %v1338 = vrot.slane %v1337, 7
    %v1339 = vsel %vm364, %v1338, %v1336
    %v1340 = vpack.c.b16 %v1339, %v1339
    %1341 = vrot.lane.b32.xlu0 %v1340, 96
    %v1342 = vpop.permute.xlu0 %1341
    %v1347 = vunpack.c.l.b16 %v1330
    %v1348 = vunpack.c.l.b16 %v1331
    %v1349 = vunpack.c.l.b16 %v1332
    %v1350 = vunpack.c.l.b16 %v1333
    %v1351 = vpack.c.b16 %v1348, %v1347
    %v1352 = vpack.c.b16 %v1350, %v1349
    %v1356 = vsel %vm247, %v1342, 0
    %1358 = vmatprep.subr.bf16.mxu0 0
    %1359 = vmatpush1.bf16.msra.mxu0 %v1351
    %1360 = vmatprep.subr.bf16.mxu0 0
    %1361 = vmatpush1.bf16.msra.mxu0 %v1352
    %1362 = vmatprep.subr.bf16.mxu0 0
    %1363 = vmatpush1.bf16.msra.mxu0 0
    %1364 = vmatprep.subr.bf16.mxu0 0
    %1365 = vmatpush1.bf16.msra.mxu0 0
    %1366 = vmatprep.subr.bf16.mxu0 0
    %1367 = vmatpush1.bf16.msra.mxu0 0
    %1368 = vmatprep.subr.bf16.mxu0 0
    %1369 = vmatpush1.bf16.msra.mxu0 0
    %1370 = vmatprep.subr.bf16.mxu0 0
    %1371 = vmatpush1.bf16.msra.mxu0 0
    %1372 = vmatprep.subr.bf16.mxu0 0
    %1373 = vmatpush1.bf16.msra.mxu0 0
    %1374 = vmatprep.subr.bf16.mxu0 0
    %1375 = vmatpush1.bf16.msra.mxu0 0
    %1376 = vmatprep.subr.bf16.mxu0 0
    %1377 = vmatpush1.bf16.msra.mxu0 0
    %1378 = vmatprep.subr.bf16.mxu0 0
    %1379 = vmatpush1.bf16.msra.mxu0 0
    %1380 = vmatprep.subr.bf16.mxu0 0
    %1381 = vmatpush1.bf16.msra.mxu0 0
    %1382 = vmatprep.subr.bf16.mxu0 0
    %1383 = vmatpush1.bf16.msra.mxu0 0
    %1384 = vmatprep.subr.bf16.mxu0 0
    %1385 = vmatpush1.bf16.msra.mxu0 0
    %1386 = vmatprep.subr.bf16.mxu0 0
    %1387 = vmatpush1.bf16.msra.mxu0 0
    %1388 = vmatprep.subr.bf16.mxu0 0
    %1389 = vmatpush1.bf16.msra.mxu0 0
    %1390 = vmatprep.mubr.bf16.mxu0 0
    %1391 = vmatmul.mubr.bf16.gmra.mrb[0].mxu0 %v1356
    %v1392 = vpop.f32.mrb[0].mxu0
    %v1393 = vadd.f32 %v198, %v1392
    %v1394 = vpop.f32.mrb[0].mxu0
    %v1395 = vpop.f32.mrb[0].mxu0
    %v1396 = vpop.f32.mrb[0].mxu0
    %1397 = vdwg.mxu0
    %v1398 = vpack.c.bf16 %v1162, %v1162
    %v1399 = vld [vmem:[%s9] sm:$0xf]
    %v1400 = vld [vmem:[%s9 + $0x4] sm:$0xf]
    %v1401 = vld [vmem:[%s9 + $0x8] sm:$0xf]
    %v1402 = vld [vmem:[%s9 + $0xc] sm:$0xf]
    %1404 = vrot.lane.b32.xlu0 %v1398, 96
    %v1405 = vpop.permute.xlu0 %1404
    %v1410 = vunpack.c.l.b16 %v1399
    %v1411 = vunpack.c.l.b16 %v1400
    %v1412 = vunpack.c.l.b16 %v1401
    %v1413 = vunpack.c.l.b16 %v1402
    %v1414 = vpack.c.b16 %v1411, %v1410
    %v1415 = vpack.c.b16 %v1413, %v1412
    %v1419 = vsel %vm247, %v1405, 0
    %1421 = vmatprep.subr.bf16.mxu0 0
    %1422 = vmatpush1.bf16.msra.mxu0 %v1414
    %1423 = vmatprep.subr.bf16.mxu0 0
    %1424 = vmatpush1.bf16.msra.mxu0 %v1415
    %1425 = vmatprep.subr.bf16.mxu0 0
    %1426 = vmatpush1.bf16.msra.mxu0 0
    %1427 = vmatprep.subr.bf16.mxu0 0
    %1428 = vmatpush1.bf16.msra.mxu0 0
    %1429 = vmatprep.subr.bf16.mxu0 0
    %1430 = vmatpush1.bf16.msra.mxu0 0
    %1431 = vmatprep.subr.bf16.mxu0 0
    %1432 = vmatpush1.bf16.msra.mxu0 0
    %1433 = vmatprep.subr.bf16.mxu0 0
    %1434 = vmatpush1.bf16.msra.mxu0 0
    %1435 = vmatprep.subr.bf16.mxu0 0
    %1436 = vmatpush1.bf16.msra.mxu0 0
    %1437 = vmatprep.subr.bf16.mxu0 0
    %1438 = vmatpush1.bf16.msra.mxu0 0
    %1439 = vmatprep.subr.bf16.mxu0 0
    %1440 = vmatpush1.bf16.msra.mxu0 0
    %1441 = vmatprep.subr.bf16.mxu0 0
    %1442 = vmatpush1.bf16.msra.mxu0 0
    %1443 = vmatprep.subr.bf16.mxu0 0
    %1444 = vmatpush1.bf16.msra.mxu0 0
    %1445 = vmatprep.subr.bf16.mxu0 0
    %1446 = vmatpush1.bf16.msra.mxu0 0
    %1447 = vmatprep.subr.bf16.mxu0 0
    %1448 = vmatpush1.bf16.msra.mxu0 0
    %1449 = vmatprep.subr.bf16.mxu0 0
    %1450 = vmatpush1.bf16.msra.mxu0 0
    %1451 = vmatprep.subr.bf16.mxu0 0
    %1452 = vmatpush1.bf16.msra.mxu0 0
    %1453 = vmatprep.mubr.bf16.mxu0 0
    %1454 = vmatmul.mubr.bf16.gmra.mrb[0].mxu0 %v1419
    %v1455 = vpop.f32.mrb[0].mxu0
    %v1456 = vadd.f32 %v205, %v1455
    %v1457 = vpop.f32.mrb[0].mxu0
    %v1458 = vpop.f32.mrb[0].mxu0
    %v1459 = vpop.f32.mrb[0].mxu0
    %1460 = vdwg.mxu0
    %v1461 = vadd.f32 %v1393, %v1456
    %v1462 = vxor.u32 %v1461, 2147483648
    %v1463 = vmul.f32 %v1462, 1.442695
    %v1464 = vpow.pop %v1463
    %v1465 = vadd.f32 %v1464, 1.0
    %v1466 = vrcp.pop %v1465
    %v1467 = vmul.f32 1.0, %v1466
    %1469 = vrot.lane.b32.xlu0 %v1456, 64
    %v1470 = vpop.permute.xlu0 %1469
    %v1472 = vmul.f32 %v1467, %v1470
    %1474 = vrot.lane.b32.xlu0 %v1472, 64
    %v1475 = vpop.permute.xlu0 %1474
    %v1477 = vadd.f32 %v1393, %v1475
    %v1478 = vtanh.pop %v1477
    %v1479 = vsub.f32 1.0, %v1467
    %1481 = vrot.lane.b32.xlu0 %v1478, 96
    %v1482 = vpop.permute.xlu0 %1481
    %v1484 = vmul.f32 %v1479, %v1482
    %v1485 = vmul.f32 %v1467, %v1162
    %v1486 = vadd.f32 %v1484, %v1485
    %v1489 = vunpack.c.l.s4 1966171168
    %v1490 = vunpack.c.0.s8 %v1489
    %v1491 = vlaneseq
    %v1492 = vshrl.u32 %v1491, 7
    %v1493 = vsub.s32 %v1490, %v1492
    %v1494 = vrot.slane %v1486, %v1493
    %v1495 = vcombine.high %v1494, %v1494
    %v1497 = vunpack.c.l.s4 1966171168
    %v1498 = vunpack.c.0.s8 %v1497
    %v1499 = vlaneseq
    %v1500 = vshrl.u32 %v1499, 7
    %v1501 = vsub.s32 %v1498, %v1500
    %v1502 = vrot.slane %v1494, %v1501
    %v1504 = vunpack.c.l.s4 1966171168
    %v1505 = vunpack.c.0.s8 %v1504
    %v1506 = vlaneseq
    %v1507 = vshrl.u32 %v1506, 7
    %v1508 = vsub.s32 %v1505, %v1507
    %v1509 = vrot.slane %v1495, %v1508
    %v1510 = vlaneseq
    %v1511 = vshrl.u32 %v1510, 7
    %v1512 = vsub.s32 0, %v1511
    %v1513 = vrot.slane %v1502, %v1512
    %v1514 = vlaneseq
    %v1515 = vshrl.u32 %v1514, 7
    %v1516 = vsub.s32 0, %v1515
    %v1517 = vrot.slane %v1509, %v1516
    %1518 = vrot.lane.b32.xlu0 %v1513, 96
    %v1519 = vpop.permute.xlu0 %1518
    %1520 = vrot.lane.b32.xlu0 %v1517, 96
    %v1521 = vpop.permute.xlu0 %1520
    %1524 = vst.msk [vmem:[#allocation4 + $0x3] sm:$0x1] %vm551, %v1519
    %1525 = vst.msk [vmem:[#allocation4 + $0xb] sm:$0x1] %vm551, %v1521
    %v1526 = vld [vmem:[%s57 + $0x3] sm:$0x1]
    %v1527 = vld [vmem:[%s57 + $0xb] sm:$0x1]
    %1529 = vset.pattern.permute.xlu0 0
    %1530 = vperm.xlu0 %1529, %v1526
    %v1531 = vpop.permute.xlu0 %1530
    %1534 = vset.pattern.permute.xlu0 0
    %1535 = vperm.xlu0 %1534, %v1527
    %v1536 = vpop.permute.xlu0 %1535
    %v1538 = vmul.f32 %v1531, %v178
    %v1539 = vmul.f32 %v1536, %v223
    %v1540 = vadd.f32 %v1538, %v184
    %v1541 = vadd.f32 %v1539, %v184
    %v1542 = vld [vmem:[%s5] sm:$0xf]
    %v1543 = vld [vmem:[%s5 + $0x4] sm:$0xf]
    %v1544 = vld [vmem:[%s5 + $0x8] sm:$0xf]
    %v1545 = vld [vmem:[%s5 + $0xc] sm:$0xf]
    %v1550 = vunpack.c.l.b16 %v1542
    %v1551 = vunpack.c.l.b16 %v1543
    %v1552 = vunpack.c.l.b16 %v1544
    %v1553 = vunpack.c.l.b16 %v1545
    %v1554 = vpack.c.b16 %v1551, %v1550
    %v1555 = vpack.c.b16 %v1553, %v1552
    %1558 = vmatprep.subr.bf16.mxu0 0
    %1559 = vmatpush1.bf16.msra.mxu0 %v1554
    %1560 = vmatprep.subr.bf16.mxu0 0
    %1561 = vmatpush1.bf16.msra.mxu0 %v1555
    %1562 = vmatprep.subr.bf16.mxu0 0
    %1563 = vmatpush1.bf16.msra.mxu0 0
    %1564 = vmatprep.subr.bf16.mxu0 0
    %1565 = vmatpush1.bf16.msra.mxu0 0
    %1566 = vmatprep.subr.bf16.mxu0 0
    %1567 = vmatpush1.bf16.msra.mxu0 0
    %1568 = vmatprep.subr.bf16.mxu0 0
    %1569 = vmatpush1.bf16.msra.mxu0 0
    %1570 = vmatprep.subr.bf16.mxu0 0
    %1571 = vmatpush1.bf16.msra.mxu0 0
    %1572 = vmatprep.subr.bf16.mxu0 0
    %1573 = vmatpush1.bf16.msra.mxu0 0
    %1574 = vmatprep.subr.bf16.mxu0 0
    %1575 = vmatpush1.bf16.msra.mxu0 0
    %1576 = vmatprep.subr.bf16.mxu0 0
    %1577 = vmatpush1.bf16.msra.mxu0 0
    %1578 = vmatprep.subr.bf16.mxu0 0
    %1579 = vmatpush1.bf16.msra.mxu0 0
    %1580 = vmatprep.subr.bf16.mxu0 0
    %1581 = vmatpush1.bf16.msra.mxu0 0
    %1582 = vmatprep.subr.bf16.mxu0 0
    %1583 = vmatpush1.bf16.msra.mxu0 0
    %1584 = vmatprep.subr.bf16.mxu0 0
    %1585 = vmatpush1.bf16.msra.mxu0 0
    %1586 = vmatprep.subr.bf16.mxu0 0
    %1587 = vmatpush1.bf16.msra.mxu0 0
    %1588 = vmatprep.subr.bf16.mxu0 0
    %1589 = vmatpush1.bf16.msra.mxu0 0
    %1590 = vmatprep.mubr.bf16.mxu0 0
    %1591 = vmatmul.mubr.bf16.gmra.mrb[0].mxu0 %v1356
    %v1592 = vpop.f32.mrb[0].mxu0
    %v1593 = vadd.f32 %v191, %v1592
    %v1594 = vpop.f32.mrb[0].mxu0
    %v1595 = vpop.f32.mrb[0].mxu0
    %v1596 = vpop.f32.mrb[0].mxu0
    %1597 = vdwg.mxu0
    %v1599 = vrot.slane %v1593, 1
    %v1602 = vadd.f32 %v1540, %v1593
    %v1603 = vadd.f32 %v1541, %v1599
    %v1604 = vxor.u32 %v1602, 2147483648
    %v1605 = vxor.u32 %v1603, 2147483648
    %v1606 = vmul.f32 %v1604, 1.442695
    %v1607 = vpow.pop %v1606
    %v1608 = vmul.f32 %v1605, 1.442695
    %v1609 = vpow.pop %v1608
    %v1610 = vadd.f32 %v1607, 1.0
    %v1611 = vadd.f32 %v1609, 1.0
    %v1612 = vrcp.pop %v1610
    %v1613 = vmul.f32 1.0, %v1612
    %v1614 = vrcp.pop %v1611
    %v1615 = vmul.f32 1.0, %v1614
    %1616 = vrot.lane.b32.xlu0 %v1593, 64
    %v1617 = vpop.permute.xlu0 %1616
    %1618 = vrot.lane.b32.xlu0 %v1599, 64
    %v1619 = vpop.permute.xlu0 %1618
    %v1622 = vmul.f32 %v1613, %v1617
    %v1623 = vmul.f32 %v1615, %v1619
    %1626 = vrot.lane.b32.xlu0 %v1622, 64
    %v1627 = vpop.permute.xlu0 %1626
    %1628 = vrot.lane.b32.xlu0 %v1623, 64
    %v1629 = vpop.permute.xlu0 %1628
    %v1632 = vadd.f32 %v1540, %v1627
    %v1633 = vadd.f32 %v1541, %v1629
    %v1634 = vtanh.pop %v1632
    %v1635 = vtanh.pop %v1633
    %v1636 = vsub.f32 1.0, %v1613
    %v1637 = vsub.f32 1.0, %v1615
    %1640 = vrot.lane.b32.xlu0 %v1634, 96
    %v1641 = vpop.permute.xlu0 %1640
    %1642 = vrot.lane.b32.xlu0 %v1635, 96
    %v1643 = vpop.permute.xlu0 %1642
    %v1646 = vmul.f32 %v1636, %v1641
    %v1647 = vmul.f32 %v1637, %v1643
    %v1648 = vmul.f32 %v1613, %v1326
    %v1649 = vmul.f32 %v1615, %v1327
    %v1650 = vadd.f32 %v1646, %v1648
    %v1651 = vadd.f32 %v1647, %v1649
    %v1652 = vpack.c.bf16 %v1650, %v1650
    %v1653 = vpack.c.bf16 %v1651, %v1651
    %v1654 = vld [vmem:[%s8] sm:$0xf]
    %v1655 = vld [vmem:[%s8 + $0x4] sm:$0xf]
    %v1656 = vld [vmem:[%s8 + $0x8] sm:$0xf]
    %v1657 = vld [vmem:[%s8 + $0xc] sm:$0xf]
    %v1660 = vunpack.c.l.b16 %v1652
    %v1661 = vunpack.c.l.b16 %v1653
    %v1662 = vrot.slane %v1661, 7
    %v1663 = vsel %vm364, %v1662, %v1660
    %v1664 = vpack.c.b16 %v1663, %v1663
    %1665 = vrot.lane.b32.xlu0 %v1664, 96
    %v1666 = vpop.permute.xlu0 %1665
    %v1671 = vunpack.c.l.b16 %v1654
    %v1672 = vunpack.c.l.b16 %v1655
    %v1673 = vunpack.c.l.b16 %v1656
    %v1674 = vunpack.c.l.b16 %v1657
    %v1675 = vpack.c.b16 %v1672, %v1671
    %v1676 = vpack.c.b16 %v1674, %v1673
    %v1680 = vsel %vm247, %v1666, 0
    %1682 = vmatprep.subr.bf16.mxu0 0
    %1683 = vmatpush1.bf16.msra.mxu0 %v1675
    %1684 = vmatprep.subr.bf16.mxu0 0
    %1685 = vmatpush1.bf16.msra.mxu0 %v1676
    %1686 = vmatprep.subr.bf16.mxu0 0
    %1687 = vmatpush1.bf16.msra.mxu0 0
    %1688 = vmatprep.subr.bf16.mxu0 0
    %1689 = vmatpush1.bf16.msra.mxu0 0
    %1690 = vmatprep.subr.bf16.mxu0 0
    %1691 = vmatpush1.bf16.msra.mxu0 0
    %1692 = vmatprep.subr.bf16.mxu0 0
    %1693 = vmatpush1.bf16.msra.mxu0 0
    %1694 = vmatprep.subr.bf16.mxu0 0
    %1695 = vmatpush1.bf16.msra.mxu0 0
    %1696 = vmatprep.subr.bf16.mxu0 0
    %1697 = vmatpush1.bf16.msra.mxu0 0
    %1698 = vmatprep.subr.bf16.mxu0 0
    %1699 = vmatpush1.bf16.msra.mxu0 0
    %1700 = vmatprep.subr.bf16.mxu0 0
    %1701 = vmatpush1.bf16.msra.mxu0 0
    %1702 = vmatprep.subr.bf16.mxu0 0
    %1703 = vmatpush1.bf16.msra.mxu0 0
    %1704 = vmatprep.subr.bf16.mxu0 0
    %1705 = vmatpush1.bf16.msra.mxu0 0
    %1706 = vmatprep.subr.bf16.mxu0 0
    %1707 = vmatpush1.bf16.msra.mxu0 0
    %1708 = vmatprep.subr.bf16.mxu0 0
    %1709 = vmatpush1.bf16.msra.mxu0 0
    %1710 = vmatprep.subr.bf16.mxu0 0
    %1711 = vmatpush1.bf16.msra.mxu0 0
    %1712 = vmatprep.subr.bf16.mxu0 0
    %1713 = vmatpush1.bf16.msra.mxu0 0
    %1714 = vmatprep.mubr.bf16.mxu0 0
    %1715 = vmatmul.mubr.bf16.gmra.mrb[0].mxu0 %v1680
    %v1716 = vpop.f32.mrb[0].mxu0
    %v1717 = vadd.f32 %v198, %v1716
    %v1718 = vpop.f32.mrb[0].mxu0
    %v1719 = vpop.f32.mrb[0].mxu0
    %v1720 = vpop.f32.mrb[0].mxu0
    %1721 = vdwg.mxu0
    %v1722 = vpack.c.bf16 %v1486, %v1486
    %v1723 = vld [vmem:[%s9] sm:$0xf]
    %v1724 = vld [vmem:[%s9 + $0x4] sm:$0xf]
    %v1725 = vld [vmem:[%s9 + $0x8] sm:$0xf]
    %v1726 = vld [vmem:[%s9 + $0xc] sm:$0xf]
    %1728 = vrot.lane.b32.xlu0 %v1722, 96
    %v1729 = vpop.permute.xlu0 %1728
    %v1734 = vunpack.c.l.b16 %v1723
    %v1735 = vunpack.c.l.b16 %v1724
    %v1736 = vunpack.c.l.b16 %v1725
    %v1737 = vunpack.c.l.b16 %v1726
    %v1738 = vpack.c.b16 %v1735, %v1734
    %v1739 = vpack.c.b16 %v1737, %v1736
    %v1743 = vsel %vm247, %v1729, 0
    %1745 = vmatprep.subr.bf16.mxu0 0
    %1746 = vmatpush1.bf16.msra.mxu0 %v1738
    %1747 = vmatprep.subr.bf16.mxu0 0
    %1748 = vmatpush1.bf16.msra.mxu0 %v1739
    %1749 = vmatprep.subr.bf16.mxu0 0
    %1750 = vmatpush1.bf16.msra.mxu0 0
    %1751 = vmatprep.subr.bf16.mxu0 0
    %1752 = vmatpush1.bf16.msra.mxu0 0
    %1753 = vmatprep.subr.bf16.mxu0 0
    %1754 = vmatpush1.bf16.msra.mxu0 0
    %1755 = vmatprep.subr.bf16.mxu0 0
    %1756 = vmatpush1.bf16.msra.mxu0 0
    %1757 = vmatprep.subr.bf16.mxu0 0
    %1758 = vmatpush1.bf16.msra.mxu0 0
    %1759 = vmatprep.subr.bf16.mxu0 0
    %1760 = vmatpush1.bf16.msra.mxu0 0
    %1761 = vmatprep.subr.bf16.mxu0 0
    %1762 = vmatpush1.bf16.msra.mxu0 0
    %1763 = vmatprep.subr.bf16.mxu0 0
    %1764 = vmatpush1.bf16.msra.mxu0 0
    %1765 = vmatprep.subr.bf16.mxu0 0
    %1766 = vmatpush1.bf16.msra.mxu0 0
    %1767 = vmatprep.subr.bf16.mxu0 0
    %1768 = vmatpush1.bf16.msra.mxu0 0
    %1769 = vmatprep.subr.bf16.mxu0 0
    %1770 = vmatpush1.bf16.msra.mxu0 0
    %1771 = vmatprep.subr.bf16.mxu0 0
    %1772 = vmatpush1.bf16.msra.mxu0 0
    %1773 = vmatprep.subr.bf16.mxu0 0
    %1774 = vmatpush1.bf16.msra.mxu0 0
    %1775 = vmatprep.subr.bf16.mxu0 0
    %1776 = vmatpush1.bf16.msra.mxu0 0
    %1777 = vmatprep.mubr.bf16.mxu0 0
    %1778 = vmatmul.mubr.bf16.gmra.mrb[0].mxu0 %v1743
    %v1779 = vpop.f32.mrb[0].mxu0
    %v1780 = vadd.f32 %v205, %v1779
    %v1781 = vpop.f32.mrb[0].mxu0
    %v1782 = vpop.f32.mrb[0].mxu0
    %v1783 = vpop.f32.mrb[0].mxu0
    %1784 = vdwg.mxu0
    %v1785 = vadd.f32 %v1717, %v1780
    %v1786 = vxor.u32 %v1785, 2147483648
    %v1787 = vmul.f32 %v1786, 1.442695
    %v1788 = vpow.pop %v1787
    %v1789 = vadd.f32 %v1788, 1.0
    %v1790 = vrcp.pop %v1789
    %v1791 = vmul.f32 1.0, %v1790
    %1793 = vrot.lane.b32.xlu0 %v1780, 64
    %v1794 = vpop.permute.xlu0 %1793
    %v1796 = vmul.f32 %v1791, %v1794
    %1798 = vrot.lane.b32.xlu0 %v1796, 64
    %v1799 = vpop.permute.xlu0 %1798
    %v1801 = vadd.f32 %v1717, %v1799
    %v1802 = vtanh.pop %v1801
    %v1803 = vsub.f32 1.0, %v1791
    %1805 = vrot.lane.b32.xlu0 %v1802, 96
    %v1806 = vpop.permute.xlu0 %1805
    %v1808 = vmul.f32 %v1803, %v1806
    %v1809 = vmul.f32 %v1791, %v1486
    %v1810 = vadd.f32 %v1808, %v1809
    %v1813 = vunpack.c.l.s4 1966171168
    %v1814 = vunpack.c.0.s8 %v1813
    %v1815 = vlaneseq
    %v1816 = vshrl.u32 %v1815, 7
    %v1817 = vsub.s32 %v1814, %v1816
    %v1818 = vrot.slane %v1810, %v1817
    %v1819 = vcombine.high %v1818, %v1818
    %v1821 = vunpack.c.l.s4 1966171168
    %v1822 = vunpack.c.0.s8 %v1821
    %v1823 = vlaneseq
    %v1824 = vshrl.u32 %v1823, 7
    %v1825 = vsub.s32 %v1822, %v1824
    %v1826 = vrot.slane %v1818, %v1825
    %v1828 = vunpack.c.l.s4 1966171168
    %v1829 = vunpack.c.0.s8 %v1828
    %v1830 = vlaneseq
    %v1831 = vshrl.u32 %v1830, 7
    %v1832 = vsub.s32 %v1829, %v1831
    %v1833 = vrot.slane %v1819, %v1832
    %v1834 = vlaneseq
    %v1835 = vshrl.u32 %v1834, 7
    %v1836 = vsub.s32 0, %v1835
    %v1837 = vrot.slane %v1826, %v1836
    %v1838 = vlaneseq
    %v1839 = vshrl.u32 %v1838, 7
    %v1840 = vsub.s32 0, %v1839
    %v1841 = vrot.slane %v1833, %v1840
    %1842 = vrot.lane.b32.xlu0 %v1837, 96
    %v1843 = vpop.permute.xlu0 %1842
    %1844 = vrot.lane.b32.xlu0 %v1841, 96
    %v1845 = vpop.permute.xlu0 %1844
    %1848 = vst.msk [vmem:[#allocation4 + $0x4] sm:$0x1] %vm551, %v1843
    %1849 = vst.msk [vmem:[#allocation4 + $0xc] sm:$0x1] %vm551, %v1845
    %v1850 = vld [vmem:[%s57 + $0x2] sm:$0x1]
    %v1851 = vld [vmem:[%s57 + $0xa] sm:$0x1]
    %1853 = vset.pattern.permute.xlu0 0
    %1854 = vperm.xlu0 %1853, %v1850
    %v1855 = vpop.permute.xlu0 %1854
    %1858 = vset.pattern.permute.xlu0 0
    %1859 = vperm.xlu0 %1858, %v1851
    %v1860 = vpop.permute.xlu0 %1859
    %v1862 = vmul.f32 %v1855, %v178
    %v1863 = vmul.f32 %v1860, %v223
    %v1864 = vadd.f32 %v1862, %v184
    %v1865 = vadd.f32 %v1863, %v184
    %v1866 = vld [vmem:[%s5] sm:$0xf]
    %v1867 = vld [vmem:[%s5 + $0x4] sm:$0xf]
    %v1868 = vld [vmem:[%s5 + $0x8] sm:$0xf]
    %v1869 = vld [vmem:[%s5 + $0xc] sm:$0xf]
    %v1874 = vunpack.c.l.b16 %v1866
    %v1875 = vunpack.c.l.b16 %v1867
    %v1876 = vunpack.c.l.b16 %v1868
    %v1877 = vunpack.c.l.b16 %v1869
    %v1878 = vpack.c.b16 %v1875, %v1874
    %v1879 = vpack.c.b16 %v1877, %v1876
    %1882 = vmatprep.subr.bf16.mxu0 0
    %1883 = vmatpush1.bf16.msra.mxu0 %v1878
    %1884 = vmatprep.subr.bf16.mxu0 0
    %1885 = vmatpush1.bf16.msra.mxu0 %v1879
    %1886 = vmatprep.subr.bf16.mxu0 0
    %1887 = vmatpush1.bf16.msra.mxu0 0
    %1888 = vmatprep.subr.bf16.mxu0 0
    %1889 = vmatpush1.bf16.msra.mxu0 0
    %1890 = vmatprep.subr.bf16.mxu0 0
    %1891 = vmatpush1.bf16.msra.mxu0 0
    %1892 = vmatprep.subr.bf16.mxu0 0
    %1893 = vmatpush1.bf16.msra.mxu0 0
    %1894 = vmatprep.subr.bf16.mxu0 0
    %1895 = vmatpush1.bf16.msra.mxu0 0
    %1896 = vmatprep.subr.bf16.mxu0 0
    %1897 = vmatpush1.bf16.msra.mxu0 0
    %1898 = vmatprep.subr.bf16.mxu0 0
    %1899 = vmatpush1.bf16.msra.mxu0 0
    %1900 = vmatprep.subr.bf16.mxu0 0
    %1901 = vmatpush1.bf16.msra.mxu0 0
    %1902 = vmatprep.subr.bf16.mxu0 0
    %1903 = vmatpush1.bf16.msra.mxu0 0
    %1904 = vmatprep.subr.bf16.mxu0 0
    %1905 = vmatpush1.bf16.msra.mxu0 0
    %1906 = vmatprep.subr.bf16.mxu0 0
    %1907 = vmatpush1.bf16.msra.mxu0 0
    %1908 = vmatprep.subr.bf16.mxu0 0
    %1909 = vmatpush1.bf16.msra.mxu0 0
    %1910 = vmatprep.subr.bf16.mxu0 0
    %1911 = vmatpush1.bf16.msra.mxu0 0
    %1912 = vmatprep.subr.bf16.mxu0 0
    %1913 = vmatpush1.bf16.msra.mxu0 0
    %1914 = vmatprep.mubr.bf16.mxu0 0
    %1915 = vmatmul.mubr.bf16.gmra.mrb[0].mxu0 %v1680
    %v1916 = vpop.f32.mrb[0].mxu0
    %v1917 = vadd.f32 %v191, %v1916
    %v1918 = vpop.f32.mrb[0].mxu0
    %v1919 = vpop.f32.mrb[0].mxu0
    %v1920 = vpop.f32.mrb[0].mxu0
    %1921 = vdwg.mxu0
    %v1923 = vrot.slane %v1917, 1
    %v1926 = vadd.f32 %v1864, %v1917
    %v1927 = vadd.f32 %v1865, %v1923
    %v1928 = vxor.u32 %v1926, 2147483648
    %v1929 = vxor.u32 %v1927, 2147483648
    %v1930 = vmul.f32 %v1928, 1.442695
    %v1931 = vpow.pop %v1930
    %v1932 = vmul.f32 %v1929, 1.442695
    %v1933 = vpow.pop %v1932
    %v1934 = vadd.f32 %v1931, 1.0
    %v1935 = vadd.f32 %v1933, 1.0
    %v1936 = vrcp.pop %v1934
    %v1937 = vmul.f32 1.0, %v1936
    %v1938 = vrcp.pop %v1935
    %v1939 = vmul.f32 1.0, %v1938
    %1940 = vrot.lane.b32.xlu0 %v1917, 64
    %v1941 = vpop.permute.xlu0 %1940
    %1942 = vrot.lane.b32.xlu0 %v1923, 64
    %v1943 = vpop.permute.xlu0 %1942
    %v1946 = vmul.f32 %v1937, %v1941
    %v1947 = vmul.f32 %v1939, %v1943
    %1950 = vrot.lane.b32.xlu0 %v1946, 64
    %v1951 = vpop.permute.xlu0 %1950
    %1952 = vrot.lane.b32.xlu0 %v1947, 64
    %v1953 = vpop.permute.xlu0 %1952
    %v1956 = vadd.f32 %v1864, %v1951
    %v1957 = vadd.f32 %v1865, %v1953
    %v1958 = vtanh.pop %v1956
    %v1959 = vtanh.pop %v1957
    %v1960 = vsub.f32 1.0, %v1937
    %v1961 = vsub.f32 1.0, %v1939
    %1964 = vrot.lane.b32.xlu0 %v1958, 96
    %v1965 = vpop.permute.xlu0 %1964
    %1966 = vrot.lane.b32.xlu0 %v1959, 96
    %v1967 = vpop.permute.xlu0 %1966
    %v1970 = vmul.f32 %v1960, %v1965
    %v1971 = vmul.f32 %v1961, %v1967
    %v1972 = vmul.f32 %v1937, %v1650
    %v1973 = vmul.f32 %v1939, %v1651
    %v1974 = vadd.f32 %v1970, %v1972
    %v1975 = vadd.f32 %v1971, %v1973
    %v1976 = vpack.c.bf16 %v1974, %v1974
    %v1977 = vpack.c.bf16 %v1975, %v1975
    %v1978 = vld [vmem:[%s8] sm:$0xf]
    %v1979 = vld [vmem:[%s8 + $0x4] sm:$0xf]
    %v1980 = vld [vmem:[%s8 + $0x8] sm:$0xf]
    %v1981 = vld [vmem:[%s8 + $0xc] sm:$0xf]
    %v1984 = vunpack.c.l.b16 %v1976
    %v1985 = vunpack.c.l.b16 %v1977
    %v1986 = vrot.slane %v1985, 7
    %v1987 = vsel %vm364, %v1986, %v1984
    %v1988 = vpack.c.b16 %v1987, %v1987
    %1989 = vrot.lane.b32.xlu0 %v1988, 96
    %v1990 = vpop.permute.xlu0 %1989
    %v1995 = vunpack.c.l.b16 %v1978
    %v1996 = vunpack.c.l.b16 %v1979
    %v1997 = vunpack.c.l.b16 %v1980
    %v1998 = vunpack.c.l.b16 %v1981
    %v1999 = vpack.c.b16 %v1996, %v1995
    %v2000 = vpack.c.b16 %v1998, %v1997
    %v2004 = vsel %vm247, %v1990, 0
    %2006 = vmatprep.subr.bf16.mxu0 0
    %2007 = vmatpush1.bf16.msra.mxu0 %v1999
    %2008 = vmatprep.subr.bf16.mxu0 0
    %2009 = vmatpush1.bf16.msra.mxu0 %v2000
    %2010 = vmatprep.subr.bf16.mxu0 0
    %2011 = vmatpush1.bf16.msra.mxu0 0
    %2012 = vmatprep.subr.bf16.mxu0 0
    %2013 = vmatpush1.bf16.msra.mxu0 0
    %2014 = vmatprep.subr.bf16.mxu0 0
    %2015 = vmatpush1.bf16.msra.mxu0 0
    %2016 = vmatprep.subr.bf16.mxu0 0
    %2017 = vmatpush1.bf16.msra.mxu0 0
    %2018 = vmatprep.subr.bf16.mxu0 0
    %2019 = vmatpush1.bf16.msra.mxu0 0
    %2020 = vmatprep.subr.bf16.mxu0 0
    %2021 = vmatpush1.bf16.msra.mxu0 0
    %2022 = vmatprep.subr.bf16.mxu0 0
    %2023 = vmatpush1.bf16.msra.mxu0 0
    %2024 = vmatprep.subr.bf16.mxu0 0
    %2025 = vmatpush1.bf16.msra.mxu0 0
    %2026 = vmatprep.subr.bf16.mxu0 0
    %2027 = vmatpush1.bf16.msra.mxu0 0
    %2028 = vmatprep.subr.bf16.mxu0 0
    %2029 = vmatpush1.bf16.msra.mxu0 0
    %2030 = vmatprep.subr.bf16.mxu0 0
    %2031 = vmatpush1.bf16.msra.mxu0 0
    %2032 = vmatprep.subr.bf16.mxu0 0
    %2033 = vmatpush1.bf16.msra.mxu0 0
    %2034 = vmatprep.subr.bf16.mxu0 0
    %2035 = vmatpush1.bf16.msra.mxu0 0
    %2036 = vmatprep.subr.bf16.mxu0 0
    %2037 = vmatpush1.bf16.msra.mxu0 0
    %2038 = vmatprep.mubr.bf16.mxu0 0
    %2039 = vmatmul.mubr.bf16.gmra.mrb[0].mxu0 %v2004
    %v2040 = vpop.f32.mrb[0].mxu0
    %v2041 = vadd.f32 %v198, %v2040
    %v2042 = vpop.f32.mrb[0].mxu0
    %v2043 = vpop.f32.mrb[0].mxu0
    %v2044 = vpop.f32.mrb[0].mxu0
    %2045 = vdwg.mxu0
    %v2046 = vpack.c.bf16 %v1810, %v1810
    %v2047 = vld [vmem:[%s9] sm:$0xf]
    %v2048 = vld [vmem:[%s9 + $0x4] sm:$0xf]
    %v2049 = vld [vmem:[%s9 + $0x8] sm:$0xf]
    %v2050 = vld [vmem:[%s9 + $0xc] sm:$0xf]
    %2052 = vrot.lane.b32.xlu0 %v2046, 96
    %v2053 = vpop.permute.xlu0 %2052
    %v2058 = vunpack.c.l.b16 %v2047
    %v2059 = vunpack.c.l.b16 %v2048
    %v2060 = vunpack.c.l.b16 %v2049
    %v2061 = vunpack.c.l.b16 %v2050
    %v2062 = vpack.c.b16 %v2059, %v2058
    %v2063 = vpack.c.b16 %v2061, %v2060
    %v2067 = vsel %vm247, %v2053, 0
    %2069 = vmatprep.subr.bf16.mxu0 0
    %2070 = vmatpush1.bf16.msra.mxu0 %v2062
    %2071 = vmatprep.subr.bf16.mxu0 0
    %2072 = vmatpush1.bf16.msra.mxu0 %v2063
    %2073 = vmatprep.subr.bf16.mxu0 0
    %2074 = vmatpush1.bf16.msra.mxu0 0
    %2075 = vmatprep.subr.bf16.mxu0 0
    %2076 = vmatpush1.bf16.msra.mxu0 0
    %2077 = vmatprep.subr.bf16.mxu0 0
    %2078 = vmatpush1.bf16.msra.mxu0 0
    %2079 = vmatprep.subr.bf16.mxu0 0
    %2080 = vmatpush1.bf16.msra.mxu0 0
    %2081 = vmatprep.subr.bf16.mxu0 0
    %2082 = vmatpush1.bf16.msra.mxu0 0
    %2083 = vmatprep.subr.bf16.mxu0 0
    %2084 = vmatpush1.bf16.msra.mxu0 0
    %2085 = vmatprep.subr.bf16.mxu0 0
    %2086 = vmatpush1.bf16.msra.mxu0 0
    %2087 = vmatprep.subr.bf16.mxu0 0
    %2088 = vmatpush1.bf16.msra.mxu0 0
    %2089 = vmatprep.subr.bf16.mxu0 0
    %2090 = vmatpush1.bf16.msra.mxu0 0
    %2091 = vmatprep.subr.bf16.mxu0 0
    %2092 = vmatpush1.bf16.msra.mxu0 0
    %2093 = vmatprep.subr.bf16.mxu0 0
    %2094 = vmatpush1.bf16.msra.mxu0 0
    %2095 = vmatprep.subr.bf16.mxu0 0
    %2096 = vmatpush1.bf16.msra.mxu0 0
    %2097 = vmatprep.subr.bf16.mxu0 0
    %2098 = vmatpush1.bf16.msra.mxu0 0
    %2099 = vmatprep.subr.bf16.mxu0 0
    %2100 = vmatpush1.bf16.msra.mxu0 0
    %2101 = vmatprep.mubr.bf16.mxu0 0
    %2102 = vmatmul.mubr.bf16.gmra.mrb[0].mxu0 %v2067
    %v2103 = vpop.f32.mrb[0].mxu0
    %v2104 = vadd.f32 %v205, %v2103
    %v2105 = vpop.f32.mrb[0].mxu0
    %v2106 = vpop.f32.mrb[0].mxu0
    %v2107 = vpop.f32.mrb[0].mxu0
    %2108 = vdwg.mxu0
    %v2109 = vadd.f32 %v2041, %v2104
    %v2110 = vxor.u32 %v2109, 2147483648
    %v2111 = vmul.f32 %v2110, 1.442695
    %v2112 = vpow.pop %v2111
    %v2113 = vadd.f32 %v2112, 1.0
    %v2114 = vrcp.pop %v2113
    %v2115 = vmul.f32 1.0, %v2114
    %2117 = vrot.lane.b32.xlu0 %v2104, 64
    %v2118 = vpop.permute.xlu0 %2117
    %v2120 = vmul.f32 %v2115, %v2118
    %2122 = vrot.lane.b32.xlu0 %v2120, 64
    %v2123 = vpop.permute.xlu0 %2122
    %v2125 = vadd.f32 %v2041, %v2123
    %v2126 = vtanh.pop %v2125
    %v2127 = vsub.f32 1.0, %v2115
    %2129 = vrot.lane.b32.xlu0 %v2126, 96
    %v2130 = vpop.permute.xlu0 %2129
    %v2132 = vmul.f32 %v2127, %v2130
    %v2133 = vmul.f32 %v2115, %v1810
    %v2134 = vadd.f32 %v2132, %v2133
    %v2137 = vunpack.c.l.s4 1966171168
    %v2138 = vunpack.c.0.s8 %v2137
    %v2139 = vlaneseq
    %v2140 = vshrl.u32 %v2139, 7
    %v2141 = vsub.s32 %v2138, %v2140
    %v2142 = vrot.slane %v2134, %v2141
    %v2143 = vcombine.high %v2142, %v2142
    %v2145 = vunpack.c.l.s4 1966171168
    %v2146 = vunpack.c.0.s8 %v2145
    %v2147 = vlaneseq
    %v2148 = vshrl.u32 %v2147, 7
    %v2149 = vsub.s32 %v2146, %v2148
    %v2150 = vrot.slane %v2142, %v2149
    %v2152 = vunpack.c.l.s4 1966171168
    %v2153 = vunpack.c.0.s8 %v2152
    %v2154 = vlaneseq
    %v2155 = vshrl.u32 %v2154, 7
    %v2156 = vsub.s32 %v2153, %v2155
    %v2157 = vrot.slane %v2143, %v2156
    %v2158 = vlaneseq
    %v2159 = vshrl.u32 %v2158, 7
    %v2160 = vsub.s32 0, %v2159
    %v2161 = vrot.slane %v2150, %v2160
    %v2162 = vlaneseq
    %v2163 = vshrl.u32 %v2162, 7
    %v2164 = vsub.s32 0, %v2163
    %v2165 = vrot.slane %v2157, %v2164
    %2166 = vrot.lane.b32.xlu0 %v2161, 96
    %v2167 = vpop.permute.xlu0 %2166
    %2168 = vrot.lane.b32.xlu0 %v2165, 96
    %v2169 = vpop.permute.xlu0 %2168
    %2172 = vst.msk [vmem:[#allocation4 + $0x5] sm:$0x1] %vm551, %v2167
    %2173 = vst.msk [vmem:[#allocation4 + $0xd] sm:$0x1] %vm551, %v2169
    %v2174 = vld [vmem:[%s57 + $0x1] sm:$0x1]
    %v2175 = vld [vmem:[%s57 + $0x9] sm:$0x1]
    %2177 = vset.pattern.permute.xlu0 0
    %2178 = vperm.xlu0 %2177, %v2174
    %v2179 = vpop.permute.xlu0 %2178
    %2182 = vset.pattern.permute.xlu0 0
    %2183 = vperm.xlu0 %2182, %v2175
    %v2184 = vpop.permute.xlu0 %2183
    %v2186 = vmul.f32 %v2179, %v178
    %v2187 = vmul.f32 %v2184, %v223
    %v2188 = vadd.f32 %v2186, %v184
    %v2189 = vadd.f32 %v2187, %v184
    %v2190 = vld [vmem:[%s5] sm:$0xf]
    %v2191 = vld [vmem:[%s5 + $0x4] sm:$0xf]
    %v2192 = vld [vmem:[%s5 + $0x8] sm:$0xf]
    %v2193 = vld [vmem:[%s5 + $0xc] sm:$0xf]
    %v2198 = vunpack.c.l.b16 %v2190
    %v2199 = vunpack.c.l.b16 %v2191
    %v2200 = vunpack.c.l.b16 %v2192
    %v2201 = vunpack.c.l.b16 %v2193
    %v2202 = vpack.c.b16 %v2199, %v2198
    %v2203 = vpack.c.b16 %v2201, %v2200
    %2206 = vmatprep.subr.bf16.mxu0 0
    %2207 = vmatpush1.bf16.msra.mxu0 %v2202
    %2208 = vmatprep.subr.bf16.mxu0 0
    %2209 = vmatpush1.bf16.msra.mxu0 %v2203
    %2210 = vmatprep.subr.bf16.mxu0 0
    %2211 = vmatpush1.bf16.msra.mxu0 0
    %2212 = vmatprep.subr.bf16.mxu0 0
    %2213 = vmatpush1.bf16.msra.mxu0 0
    %2214 = vmatprep.subr.bf16.mxu0 0
    %2215 = vmatpush1.bf16.msra.mxu0 0
    %2216 = vmatprep.subr.bf16.mxu0 0
    %2217 = vmatpush1.bf16.msra.mxu0 0
    %2218 = vmatprep.subr.bf16.mxu0 0
    %2219 = vmatpush1.bf16.msra.mxu0 0
    %2220 = vmatprep.subr.bf16.mxu0 0
    %2221 = vmatpush1.bf16.msra.mxu0 0
    %2222 = vmatprep.subr.bf16.mxu0 0
    %2223 = vmatpush1.bf16.msra.mxu0 0
    %2224 = vmatprep.subr.bf16.mxu0 0
    %2225 = vmatpush1.bf16.msra.mxu0 0
    %2226 = vmatprep.subr.bf16.mxu0 0
    %2227 = vmatpush1.bf16.msra.mxu0 0
    %2228 = vmatprep.subr.bf16.mxu0 0
    %2229 = vmatpush1.bf16.msra.mxu0 0
    %2230 = vmatprep.subr.bf16.mxu0 0
    %2231 = vmatpush1.bf16.msra.mxu0 0
    %2232 = vmatprep.subr.bf16.mxu0 0
    %2233 = vmatpush1.bf16.msra.mxu0 0
    %2234 = vmatprep.subr.bf16.mxu0 0
    %2235 = vmatpush1.bf16.msra.mxu0 0
    %2236 = vmatprep.subr.bf16.mxu0 0
    %2237 = vmatpush1.bf16.msra.mxu0 0
    %2238 = vmatprep.mubr.bf16.mxu0 0
    %2239 = vmatmul.mubr.bf16.gmra.mrb[0].mxu0 %v2004
    %v2240 = vpop.f32.mrb[0].mxu0
    %v2241 = vadd.f32 %v191, %v2240
    %v2242 = vpop.f32.mrb[0].mxu0
    %v2243 = vpop.f32.mrb[0].mxu0
    %v2244 = vpop.f32.mrb[0].mxu0
    %2245 = vdwg.mxu0
    %v2247 = vrot.slane %v2241, 1
    %v2250 = vadd.f32 %v2188, %v2241
    %v2251 = vadd.f32 %v2189, %v2247
    %v2252 = vxor.u32 %v2250, 2147483648
    %v2253 = vxor.u32 %v2251, 2147483648
    %v2254 = vmul.f32 %v2252, 1.442695
    %v2255 = vpow.pop %v2254
    %v2256 = vmul.f32 %v2253, 1.442695
    %v2257 = vpow.pop %v2256
    %v2258 = vadd.f32 %v2255, 1.0
    %v2259 = vadd.f32 %v2257, 1.0
    %v2260 = vrcp.pop %v2258
    %v2261 = vmul.f32 1.0, %v2260
    %v2262 = vrcp.pop %v2259
    %v2263 = vmul.f32 1.0, %v2262
    %2264 = vrot.lane.b32.xlu0 %v2241, 64
    %v2265 = vpop.permute.xlu0 %2264
    %2266 = vrot.lane.b32.xlu0 %v2247, 64
    %v2267 = vpop.permute.xlu0 %2266
    %v2270 = vmul.f32 %v2261, %v2265
    %v2271 = vmul.f32 %v2263, %v2267
    %2274 = vrot.lane.b32.xlu0 %v2270, 64
    %v2275 = vpop.permute.xlu0 %2274
    %2276 = vrot.lane.b32.xlu0 %v2271, 64
    %v2277 = vpop.permute.xlu0 %2276
    %v2280 = vadd.f32 %v2188, %v2275
    %v2281 = vadd.f32 %v2189, %v2277
    %v2282 = vtanh.pop %v2280
    %v2283 = vtanh.pop %v2281
    %v2284 = vsub.f32 1.0, %v2261
    %v2285 = vsub.f32 1.0, %v2263
    %2288 = vrot.lane.b32.xlu0 %v2282, 96
    %v2289 = vpop.permute.xlu0 %2288
    %2290 = vrot.lane.b32.xlu0 %v2283, 96
    %v2291 = vpop.permute.xlu0 %2290
    %v2294 = vmul.f32 %v2284, %v2289
    %v2295 = vmul.f32 %v2285, %v2291
    %v2296 = vmul.f32 %v2261, %v1974
    %v2297 = vmul.f32 %v2263, %v1975
    %v2298 = vadd.f32 %v2294, %v2296
    %v2299 = vadd.f32 %v2295, %v2297
    %v2300 = vpack.c.bf16 %v2298, %v2298
    %v2301 = vpack.c.bf16 %v2299, %v2299
    %v2302 = vld [vmem:[%s8] sm:$0xf]
    %v2303 = vld [vmem:[%s8 + $0x4] sm:$0xf]
    %v2304 = vld [vmem:[%s8 + $0x8] sm:$0xf]
    %v2305 = vld [vmem:[%s8 + $0xc] sm:$0xf]
    %v2308 = vunpack.c.l.b16 %v2300
    %v2309 = vunpack.c.l.b16 %v2301
    %v2310 = vrot.slane %v2309, 7
    %v2311 = vsel %vm364, %v2310, %v2308
    %v2312 = vpack.c.b16 %v2311, %v2311
    %2313 = vrot.lane.b32.xlu0 %v2312, 96
    %v2314 = vpop.permute.xlu0 %2313
    %v2319 = vunpack.c.l.b16 %v2302
    %v2320 = vunpack.c.l.b16 %v2303
    %v2321 = vunpack.c.l.b16 %v2304
    %v2322 = vunpack.c.l.b16 %v2305
    %v2323 = vpack.c.b16 %v2320, %v2319
    %v2324 = vpack.c.b16 %v2322, %v2321
    %v2328 = vsel %vm247, %v2314, 0
    %2330 = vmatprep.subr.bf16.mxu0 0
    %2331 = vmatpush1.bf16.msra.mxu0 %v2323
    %2332 = vmatprep.subr.bf16.mxu0 0
    %2333 = vmatpush1.bf16.msra.mxu0 %v2324
    %2334 = vmatprep.subr.bf16.mxu0 0
    %2335 = vmatpush1.bf16.msra.mxu0 0
    %2336 = vmatprep.subr.bf16.mxu0 0
    %2337 = vmatpush1.bf16.msra.mxu0 0
    %2338 = vmatprep.subr.bf16.mxu0 0
    %2339 = vmatpush1.bf16.msra.mxu0 0
    %2340 = vmatprep.subr.bf16.mxu0 0
    %2341 = vmatpush1.bf16.msra.mxu0 0
    %2342 = vmatprep.subr.bf16.mxu0 0
    %2343 = vmatpush1.bf16.msra.mxu0 0
    %2344 = vmatprep.subr.bf16.mxu0 0
    %2345 = vmatpush1.bf16.msra.mxu0 0
    %2346 = vmatprep.subr.bf16.mxu0 0
    %2347 = vmatpush1.bf16.msra.mxu0 0
    %2348 = vmatprep.subr.bf16.mxu0 0
    %2349 = vmatpush1.bf16.msra.mxu0 0
    %2350 = vmatprep.subr.bf16.mxu0 0
    %2351 = vmatpush1.bf16.msra.mxu0 0
    %2352 = vmatprep.subr.bf16.mxu0 0
    %2353 = vmatpush1.bf16.msra.mxu0 0
    %2354 = vmatprep.subr.bf16.mxu0 0
    %2355 = vmatpush1.bf16.msra.mxu0 0
    %2356 = vmatprep.subr.bf16.mxu0 0
    %2357 = vmatpush1.bf16.msra.mxu0 0
    %2358 = vmatprep.subr.bf16.mxu0 0
    %2359 = vmatpush1.bf16.msra.mxu0 0
    %2360 = vmatprep.subr.bf16.mxu0 0
    %2361 = vmatpush1.bf16.msra.mxu0 0
    %2362 = vmatprep.mubr.bf16.mxu0 0
    %2363 = vmatmul.mubr.bf16.gmra.mrb[0].mxu0 %v2328
    %v2364 = vpop.f32.mrb[0].mxu0
    %v2365 = vadd.f32 %v198, %v2364
    %v2366 = vpop.f32.mrb[0].mxu0
    %v2367 = vpop.f32.mrb[0].mxu0
    %v2368 = vpop.f32.mrb[0].mxu0
    %2369 = vdwg.mxu0
    %v2370 = vpack.c.bf16 %v2134, %v2134
    %v2371 = vld [vmem:[%s9] sm:$0xf]
    %v2372 = vld [vmem:[%s9 + $0x4] sm:$0xf]
    %v2373 = vld [vmem:[%s9 + $0x8] sm:$0xf]
    %v2374 = vld [vmem:[%s9 + $0xc] sm:$0xf]
    %2376 = vrot.lane.b32.xlu0 %v2370, 96
    %v2377 = vpop.permute.xlu0 %2376
    %v2382 = vunpack.c.l.b16 %v2371
    %v2383 = vunpack.c.l.b16 %v2372
    %v2384 = vunpack.c.l.b16 %v2373
    %v2385 = vunpack.c.l.b16 %v2374
    %v2386 = vpack.c.b16 %v2383, %v2382
    %v2387 = vpack.c.b16 %v2385, %v2384
    %v2391 = vsel %vm247, %v2377, 0
    %2393 = vmatprep.subr.bf16.mxu0 0
    %2394 = vmatpush1.bf16.msra.mxu0 %v2386
    %2395 = vmatprep.subr.bf16.mxu0 0
    %2396 = vmatpush1.bf16.msra.mxu0 %v2387
    %2397 = vmatprep.subr.bf16.mxu0 0
    %2398 = vmatpush1.bf16.msra.mxu0 0
    %2399 = vmatprep.subr.bf16.mxu0 0
    %2400 = vmatpush1.bf16.msra.mxu0 0
    %2401 = vmatprep.subr.bf16.mxu0 0
    %2402 = vmatpush1.bf16.msra.mxu0 0
    %2403 = vmatprep.subr.bf16.mxu0 0
    %2404 = vmatpush1.bf16.msra.mxu0 0
    %2405 = vmatprep.subr.bf16.mxu0 0
    %2406 = vmatpush1.bf16.msra.mxu0 0
    %2407 = vmatprep.subr.bf16.mxu0 0
    %2408 = vmatpush1.bf16.msra.mxu0 0
    %2409 = vmatprep.subr.bf16.mxu0 0
    %2410 = vmatpush1.bf16.msra.mxu0 0
    %2411 = vmatprep.subr.bf16.mxu0 0
    %2412 = vmatpush1.bf16.msra.mxu0 0
    %2413 = vmatprep.subr.bf16.mxu0 0
    %2414 = vmatpush1.bf16.msra.mxu0 0
    %2415 = vmatprep.subr.bf16.mxu0 0
    %2416 = vmatpush1.bf16.msra.mxu0 0
    %2417 = vmatprep.subr.bf16.mxu0 0
    %2418 = vmatpush1.bf16.msra.mxu0 0
    %2419 = vmatprep.subr.bf16.mxu0 0
    %2420 = vmatpush1.bf16.msra.mxu0 0
    %2421 = vmatprep.subr.bf16.mxu0 0
    %2422 = vmatpush1.bf16.msra.mxu0 0
    %2423 = vmatprep.subr.bf16.mxu0 0
    %2424 = vmatpush1.bf16.msra.mxu0 0
    %2425 = vmatprep.mubr.bf16.mxu0 0
    %2426 = vmatmul.mubr.bf16.gmra.mrb[0].mxu0 %v2391
    %v2427 = vpop.f32.mrb[0].mxu0
    %v2428 = vadd.f32 %v205, %v2427
    %v2429 = vpop.f32.mrb[0].mxu0
    %v2430 = vpop.f32.mrb[0].mxu0
    %v2431 = vpop.f32.mrb[0].mxu0
    %2432 = vdwg.mxu0
    %v2433 = vadd.f32 %v2365, %v2428
    %v2434 = vxor.u32 %v2433, 2147483648
    %v2435 = vmul.f32 %v2434, 1.442695
    %v2436 = vpow.pop %v2435
    %v2437 = vadd.f32 %v2436, 1.0
    %v2438 = vrcp.pop %v2437
    %v2439 = vmul.f32 1.0, %v2438
    %2441 = vrot.lane.b32.xlu0 %v2428, 64
    %v2442 = vpop.permute.xlu0 %2441
    %v2444 = vmul.f32 %v2439, %v2442
    %2446 = vrot.lane.b32.xlu0 %v2444, 64
    %v2447 = vpop.permute.xlu0 %2446
    %v2449 = vadd.f32 %v2365, %v2447
    %v2450 = vtanh.pop %v2449
    %v2451 = vsub.f32 1.0, %v2439
    %2453 = vrot.lane.b32.xlu0 %v2450, 96
    %v2454 = vpop.permute.xlu0 %2453
    %v2456 = vmul.f32 %v2451, %v2454
    %v2457 = vmul.f32 %v2439, %v2134
    %v2458 = vadd.f32 %v2456, %v2457
    %v2461 = vunpack.c.l.s4 1966171168
    %v2462 = vunpack.c.0.s8 %v2461
    %v2463 = vlaneseq
    %v2464 = vshrl.u32 %v2463, 7
    %v2465 = vsub.s32 %v2462, %v2464
    %v2466 = vrot.slane %v2458, %v2465
    %v2467 = vcombine.high %v2466, %v2466
    %v2469 = vunpack.c.l.s4 1966171168
    %v2470 = vunpack.c.0.s8 %v2469
    %v2471 = vlaneseq
    %v2472 = vshrl.u32 %v2471, 7
    %v2473 = vsub.s32 %v2470, %v2472
    %v2474 = vrot.slane %v2466, %v2473
    %v2476 = vunpack.c.l.s4 1966171168
    %v2477 = vunpack.c.0.s8 %v2476
    %v2478 = vlaneseq
    %v2479 = vshrl.u32 %v2478, 7
    %v2480 = vsub.s32 %v2477, %v2479
    %v2481 = vrot.slane %v2467, %v2480
    %v2482 = vlaneseq
    %v2483 = vshrl.u32 %v2482, 7
    %v2484 = vsub.s32 0, %v2483
    %v2485 = vrot.slane %v2474, %v2484
    %v2486 = vlaneseq
    %v2487 = vshrl.u32 %v2486, 7
    %v2488 = vsub.s32 0, %v2487
    %v2489 = vrot.slane %v2481, %v2488
    %2490 = vrot.lane.b32.xlu0 %v2485, 96
    %v2491 = vpop.permute.xlu0 %2490
    %2492 = vrot.lane.b32.xlu0 %v2489, 96
    %v2493 = vpop.permute.xlu0 %2492
    %2496 = vst.msk [vmem:[#allocation4 + $0x6] sm:$0x1] %vm551, %v2491
    %2497 = vst.msk [vmem:[#allocation4 + $0xe] sm:$0x1] %vm551, %v2493
    %v2498 = vld [vmem:[%s57] sm:$0x1]
    %v2499 = vld [vmem:[%s57 + $0x8] sm:$0x1]
    %2501 = vset.pattern.permute.xlu0 0
    %2502 = vperm.xlu0 %2501, %v2498
    %v2503 = vpop.permute.xlu0 %2502
    %2506 = vset.pattern.permute.xlu0 0
    %2507 = vperm.xlu0 %2506, %v2499
    %v2508 = vpop.permute.xlu0 %2507
    %v2510 = vmul.f32 %v2503, %v178
    %v2511 = vmul.f32 %v2508, %v223
    %v2512 = vadd.f32 %v2510, %v184
    %v2513 = vadd.f32 %v2511, %v184
    %v2514 = vld [vmem:[%s5] sm:$0xf]
    %v2515 = vld [vmem:[%s5 + $0x4] sm:$0xf]
    %v2516 = vld [vmem:[%s5 + $0x8] sm:$0xf]
    %v2517 = vld [vmem:[%s5 + $0xc] sm:$0xf]
    %v2522 = vunpack.c.l.b16 %v2514
    %v2523 = vunpack.c.l.b16 %v2515
    %v2524 = vunpack.c.l.b16 %v2516
    %v2525 = vunpack.c.l.b16 %v2517
    %v2526 = vpack.c.b16 %v2523, %v2522
    %v2527 = vpack.c.b16 %v2525, %v2524
    %2530 = vmatprep.subr.bf16.mxu0 0
    %2531 = vmatpush1.bf16.msra.mxu0 %v2526
    %2532 = vmatprep.subr.bf16.mxu0 0
    %2533 = vmatpush1.bf16.msra.mxu0 %v2527
    %2534 = vmatprep.subr.bf16.mxu0 0
    %2535 = vmatpush1.bf16.msra.mxu0 0
    %2536 = vmatprep.subr.bf16.mxu0 0
    %2537 = vmatpush1.bf16.msra.mxu0 0
    %2538 = vmatprep.subr.bf16.mxu0 0
    %2539 = vmatpush1.bf16.msra.mxu0 0
    %2540 = vmatprep.subr.bf16.mxu0 0
    %2541 = vmatpush1.bf16.msra.mxu0 0
    %2542 = vmatprep.subr.bf16.mxu0 0
    %2543 = vmatpush1.bf16.msra.mxu0 0
    %2544 = vmatprep.subr.bf16.mxu0 0
    %2545 = vmatpush1.bf16.msra.mxu0 0
    %2546 = vmatprep.subr.bf16.mxu0 0
    %2547 = vmatpush1.bf16.msra.mxu0 0
    %2548 = vmatprep.subr.bf16.mxu0 0
    %2549 = vmatpush1.bf16.msra.mxu0 0
    %2550 = vmatprep.subr.bf16.mxu0 0
    %2551 = vmatpush1.bf16.msra.mxu0 0
    %2552 = vmatprep.subr.bf16.mxu0 0
    %2553 = vmatpush1.bf16.msra.mxu0 0
    %2554 = vmatprep.subr.bf16.mxu0 0
    %2555 = vmatpush1.bf16.msra.mxu0 0
    %2556 = vmatprep.subr.bf16.mxu0 0
    %2557 = vmatpush1.bf16.msra.mxu0 0
    %2558 = vmatprep.subr.bf16.mxu0 0
    %2559 = vmatpush1.bf16.msra.mxu0 0
    %2560 = vmatprep.subr.bf16.mxu0 0
    %2561 = vmatpush1.bf16.msra.mxu0 0
    %2562 = vmatprep.mubr.bf16.mxu0 0
    %2563 = vmatmul.mubr.bf16.gmra.mrb[0].mxu0 %v2328
    %v2564 = vpop.f32.mrb[0].mxu0
    %v2565 = vadd.f32 %v191, %v2564
    %v2566 = vpop.f32.mrb[0].mxu0
    %v2567 = vpop.f32.mrb[0].mxu0
    %v2568 = vpop.f32.mrb[0].mxu0
    %2569 = vdwg.mxu0
    %v2571 = vrot.slane %v2565, 1
    %v2574 = vadd.f32 %v2512, %v2565
    %v2575 = vadd.f32 %v2513, %v2571
    %v2576 = vxor.u32 %v2574, 2147483648
    %v2577 = vxor.u32 %v2575, 2147483648
    %v2578 = vmul.f32 %v2576, 1.442695
    %v2579 = vpow.pop %v2578
    %v2580 = vmul.f32 %v2577, 1.442695
    %v2581 = vpow.pop %v2580
    %v2582 = vadd.f32 %v2579, 1.0
    %v2583 = vadd.f32 %v2581, 1.0
    %v2584 = vrcp.pop %v2582
    %v2585 = vmul.f32 1.0, %v2584
    %v2586 = vrcp.pop %v2583
    %v2587 = vmul.f32 1.0, %v2586
    %2588 = vrot.lane.b32.xlu0 %v2565, 64
    %v2589 = vpop.permute.xlu0 %2588
    %2590 = vrot.lane.b32.xlu0 %v2571, 64
    %v2591 = vpop.permute.xlu0 %2590
    %v2594 = vmul.f32 %v2585, %v2589
    %v2595 = vmul.f32 %v2587, %v2591
    %2598 = vrot.lane.b32.xlu0 %v2594, 64
    %v2599 = vpop.permute.xlu0 %2598
    %2600 = vrot.lane.b32.xlu0 %v2595, 64
    %v2601 = vpop.permute.xlu0 %2600
    %v2604 = vadd.f32 %v2512, %v2599
    %v2605 = vadd.f32 %v2513, %v2601
    %v2606 = vtanh.pop %v2604
    %v2607 = vtanh.pop %v2605
    %v2608 = vsub.f32 1.0, %v2585
    %v2609 = vsub.f32 1.0, %v2587
    %2612 = vrot.lane.b32.xlu0 %v2606, 96
    %v2613 = vpop.permute.xlu0 %2612
    %2614 = vrot.lane.b32.xlu0 %v2607, 96
    %v2615 = vpop.permute.xlu0 %2614
    %v2618 = vmul.f32 %v2608, %v2613
    %v2619 = vmul.f32 %v2609, %v2615
    %v2620 = vmul.f32 %v2585, %v2298
    %v2621 = vmul.f32 %v2587, %v2299
    %v2622 = vadd.f32 %v2618, %v2620
    %v2623 = vadd.f32 %v2619, %v2621
    %v2624 = vpack.c.bf16 %v2622, %v2622
    %v2625 = vpack.c.bf16 %v2623, %v2623
    %v2626 = vld [vmem:[%s8] sm:$0xf]
    %v2627 = vld [vmem:[%s8 + $0x4] sm:$0xf]
    %v2628 = vld [vmem:[%s8 + $0x8] sm:$0xf]
    %v2629 = vld [vmem:[%s8 + $0xc] sm:$0xf]
    %v2632 = vunpack.c.l.b16 %v2624
    %v2633 = vunpack.c.l.b16 %v2625
    %v2634 = vrot.slane %v2633, 7
    %v2635 = vsel %vm364, %v2634, %v2632
    %v2636 = vpack.c.b16 %v2635, %v2635
    %2637 = vrot.lane.b32.xlu0 %v2636, 96
    %v2638 = vpop.permute.xlu0 %2637
    %v2643 = vunpack.c.l.b16 %v2626
    %v2644 = vunpack.c.l.b16 %v2627
    %v2645 = vunpack.c.l.b16 %v2628
    %v2646 = vunpack.c.l.b16 %v2629
    %v2647 = vpack.c.b16 %v2644, %v2643
    %v2648 = vpack.c.b16 %v2646, %v2645
    %v2652 = vsel %vm247, %v2638, 0
    %2654 = vmatprep.subr.bf16.mxu0 0
    %2655 = vmatpush1.bf16.msra.mxu0 %v2647
    %2656 = vmatprep.subr.bf16.mxu0 0
    %2657 = vmatpush1.bf16.msra.mxu0 %v2648
    %2658 = vmatprep.subr.bf16.mxu0 0
    %2659 = vmatpush1.bf16.msra.mxu0 0
    %2660 = vmatprep.subr.bf16.mxu0 0
    %2661 = vmatpush1.bf16.msra.mxu0 0
    %2662 = vmatprep.subr.bf16.mxu0 0
    %2663 = vmatpush1.bf16.msra.mxu0 0
    %2664 = vmatprep.subr.bf16.mxu0 0
    %2665 = vmatpush1.bf16.msra.mxu0 0
    %2666 = vmatprep.subr.bf16.mxu0 0
    %2667 = vmatpush1.bf16.msra.mxu0 0
    %2668 = vmatprep.subr.bf16.mxu0 0
    %2669 = vmatpush1.bf16.msra.mxu0 0
    %2670 = vmatprep.subr.bf16.mxu0 0
    %2671 = vmatpush1.bf16.msra.mxu0 0
    %2672 = vmatprep.subr.bf16.mxu0 0
    %2673 = vmatpush1.bf16.msra.mxu0 0
    %2674 = vmatprep.subr.bf16.mxu0 0
    %2675 = vmatpush1.bf16.msra.mxu0 0
    %2676 = vmatprep.subr.bf16.mxu0 0
    %2677 = vmatpush1.bf16.msra.mxu0 0
    %2678 = vmatprep.subr.bf16.mxu0 0
    %2679 = vmatpush1.bf16.msra.mxu0 0
    %2680 = vmatprep.subr.bf16.mxu0 0
    %2681 = vmatpush1.bf16.msra.mxu0 0
    %2682 = vmatprep.subr.bf16.mxu0 0
    %2683 = vmatpush1.bf16.msra.mxu0 0
    %2684 = vmatprep.subr.bf16.mxu0 0
    %2685 = vmatpush1.bf16.msra.mxu0 0
    %2686 = vmatprep.mubr.bf16.mxu0 0
    %2687 = vmatmul.mubr.bf16.gmra.mrb[0].mxu0 %v2652
    %v2688 = vpop.f32.mrb[0].mxu0
    %v2689 = vadd.f32 %v198, %v2688
    %v2690 = vpop.f32.mrb[0].mxu0
    %v2691 = vpop.f32.mrb[0].mxu0
    %v2692 = vpop.f32.mrb[0].mxu0
    %2693 = vdwg.mxu0
    %v2694 = vpack.c.bf16 %v2458, %v2458
    %v2695 = vld [vmem:[%s9] sm:$0xf]
    %v2696 = vld [vmem:[%s9 + $0x4] sm:$0xf]
    %v2697 = vld [vmem:[%s9 + $0x8] sm:$0xf]
    %v2698 = vld [vmem:[%s9 + $0xc] sm:$0xf]
    %2700 = vrot.lane.b32.xlu0 %v2694, 96
    %v2701 = vpop.permute.xlu0 %2700
    %v2706 = vunpack.c.l.b16 %v2695
    %v2707 = vunpack.c.l.b16 %v2696
    %v2708 = vunpack.c.l.b16 %v2697
    %v2709 = vunpack.c.l.b16 %v2698
    %v2710 = vpack.c.b16 %v2707, %v2706
    %v2711 = vpack.c.b16 %v2709, %v2708
    %v2715 = vsel %vm247, %v2701, 0
    %2717 = vmatprep.subr.bf16.mxu0 0
    %2718 = vmatpush1.bf16.msra.mxu0 %v2710
    %2719 = vmatprep.subr.bf16.mxu0 0
    %2720 = vmatpush1.bf16.msra.mxu0 %v2711
    %2721 = vmatprep.subr.bf16.mxu0 0
    %2722 = vmatpush1.bf16.msra.mxu0 0
    %2723 = vmatprep.subr.bf16.mxu0 0
    %2724 = vmatpush1.bf16.msra.mxu0 0
    %2725 = vmatprep.subr.bf16.mxu0 0
    %2726 = vmatpush1.bf16.msra.mxu0 0
    %2727 = vmatprep.subr.bf16.mxu0 0
    %2728 = vmatpush1.bf16.msra.mxu0 0
    %2729 = vmatprep.subr.bf16.mxu0 0
    %2730 = vmatpush1.bf16.msra.mxu0 0
    %2731 = vmatprep.subr.bf16.mxu0 0
    %2732 = vmatpush1.bf16.msra.mxu0 0
    %2733 = vmatprep.subr.bf16.mxu0 0
    %2734 = vmatpush1.bf16.msra.mxu0 0
    %2735 = vmatprep.subr.bf16.mxu0 0
    %2736 = vmatpush1.bf16.msra.mxu0 0
    %2737 = vmatprep.subr.bf16.mxu0 0
    %2738 = vmatpush1.bf16.msra.mxu0 0
    %2739 = vmatprep.subr.bf16.mxu0 0
    %2740 = vmatpush1.bf16.msra.mxu0 0
    %2741 = vmatprep.subr.bf16.mxu0 0
    %2742 = vmatpush1.bf16.msra.mxu0 0
    %2743 = vmatprep.subr.bf16.mxu0 0
    %2744 = vmatpush1.bf16.msra.mxu0 0
    %2745 = vmatprep.subr.bf16.mxu0 0
    %2746 = vmatpush1.bf16.msra.mxu0 0
    %2747 = vmatprep.subr.bf16.mxu0 0
    %2748 = vmatpush1.bf16.msra.mxu0 0
    %2749 = vmatprep.mubr.bf16.mxu0 0
    %2750 = vmatmul.mubr.bf16.gmra.mrb[0].mxu0 %v2715
    %v2751 = vpop.f32.mrb[0].mxu0
    %v2752 = vadd.f32 %v205, %v2751
    %v2753 = vpop.f32.mrb[0].mxu0
    %v2754 = vpop.f32.mrb[0].mxu0
    %v2755 = vpop.f32.mrb[0].mxu0
    %2756 = vdwg.mxu0
    %v2757 = vadd.f32 %v2689, %v2752
    %v2758 = vxor.u32 %v2757, 2147483648
    %v2759 = vmul.f32 %v2758, 1.442695
    %v2760 = vpow.pop %v2759
    %v2761 = vadd.f32 %v2760, 1.0
    %v2762 = vrcp.pop %v2761
    %v2763 = vmul.f32 1.0, %v2762
    %2765 = vrot.lane.b32.xlu0 %v2752, 64
    %v2766 = vpop.permute.xlu0 %2765
    %v2768 = vmul.f32 %v2763, %v2766
    %2770 = vrot.lane.b32.xlu0 %v2768, 64
    %v2771 = vpop.permute.xlu0 %2770
    %v2773 = vadd.f32 %v2689, %v2771
    %v2774 = vtanh.pop %v2773
    %v2775 = vsub.f32 1.0, %v2763
    %2777 = vrot.lane.b32.xlu0 %v2774, 96
    %v2778 = vpop.permute.xlu0 %2777
    %v2780 = vmul.f32 %v2775, %v2778
    %v2781 = vmul.f32 %v2763, %v2458
    %v2782 = vadd.f32 %v2780, %v2781
    %v2785 = vunpack.c.l.s4 1966171168
    %v2786 = vunpack.c.0.s8 %v2785
    %v2787 = vlaneseq
    %v2788 = vshrl.u32 %v2787, 7
    %v2789 = vsub.s32 %v2786, %v2788
    %v2790 = vrot.slane %v2782, %v2789
    %v2791 = vcombine.high %v2790, %v2790
    %v2793 = vunpack.c.l.s4 1966171168
    %v2794 = vunpack.c.0.s8 %v2793
    %v2795 = vlaneseq
    %v2796 = vshrl.u32 %v2795, 7
    %v2797 = vsub.s32 %v2794, %v2796
    %v2798 = vrot.slane %v2790, %v2797
    %v2800 = vunpack.c.l.s4 1966171168
    %v2801 = vunpack.c.0.s8 %v2800
    %v2802 = vlaneseq
    %v2803 = vshrl.u32 %v2802, 7
    %v2804 = vsub.s32 %v2801, %v2803
    %v2805 = vrot.slane %v2791, %v2804
    %v2806 = vlaneseq
    %v2807 = vshrl.u32 %v2806, 7
    %v2808 = vsub.s32 0, %v2807
    %v2809 = vrot.slane %v2798, %v2808
    %v2810 = vlaneseq
    %v2811 = vshrl.u32 %v2810, 7
    %v2812 = vsub.s32 0, %v2811
    %v2813 = vrot.slane %v2805, %v2812
    %2814 = vrot.lane.b32.xlu0 %v2809, 96
    %v2815 = vpop.permute.xlu0 %2814
    %2816 = vrot.lane.b32.xlu0 %v2813, 96
    %v2817 = vpop.permute.xlu0 %2816
    %2820 = vst.msk [vmem:[#allocation4 + $0x7] sm:$0x1] %vm551, %v2815
    %2821 = vst.msk [vmem:[#allocation4 + $0xf] sm:$0x1] %vm551, %v2817
    %v2824 = vrot.slane %v2623, 7
    %v2825 = vsel %vm364, %v2824, %v2622
    %2826 = vrot.lane.b32.xlu0 %v2825, 96
    %v2827 = vpop.permute.xlu0 %2826
    %vm2829 = vcmask 254976
    %2830 = vst.msk [vmem:[#allocation2] sm:$0x3] %vm2829, %v2827
    %2831 = vrot.lane.b32.xlu0 %v2782, 96
    %v2832 = vpop.permute.xlu0 %2831
    %2834 = vst.msk [vmem:[%s208] sm:$0x3] %vm2829, %v2832
    // Predicated region
    $region54: #{gru_ae_forward.3} parent=1 // pred_check
      _
    $region55: #{gru_ae_forward.3} parent=1 // pred_check_branch
      %2836 = sbr.rel (0) target = $region57
    $region56: #{gru_ae_forward.3} parent=1 // pred_region
      %s2838 = ssub.s32 256, 256
      %2839 = vsyncadd [#allocation5], %s2838
      %s2840 = sshll.u32 [#allocation4], 4
      %s2841 = int_to_ptr.vmem [resolvable:$true] %s2840
      %2846 = dma.vmem_to_hbm [thread:$0]  %s2841, 256, %s12, [#allocation5], 128, 128, 8
    $region57: #{gru_ae_forward.3} parent=1 // pred_fallthru
      _
    // Predicated region
    $region58: #{gru_ae_forward.3} parent=1 // pred_check
      _
    $region59: #{gru_ae_forward.3} parent=1 // pred_check_branch
      %2848 = sbr.rel (0) target = $region61
    $region60: #{gru_ae_forward.3} parent=1 // pred_region
      %2849 = dma.done [#allocation5], 256
    $region61: #{gru_ae_forward.3} parent=1 // pred_fallthru
      _
    %2850 = vsyncpa [#allocation5], 1

</llo_original>
